<compile_context>
chip_gen: v5e
topology: v5e:2x2
jax: 0.10.0
libtpu: 0.0.40
codegen_flags: <defaults>
</compile_context>

<pallas_src>
import functools

import jax
import jax.numpy as jnp
from jax import lax
from jax.experimental import pallas as pl
from jax.experimental.pallas import tpu as pltpu

EPS = 1e-5                  # nn.InstanceNorm2d default (affine=False, no running stats)
GROWTH = 32                 # channels added by each dense stage (fixed by the module)
MATMUL_DTYPE = jnp.float32  # set to jnp.bfloat16 on v6e/v7x for MXU-native operands


# ---------------------------------------------------------------------------
# Fused Pallas kernel: the whole dense block for one batch element
# ---------------------------------------------------------------------------
def _fused_kernel(x_ref, m_ref, w1, w2, w3, w4, w5, w6, w7,
                  o_ref, nrm_ref, pat_ref, *, H, W, C0, C_OUT):
    """x_ref   : (1, C0, H*W)          raw input (NCHW, spatial flattened on lanes)
       m_ref   : (9, H*W)              f32 {0,1} border masks, one row per 3x3 tap
       w1..w5  : (32, 9*cin_i)         3x3 weights, cols grouped (group, ky, kx, cin)
       w6      : (inter, C0+5*32)      1x1 conv weight
       w7      : (C_OUT, 9*inter)      final 3x3 conv weight
       o_ref   : (1, C0+C_OUT, H*W)    cat([x, conv7_out]) along channels
       nrm_ref : (C0+5*32, H*W)        VMEM cache of normalized+ReLU'd concat channels
       pat_ref : (9*max_cin, H*W)      VMEM incremental im2col patch cache
    """
    HW = H * W

    def in_relu(v):
        # InstanceNorm2d (biased variance, eps=1e-5) + ReLU, per channel over H*W.
        mean = jnp.mean(v, axis=-1, keepdims=True)
        var = jnp.mean(jnp.square(v - mean), axis=-1, keepdims=True)
        return jnp.maximum((v - mean) * lax.rsqrt(var + EPS), 0.0)

    def append_taps(nrm, p_off):
        # nrm: (cg, HW) normalized new channels.  Write their 9 shifted+masked taps
        # into the persistent im2col cache rows [p_off : p_off + 9*cg).
        cg = nrm.shape[0]
        t = 0
        for dy in (-1, 0, 1):
            for dx in (-1, 0, 1):
                d = dy * W + dx
                if d == 0:
                    tap = nrm                              # center tap: no roll/mask
                else:
                    tap = pltpu.roll(nrm, shift=(-d) % HW, axis=1) * m_ref[t:t + 1, :]
                pat_ref[p_off + t * cg:p_off + (t + 1) * cg, :] = tap
                t += 1
        return p_off + 9 * cg

    def mxu_dot(a, b):
        return jnp.dot(a.astype(MATMUL_DTYPE), b.astype(MATMUL_DTYPE),
                       preferred_element_type=jnp.float32)

    x2 = x_ref[0].astype(jnp.float32)                      # (C0, HW)

    # Stages 1-5: normalize ONLY the new channels (InstanceNorm is per-channel, so
    # prefix stats never change as the concat grows), append their 9 taps to the
    # incremental patch cache, then one deep-K MXU dot per 3x3 conv.
    new_raw, c_off, p_off = x2, 0, 0
    for w_ref in (w1, w2, w3, w4, w5):
        cg = new_raw.shape[0]
        nrm = in_relu(new_raw)
        nrm_ref[c_off:c_off + cg, :] = nrm
        c_off += cg
        p_off = append_taps(nrm, p_off)
        new_raw = mxu_dot(w_ref[...], pat_ref[:p_off, :])  # (32, HW)

    # Stage 6: normalize out5, append to the nrm cache, 1x1 conv over full concat.
    cg = new_raw.shape[0]
    nrm_ref[c_off:c_off + cg, :] = in_relu(new_raw)
    c_off += cg
    out6 = mxu_dot(w6[...], nrm_ref[:c_off, :])            # (inter, HW)

    # Stage 7: normalize out6, build its taps at the (now free) start of the patch
    # cache, final 3x3 conv.
    p7 = append_taps(in_relu(out6), 0)
    out7 = mxu_dot(w7[...], pat_ref[:p7, :])               # (C_OUT, HW)

    # droprate == 0.0 -> dropout is identity.  Emit cat([x, out7], channel) directly:
    # two full-lane, sublane-aligned stores (no XLA concat pass, no masked stores).
    o_ref[0, 0:C0, :] = x_ref[0].astype(o_ref.dtype)
    o_ref[0, C0:C0 + C_OUT, :] = out7.astype(o_ref.dtype)


# ---------------------------------------------------------------------------
# Host-side helpers + pallas_call wrapper
# ---------------------------------------------------------------------------
def _prep_weights(w_oihw, C0):
    """OIHW conv weights -> matmul-ready 2-D matrices whose column order matches the
    incremental patch cache: group-major, then (ky, kx), then channel within group."""
    def w3x3_grouped(w, group_sizes):
        cout = w.shape[0]
        parts, off = [], 0
        for cg in group_sizes:
            wg = w[:, off:off + cg]                                   # (cout,cg,3,3)
            parts.append(jnp.transpose(wg, (0, 2, 3, 1)).reshape(cout, 9 * cg))
            off += cg
        return jnp.concatenate(parts, axis=1)                         # (cout, 9*cin)

    w1, w2, w3, w4, w5, w6, w7 = w_oihw
    g = [C0] + [GROWTH] * 4
    return (w3x3_grouped(w1, g[:1]),
            w3x3_grouped(w2, g[:2]),
            w3x3_grouped(w3, g[:3]),
            w3x3_grouped(w4, g[:4]),
            w3x3_grouped(w5, g[:5]),
            w6[:, :, 0, 0],                                           # (inter, C_cat)
            w3x3_grouped(w7, [w7.shape[1]]))                          # (C_OUT, 9*inter)


def _build_masks(H, W):
    """(9, H*W) f32 {0,1} validity masks for the 9 taps of a padding=1 3x3 conv."""
    ys = jnp.repeat(jnp.arange(H), W)
    xs = jnp.tile(jnp.arange(W), H)
    rows = []
    for dy in (-1, 0, 1):
        for dx in (-1, 0, 1):
            ok = (ys + dy >= 0) & (ys + dy < H) & (xs + dx >= 0) & (xs + dx < W)
            rows.append(ok)
    return jnp.stack(rows, axis=0).astype(jnp.float32)


def _bottleneck_flat(x_flat, w_oihw, H, W):
    """Fused forward on (N, C, H*W) activations (NCHW with spatial flattened)."""
    N, C0, HW = x_flat.shape
    C_OUT = w_oihw[6].shape[0]
    INTER = w_oihw[5].shape[0]
    C_CAT = C0 + 5 * GROWTH                        # widest concatenation (conv6 input)
    P_MAX = 9 * max(C0 + 4 * GROWTH, INTER)        # widest im2col patch cache

    wk = _prep_weights(w_oihw, C0)
    masks = _build_masks(H, W)

    kernel = functools.partial(_fused_kernel, H=H, W=W, C0=C0, C_OUT=C_OUT)
    w_specs = [pl.BlockSpec(w.shape, lambda n: (0, 0)) for w in wk]

    # Per-sample working set (patch cache ~1.5 MB, nrm cache ~0.2 MB, weights ~0.6 MB
    # double-buffered, I/O blocks ~0.1 MB) stays far below the default scoped-VMEM
    # limit on every generation, including v7x's 64 MiB physical VMEM.
    return pl.pallas_call(
        kernel,
        out_shape=jax.ShapeDtypeStruct((N, C0 + C_OUT, HW), x_flat.dtype),
        grid_spec=pltpu.PrefetchScalarGridSpec(
            num_scalar_prefetch=0,
            grid=(N,),
            in_specs=[pl.BlockSpec((1, C0, HW), lambda n: (n, 0, 0)),
                      pl.BlockSpec((9, HW), lambda n: (0, 0))] + w_specs,
            out_specs=pl.BlockSpec((1, C0 + C_OUT, HW), lambda n: (n, 0, 0)),
            scratch_shapes=[pltpu.VMEM((C_CAT, HW), jnp.float32),
                            pltpu.VMEM((P_MAX, HW), jnp.float32)],
        ),
        compiler_params=pltpu.CompilerParams(
            dimension_semantics=("parallel",)),    # v7x: one sample per TensorCore
    )(x_flat, masks, *wk)


def bottleneck_decoder_block_ins(x_nchw, w_oihw):
    """NCHW interface matching the PyTorch module (only free reshapes at boundary)."""
    N, C0, H, W = x_nchw.shape
    C_OUT = w_oihw[6].shape[0]
    y = _bottleneck_flat(x_nchw.reshape(N, C0, H * W), w_oihw, H, W)
    return y.reshape(N, C0 + C_OUT, H, W)


# ---------------------------------------------------------------------------
# Parameter init (deterministic synthetic OIHW weights, like the PyTorch convs)
# ---------------------------------------------------------------------------
def init_params(key, in_planes, out_planes):
    inter = out_planes * 4
    shapes = [
        (GROWTH, in_planes, 3, 3),                 # conv1
        (GROWTH, in_planes + GROWTH, 3, 3),        # conv2
        (GROWTH, in_planes + 2 * GROWTH, 3, 3),    # conv3
        (GROWTH, in_planes + 3 * GROWTH, 3, 3),    # conv4
        (GROWTH, in_planes + 4 * GROWTH, 3, 3),    # conv5
        (inter, in_planes + 5 * GROWTH, 1, 1),     # conv6 (1x1)
        (out_planes, inter, 3, 3),                 # conv7
    ]
    keys = jax.random.split(key, len(shapes))
    return [0.05 * jax.random.normal(k, s, jnp.float32) for k, s in zip(keys, shapes)]


# ---------------------------------------------------------------------------
# Pure-JAX reference (NCHW, OIHW) for verification
# ---------------------------------------------------------------------------
def _in_relu_ref(x):
    mean = jnp.mean(x, axis=(2, 3), keepdims=True)
    var = jnp.mean((x - mean) ** 2, axis=(2, 3), keepdims=True)
    return jnp.maximum((x - mean) * lax.rsqrt(var + EPS), 0.0)


def _conv_ref(x, w_oihw, pad):
    return lax.conv_general_dilated(
        x, w_oihw, window_strides=(1, 1), padding=[(pad, pad), (pad, pad)],
        dimension_numbers=("NCHW", "OIHW", "NCHW"))


def reference_forward(x, w_oihw):
    w1, w2, w3, w4, w5, w6, w7 = w_oihw
    out1 = _conv_ref(_in_relu_ref(x), w1, 1)
    cat1 = jnp.concatenate([x, out1], 1)
    out2 = _conv_ref(_in_relu_ref(cat1), w2, 1)
    cat2 = jnp.concatenate([cat1, out2], 1)
    out3 = _conv_ref(_in_relu_ref(cat2), w3, 1)
    cat3 = jnp.concatenate([cat2, out3], 1)
    out4 = _conv_ref(_in_relu_ref(cat3), w4, 1)
    cat4 = jnp.concatenate([cat3, out4], 1)
    out5 = _conv_ref(_in_relu_ref(cat4), w5, 1)
    cat5 = jnp.concatenate([cat4, out5], 1)
    out6 = _conv_ref(_in_relu_ref(cat5), w6, 0)
    out = _conv_ref(_in_relu_ref(out6), w7, 1)
    return jnp.concatenate([x, out], 1)


if __name__ == "__main__":
    N, in_planes, out_planes, H, W = 2, 32, 16, 16, 16

    key = jax.random.PRNGKey(0)
    k_x, k_w = jax.random.split(key)
    x = jax.random.normal(k_x, (N, in_planes, H, W), jnp.float32)
    w_oihw = init_params(k_w, in_planes, out_planes)

    fwd = jax.jit(bottleneck_decoder_block_ins)
    y = jax.block_until_ready(fwd(x, w_oihw))
    assert y.shape == (N, in_planes + out_planes, H, W), y.shape

    y_ref = jax.block_until_ready(reference_forward(x, w_oihw))
    max_err = float(jnp.max(jnp.abs(y - y_ref)))
    assert jnp.allclose(y, y_ref, rtol=1e-3, atol=1e-3), max_err

    print("KERNEL_OK")
</pallas_src>

<mosaic_0001>
module attributes {stable_mosaic.version = 11 : i64} {
  func.func @_fused_kernel(%arg0: i32, %arg1: memref<1x32x256xf32, #tpu.memory_space<vmem>>, %arg2: memref<9x256xf32, #tpu.memory_space<vmem>>, %arg3: memref<32x288xf32, #tpu.memory_space<vmem>>, %arg4: memref<32x576xf32, #tpu.memory_space<vmem>>, %arg5: memref<32x864xf32, #tpu.memory_space<vmem>>, %arg6: memref<32x1152xf32, #tpu.memory_space<vmem>>, %arg7: memref<32x1440xf32, #tpu.memory_space<vmem>>, %arg8: memref<64x192xf32, #tpu.memory_space<vmem>>, %arg9: memref<16x576xf32, #tpu.memory_space<vmem>>, %arg10: memref<1x48x256xf32, #tpu.memory_space<vmem>>, %arg11: memref<192x256xf32, #tpu.memory_space<vmem>>, %arg12: memref<1440x256xf32, #tpu.memory_space<vmem>>) attributes {dimension_semantics = [#tpu.dimension_semantics<parallel>], iteration_bounds = array<i64: 2>, scalar_prefetch = 0 : i64, scratch_operands = 2 : i64, tpu.core_type = #tpu.core_type<tc>, window_params = [{transform_indices = @transform_0, window_bounds = array<i64: 1, 32, 256>}, {pipeline_mode = #tpu.pipeline_mode<synchronous>, transform_indices = @transform_1, window_bounds = array<i64: 9, 256>}, {pipeline_mode = #tpu.pipeline_mode<synchronous>, transform_indices = @transform_2, window_bounds = array<i64: 32, 288>}, {pipeline_mode = #tpu.pipeline_mode<synchronous>, transform_indices = @transform_3, window_bounds = array<i64: 32, 576>}, {pipeline_mode = #tpu.pipeline_mode<synchronous>, transform_indices = @transform_4, window_bounds = array<i64: 32, 864>}, {pipeline_mode = #tpu.pipeline_mode<synchronous>, transform_indices = @transform_5, window_bounds = array<i64: 32, 1152>}, {pipeline_mode = #tpu.pipeline_mode<synchronous>, transform_indices = @transform_6, window_bounds = array<i64: 32, 1440>}, {pipeline_mode = #tpu.pipeline_mode<synchronous>, transform_indices = @transform_7, window_bounds = array<i64: 64, 192>}, {pipeline_mode = #tpu.pipeline_mode<synchronous>, transform_indices = @transform_8, window_bounds = array<i64: 16, 576>}, {transform_indices = @transform_9, window_bounds = array<i64: 1, 48, 256>}]} {
    %c0 = arith.constant 0 : index
    %c0_0 = arith.constant 0 : index
    %c0_1 = arith.constant 0 : index
    %0 = vector.load %arg1[%c0, %c0_0, %c0_1] : memref<1x32x256xf32, #tpu.memory_space<vmem>>, vector<1x32x256xf32>
    %1 = vector.shape_cast %0 : vector<1x32x256xf32> to vector<32x256xf32>
    %cst = arith.constant dense<0.000000e+00> : vector<32xf32>
    %2 = vector.multi_reduction <add>, %1, %cst [1] : vector<32x256xf32> to vector<32xf32>
    %3 = vector.shape_cast %2 : vector<32xf32> to vector<32x1xf32>
    %cst_2 = arith.constant 2.560000e+02 : f32
    %4 = vector.broadcast %cst_2 : f32 to vector<32x1xf32>
    %5 = arith.divf %3, %4 : vector<32x1xf32>
    %6 = vector.broadcast %5 : vector<32x1xf32> to vector<32x256xf32>
    %7 = arith.subf %1, %6 : vector<32x256xf32>
    %8 = arith.mulf %7, %7 : vector<32x256xf32>
    %cst_3 = arith.constant dense<0.000000e+00> : vector<32xf32>
    %9 = vector.multi_reduction <add>, %8, %cst_3 [1] : vector<32x256xf32> to vector<32xf32>
    %10 = vector.shape_cast %9 : vector<32xf32> to vector<32x1xf32>
    %cst_4 = arith.constant 2.560000e+02 : f32
    %11 = vector.broadcast %cst_4 : f32 to vector<32x1xf32>
    %12 = arith.divf %10, %11 : vector<32x1xf32>
    %13 = vector.broadcast %5 : vector<32x1xf32> to vector<32x256xf32>
    %14 = arith.subf %1, %13 : vector<32x256xf32>
    %cst_5 = arith.constant 9.99999974E-6 : f32
    %15 = vector.broadcast %cst_5 : f32 to vector<32x1xf32>
    %16 = arith.addf %12, %15 : vector<32x1xf32>
    %17 = math.rsqrt %16 : vector<32x1xf32>
    %18 = vector.broadcast %17 : vector<32x1xf32> to vector<32x256xf32>
    %19 = arith.mulf %14, %18 : vector<32x256xf32>
    %cst_6 = arith.constant 0.000000e+00 : f32
    %20 = vector.broadcast %cst_6 : f32 to vector<32x256xf32>
    %21 = arith.maximumf %19, %20 : vector<32x256xf32>
    %c0_7 = arith.constant 0 : index
    %c0_8 = arith.constant 0 : index
    %22 = vector.load %arg11[%c0_7, %c0_8] : memref<192x256xf32, #tpu.memory_space<vmem>>, vector<32x256xf32>
    tpu.vector_store %arg11[%c0_7, %c0_8], %21 {strides = array<i32>} : memref<192x256xf32, #tpu.memory_space<vmem>>, vector<32x256xf32>,
    %c17_i32 = arith.constant 17 : i32
    %23 = tpu.dynamic_rotate %21 by %c17_i32 dim 1 : vector<32x256xf32>, i32 -> vector<32x256xf32>
    %c0_9 = arith.constant 0 : index
    %c0_10 = arith.constant 0 : index
    %24 = vector.load %arg2[%c0_9, %c0_10] : memref<9x256xf32, #tpu.memory_space<vmem>>, vector<1x256xf32>
    %25 = vector.broadcast %24 : vector<1x256xf32> to vector<32x256xf32>
    %26 = arith.mulf %23, %25 : vector<32x256xf32>
    %c0_11 = arith.constant 0 : index
    %c0_12 = arith.constant 0 : index
    %27 = vector.load %arg12[%c0_11, %c0_12] : memref<1440x256xf32, #tpu.memory_space<vmem>>, vector<32x256xf32>
    tpu.vector_store %arg12[%c0_11, %c0_12], %26 {strides = array<i32>} : memref<1440x256xf32, #tpu.memory_space<vmem>>, vector<32x256xf32>,
    %c16_i32 = arith.constant 16 : i32
    %28 = tpu.dynamic_rotate %21 by %c16_i32 dim 1 : vector<32x256xf32>, i32 -> vector<32x256xf32>
    %c1 = arith.constant 1 : index
    %c0_13 = arith.constant 0 : index
    %29 = vector.load %arg2[%c1, %c0_13] : memref<9x256xf32, #tpu.memory_space<vmem>>, vector<1x256xf32>
    %30 = vector.broadcast %29 : vector<1x256xf32> to vector<32x256xf32>
    %31 = arith.mulf %28, %30 : vector<32x256xf32>
    %c32 = arith.constant 32 : index
    %c0_14 = arith.constant 0 : index
    %32 = vector.load %arg12[%c32, %c0_14] : memref<1440x256xf32, #tpu.memory_space<vmem>>, vector<32x256xf32>
    tpu.vector_store %arg12[%c32, %c0_14], %31 {strides = array<i32>} : memref<1440x256xf32, #tpu.memory_space<vmem>>, vector<32x256xf32>,
    %c15_i32 = arith.constant 15 : i32
    %33 = tpu.dynamic_rotate %21 by %c15_i32 dim 1 : vector<32x256xf32>, i32 -> vector<32x256xf32>
    %c2 = arith.constant 2 : index
    %c0_15 = arith.constant 0 : index
    %34 = vector.load %arg2[%c2, %c0_15] : memref<9x256xf32, #tpu.memory_space<vmem>>, vector<1x256xf32>
    %35 = vector.broadcast %34 : vector<1x256xf32> to vector<32x256xf32>
    %36 = arith.mulf %33, %35 : vector<32x256xf32>
    %c64 = arith.constant 64 : index
    %c0_16 = arith.constant 0 : index
    %37 = vector.load %arg12[%c64, %c0_16] : memref<1440x256xf32, #tpu.memory_space<vmem>>, vector<32x256xf32>
    tpu.vector_store %arg12[%c64, %c0_16], %36 {strides = array<i32>} : memref<1440x256xf32, #tpu.memory_space<vmem>>, vector<32x256xf32>,
    %c1_i32 = arith.constant 1 : i32
    %38 = tpu.dynamic_rotate %21 by %c1_i32 dim 1 : vector<32x256xf32>, i32 -> vector<32x256xf32>
    %c3 = arith.constant 3 : index
    %c0_17 = arith.constant 0 : index
    %39 = vector.load %arg2[%c3, %c0_17] : memref<9x256xf32, #tpu.memory_space<vmem>>, vector<1x256xf32>
    %40 = vector.broadcast %39 : vector<1x256xf32> to vector<32x256xf32>
    %41 = arith.mulf %38, %40 : vector<32x256xf32>
    %c96 = arith.constant 96 : index
    %c0_18 = arith.constant 0 : index
    %42 = vector.load %arg12[%c96, %c0_18] : memref<1440x256xf32, #tpu.memory_space<vmem>>, vector<32x256xf32>
    tpu.vector_store %arg12[%c96, %c0_18], %41 {strides = array<i32>} : memref<1440x256xf32, #tpu.memory_space<vmem>>, vector<32x256xf32>,
    %c128 = arith.constant 128 : index
    %c0_19 = arith.constant 0 : index
    %43 = vector.load %arg12[%c128, %c0_19] : memref<1440x256xf32, #tpu.memory_space<vmem>>, vector<32x256xf32>
    tpu.vector_store %arg12[%c128, %c0_19], %21 {strides = array<i32>} : memref<1440x256xf32, #tpu.memory_space<vmem>>, vector<32x256xf32>,
    %c255_i32 = arith.constant 255 : i32
    %44 = tpu.dynamic_rotate %21 by %c255_i32 dim 1 : vector<32x256xf32>, i32 -> vector<32x256xf32>
    %c5 = arith.constant 5 : index
    %c0_20 = arith.constant 0 : index
    %45 = vector.load %arg2[%c5, %c0_20] : memref<9x256xf32, #tpu.memory_space<vmem>>, vector<1x256xf32>
    %46 = vector.broadcast %45 : vector<1x256xf32> to vector<32x256xf32>
    %47 = arith.mulf %44, %46 : vector<32x256xf32>
    %c160 = arith.constant 160 : index
    %c0_21 = arith.constant 0 : index
    %48 = vector.load %arg12[%c160, %c0_21] : memref<1440x256xf32, #tpu.memory_space<vmem>>, vector<32x256xf32>
    tpu.vector_store %arg12[%c160, %c0_21], %47 {strides = array<i32>} : memref<1440x256xf32, #tpu.memory_space<vmem>>, vector<32x256xf32>,
    %c241_i32 = arith.constant 241 : i32
    %49 = tpu.dynamic_rotate %21 by %c241_i32 dim 1 : vector<32x256xf32>, i32 -> vector<32x256xf32>
    %c6 = arith.constant 6 : index
    %c0_22 = arith.constant 0 : index
    %50 = vector.load %arg2[%c6, %c0_22] : memref<9x256xf32, #tpu.memory_space<vmem>>, vector<1x256xf32>
    %51 = vector.broadcast %50 : vector<1x256xf32> to vector<32x256xf32>
    %52 = arith.mulf %49, %51 : vector<32x256xf32>
    %c192 = arith.constant 192 : index
    %c0_23 = arith.constant 0 : index
    %53 = vector.load %arg12[%c192, %c0_23] : memref<1440x256xf32, #tpu.memory_space<vmem>>, vector<32x256xf32>
    tpu.vector_store %arg12[%c192, %c0_23], %52 {strides = array<i32>} : memref<1440x256xf32, #tpu.memory_space<vmem>>, vector<32x256xf32>,
    %c240_i32 = arith.constant 240 : i32
    %54 = tpu.dynamic_rotate %21 by %c240_i32 dim 1 : vector<32x256xf32>, i32 -> vector<32x256xf32>
    %c7 = arith.constant 7 : index
    %c0_24 = arith.constant 0 : index
    %55 = vector.load %arg2[%c7, %c0_24] : memref<9x256xf32, #tpu.memory_space<vmem>>, vector<1x256xf32>
    %56 = vector.broadcast %55 : vector<1x256xf32> to vector<32x256xf32>
    %57 = arith.mulf %54, %56 : vector<32x256xf32>
    %c224 = arith.constant 224 : index
    %c0_25 = arith.constant 0 : index
    %58 = vector.load %arg12[%c224, %c0_25] : memref<1440x256xf32, #tpu.memory_space<vmem>>, vector<32x256xf32>
    tpu.vector_store %arg12[%c224, %c0_25], %57 {strides = array<i32>} : memref<1440x256xf32, #tpu.memory_space<vmem>>, vector<32x256xf32>,
    %c239_i32 = arith.constant 239 : i32
    %59 = tpu.dynamic_rotate %21 by %c239_i32 dim 1 : vector<32x256xf32>, i32 -> vector<32x256xf32>
    %c8 = arith.constant 8 : index
    %c0_26 = arith.constant 0 : index
    %60 = vector.load %arg2[%c8, %c0_26] : memref<9x256xf32, #tpu.memory_space<vmem>>, vector<1x256xf32>
    %61 = vector.broadcast %60 : vector<1x256xf32> to vector<32x256xf32>
    %62 = arith.mulf %59, %61 : vector<32x256xf32>
    %c256 = arith.constant 256 : index
    %c0_27 = arith.constant 0 : index
    %63 = vector.load %arg12[%c256, %c0_27] : memref<1440x256xf32, #tpu.memory_space<vmem>>, vector<32x256xf32>
    tpu.vector_store %arg12[%c256, %c0_27], %62 {strides = array<i32>} : memref<1440x256xf32, #tpu.memory_space<vmem>>, vector<32x256xf32>,
    %c0_28 = arith.constant 0 : index
    %c0_29 = arith.constant 0 : index
    %64 = vector.load %arg3[%c0_28, %c0_29] : memref<32x288xf32, #tpu.memory_space<vmem>>, vector<32x288xf32>
    %c0_30 = arith.constant 0 : index
    %c0_31 = arith.constant 0 : index
    %65 = vector.load %arg12[%c0_30, %c0_31] : memref<1440x256xf32, #tpu.memory_space<vmem>>, vector<288x256xf32>
    %cst_32 = arith.constant dense<0.000000e+00> : vector<32x256xf32>
    %66 = tpu.matmul %64, %65, %cst_32 {dimension_numbers = #tpu.dot_dimension_numbers<[1], [0], [0], [1], [0, 0, 1, 1], [], []>} : vector<32x288xf32>, vector<288x256xf32>, vector<32x256xf32> -> vector<32x256xf32>
    %cst_33 = arith.constant dense<0.000000e+00> : vector<32xf32>
    %67 = vector.multi_reduction <add>, %66, %cst_33 [1] : vector<32x256xf32> to vector<32xf32>
    %68 = vector.shape_cast %67 : vector<32xf32> to vector<32x1xf32>
    %cst_34 = arith.constant 2.560000e+02 : f32
    %69 = vector.broadcast %cst_34 : f32 to vector<32x1xf32>
    %70 = arith.divf %68, %69 : vector<32x1xf32>
    %71 = vector.broadcast %70 : vector<32x1xf32> to vector<32x256xf32>
    %72 = arith.subf %66, %71 : vector<32x256xf32>
    %73 = arith.mulf %72, %72 : vector<32x256xf32>
    %cst_35 = arith.constant dense<0.000000e+00> : vector<32xf32>
    %74 = vector.multi_reduction <add>, %73, %cst_35 [1] : vector<32x256xf32> to vector<32xf32>
    %75 = vector.shape_cast %74 : vector<32xf32> to vector<32x1xf32>
    %cst_36 = arith.constant 2.560000e+02 : f32
    %76 = vector.broadcast %cst_36 : f32 to vector<32x1xf32>
    %77 = arith.divf %75, %76 : vector<32x1xf32>
    %78 = vector.broadcast %70 : vector<32x1xf32> to vector<32x256xf32>
    %79 = arith.subf %66, %78 : vector<32x256xf32>
    %cst_37 = arith.constant 9.99999974E-6 : f32
    %80 = vector.broadcast %cst_37 : f32 to vector<32x1xf32>
    %81 = arith.addf %77, %80 : vector<32x1xf32>
    %82 = math.rsqrt %81 : vector<32x1xf32>
    %83 = vector.broadcast %82 : vector<32x1xf32> to vector<32x256xf32>
    %84 = arith.mulf %79, %83 : vector<32x256xf32>
    %cst_38 = arith.constant 0.000000e+00 : f32
    %85 = vector.broadcast %cst_38 : f32 to vector<32x256xf32>
    %86 = arith.maximumf %84, %85 : vector<32x256xf32>
    %c32_39 = arith.constant 32 : index
    %c0_40 = arith.constant 0 : index
    %87 = vector.load %arg11[%c32_39, %c0_40] : memref<192x256xf32, #tpu.memory_space<vmem>>, vector<32x256xf32>
    tpu.vector_store %arg11[%c32_39, %c0_40], %86 {strides = array<i32>} : memref<192x256xf32, #tpu.memory_space<vmem>>, vector<32x256xf32>,
    %c17_i32_41 = arith.constant 17 : i32
    %88 = tpu.dynamic_rotate %86 by %c17_i32_41 dim 1 : vector<32x256xf32>, i32 -> vector<32x256xf32>
    %c0_42 = arith.constant 0 : index
    %c0_43 = arith.constant 0 : index
    %89 = vector.load %arg2[%c0_42, %c0_43] : memref<9x256xf32, #tpu.memory_space<vmem>>, vector<1x256xf32>
    %90 = vector.broadcast %89 : vector<1x256xf32> to vector<32x256xf32>
    %91 = arith.mulf %88, %90 : vector<32x256xf32>
    %c288 = arith.constant 288 : index
    %c0_44 = arith.constant 0 : index
    %92 = vector.load %arg12[%c288, %c0_44] : memref<1440x256xf32, #tpu.memory_space<vmem>>, vector<32x256xf32>
    tpu.vector_store %arg12[%c288, %c0_44], %91 {strides = array<i32>} : memref<1440x256xf32, #tpu.memory_space<vmem>>, vector<32x256xf32>,
    %c16_i32_45 = arith.constant 16 : i32
    %93 = tpu.dynamic_rotate %86 by %c16_i32_45 dim 1 : vector<32x256xf32>, i32 -> vector<32x256xf32>
    %c1_46 = arith.constant 1 : index
    %c0_47 = arith.constant 0 : index
    %94 = vector.load %arg2[%c1_46, %c0_47] : memref<9x256xf32, #tpu.memory_space<vmem>>, vector<1x256xf32>
    %95 = vector.broadcast %94 : vector<1x256xf32> to vector<32x256xf32>
    %96 = arith.mulf %93, %95 : vector<32x256xf32>
    %c320 = arith.constant 320 : index
    %c0_48 = arith.constant 0 : index
    %97 = vector.load %arg12[%c320, %c0_48] : memref<1440x256xf32, #tpu.memory_space<vmem>>, vector<32x256xf32>
    tpu.vector_store %arg12[%c320, %c0_48], %96 {strides = array<i32>} : memref<1440x256xf32, #tpu.memory_space<vmem>>, vector<32x256xf32>,
    %c15_i32_49 = arith.constant 15 : i32
    %98 = tpu.dynamic_rotate %86 by %c15_i32_49 dim 1 : vector<32x256xf32>, i32 -> vector<32x256xf32>
    %c2_50 = arith.constant 2 : index
    %c0_51 = arith.constant 0 : index
    %99 = vector.load %arg2[%c2_50, %c0_51] : memref<9x256xf32, #tpu.memory_space<vmem>>, vector<1x256xf32>
    %100 = vector.broadcast %99 : vector<1x256xf32> to vector<32x256xf32>
    %101 = arith.mulf %98, %100 : vector<32x256xf32>
    %c352 = arith.constant 352 : index
    %c0_52 = arith.constant 0 : index
    %102 = vector.load %arg12[%c352, %c0_52] : memref<1440x256xf32, #tpu.memory_space<vmem>>, vector<32x256xf32>
    tpu.vector_store %arg12[%c352, %c0_52], %101 {strides = array<i32>} : memref<1440x256xf32, #tpu.memory_space<vmem>>, vector<32x256xf32>,
    %c1_i32_53 = arith.constant 1 : i32
    %103 = tpu.dynamic_rotate %86 by %c1_i32_53 dim 1 : vector<32x256xf32>, i32 -> vector<32x256xf32>
    %c3_54 = arith.constant 3 : index
    %c0_55 = arith.constant 0 : index
    %104 = vector.load %arg2[%c3_54, %c0_55] : memref<9x256xf32, #tpu.memory_space<vmem>>, vector<1x256xf32>
    %105 = vector.broadcast %104 : vector<1x256xf32> to vector<32x256xf32>
    %106 = arith.mulf %103, %105 : vector<32x256xf32>
    %c384 = arith.constant 384 : index
    %c0_56 = arith.constant 0 : index
    %107 = vector.load %arg12[%c384, %c0_56] : memref<1440x256xf32, #tpu.memory_space<vmem>>, vector<32x256xf32>
    tpu.vector_store %arg12[%c384, %c0_56], %106 {strides = array<i32>} : memref<1440x256xf32, #tpu.memory_space<vmem>>, vector<32x256xf32>,
    %c416 = arith.constant 416 : index
    %c0_57 = arith.constant 0 : index
    %108 = vector.load %arg12[%c416, %c0_57] : memref<1440x256xf32, #tpu.memory_space<vmem>>, vector<32x256xf32>
    tpu.vector_store %arg12[%c416, %c0_57], %86 {strides = array<i32>} : memref<1440x256xf32, #tpu.memory_space<vmem>>, vector<32x256xf32>,
    %c255_i32_58 = arith.constant 255 : i32
    %109 = tpu.dynamic_rotate %86 by %c255_i32_58 dim 1 : vector<32x256xf32>, i32 -> vector<32x256xf32>
    %c5_59 = arith.constant 5 : index
    %c0_60 = arith.constant 0 : index
    %110 = vector.load %arg2[%c5_59, %c0_60] : memref<9x256xf32, #tpu.memory_space<vmem>>, vector<1x256xf32>
    %111 = vector.broadcast %110 : vector<1x256xf32> to vector<32x256xf32>
    %112 = arith.mulf %109, %111 : vector<32x256xf32>
    %c448 = arith.constant 448 : index
    %c0_61 = arith.constant 0 : index
    %113 = vector.load %arg12[%c448, %c0_61] : memref<1440x256xf32, #tpu.memory_space<vmem>>, vector<32x256xf32>
    tpu.vector_store %arg12[%c448, %c0_61], %112 {strides = array<i32>} : memref<1440x256xf32, #tpu.memory_space<vmem>>, vector<32x256xf32>,
    %c241_i32_62 = arith.constant 241 : i32
    %114 = tpu.dynamic_rotate %86 by %c241_i32_62 dim 1 : vector<32x256xf32>, i32 -> vector<32x256xf32>
    %c6_63 = arith.constant 6 : index
    %c0_64 = arith.constant 0 : index
    %115 = vector.load %arg2[%c6_63, %c0_64] : memref<9x256xf32, #tpu.memory_space<vmem>>, vector<1x256xf32>
    %116 = vector.broadcast %115 : vector<1x256xf32> to vector<32x256xf32>
    %117 = arith.mulf %114, %116 : vector<32x256xf32>
    %c480 = arith.constant 480 : index
    %c0_65 = arith.constant 0 : index
    %118 = vector.load %arg12[%c480, %c0_65] : memref<1440x256xf32, #tpu.memory_space<vmem>>, vector<32x256xf32>
    tpu.vector_store %arg12[%c480, %c0_65], %117 {strides = array<i32>} : memref<1440x256xf32, #tpu.memory_space<vmem>>, vector<32x256xf32>,
    %c240_i32_66 = arith.constant 240 : i32
    %119 = tpu.dynamic_rotate %86 by %c240_i32_66 dim 1 : vector<32x256xf32>, i32 -> vector<32x256xf32>
    %c7_67 = arith.constant 7 : index
    %c0_68 = arith.constant 0 : index
    %120 = vector.load %arg2[%c7_67, %c0_68] : memref<9x256xf32, #tpu.memory_space<vmem>>, vector<1x256xf32>
    %121 = vector.broadcast %120 : vector<1x256xf32> to vector<32x256xf32>
    %122 = arith.mulf %119, %121 : vector<32x256xf32>
    %c512 = arith.constant 512 : index
    %c0_69 = arith.constant 0 : index
    %123 = vector.load %arg12[%c512, %c0_69] : memref<1440x256xf32, #tpu.memory_space<vmem>>, vector<32x256xf32>
    tpu.vector_store %arg12[%c512, %c0_69], %122 {strides = array<i32>} : memref<1440x256xf32, #tpu.memory_space<vmem>>, vector<32x256xf32>,
    %c239_i32_70 = arith.constant 239 : i32
    %124 = tpu.dynamic_rotate %86 by %c239_i32_70 dim 1 : vector<32x256xf32>, i32 -> vector<32x256xf32>
    %c8_71 = arith.constant 8 : index
    %c0_72 = arith.constant 0 : index
    %125 = vector.load %arg2[%c8_71, %c0_72] : memref<9x256xf32, #tpu.memory_space<vmem>>, vector<1x256xf32>
    %126 = vector.broadcast %125 : vector<1x256xf32> to vector<32x256xf32>
    %127 = arith.mulf %124, %126 : vector<32x256xf32>
    %c544 = arith.constant 544 : index
    %c0_73 = arith.constant 0 : index
    %128 = vector.load %arg12[%c544, %c0_73] : memref<1440x256xf32, #tpu.memory_space<vmem>>, vector<32x256xf32>
    tpu.vector_store %arg12[%c544, %c0_73], %127 {strides = array<i32>} : memref<1440x256xf32, #tpu.memory_space<vmem>>, vector<32x256xf32>,
    %c0_74 = arith.constant 0 : index
    %c0_75 = arith.constant 0 : index
    %129 = vector.load %arg4[%c0_74, %c0_75] : memref<32x576xf32, #tpu.memory_space<vmem>>, vector<32x576xf32>
    %c0_76 = arith.constant 0 : index
    %c0_77 = arith.constant 0 : index
    %130 = vector.load %arg12[%c0_76, %c0_77] : memref<1440x256xf32, #tpu.memory_space<vmem>>, vector<576x256xf32>
    %cst_78 = arith.constant dense<0.000000e+00> : vector<32x256xf32>
    %131 = tpu.matmul %129, %130, %cst_78 {dimension_numbers = #tpu.dot_dimension_numbers<[1], [0], [0], [1], [0, 0, 1, 1], [], []>} : vector<32x576xf32>, vector<576x256xf32>, vector<32x256xf32> -> vector<32x256xf32>
    %cst_79 = arith.constant dense<0.000000e+00> : vector<32xf32>
    %132 = vector.multi_reduction <add>, %131, %cst_79 [1] : vector<32x256xf32> to vector<32xf32>
    %133 = vector.shape_cast %132 : vector<32xf32> to vector<32x1xf32>
    %cst_80 = arith.constant 2.560000e+02 : f32
    %134 = vector.broadcast %cst_80 : f32 to vector<32x1xf32>
    %135 = arith.divf %133, %134 : vector<32x1xf32>
    %136 = vector.broadcast %135 : vector<32x1xf32> to vector<32x256xf32>
    %137 = arith.subf %131, %136 : vector<32x256xf32>
    %138 = arith.mulf %137, %137 : vector<32x256xf32>
    %cst_81 = arith.constant dense<0.000000e+00> : vector<32xf32>
    %139 = vector.multi_reduction <add>, %138, %cst_81 [1] : vector<32x256xf32> to vector<32xf32>
    %140 = vector.shape_cast %139 : vector<32xf32> to vector<32x1xf32>
    %cst_82 = arith.constant 2.560000e+02 : f32
    %141 = vector.broadcast %cst_82 : f32 to vector<32x1xf32>
    %142 = arith.divf %140, %141 : vector<32x1xf32>
    %143 = vector.broadcast %135 : vector<32x1xf32> to vector<32x256xf32>
    %144 = arith.subf %131, %143 : vector<32x256xf32>
    %cst_83 = arith.constant 9.99999974E-6 : f32
    %145 = vector.broadcast %cst_83 : f32 to vector<32x1xf32>
    %146 = arith.addf %142, %145 : vector<32x1xf32>
    %147 = math.rsqrt %146 : vector<32x1xf32>
    %148 = vector.broadcast %147 : vector<32x1xf32> to vector<32x256xf32>
    %149 = arith.mulf %144, %148 : vector<32x256xf32>
    %cst_84 = arith.constant 0.000000e+00 : f32
    %150 = vector.broadcast %cst_84 : f32 to vector<32x256xf32>
    %151 = arith.maximumf %149, %150 : vector<32x256xf32>
    %c64_85 = arith.constant 64 : index
    %c0_86 = arith.constant 0 : index
    %152 = vector.load %arg11[%c64_85, %c0_86] : memref<192x256xf32, #tpu.memory_space<vmem>>, vector<32x256xf32>
    tpu.vector_store %arg11[%c64_85, %c0_86], %151 {strides = array<i32>} : memref<192x256xf32, #tpu.memory_space<vmem>>, vector<32x256xf32>,
    %c17_i32_87 = arith.constant 17 : i32
    %153 = tpu.dynamic_rotate %151 by %c17_i32_87 dim 1 : vector<32x256xf32>, i32 -> vector<32x256xf32>
    %c0_88 = arith.constant 0 : index
    %c0_89 = arith.constant 0 : index
    %154 = vector.load %arg2[%c0_88, %c0_89] : memref<9x256xf32, #tpu.memory_space<vmem>>, vector<1x256xf32>
    %155 = vector.broadcast %154 : vector<1x256xf32> to vector<32x256xf32>
    %156 = arith.mulf %153, %155 : vector<32x256xf32>
    %c576 = arith.constant 576 : index
    %c0_90 = arith.constant 0 : index
    %157 = vector.load %arg12[%c576, %c0_90] : memref<1440x256xf32, #tpu.memory_space<vmem>>, vector<32x256xf32>
    tpu.vector_store %arg12[%c576, %c0_90], %156 {strides = array<i32>} : memref<1440x256xf32, #tpu.memory_space<vmem>>, vector<32x256xf32>,
    %c16_i32_91 = arith.constant 16 : i32
    %158 = tpu.dynamic_rotate %151 by %c16_i32_91 dim 1 : vector<32x256xf32>, i32 -> vector<32x256xf32>
    %c1_92 = arith.constant 1 : index
    %c0_93 = arith.constant 0 : index
    %159 = vector.load %arg2[%c1_92, %c0_93] : memref<9x256xf32, #tpu.memory_space<vmem>>, vector<1x256xf32>
    %160 = vector.broadcast %159 : vector<1x256xf32> to vector<32x256xf32>
    %161 = arith.mulf %158, %160 : vector<32x256xf32>
    %c608 = arith.constant 608 : index
    %c0_94 = arith.constant 0 : index
    %162 = vector.load %arg12[%c608, %c0_94] : memref<1440x256xf32, #tpu.memory_space<vmem>>, vector<32x256xf32>
    tpu.vector_store %arg12[%c608, %c0_94], %161 {strides = array<i32>} : memref<1440x256xf32, #tpu.memory_space<vmem>>, vector<32x256xf32>,
    %c15_i32_95 = arith.constant 15 : i32
    %163 = tpu.dynamic_rotate %151 by %c15_i32_95 dim 1 : vector<32x256xf32>, i32 -> vector<32x256xf32>
    %c2_96 = arith.constant 2 : index
    %c0_97 = arith.constant 0 : index
    %164 = vector.load %arg2[%c2_96, %c0_97] : memref<9x256xf32, #tpu.memory_space<vmem>>, vector<1x256xf32>
    %165 = vector.broadcast %164 : vector<1x256xf32> to vector<32x256xf32>
    %166 = arith.mulf %163, %165 : vector<32x256xf32>
    %c640 = arith.constant 640 : index
    %c0_98 = arith.constant 0 : index
    %167 = vector.load %arg12[%c640, %c0_98] : memref<1440x256xf32, #tpu.memory_space<vmem>>, vector<32x256xf32>
    tpu.vector_store %arg12[%c640, %c0_98], %166 {strides = array<i32>} : memref<1440x256xf32, #tpu.memory_space<vmem>>, vector<32x256xf32>,
    %c1_i32_99 = arith.constant 1 : i32
    %168 = tpu.dynamic_rotate %151 by %c1_i32_99 dim 1 : vector<32x256xf32>, i32 -> vector<32x256xf32>
    %c3_100 = arith.constant 3 : index
    %c0_101 = arith.constant 0 : index
    %169 = vector.load %arg2[%c3_100, %c0_101] : memref<9x256xf32, #tpu.memory_space<vmem>>, vector<1x256xf32>
    %170 = vector.broadcast %169 : vector<1x256xf32> to vector<32x256xf32>
    %171 = arith.mulf %168, %170 : vector<32x256xf32>
    %c672 = arith.constant 672 : index
    %c0_102 = arith.constant 0 : index
    %172 = vector.load %arg12[%c672, %c0_102] : memref<1440x256xf32, #tpu.memory_space<vmem>>, vector<32x256xf32>
    tpu.vector_store %arg12[%c672, %c0_102], %171 {strides = array<i32>} : memref<1440x256xf32, #tpu.memory_space<vmem>>, vector<32x256xf32>,
    %c704 = arith.constant 704 : index
    %c0_103 = arith.constant 0 : index
    %173 = vector.load %arg12[%c704, %c0_103] : memref<1440x256xf32, #tpu.memory_space<vmem>>, vector<32x256xf32>
    tpu.vector_store %arg12[%c704, %c0_103], %151 {strides = array<i32>} : memref<1440x256xf32, #tpu.memory_space<vmem>>, vector<32x256xf32>,
    %c255_i32_104 = arith.constant 255 : i32
    %174 = tpu.dynamic_rotate %151 by %c255_i32_104 dim 1 : vector<32x256xf32>, i32 -> vector<32x256xf32>
    %c5_105 = arith.constant 5 : index
    %c0_106 = arith.constant 0 : index
    %175 = vector.load %arg2[%c5_105, %c0_106] : memref<9x256xf32, #tpu.memory_space<vmem>>, vector<1x256xf32>
    %176 = vector.broadcast %175 : vector<1x256xf32> to vector<32x256xf32>
    %177 = arith.mulf %174, %176 : vector<32x256xf32>
    %c736 = arith.constant 736 : index
    %c0_107 = arith.constant 0 : index
    %178 = vector.load %arg12[%c736, %c0_107] : memref<1440x256xf32, #tpu.memory_space<vmem>>, vector<32x256xf32>
    tpu.vector_store %arg12[%c736, %c0_107], %177 {strides = array<i32>} : memref<1440x256xf32, #tpu.memory_space<vmem>>, vector<32x256xf32>,
    %c241_i32_108 = arith.constant 241 : i32
    %179 = tpu.dynamic_rotate %151 by %c241_i32_108 dim 1 : vector<32x256xf32>, i32 -> vector<32x256xf32>
    %c6_109 = arith.constant 6 : index
    %c0_110 = arith.constant 0 : index
    %180 = vector.load %arg2[%c6_109, %c0_110] : memref<9x256xf32, #tpu.memory_space<vmem>>, vector<1x256xf32>
    %181 = vector.broadcast %180 : vector<1x256xf32> to vector<32x256xf32>
    %182 = arith.mulf %179, %181 : vector<32x256xf32>
    %c768 = arith.constant 768 : index
    %c0_111 = arith.constant 0 : index
    %183 = vector.load %arg12[%c768, %c0_111] : memref<1440x256xf32, #tpu.memory_space<vmem>>, vector<32x256xf32>
    tpu.vector_store %arg12[%c768, %c0_111], %182 {strides = array<i32>} : memref<1440x256xf32, #tpu.memory_space<vmem>>, vector<32x256xf32>,
    %c240_i32_112 = arith.constant 240 : i32
    %184 = tpu.dynamic_rotate %151 by %c240_i32_112 dim 1 : vector<32x256xf32>, i32 -> vector<32x256xf32>
    %c7_113 = arith.constant 7 : index
    %c0_114 = arith.constant 0 : index
    %185 = vector.load %arg2[%c7_113, %c0_114] : memref<9x256xf32, #tpu.memory_space<vmem>>, vector<1x256xf32>
    %186 = vector.broadcast %185 : vector<1x256xf32> to vector<32x256xf32>
    %187 = arith.mulf %184, %186 : vector<32x256xf32>
    %c800 = arith.constant 800 : index
    %c0_115 = arith.constant 0 : index
    %188 = vector.load %arg12[%c800, %c0_115] : memref<1440x256xf32, #tpu.memory_space<vmem>>, vector<32x256xf32>
    tpu.vector_store %arg12[%c800, %c0_115], %187 {strides = array<i32>} : memref<1440x256xf32, #tpu.memory_space<vmem>>, vector<32x256xf32>,
    %c239_i32_116 = arith.constant 239 : i32
    %189 = tpu.dynamic_rotate %151 by %c239_i32_116 dim 1 : vector<32x256xf32>, i32 -> vector<32x256xf32>
    %c8_117 = arith.constant 8 : index
    %c0_118 = arith.constant 0 : index
    %190 = vector.load %arg2[%c8_117, %c0_118] : memref<9x256xf32, #tpu.memory_space<vmem>>, vector<1x256xf32>
    %191 = vector.broadcast %190 : vector<1x256xf32> to vector<32x256xf32>
    %192 = arith.mulf %189, %191 : vector<32x256xf32>
    %c832 = arith.constant 832 : index
    %c0_119 = arith.constant 0 : index
    %193 = vector.load %arg12[%c832, %c0_119] : memref<1440x256xf32, #tpu.memory_space<vmem>>, vector<32x256xf32>
    tpu.vector_store %arg12[%c832, %c0_119], %192 {strides = array<i32>} : memref<1440x256xf32, #tpu.memory_space<vmem>>, vector<32x256xf32>,
    %c0_120 = arith.constant 0 : index
    %c0_121 = arith.constant 0 : index
    %194 = vector.load %arg5[%c0_120, %c0_121] : memref<32x864xf32, #tpu.memory_space<vmem>>, vector<32x864xf32>
    %c0_122 = arith.constant 0 : index
    %c0_123 = arith.constant 0 : index
    %195 = vector.load %arg12[%c0_122, %c0_123] : memref<1440x256xf32, #tpu.memory_space<vmem>>, vector<864x256xf32>
    %cst_124 = arith.constant dense<0.000000e+00> : vector<32x256xf32>
    %196 = tpu.matmul %194, %195, %cst_124 {dimension_numbers = #tpu.dot_dimension_numbers<[1], [0], [0], [1], [0, 0, 1, 1], [], []>} : vector<32x864xf32>, vector<864x256xf32>, vector<32x256xf32> -> vector<32x256xf32>
    %cst_125 = arith.constant dense<0.000000e+00> : vector<32xf32>
    %197 = vector.multi_reduction <add>, %196, %cst_125 [1] : vector<32x256xf32> to vector<32xf32>
    %198 = vector.shape_cast %197 : vector<32xf32> to vector<32x1xf32>
    %cst_126 = arith.constant 2.560000e+02 : f32
    %199 = vector.broadcast %cst_126 : f32 to vector<32x1xf32>
    %200 = arith.divf %198, %199 : vector<32x1xf32>
    %201 = vector.broadcast %200 : vector<32x1xf32> to vector<32x256xf32>
    %202 = arith.subf %196, %201 : vector<32x256xf32>
    %203 = arith.mulf %202, %202 : vector<32x256xf32>
    %cst_127 = arith.constant dense<0.000000e+00> : vector<32xf32>
    %204 = vector.multi_reduction <add>, %203, %cst_127 [1] : vector<32x256xf32> to vector<32xf32>
    %205 = vector.shape_cast %204 : vector<32xf32> to vector<32x1xf32>
    %cst_128 = arith.constant 2.560000e+02 : f32
    %206 = vector.broadcast %cst_128 : f32 to vector<32x1xf32>
    %207 = arith.divf %205, %206 : vector<32x1xf32>
    %208 = vector.broadcast %200 : vector<32x1xf32> to vector<32x256xf32>
    %209 = arith.subf %196, %208 : vector<32x256xf32>
    %cst_129 = arith.constant 9.99999974E-6 : f32
    %210 = vector.broadcast %cst_129 : f32 to vector<32x1xf32>
    %211 = arith.addf %207, %210 : vector<32x1xf32>
    %212 = math.rsqrt %211 : vector<32x1xf32>
    %213 = vector.broadcast %212 : vector<32x1xf32> to vector<32x256xf32>
    %214 = arith.mulf %209, %213 : vector<32x256xf32>
    %cst_130 = arith.constant 0.000000e+00 : f32
    %215 = vector.broadcast %cst_130 : f32 to vector<32x256xf32>
    %216 = arith.maximumf %214, %215 : vector<32x256xf32>
    %c96_131 = arith.constant 96 : index
    %c0_132 = arith.constant 0 : index
    %217 = vector.load %arg11[%c96_131, %c0_132] : memref<192x256xf32, #tpu.memory_space<vmem>>, vector<32x256xf32>
    tpu.vector_store %arg11[%c96_131, %c0_132], %216 {strides = array<i32>} : memref<192x256xf32, #tpu.memory_space<vmem>>, vector<32x256xf32>,
    %c17_i32_133 = arith.constant 17 : i32
    %218 = tpu.dynamic_rotate %216 by %c17_i32_133 dim 1 : vector<32x256xf32>, i32 -> vector<32x256xf32>
    %c0_134 = arith.constant 0 : index
    %c0_135 = arith.constant 0 : index
    %219 = vector.load %arg2[%c0_134, %c0_135] : memref<9x256xf32, #tpu.memory_space<vmem>>, vector<1x256xf32>
    %220 = vector.broadcast %219 : vector<1x256xf32> to vector<32x256xf32>
    %221 = arith.mulf %218, %220 : vector<32x256xf32>
    %c864 = arith.constant 864 : index
    %c0_136 = arith.constant 0 : index
    %222 = vector.load %arg12[%c864, %c0_136] : memref<1440x256xf32, #tpu.memory_space<vmem>>, vector<32x256xf32>
    tpu.vector_store %arg12[%c864, %c0_136], %221 {strides = array<i32>} : memref<1440x256xf32, #tpu.memory_space<vmem>>, vector<32x256xf32>,
    %c16_i32_137 = arith.constant 16 : i32
    %223 = tpu.dynamic_rotate %216 by %c16_i32_137 dim 1 : vector<32x256xf32>, i32 -> vector<32x256xf32>
    %c1_138 = arith.constant 1 : index
    %c0_139 = arith.constant 0 : index
    %224 = vector.load %arg2[%c1_138, %c0_139] : memref<9x256xf32, #tpu.memory_space<vmem>>, vector<1x256xf32>
    %225 = vector.broadcast %224 : vector<1x256xf32> to vector<32x256xf32>
    %226 = arith.mulf %223, %225 : vector<32x256xf32>
    %c896 = arith.constant 896 : index
    %c0_140 = arith.constant 0 : index
    %227 = vector.load %arg12[%c896, %c0_140] : memref<1440x256xf32, #tpu.memory_space<vmem>>, vector<32x256xf32>
    tpu.vector_store %arg12[%c896, %c0_140], %226 {strides = array<i32>} : memref<1440x256xf32, #tpu.memory_space<vmem>>, vector<32x256xf32>,
    %c15_i32_141 = arith.constant 15 : i32
    %228 = tpu.dynamic_rotate %216 by %c15_i32_141 dim 1 : vector<32x256xf32>, i32 -> vector<32x256xf32>
    %c2_142 = arith.constant 2 : index
    %c0_143 = arith.constant 0 : index
    %229 = vector.load %arg2[%c2_142, %c0_143] : memref<9x256xf32, #tpu.memory_space<vmem>>, vector<1x256xf32>
    %230 = vector.broadcast %229 : vector<1x256xf32> to vector<32x256xf32>
    %231 = arith.mulf %228, %230 : vector<32x256xf32>
    %c928 = arith.constant 928 : index
    %c0_144 = arith.constant 0 : index
    %232 = vector.load %arg12[%c928, %c0_144] : memref<1440x256xf32, #tpu.memory_space<vmem>>, vector<32x256xf32>
    tpu.vector_store %arg12[%c928, %c0_144], %231 {strides = array<i32>} : memref<1440x256xf32, #tpu.memory_space<vmem>>, vector<32x256xf32>,
    %c1_i32_145 = arith.constant 1 : i32
    %233 = tpu.dynamic_rotate %216 by %c1_i32_145 dim 1 : vector<32x256xf32>, i32 -> vector<32x256xf32>
    %c3_146 = arith.constant 3 : index
    %c0_147 = arith.constant 0 : index
    %234 = vector.load %arg2[%c3_146, %c0_147] : memref<9x256xf32, #tpu.memory_space<vmem>>, vector<1x256xf32>
    %235 = vector.broadcast %234 : vector<1x256xf32> to vector<32x256xf32>
    %236 = arith.mulf %233, %235 : vector<32x256xf32>
    %c960 = arith.constant 960 : index
    %c0_148 = arith.constant 0 : index
    %237 = vector.load %arg12[%c960, %c0_148] : memref<1440x256xf32, #tpu.memory_space<vmem>>, vector<32x256xf32>
    tpu.vector_store %arg12[%c960, %c0_148], %236 {strides = array<i32>} : memref<1440x256xf32, #tpu.memory_space<vmem>>, vector<32x256xf32>,
    %c992 = arith.constant 992 : index
    %c0_149 = arith.constant 0 : index
    %238 = vector.load %arg12[%c992, %c0_149] : memref<1440x256xf32, #tpu.memory_space<vmem>>, vector<32x256xf32>
    tpu.vector_store %arg12[%c992, %c0_149], %216 {strides = array<i32>} : memref<1440x256xf32, #tpu.memory_space<vmem>>, vector<32x256xf32>,
    %c255_i32_150 = arith.constant 255 : i32
    %239 = tpu.dynamic_rotate %216 by %c255_i32_150 dim 1 : vector<32x256xf32>, i32 -> vector<32x256xf32>
    %c5_151 = arith.constant 5 : index
    %c0_152 = arith.constant 0 : index
    %240 = vector.load %arg2[%c5_151, %c0_152] : memref<9x256xf32, #tpu.memory_space<vmem>>, vector<1x256xf32>
    %241 = vector.broadcast %240 : vector<1x256xf32> to vector<32x256xf32>
    %242 = arith.mulf %239, %241 : vector<32x256xf32>
    %c1024 = arith.constant 1024 : index
    %c0_153 = arith.constant 0 : index
    %243 = vector.load %arg12[%c1024, %c0_153] : memref<1440x256xf32, #tpu.memory_space<vmem>>, vector<32x256xf32>
    tpu.vector_store %arg12[%c1024, %c0_153], %242 {strides = array<i32>} : memref<1440x256xf32, #tpu.memory_space<vmem>>, vector<32x256xf32>,
    %c241_i32_154 = arith.constant 241 : i32
    %244 = tpu.dynamic_rotate %216 by %c241_i32_154 dim 1 : vector<32x256xf32>, i32 -> vector<32x256xf32>
    %c6_155 = arith.constant 6 : index
    %c0_156 = arith.constant 0 : index
    %245 = vector.load %arg2[%c6_155, %c0_156] : memref<9x256xf32, #tpu.memory_space<vmem>>, vector<1x256xf32>
    %246 = vector.broadcast %245 : vector<1x256xf32> to vector<32x256xf32>
    %247 = arith.mulf %244, %246 : vector<32x256xf32>
    %c1056 = arith.constant 1056 : index
    %c0_157 = arith.constant 0 : index
    %248 = vector.load %arg12[%c1056, %c0_157] : memref<1440x256xf32, #tpu.memory_space<vmem>>, vector<32x256xf32>
    tpu.vector_store %arg12[%c1056, %c0_157], %247 {strides = array<i32>} : memref<1440x256xf32, #tpu.memory_space<vmem>>, vector<32x256xf32>,
    %c240_i32_158 = arith.constant 240 : i32
    %249 = tpu.dynamic_rotate %216 by %c240_i32_158 dim 1 : vector<32x256xf32>, i32 -> vector<32x256xf32>
    %c7_159 = arith.constant 7 : index
    %c0_160 = arith.constant 0 : index
    %250 = vector.load %arg2[%c7_159, %c0_160] : memref<9x256xf32, #tpu.memory_space<vmem>>, vector<1x256xf32>
    %251 = vector.broadcast %250 : vector<1x256xf32> to vector<32x256xf32>
    %252 = arith.mulf %249, %251 : vector<32x256xf32>
    %c1088 = arith.constant 1088 : index
    %c0_161 = arith.constant 0 : index
    %253 = vector.load %arg12[%c1088, %c0_161] : memref<1440x256xf32, #tpu.memory_space<vmem>>, vector<32x256xf32>
    tpu.vector_store %arg12[%c1088, %c0_161], %252 {strides = array<i32>} : memref<1440x256xf32, #tpu.memory_space<vmem>>, vector<32x256xf32>,
    %c239_i32_162 = arith.constant 239 : i32
    %254 = tpu.dynamic_rotate %216 by %c239_i32_162 dim 1 : vector<32x256xf32>, i32 -> vector<32x256xf32>
    %c8_163 = arith.constant 8 : index
    %c0_164 = arith.constant 0 : index
    %255 = vector.load %arg2[%c8_163, %c0_164] : memref<9x256xf32, #tpu.memory_space<vmem>>, vector<1x256xf32>
    %256 = vector.broadcast %255 : vector<1x256xf32> to vector<32x256xf32>
    %257 = arith.mulf %254, %256 : vector<32x256xf32>
    %c1120 = arith.constant 1120 : index
    %c0_165 = arith.constant 0 : index
    %258 = vector.load %arg12[%c1120, %c0_165] : memref<1440x256xf32, #tpu.memory_space<vmem>>, vector<32x256xf32>
    tpu.vector_store %arg12[%c1120, %c0_165], %257 {strides = array<i32>} : memref<1440x256xf32, #tpu.memory_space<vmem>>, vector<32x256xf32>,
    %c0_166 = arith.constant 0 : index
    %c0_167 = arith.constant 0 : index
    %259 = vector.load %arg6[%c0_166, %c0_167] : memref<32x1152xf32, #tpu.memory_space<vmem>>, vector<32x1152xf32>
    %c0_168 = arith.constant 0 : index
    %c0_169 = arith.constant 0 : index
    %260 = vector.load %arg12[%c0_168, %c0_169] : memref<1440x256xf32, #tpu.memory_space<vmem>>, vector<1152x256xf32>
    %cst_170 = arith.constant dense<0.000000e+00> : vector<32x256xf32>
    %261 = tpu.matmul %259, %260, %cst_170 {dimension_numbers = #tpu.dot_dimension_numbers<[1], [0], [0], [1], [0, 0, 1, 1], [], []>} : vector<32x1152xf32>, vector<1152x256xf32>, vector<32x256xf32> -> vector<32x256xf32>
    %cst_171 = arith.constant dense<0.000000e+00> : vector<32xf32>
    %262 = vector.multi_reduction <add>, %261, %cst_171 [1] : vector<32x256xf32> to vector<32xf32>
    %263 = vector.shape_cast %262 : vector<32xf32> to vector<32x1xf32>
    %cst_172 = arith.constant 2.560000e+02 : f32
    %264 = vector.broadcast %cst_172 : f32 to vector<32x1xf32>
    %265 = arith.divf %263, %264 : vector<32x1xf32>
    %266 = vector.broadcast %265 : vector<32x1xf32> to vector<32x256xf32>
    %267 = arith.subf %261, %266 : vector<32x256xf32>
    %268 = arith.mulf %267, %267 : vector<32x256xf32>
    %cst_173 = arith.constant dense<0.000000e+00> : vector<32xf32>
    %269 = vector.multi_reduction <add>, %268, %cst_173 [1] : vector<32x256xf32> to vector<32xf32>
    %270 = vector.shape_cast %269 : vector<32xf32> to vector<32x1xf32>
    %cst_174 = arith.constant 2.560000e+02 : f32
    %271 = vector.broadcast %cst_174 : f32 to vector<32x1xf32>
    %272 = arith.divf %270, %271 : vector<32x1xf32>
    %273 = vector.broadcast %265 : vector<32x1xf32> to vector<32x256xf32>
    %274 = arith.subf %261, %273 : vector<32x256xf32>
    %cst_175 = arith.constant 9.99999974E-6 : f32
    %275 = vector.broadcast %cst_175 : f32 to vector<32x1xf32>
    %276 = arith.addf %272, %275 : vector<32x1xf32>
    %277 = math.rsqrt %276 : vector<32x1xf32>
    %278 = vector.broadcast %277 : vector<32x1xf32> to vector<32x256xf32>
    %279 = arith.mulf %274, %278 : vector<32x256xf32>
    %cst_176 = arith.constant 0.000000e+00 : f32
    %280 = vector.broadcast %cst_176 : f32 to vector<32x256xf32>
    %281 = arith.maximumf %279, %280 : vector<32x256xf32>
    %c128_177 = arith.constant 128 : index
    %c0_178 = arith.constant 0 : index
    %282 = vector.load %arg11[%c128_177, %c0_178] : memref<192x256xf32, #tpu.memory_space<vmem>>, vector<32x256xf32>
    tpu.vector_store %arg11[%c128_177, %c0_178], %281 {strides = array<i32>} : memref<192x256xf32, #tpu.memory_space<vmem>>, vector<32x256xf32>,
    %c17_i32_179 = arith.constant 17 : i32
    %283 = tpu.dynamic_rotate %281 by %c17_i32_179 dim 1 : vector<32x256xf32>, i32 -> vector<32x256xf32>
    %c0_180 = arith.constant 0 : index
    %c0_181 = arith.constant 0 : index
    %284 = vector.load %arg2[%c0_180, %c0_181] : memref<9x256xf32, #tpu.memory_space<vmem>>, vector<1x256xf32>
    %285 = vector.broadcast %284 : vector<1x256xf32> to vector<32x256xf32>
    %286 = arith.mulf %283, %285 : vector<32x256xf32>
    %c1152 = arith.constant 1152 : index
    %c0_182 = arith.constant 0 : index
    %287 = vector.load %arg12[%c1152, %c0_182] : memref<1440x256xf32, #tpu.memory_space<vmem>>, vector<32x256xf32>
    tpu.vector_store %arg12[%c1152, %c0_182], %286 {strides = array<i32>} : memref<1440x256xf32, #tpu.memory_space<vmem>>, vector<32x256xf32>,
    %c16_i32_183 = arith.constant 16 : i32
    %288 = tpu.dynamic_rotate %281 by %c16_i32_183 dim 1 : vector<32x256xf32>, i32 -> vector<32x256xf32>
    %c1_184 = arith.constant 1 : index
    %c0_185 = arith.constant 0 : index
    %289 = vector.load %arg2[%c1_184, %c0_185] : memref<9x256xf32, #tpu.memory_space<vmem>>, vector<1x256xf32>
    %290 = vector.broadcast %289 : vector<1x256xf32> to vector<32x256xf32>
    %291 = arith.mulf %288, %290 : vector<32x256xf32>
    %c1184 = arith.constant 1184 : index
    %c0_186 = arith.constant 0 : index
    %292 = vector.load %arg12[%c1184, %c0_186] : memref<1440x256xf32, #tpu.memory_space<vmem>>, vector<32x256xf32>
    tpu.vector_store %arg12[%c1184, %c0_186], %291 {strides = array<i32>} : memref<1440x256xf32, #tpu.memory_space<vmem>>, vector<32x256xf32>,
    %c15_i32_187 = arith.constant 15 : i32
    %293 = tpu.dynamic_rotate %281 by %c15_i32_187 dim 1 : vector<32x256xf32>, i32 -> vector<32x256xf32>
    %c2_188 = arith.constant 2 : index
    %c0_189 = arith.constant 0 : index
    %294 = vector.load %arg2[%c2_188, %c0_189] : memref<9x256xf32, #tpu.memory_space<vmem>>, vector<1x256xf32>
    %295 = vector.broadcast %294 : vector<1x256xf32> to vector<32x256xf32>
    %296 = arith.mulf %293, %295 : vector<32x256xf32>
    %c1216 = arith.constant 1216 : index
    %c0_190 = arith.constant 0 : index
    %297 = vector.load %arg12[%c1216, %c0_190] : memref<1440x256xf32, #tpu.memory_space<vmem>>, vector<32x256xf32>
    tpu.vector_store %arg12[%c1216, %c0_190], %296 {strides = array<i32>} : memref<1440x256xf32, #tpu.memory_space<vmem>>, vector<32x256xf32>,
    %c1_i32_191 = arith.constant 1 : i32
    %298 = tpu.dynamic_rotate %281 by %c1_i32_191 dim 1 : vector<32x256xf32>, i32 -> vector<32x256xf32>
    %c3_192 = arith.constant 3 : index
    %c0_193 = arith.constant 0 : index
    %299 = vector.load %arg2[%c3_192, %c0_193] : memref<9x256xf32, #tpu.memory_space<vmem>>, vector<1x256xf32>
    %300 = vector.broadcast %299 : vector<1x256xf32> to vector<32x256xf32>
    %301 = arith.mulf %298, %300 : vector<32x256xf32>
    %c1248 = arith.constant 1248 : index
    %c0_194 = arith.constant 0 : index
    %302 = vector.load %arg12[%c1248, %c0_194] : memref<1440x256xf32, #tpu.memory_space<vmem>>, vector<32x256xf32>
    tpu.vector_store %arg12[%c1248, %c0_194], %301 {strides = array<i32>} : memref<1440x256xf32, #tpu.memory_space<vmem>>, vector<32x256xf32>,
    %c1280 = arith.constant 1280 : index
    %c0_195 = arith.constant 0 : index
    %303 = vector.load %arg12[%c1280, %c0_195] : memref<1440x256xf32, #tpu.memory_space<vmem>>, vector<32x256xf32>
    tpu.vector_store %arg12[%c1280, %c0_195], %281 {strides = array<i32>} : memref<1440x256xf32, #tpu.memory_space<vmem>>, vector<32x256xf32>,
    %c255_i32_196 = arith.constant 255 : i32
    %304 = tpu.dynamic_rotate %281 by %c255_i32_196 dim 1 : vector<32x256xf32>, i32 -> vector<32x256xf32>
    %c5_197 = arith.constant 5 : index
    %c0_198 = arith.constant 0 : index
    %305 = vector.load %arg2[%c5_197, %c0_198] : memref<9x256xf32, #tpu.memory_space<vmem>>, vector<1x256xf32>
    %306 = vector.broadcast %305 : vector<1x256xf32> to vector<32x256xf32>
    %307 = arith.mulf %304, %306 : vector<32x256xf32>
    %c1312 = arith.constant 1312 : index
    %c0_199 = arith.constant 0 : index
    %308 = vector.load %arg12[%c1312, %c0_199] : memref<1440x256xf32, #tpu.memory_space<vmem>>, vector<32x256xf32>
    tpu.vector_store %arg12[%c1312, %c0_199], %307 {strides = array<i32>} : memref<1440x256xf32, #tpu.memory_space<vmem>>, vector<32x256xf32>,
    %c241_i32_200 = arith.constant 241 : i32
    %309 = tpu.dynamic_rotate %281 by %c241_i32_200 dim 1 : vector<32x256xf32>, i32 -> vector<32x256xf32>
    %c6_201 = arith.constant 6 : index
    %c0_202 = arith.constant 0 : index
    %310 = vector.load %arg2[%c6_201, %c0_202] : memref<9x256xf32, #tpu.memory_space<vmem>>, vector<1x256xf32>
    %311 = vector.broadcast %310 : vector<1x256xf32> to vector<32x256xf32>
    %312 = arith.mulf %309, %311 : vector<32x256xf32>
    %c1344 = arith.constant 1344 : index
    %c0_203 = arith.constant 0 : index
    %313 = vector.load %arg12[%c1344, %c0_203] : memref<1440x256xf32, #tpu.memory_space<vmem>>, vector<32x256xf32>
    tpu.vector_store %arg12[%c1344, %c0_203], %312 {strides = array<i32>} : memref<1440x256xf32, #tpu.memory_space<vmem>>, vector<32x256xf32>,
    %c240_i32_204 = arith.constant 240 : i32
    %314 = tpu.dynamic_rotate %281 by %c240_i32_204 dim 1 : vector<32x256xf32>, i32 -> vector<32x256xf32>
    %c7_205 = arith.constant 7 : index
    %c0_206 = arith.constant 0 : index
    %315 = vector.load %arg2[%c7_205, %c0_206] : memref<9x256xf32, #tpu.memory_space<vmem>>, vector<1x256xf32>
    %316 = vector.broadcast %315 : vector<1x256xf32> to vector<32x256xf32>
    %317 = arith.mulf %314, %316 : vector<32x256xf32>
    %c1376 = arith.constant 1376 : index
    %c0_207 = arith.constant 0 : index
    %318 = vector.load %arg12[%c1376, %c0_207] : memref<1440x256xf32, #tpu.memory_space<vmem>>, vector<32x256xf32>
    tpu.vector_store %arg12[%c1376, %c0_207], %317 {strides = array<i32>} : memref<1440x256xf32, #tpu.memory_space<vmem>>, vector<32x256xf32>,
    %c239_i32_208 = arith.constant 239 : i32
    %319 = tpu.dynamic_rotate %281 by %c239_i32_208 dim 1 : vector<32x256xf32>, i32 -> vector<32x256xf32>
    %c8_209 = arith.constant 8 : index
    %c0_210 = arith.constant 0 : index
    %320 = vector.load %arg2[%c8_209, %c0_210] : memref<9x256xf32, #tpu.memory_space<vmem>>, vector<1x256xf32>
    %321 = vector.broadcast %320 : vector<1x256xf32> to vector<32x256xf32>
    %322 = arith.mulf %319, %321 : vector<32x256xf32>
    %c1408 = arith.constant 1408 : index
    %c0_211 = arith.constant 0 : index
    %323 = vector.load %arg12[%c1408, %c0_211] : memref<1440x256xf32, #tpu.memory_space<vmem>>, vector<32x256xf32>
    tpu.vector_store %arg12[%c1408, %c0_211], %322 {strides = array<i32>} : memref<1440x256xf32, #tpu.memory_space<vmem>>, vector<32x256xf32>,
    %c0_212 = arith.constant 0 : index
    %c0_213 = arith.constant 0 : index
    %324 = vector.load %arg7[%c0_212, %c0_213] : memref<32x1440xf32, #tpu.memory_space<vmem>>, vector<32x1440xf32>
    %c0_214 = arith.constant 0 : index
    %c0_215 = arith.constant 0 : index
    %325 = vector.load %arg12[%c0_214, %c0_215] : memref<1440x256xf32, #tpu.memory_space<vmem>>, vector<1440x256xf32>
    %cst_216 = arith.constant dense<0.000000e+00> : vector<32x256xf32>
    %326 = tpu.matmul %324, %325, %cst_216 {dimension_numbers = #tpu.dot_dimension_numbers<[1], [0], [0], [1], [0, 0, 1, 1], [], []>} : vector<32x1440xf32>, vector<1440x256xf32>, vector<32x256xf32> -> vector<32x256xf32>
    %cst_217 = arith.constant dense<0.000000e+00> : vector<32xf32>
    %327 = vector.multi_reduction <add>, %326, %cst_217 [1] : vector<32x256xf32> to vector<32xf32>
    %328 = vector.shape_cast %327 : vector<32xf32> to vector<32x1xf32>
    %cst_218 = arith.constant 2.560000e+02 : f32
    %329 = vector.broadcast %cst_218 : f32 to vector<32x1xf32>
    %330 = arith.divf %328, %329 : vector<32x1xf32>
    %331 = vector.broadcast %330 : vector<32x1xf32> to vector<32x256xf32>
    %332 = arith.subf %326, %331 : vector<32x256xf32>
    %333 = arith.mulf %332, %332 : vector<32x256xf32>
    %cst_219 = arith.constant dense<0.000000e+00> : vector<32xf32>
    %334 = vector.multi_reduction <add>, %333, %cst_219 [1] : vector<32x256xf32> to vector<32xf32>
    %335 = vector.shape_cast %334 : vector<32xf32> to vector<32x1xf32>
    %cst_220 = arith.constant 2.560000e+02 : f32
    %336 = vector.broadcast %cst_220 : f32 to vector<32x1xf32>
    %337 = arith.divf %335, %336 : vector<32x1xf32>
    %338 = vector.broadcast %330 : vector<32x1xf32> to vector<32x256xf32>
    %339 = arith.subf %326, %338 : vector<32x256xf32>
    %cst_221 = arith.constant 9.99999974E-6 : f32
    %340 = vector.broadcast %cst_221 : f32 to vector<32x1xf32>
    %341 = arith.addf %337, %340 : vector<32x1xf32>
    %342 = math.rsqrt %341 : vector<32x1xf32>
    %343 = vector.broadcast %342 : vector<32x1xf32> to vector<32x256xf32>
    %344 = arith.mulf %339, %343 : vector<32x256xf32>
    %cst_222 = arith.constant 0.000000e+00 : f32
    %345 = vector.broadcast %cst_222 : f32 to vector<32x256xf32>
    %346 = arith.maximumf %344, %345 : vector<32x256xf32>
    %c160_223 = arith.constant 160 : index
    %c0_224 = arith.constant 0 : index
    %347 = vector.load %arg11[%c160_223, %c0_224] : memref<192x256xf32, #tpu.memory_space<vmem>>, vector<32x256xf32>
    tpu.vector_store %arg11[%c160_223, %c0_224], %346 {strides = array<i32>} : memref<192x256xf32, #tpu.memory_space<vmem>>, vector<32x256xf32>,
    %c0_225 = arith.constant 0 : index
    %c0_226 = arith.constant 0 : index
    %348 = vector.load %arg8[%c0_225, %c0_226] : memref<64x192xf32, #tpu.memory_space<vmem>>, vector<64x192xf32>
    %c0_227 = arith.constant 0 : index
    %c0_228 = arith.constant 0 : index
    %349 = vector.load %arg11[%c0_227, %c0_228] : memref<192x256xf32, #tpu.memory_space<vmem>>, vector<192x256xf32>
    %cst_229 = arith.constant dense<0.000000e+00> : vector<64x256xf32>
    %350 = tpu.matmul %348, %349, %cst_229 {dimension_numbers = #tpu.dot_dimension_numbers<[1], [0], [0], [1], [0, 0, 1, 1], [], []>} : vector<64x192xf32>, vector<192x256xf32>, vector<64x256xf32> -> vector<64x256xf32>
    %cst_230 = arith.constant dense<0.000000e+00> : vector<64xf32>
    %351 = vector.multi_reduction <add>, %350, %cst_230 [1] : vector<64x256xf32> to vector<64xf32>
    %352 = vector.shape_cast %351 : vector<64xf32> to vector<64x1xf32>
    %cst_231 = arith.constant 2.560000e+02 : f32
    %353 = vector.broadcast %cst_231 : f32 to vector<64x1xf32>
    %354 = arith.divf %352, %353 : vector<64x1xf32>
    %355 = vector.broadcast %354 : vector<64x1xf32> to vector<64x256xf32>
    %356 = arith.subf %350, %355 : vector<64x256xf32>
    %357 = arith.mulf %356, %356 : vector<64x256xf32>
    %cst_232 = arith.constant dense<0.000000e+00> : vector<64xf32>
    %358 = vector.multi_reduction <add>, %357, %cst_232 [1] : vector<64x256xf32> to vector<64xf32>
    %359 = vector.shape_cast %358 : vector<64xf32> to vector<64x1xf32>
    %cst_233 = arith.constant 2.560000e+02 : f32
    %360 = vector.broadcast %cst_233 : f32 to vector<64x1xf32>
    %361 = arith.divf %359, %360 : vector<64x1xf32>
    %362 = vector.broadcast %354 : vector<64x1xf32> to vector<64x256xf32>
    %363 = arith.subf %350, %362 : vector<64x256xf32>
    %cst_234 = arith.constant 9.99999974E-6 : f32
    %364 = vector.broadcast %cst_234 : f32 to vector<64x1xf32>
    %365 = arith.addf %361, %364 : vector<64x1xf32>
    %366 = math.rsqrt %365 : vector<64x1xf32>
    %367 = vector.broadcast %366 : vector<64x1xf32> to vector<64x256xf32>
    %368 = arith.mulf %363, %367 : vector<64x256xf32>
    %cst_235 = arith.constant 0.000000e+00 : f32
    %369 = vector.broadcast %cst_235 : f32 to vector<64x256xf32>
    %370 = arith.maximumf %368, %369 : vector<64x256xf32>
    %c17_i32_236 = arith.constant 17 : i32
    %371 = tpu.dynamic_rotate %370 by %c17_i32_236 dim 1 : vector<64x256xf32>, i32 -> vector<64x256xf32>
    %c0_237 = arith.constant 0 : index
    %c0_238 = arith.constant 0 : index
    %372 = vector.load %arg2[%c0_237, %c0_238] : memref<9x256xf32, #tpu.memory_space<vmem>>, vector<1x256xf32>
    %373 = vector.broadcast %372 : vector<1x256xf32> to vector<64x256xf32>
    %374 = arith.mulf %371, %373 : vector<64x256xf32>
    %c0_239 = arith.constant 0 : index
    %c0_240 = arith.constant 0 : index
    %375 = vector.load %arg12[%c0_239, %c0_240] : memref<1440x256xf32, #tpu.memory_space<vmem>>, vector<64x256xf32>
    tpu.vector_store %arg12[%c0_239, %c0_240], %374 {strides = array<i32>} : memref<1440x256xf32, #tpu.memory_space<vmem>>, vector<64x256xf32>,
    %c16_i32_241 = arith.constant 16 : i32
    %376 = tpu.dynamic_rotate %370 by %c16_i32_241 dim 1 : vector<64x256xf32>, i32 -> vector<64x256xf32>
    %c1_242 = arith.constant 1 : index
    %c0_243 = arith.constant 0 : index
    %377 = vector.load %arg2[%c1_242, %c0_243] : memref<9x256xf32, #tpu.memory_space<vmem>>, vector<1x256xf32>
    %378 = vector.broadcast %377 : vector<1x256xf32> to vector<64x256xf32>
    %379 = arith.mulf %376, %378 : vector<64x256xf32>
    %c64_244 = arith.constant 64 : index
    %c0_245 = arith.constant 0 : index
    %380 = vector.load %arg12[%c64_244, %c0_245] : memref<1440x256xf32, #tpu.memory_space<vmem>>, vector<64x256xf32>
    tpu.vector_store %arg12[%c64_244, %c0_245], %379 {strides = array<i32>} : memref<1440x256xf32, #tpu.memory_space<vmem>>, vector<64x256xf32>,
    %c15_i32_246 = arith.constant 15 : i32
    %381 = tpu.dynamic_rotate %370 by %c15_i32_246 dim 1 : vector<64x256xf32>, i32 -> vector<64x256xf32>
    %c2_247 = arith.constant 2 : index
    %c0_248 = arith.constant 0 : index
    %382 = vector.load %arg2[%c2_247, %c0_248] : memref<9x256xf32, #tpu.memory_space<vmem>>, vector<1x256xf32>
    %383 = vector.broadcast %382 : vector<1x256xf32> to vector<64x256xf32>
    %384 = arith.mulf %381, %383 : vector<64x256xf32>
    %c128_249 = arith.constant 128 : index
    %c0_250 = arith.constant 0 : index
    %385 = vector.load %arg12[%c128_249, %c0_250] : memref<1440x256xf32, #tpu.memory_space<vmem>>, vector<64x256xf32>
    tpu.vector_store %arg12[%c128_249, %c0_250], %384 {strides = array<i32>} : memref<1440x256xf32, #tpu.memory_space<vmem>>, vector<64x256xf32>,
    %c1_i32_251 = arith.constant 1 : i32
    %386 = tpu.dynamic_rotate %370 by %c1_i32_251 dim 1 : vector<64x256xf32>, i32 -> vector<64x256xf32>
    %c3_252 = arith.constant 3 : index
    %c0_253 = arith.constant 0 : index
    %387 = vector.load %arg2[%c3_252, %c0_253] : memref<9x256xf32, #tpu.memory_space<vmem>>, vector<1x256xf32>
    %388 = vector.broadcast %387 : vector<1x256xf32> to vector<64x256xf32>
    %389 = arith.mulf %386, %388 : vector<64x256xf32>
    %c192_254 = arith.constant 192 : index
    %c0_255 = arith.constant 0 : index
    %390 = vector.load %arg12[%c192_254, %c0_255] : memref<1440x256xf32, #tpu.memory_space<vmem>>, vector<64x256xf32>
    tpu.vector_store %arg12[%c192_254, %c0_255], %389 {strides = array<i32>} : memref<1440x256xf32, #tpu.memory_space<vmem>>, vector<64x256xf32>,
    %c256_256 = arith.constant 256 : index
    %c0_257 = arith.constant 0 : index
    %391 = vector.load %arg12[%c256_256, %c0_257] : memref<1440x256xf32, #tpu.memory_space<vmem>>, vector<64x256xf32>
    tpu.vector_store %arg12[%c256_256, %c0_257], %370 {strides = array<i32>} : memref<1440x256xf32, #tpu.memory_space<vmem>>, vector<64x256xf32>,
    %c255_i32_258 = arith.constant 255 : i32
    %392 = tpu.dynamic_rotate %370 by %c255_i32_258 dim 1 : vector<64x256xf32>, i32 -> vector<64x256xf32>
    %c5_259 = arith.constant 5 : index
    %c0_260 = arith.constant 0 : index
    %393 = vector.load %arg2[%c5_259, %c0_260] : memref<9x256xf32, #tpu.memory_space<vmem>>, vector<1x256xf32>
    %394 = vector.broadcast %393 : vector<1x256xf32> to vector<64x256xf32>
    %395 = arith.mulf %392, %394 : vector<64x256xf32>
    %c320_261 = arith.constant 320 : index
    %c0_262 = arith.constant 0 : index
    %396 = vector.load %arg12[%c320_261, %c0_262] : memref<1440x256xf32, #tpu.memory_space<vmem>>, vector<64x256xf32>
    tpu.vector_store %arg12[%c320_261, %c0_262], %395 {strides = array<i32>} : memref<1440x256xf32, #tpu.memory_space<vmem>>, vector<64x256xf32>,
    %c241_i32_263 = arith.constant 241 : i32
    %397 = tpu.dynamic_rotate %370 by %c241_i32_263 dim 1 : vector<64x256xf32>, i32 -> vector<64x256xf32>
    %c6_264 = arith.constant 6 : index
    %c0_265 = arith.constant 0 : index
    %398 = vector.load %arg2[%c6_264, %c0_265] : memref<9x256xf32, #tpu.memory_space<vmem>>, vector<1x256xf32>
    %399 = vector.broadcast %398 : vector<1x256xf32> to vector<64x256xf32>
    %400 = arith.mulf %397, %399 : vector<64x256xf32>
    %c384_266 = arith.constant 384 : index
    %c0_267 = arith.constant 0 : index
    %401 = vector.load %arg12[%c384_266, %c0_267] : memref<1440x256xf32, #tpu.memory_space<vmem>>, vector<64x256xf32>
    tpu.vector_store %arg12[%c384_266, %c0_267], %400 {strides = array<i32>} : memref<1440x256xf32, #tpu.memory_space<vmem>>, vector<64x256xf32>,
    %c240_i32_268 = arith.constant 240 : i32
    %402 = tpu.dynamic_rotate %370 by %c240_i32_268 dim 1 : vector<64x256xf32>, i32 -> vector<64x256xf32>
    %c7_269 = arith.constant 7 : index
    %c0_270 = arith.constant 0 : index
    %403 = vector.load %arg2[%c7_269, %c0_270] : memref<9x256xf32, #tpu.memory_space<vmem>>, vector<1x256xf32>
    %404 = vector.broadcast %403 : vector<1x256xf32> to vector<64x256xf32>
    %405 = arith.mulf %402, %404 : vector<64x256xf32>
    %c448_271 = arith.constant 448 : index
    %c0_272 = arith.constant 0 : index
    %406 = vector.load %arg12[%c448_271, %c0_272] : memref<1440x256xf32, #tpu.memory_space<vmem>>, vector<64x256xf32>
    tpu.vector_store %arg12[%c448_271, %c0_272], %405 {strides = array<i32>} : memref<1440x256xf32, #tpu.memory_space<vmem>>, vector<64x256xf32>,
    %c239_i32_273 = arith.constant 239 : i32
    %407 = tpu.dynamic_rotate %370 by %c239_i32_273 dim 1 : vector<64x256xf32>, i32 -> vector<64x256xf32>
    %c8_274 = arith.constant 8 : index
    %c0_275 = arith.constant 0 : index
    %408 = vector.load %arg2[%c8_274, %c0_275] : memref<9x256xf32, #tpu.memory_space<vmem>>, vector<1x256xf32>
    %409 = vector.broadcast %408 : vector<1x256xf32> to vector<64x256xf32>
    %410 = arith.mulf %407, %409 : vector<64x256xf32>
    %c512_276 = arith.constant 512 : index
    %c0_277 = arith.constant 0 : index
    %411 = vector.load %arg12[%c512_276, %c0_277] : memref<1440x256xf32, #tpu.memory_space<vmem>>, vector<64x256xf32>
    tpu.vector_store %arg12[%c512_276, %c0_277], %410 {strides = array<i32>} : memref<1440x256xf32, #tpu.memory_space<vmem>>, vector<64x256xf32>,
    %c0_278 = arith.constant 0 : index
    %c0_279 = arith.constant 0 : index
    %412 = vector.load %arg9[%c0_278, %c0_279] : memref<16x576xf32, #tpu.memory_space<vmem>>, vector<16x576xf32>
    %c0_280 = arith.constant 0 : index
    %c0_281 = arith.constant 0 : index
    %413 = vector.load %arg12[%c0_280, %c0_281] : memref<1440x256xf32, #tpu.memory_space<vmem>>, vector<576x256xf32>
    %cst_282 = arith.constant dense<0.000000e+00> : vector<16x256xf32>
    %414 = tpu.matmul %412, %413, %cst_282 {dimension_numbers = #tpu.dot_dimension_numbers<[1], [0], [0], [1], [0, 0, 1, 1], [], []>} : vector<16x576xf32>, vector<576x256xf32>, vector<16x256xf32> -> vector<16x256xf32>
    %c0_283 = arith.constant 0 : index
    %c0_284 = arith.constant 0 : index
    %c0_285 = arith.constant 0 : index
    %415 = vector.load %arg1[%c0_283, %c0_284, %c0_285] : memref<1x32x256xf32, #tpu.memory_space<vmem>>, vector<1x32x256xf32>
    %416 = vector.shape_cast %415 : vector<1x32x256xf32> to vector<32x256xf32>
    %c0_286 = arith.constant 0 : index
    %c0_287 = arith.constant 0 : index
    %c0_288 = arith.constant 0 : index
    %417 = vector.load %arg10[%c0_286, %c0_287, %c0_288] : memref<1x48x256xf32, #tpu.memory_space<vmem>>, vector<1x32x256xf32>
    %418 = vector.shape_cast %417 : vector<1x32x256xf32> to vector<32x256xf32>
    %419 = vector.shape_cast %416 : vector<32x256xf32> to vector<1x32x256xf32>
    tpu.vector_store %arg10[%c0_286, %c0_287, %c0_288], %419 {strides = array<i32>} : memref<1x48x256xf32, #tpu.memory_space<vmem>>, vector<1x32x256xf32>,
    %c0_289 = arith.constant 0 : index
    %c32_290 = arith.constant 32 : index
    %c0_291 = arith.constant 0 : index
    %420 = vector.load %arg10[%c0_289, %c32_290, %c0_291] : memref<1x48x256xf32, #tpu.memory_space<vmem>>, vector<1x16x256xf32>
    %421 = vector.shape_cast %420 : vector<1x16x256xf32> to vector<16x256xf32>
    %422 = vector.shape_cast %414 : vector<16x256xf32> to vector<1x16x256xf32>
    tpu.vector_store %arg10[%c0_289, %c32_290, %c0_291], %422 {strides = array<i32>} : memref<1x48x256xf32, #tpu.memory_space<vmem>>, vector<1x16x256xf32>,
    return
  }
  func.func @transform_0(%arg0: i32) -> (i32, i32, i32) {
    %c0_i32 = arith.constant 0 : i32
    %c0_i32_0 = arith.constant 0 : i32
    %c0_i32_1 = arith.constant 0 : i32
    return %arg0, %c0_i32, %c0_i32_0 : i32, i32, i32
  }
  func.func @transform_1(%arg0: i32) -> (i32, i32) {
    %c0_i32 = arith.constant 0 : i32
    %c0_i32_0 = arith.constant 0 : i32
    %c0_i32_1 = arith.constant 0 : i32
    return %c0_i32, %c0_i32_0 : i32, i32
  }
  func.func @transform_2(%arg0: i32) -> (i32, i32) {
    %c0_i32 = arith.constant 0 : i32
    %c0_i32_0 = arith.constant 0 : i32
    %c0_i32_1 = arith.constant 0 : i32
    return %c0_i32, %c0_i32_0 : i32, i32
  }
  func.func @transform_3(%arg0: i32) -> (i32, i32) {
    %c0_i32 = arith.constant 0 : i32
    %c0_i32_0 = arith.constant 0 : i32
    %c0_i32_1 = arith.constant 0 : i32
    return %c0_i32, %c0_i32_0 : i32, i32
  }
  func.func @transform_4(%arg0: i32) -> (i32, i32) {
    %c0_i32 = arith.constant 0 : i32
    %c0_i32_0 = arith.constant 0 : i32
    %c0_i32_1 = arith.constant 0 : i32
    return %c0_i32, %c0_i32_0 : i32, i32
  }
  func.func @transform_5(%arg0: i32) -> (i32, i32) {
    %c0_i32 = arith.constant 0 : i32
    %c0_i32_0 = arith.constant 0 : i32
    %c0_i32_1 = arith.constant 0 : i32
    return %c0_i32, %c0_i32_0 : i32, i32
  }
  func.func @transform_6(%arg0: i32) -> (i32, i32) {
    %c0_i32 = arith.constant 0 : i32
    %c0_i32_0 = arith.constant 0 : i32
    %c0_i32_1 = arith.constant 0 : i32
    return %c0_i32, %c0_i32_0 : i32, i32
  }
  func.func @transform_7(%arg0: i32) -> (i32, i32) {
    %c0_i32 = arith.constant 0 : i32
    %c0_i32_0 = arith.constant 0 : i32
    %c0_i32_1 = arith.constant 0 : i32
    return %c0_i32, %c0_i32_0 : i32, i32
  }
  func.func @transform_8(%arg0: i32) -> (i32, i32) {
    %c0_i32 = arith.constant 0 : i32
    %c0_i32_0 = arith.constant 0 : i32
    %c0_i32_1 = arith.constant 0 : i32
    return %c0_i32, %c0_i32_0 : i32, i32
  }
  func.func @transform_9(%arg0: i32) -> (i32, i32, i32) {
    %c0_i32 = arith.constant 0 : i32
    %c0_i32_0 = arith.constant 0 : i32
    %c0_i32_1 = arith.constant 0 : i32
    return %arg0, %c0_i32, %c0_i32_0 : i32, i32, i32
  }
}

</mosaic_0001>

<llo_original>
// kernel: bottleneck_decoder_block_ins.1
$region0: #{bottleneck_decoder_block_ins.1}
  #allocation0 [shape = 'u32[]', space=smem, size = 0x4, offset = 0x4, fixed_abs, tag = 'smem constant byte address 0x4 - core index']
  #allocation1 [shape = 'u32[72,128]{1,0:T(1,128)}', space=vmem, size = 0x9000, scoped, tag = 'internal scratch']
  #allocation2 [shape = 'f32[192,256]{1,0:T(8,128)}', space=vmem, size = 0x30000, scoped, tag = 'scratch operand']
  #allocation3 [shape = 'f32[1440,256]{1,0:T(8,128)}', space=vmem, size = 0x168000, scoped, tag = 'scratch operand']
  %s0 = inlined_call_operand.vmem [shape: f32[2,32,256], index: 0, kind: input, shape index: {}]
  %s1 = inlined_call_operand.vmem [shape: f32[9,256], index: 1, kind: input, shape index: {}]
  %s2 = inlined_call_operand.vmem [shape: f32[32,288], index: 2, kind: input, shape index: {}]
  %s3 = inlined_call_operand.vmem [shape: f32[32,576], index: 3, kind: input, shape index: {}]
  %s4 = inlined_call_operand.vmem [shape: f32[32,864], index: 4, kind: input, shape index: {}]
  %s5 = inlined_call_operand.vmem [shape: f32[32,1152], index: 5, kind: input, shape index: {}]
  %s6 = inlined_call_operand.vmem [shape: f32[32,1440], index: 6, kind: input, shape index: {}]
  %s7 = inlined_call_operand.vmem [shape: f32[64,192], index: 7, kind: input, shape index: {}]
  %s8 = inlined_call_operand.vmem [shape: f32[16,576], index: 8, kind: input, shape index: {}]
  %s9 = inlined_call_operand.vmem [shape: f32[2,48,256], index: 9, kind: output, shape index: {}]
  %s10 = sld [smem:[#allocation0]]
  $region69: #{bottleneck_decoder_block_ins.1} parent=0
    _
  %s12 = ssub.s32 1, %s10
  %s13 = scalar_select 0, %s12, %s10
  loop: start=0, step=1, limit=4
  $region2: #{bottleneck_decoder_block_ins.1} parent=0 // loop_pre_header
    _
  $region3: #{bottleneck_decoder_block_ins.1} parent=0 // loop_header
    %s15 = sphi 0, %s19
    %p16 = scmp.ge.s32.totalorder %s15, 4
    %s25 = sphi 0, %s27
    %s28 = sphi 0, %s25
    %s29 = sphi 0, %s28
    %s45 = sphi 0, %s29
    %s49 = sphi 0, %s49
    %s51 = sphi 0, %s49
    %s52 = sphi 0, %s51
    %s66 = sphi 0, %s52
    %s70 = sphi 0, %s70
    %s72 = sphi 0, %s70
    %s73 = sphi 0, %s72
    %s87 = sphi 0, %s73
    %s91 = sphi 0, %s91
    %s93 = sphi 0, %s91
    %s94 = sphi 0, %s93
    %s108 = sphi 0, %s94
    %s112 = sphi 0, %s112
    %s114 = sphi 0, %s112
    %s115 = sphi 0, %s114
    %s129 = sphi 0, %s115
    %s133 = sphi 0, %s133
    %s135 = sphi 0, %s133
    %s136 = sphi 0, %s135
    %s150 = sphi 0, %s136
    %s154 = sphi 0, %s154
    %s156 = sphi 0, %s154
    %s157 = sphi 0, %s156
    %s171 = sphi 0, %s157
    %s175 = sphi 0, %s175
    %s177 = sphi 0, %s175
    %s178 = sphi 0, %s177
    %s192 = sphi 0, %s178
    %s196 = sphi 0, %s196
    %s198 = sphi 0, %s196
    %s199 = sphi 0, %s198
    %s213 = sphi 0, %s199
    %s219 = sphi 0, %s221
    %s222 = sphi 0, %s219
    %s223 = sphi 0, %s222
    %s239 = sphi 0, %s223
  $region4: #{bottleneck_decoder_block_ins.1} parent=0 // loop_header_branch
    %18 = sbr.rel (%p16) target = $region8
  $region5: #{bottleneck_decoder_block_ins.1} parent=0 // loop_body
    %s20 = ssub.s32 %s15, 1
    %s21 = ssub.s32 %s15, 2
    %s22 = sadd.s32 %s15, 1
    %s23 = ssub.s32 %s15, %s22
    %p24 = scmp.eq.s32.totalorder %s23, 0
    %s26 = sadd.s32 %s25, 1
    %s27 = scalar_select %p24, %s25, %s26
    %p30 = pneg %p24
    %p31 = scmp.eq.s32.totalorder %s15, 1
    %p32 = por %p30, %p31
    %p33 = scmp.ne.s32.totalorder %s25, %s28
    %p34 = scmp.eq.s32.totalorder %s15, 0
    %p35 = por %p33, %p34
    %p36 = scmp.ne.s32.totalorder %s25, %s28
    %p37 = scmp.eq.s32.totalorder %s20, 1
    %p38 = por %p36, %p37
    %p39 = scmp.ne.s32.totalorder %s28, %s29
    %p40 = scmp.eq.s32.totalorder %s20, 0
    %p41 = por %p39, %p40
    %p42 = scmp.ne.s32.totalorder %s28, %s29
    %p43 = scmp.eq.s32.totalorder %s21, 1
    %p44 = por %p42, %p43
    %p46 = scmp.ne.s32.totalorder %s29, %s45
    %p47 = scmp.eq.s32.totalorder %s21, 0
    %p48 = por %p46, %p47
    %s50 = sadd.s32 %s49, 1
    %p53 = scmp.eq.s32.totalorder %s15, 1
    %p54 = scmp.ne.s32.totalorder %s49, %s51
    %p55 = scmp.eq.s32.totalorder %s15, 0
    %p56 = por %p54, %p55
    %p57 = scmp.ne.s32.totalorder %s49, %s51
    %p58 = scmp.eq.s32.totalorder %s20, 1
    %p59 = por %p57, %p58
    %p60 = scmp.ne.s32.totalorder %s51, %s52
    %p61 = scmp.eq.s32.totalorder %s20, 0
    %p62 = por %p60, %p61
    %p63 = scmp.ne.s32.totalorder %s51, %s52
    %p64 = scmp.eq.s32.totalorder %s21, 1
    %p65 = por %p63, %p64
    %p67 = scmp.ne.s32.totalorder %s52, %s66
    %p68 = scmp.eq.s32.totalorder %s21, 0
    %p69 = por %p67, %p68
    %s71 = sadd.s32 %s70, 1
    %p74 = scmp.eq.s32.totalorder %s15, 1
    %p75 = scmp.ne.s32.totalorder %s70, %s72
    %p76 = scmp.eq.s32.totalorder %s15, 0
    %p77 = por %p75, %p76
    %p78 = scmp.ne.s32.totalorder %s70, %s72
    %p79 = scmp.eq.s32.totalorder %s20, 1
    %p80 = por %p78, %p79
    %p81 = scmp.ne.s32.totalorder %s72, %s73
    %p82 = scmp.eq.s32.totalorder %s20, 0
    %p83 = por %p81, %p82
    %p84 = scmp.ne.s32.totalorder %s72, %s73
    %p85 = scmp.eq.s32.totalorder %s21, 1
    %p86 = por %p84, %p85
    %p88 = scmp.ne.s32.totalorder %s73, %s87
    %p89 = scmp.eq.s32.totalorder %s21, 0
    %p90 = por %p88, %p89
    %s92 = sadd.s32 %s91, 1
    %p95 = scmp.eq.s32.totalorder %s15, 1
    %p96 = scmp.ne.s32.totalorder %s91, %s93
    %p97 = scmp.eq.s32.totalorder %s15, 0
    %p98 = por %p96, %p97
    %p99 = scmp.ne.s32.totalorder %s91, %s93
    %p100 = scmp.eq.s32.totalorder %s20, 1
    %p101 = por %p99, %p100
    %p102 = scmp.ne.s32.totalorder %s93, %s94
    %p103 = scmp.eq.s32.totalorder %s20, 0
    %p104 = por %p102, %p103
    %p105 = scmp.ne.s32.totalorder %s93, %s94
    %p106 = scmp.eq.s32.totalorder %s21, 1
    %p107 = por %p105, %p106
    %p109 = scmp.ne.s32.totalorder %s94, %s108
    %p110 = scmp.eq.s32.totalorder %s21, 0
    %p111 = por %p109, %p110
    %s113 = sadd.s32 %s112, 1
    %p116 = scmp.eq.s32.totalorder %s15, 1
    %p117 = scmp.ne.s32.totalorder %s112, %s114
    %p118 = scmp.eq.s32.totalorder %s15, 0
    %p119 = por %p117, %p118
    %p120 = scmp.ne.s32.totalorder %s112, %s114
    %p121 = scmp.eq.s32.totalorder %s20, 1
    %p122 = por %p120, %p121
    %p123 = scmp.ne.s32.totalorder %s114, %s115
    %p124 = scmp.eq.s32.totalorder %s20, 0
    %p125 = por %p123, %p124
    %p126 = scmp.ne.s32.totalorder %s114, %s115
    %p127 = scmp.eq.s32.totalorder %s21, 1
    %p128 = por %p126, %p127
    %p130 = scmp.ne.s32.totalorder %s115, %s129
    %p131 = scmp.eq.s32.totalorder %s21, 0
    %p132 = por %p130, %p131
    %s134 = sadd.s32 %s133, 1
    %p137 = scmp.eq.s32.totalorder %s15, 1
    %p138 = scmp.ne.s32.totalorder %s133, %s135
    %p139 = scmp.eq.s32.totalorder %s15, 0
    %p140 = por %p138, %p139
    %p141 = scmp.ne.s32.totalorder %s133, %s135
    %p142 = scmp.eq.s32.totalorder %s20, 1
    %p143 = por %p141, %p142
    %p144 = scmp.ne.s32.totalorder %s135, %s136
    %p145 = scmp.eq.s32.totalorder %s20, 0
    %p146 = por %p144, %p145
    %p147 = scmp.ne.s32.totalorder %s135, %s136
    %p148 = scmp.eq.s32.totalorder %s21, 1
    %p149 = por %p147, %p148
    %p151 = scmp.ne.s32.totalorder %s136, %s150
    %p152 = scmp.eq.s32.totalorder %s21, 0
    %p153 = por %p151, %p152
    %s155 = sadd.s32 %s154, 1
    %p158 = scmp.eq.s32.totalorder %s15, 1
    %p159 = scmp.ne.s32.totalorder %s154, %s156
    %p160 = scmp.eq.s32.totalorder %s15, 0
    %p161 = por %p159, %p160
    %p162 = scmp.ne.s32.totalorder %s154, %s156
    %p163 = scmp.eq.s32.totalorder %s20, 1
    %p164 = por %p162, %p163
    %p165 = scmp.ne.s32.totalorder %s156, %s157
    %p166 = scmp.eq.s32.totalorder %s20, 0
    %p167 = por %p165, %p166
    %p168 = scmp.ne.s32.totalorder %s156, %s157
    %p169 = scmp.eq.s32.totalorder %s21, 1
    %p170 = por %p168, %p169
    %p172 = scmp.ne.s32.totalorder %s157, %s171
    %p173 = scmp.eq.s32.totalorder %s21, 0
    %p174 = por %p172, %p173
    %s176 = sadd.s32 %s175, 1
    %p179 = scmp.eq.s32.totalorder %s15, 1
    %p180 = scmp.ne.s32.totalorder %s175, %s177
    %p181 = scmp.eq.s32.totalorder %s15, 0
    %p182 = por %p180, %p181
    %p183 = scmp.ne.s32.totalorder %s175, %s177
    %p184 = scmp.eq.s32.totalorder %s20, 1
    %p185 = por %p183, %p184
    %p186 = scmp.ne.s32.totalorder %s177, %s178
    %p187 = scmp.eq.s32.totalorder %s20, 0
    %p188 = por %p186, %p187
    %p189 = scmp.ne.s32.totalorder %s177, %s178
    %p190 = scmp.eq.s32.totalorder %s21, 1
    %p191 = por %p189, %p190
    %p193 = scmp.ne.s32.totalorder %s178, %s192
    %p194 = scmp.eq.s32.totalorder %s21, 0
    %p195 = por %p193, %p194
    %s197 = sadd.s32 %s196, 1
    %p200 = scmp.eq.s32.totalorder %s15, 1
    %p201 = scmp.ne.s32.totalorder %s196, %s198
    %p202 = scmp.eq.s32.totalorder %s15, 0
    %p203 = por %p201, %p202
    %p204 = scmp.ne.s32.totalorder %s196, %s198
    %p205 = scmp.eq.s32.totalorder %s20, 1
    %p206 = por %p204, %p205
    %p207 = scmp.ne.s32.totalorder %s198, %s199
    %p208 = scmp.eq.s32.totalorder %s20, 0
    %p209 = por %p207, %p208
    %p210 = scmp.ne.s32.totalorder %s198, %s199
    %p211 = scmp.eq.s32.totalorder %s21, 1
    %p212 = por %p210, %p211
    %p214 = scmp.ne.s32.totalorder %s199, %s213
    %p215 = scmp.eq.s32.totalorder %s21, 0
    %p216 = por %p214, %p215
    %s217 = ssub.s32 %s15, %s22
    %p218 = scmp.eq.s32.totalorder %s217, 0
    %s220 = sadd.s32 %s219, 1
    %s221 = scalar_select %p218, %s219, %s220
    %p224 = pneg %p218
    %p225 = scmp.eq.s32.totalorder %s15, 1
    %p226 = por %p224, %p225
    %p227 = scmp.ne.s32.totalorder %s219, %s222
    %p228 = scmp.eq.s32.totalorder %s15, 0
    %p229 = por %p227, %p228
    %p230 = scmp.ne.s32.totalorder %s219, %s222
    %p231 = scmp.eq.s32.totalorder %s20, 1
    %p232 = por %p230, %p231
    %p233 = scmp.ne.s32.totalorder %s222, %s223
    %p234 = scmp.eq.s32.totalorder %s20, 0
    %p235 = por %p233, %p234
    %p236 = scmp.ne.s32.totalorder %s222, %s223
    %p237 = scmp.eq.s32.totalorder %s21, 1
    %p238 = por %p236, %p237
    %p240 = scmp.ne.s32.totalorder %s223, %s239
    %p241 = scmp.eq.s32.totalorder %s21, 0
    %p242 = por %p240, %p241
    %p243 = scmp.le.s32.totalorder 1, %s15
    %p244 = scmp.lt.s32.totalorder %s15, 3
    %p245 = pnand %p243, %p244
    %p246 = pneg %p245
    // Predicated region
    $region9: #{bottleneck_decoder_block_ins.1} parent=5 // pred_check
      _
    $region10: #{bottleneck_decoder_block_ins.1} parent=5 // pred_check_branch
      %248 = sbr.rel (%p245) target = $region12
    $region11: #{bottleneck_decoder_block_ins.1} parent=5 // pred_region
      %s249 = ssub.s32 %s15, 1
      // Predicated region
      $region13: #{bottleneck_decoder_block_ins.1} parent=11 // pred_check
        %p250 = pneg %p62
      $region14: #{bottleneck_decoder_block_ins.1} parent=11 // pred_check_branch
        %252 = sbr.rel (%p250) target = $region16
      $region15: #{bottleneck_decoder_block_ins.1} parent=11 // pred_region
        _
      $region16: #{bottleneck_decoder_block_ins.1} parent=11 // pred_fallthru
        _
      // Predicated region
      $region17: #{bottleneck_decoder_block_ins.1} parent=11 // pred_check
        %p253 = pneg %p83
      $region18: #{bottleneck_decoder_block_ins.1} parent=11 // pred_check_branch
        %255 = sbr.rel (%p253) target = $region20
      $region19: #{bottleneck_decoder_block_ins.1} parent=11 // pred_region
        _
      $region20: #{bottleneck_decoder_block_ins.1} parent=11 // pred_fallthru
        _
      // Predicated region
      $region21: #{bottleneck_decoder_block_ins.1} parent=11 // pred_check
        %p256 = pneg %p104
      $region22: #{bottleneck_decoder_block_ins.1} parent=11 // pred_check_branch
        %258 = sbr.rel (%p256) target = $region24
      $region23: #{bottleneck_decoder_block_ins.1} parent=11 // pred_region
        _
      $region24: #{bottleneck_decoder_block_ins.1} parent=11 // pred_fallthru
        _
      // Predicated region
      $region25: #{bottleneck_decoder_block_ins.1} parent=11 // pred_check
        %p259 = pneg %p125
      $region26: #{bottleneck_decoder_block_ins.1} parent=11 // pred_check_branch
        %261 = sbr.rel (%p259) target = $region28
      $region27: #{bottleneck_decoder_block_ins.1} parent=11 // pred_region
        _
      $region28: #{bottleneck_decoder_block_ins.1} parent=11 // pred_fallthru
        _
      // Predicated region
      $region29: #{bottleneck_decoder_block_ins.1} parent=11 // pred_check
        %p262 = pneg %p146
      $region30: #{bottleneck_decoder_block_ins.1} parent=11 // pred_check_branch
        %264 = sbr.rel (%p262) target = $region32
      $region31: #{bottleneck_decoder_block_ins.1} parent=11 // pred_region
        _
      $region32: #{bottleneck_decoder_block_ins.1} parent=11 // pred_fallthru
        _
      // Predicated region
      $region33: #{bottleneck_decoder_block_ins.1} parent=11 // pred_check
        %p265 = pneg %p167
      $region34: #{bottleneck_decoder_block_ins.1} parent=11 // pred_check_branch
        %267 = sbr.rel (%p265) target = $region36
      $region35: #{bottleneck_decoder_block_ins.1} parent=11 // pred_region
        _
      $region36: #{bottleneck_decoder_block_ins.1} parent=11 // pred_fallthru
        _
      // Predicated region
      $region37: #{bottleneck_decoder_block_ins.1} parent=11 // pred_check
        %p268 = pneg %p188
      $region38: #{bottleneck_decoder_block_ins.1} parent=11 // pred_check_branch
        %270 = sbr.rel (%p268) target = $region40
      $region39: #{bottleneck_decoder_block_ins.1} parent=11 // pred_region
        _
      $region40: #{bottleneck_decoder_block_ins.1} parent=11 // pred_fallthru
        _
      // Predicated region
      $region41: #{bottleneck_decoder_block_ins.1} parent=11 // pred_check
        %p271 = pneg %p209
      $region42: #{bottleneck_decoder_block_ins.1} parent=11 // pred_check_branch
        %273 = sbr.rel (%p271) target = $region44
      $region43: #{bottleneck_decoder_block_ins.1} parent=11 // pred_region
        _
      $region44: #{bottleneck_decoder_block_ins.1} parent=11 // pred_fallthru
        _
    $region12: #{bottleneck_decoder_block_ins.1} parent=5 // pred_fallthru
      _
    %p274 = scmp.lt.s32.totalorder %s15, 2
    // Predicated region
    $region45: #{bottleneck_decoder_block_ins.1} parent=5 // pred_check
      %p275 = pneg %p274
    $region46: #{bottleneck_decoder_block_ins.1} parent=5 // pred_check_branch
      %277 = sbr.rel (%p275) target = $region48
    $region47: #{bottleneck_decoder_block_ins.1} parent=5 // pred_region
      // Predicated region
      $region49: #{bottleneck_decoder_block_ins.1} parent=47 // pred_check
        %p278 = pneg %p35
      $region50: #{bottleneck_decoder_block_ins.1} parent=47 // pred_check_branch
        %280 = sbr.rel (%p278) target = $region52
      $region51: #{bottleneck_decoder_block_ins.1} parent=47 // pred_region
        %p281 = scmp.lt.s32.totalorder %s15, 1
        %s282 = scalar_select %p281, %s15, 1
        %s283 = smul.addr %s282, 8
        %s284 = smul.addr %s283, 8
        %s285 = scalar_lea.vmem %s0, %s284
      $region52: #{bottleneck_decoder_block_ins.1} parent=47 // pred_fallthru
        _
    $region48: #{bottleneck_decoder_block_ins.1} parent=5 // pred_fallthru
      _
    %p286 = scmp.le.s32.totalorder 1, %s15
    %p287 = scmp.lt.s32.totalorder %s15, 3
    %p288 = pnand %p286, %p287
    %p289 = pneg %p288
    // Predicated region
    $region53: #{bottleneck_decoder_block_ins.1} parent=5 // pred_check
      _
    $region54: #{bottleneck_decoder_block_ins.1} parent=5 // pred_check_branch
      %291 = sbr.rel (%p288) target = $region56
    $region55: #{bottleneck_decoder_block_ins.1} parent=5 // pred_region
      %s292 = ssub.s32 %s15, 1
      %p293 = scmp.lt.s32.totalorder %s20, 1
      %s294 = scalar_select %p293, %s20, 1
      %s295 = smul.addr %s294, 8
      %s296 = smul.addr %s295, 8
      %s297 = scalar_lea.vmem %s0, %s296
      %p298 = pneg %p41
      %p299 = pneg %p38
      %p300 = pneg %p62
      %p301 = pneg %p59
      %p302 = pneg %p83
      %p303 = pneg %p80
      %p304 = pneg %p104
      %p305 = pneg %p101
      %p306 = pneg %p125
      %p307 = pneg %p122
      %p308 = pneg %p146
      %p309 = pneg %p143
      %p310 = pneg %p167
      %p311 = pneg %p164
      %p312 = pneg %p188
      %p313 = pneg %p185
      %p314 = pneg %p209
      %p315 = pneg %p206
      %p316 = pneg %p235
      %p317 = pneg %p232
      %p318 = scmp.lt.s32.totalorder %s20, 1
      %s319 = scalar_select %p318, %s20, 1
      %s320 = smul.addr %s319, 12
      %s321 = smul.addr %s320, 8
      %s322 = scalar_lea.vmem %s9, %s321
      %p323 = scmp.lt.s32.totalorder %s20, 1
      %s324 = scalar_select %p323, %s20, 1
      %s325 = smul.addr %s324, 8
      %s326 = smul.addr %s325, 8
      %s327 = scalar_lea.vmem %s0, %s326
      %p328 = scmp.lt.s32.totalorder %s20, 1
      %s329 = scalar_select %p328, %s20, 1
      %s330 = smul.addr %s329, 12
      %s331 = smul.addr %s330, 8
      %s332 = scalar_lea.vmem %s9, %s331
      %v333 = vld [vmem:[%s327] sm:$0xff]
      %v334 = vld [vmem:[%s327 + $0x8] sm:$0xff]
      %v335 = vld [vmem:[%s327 + $0x10] sm:$0xff]
      %v336 = vld [vmem:[%s327 + $0x18] sm:$0xff]
      %v337 = vld [vmem:[%s327 + $0x20] sm:$0xff]
      %v338 = vld [vmem:[%s327 + $0x28] sm:$0xff]
      %v339 = vld [vmem:[%s327 + $0x30] sm:$0xff]
      %v340 = vld [vmem:[%s327 + $0x38] sm:$0xff]
      %v341 = vadd.f32 %v333, %v334
      %342 = vadd.xlane.f32.xlu0 %v341
      %v343 = vpop.xlane.xlu0 %342
      %v344 = vadd.f32 %v335, %v336
      %345 = vadd.xlane.f32.xlu0 %v344
      %v346 = vpop.xlane.xlu0 %345
      %v347 = vadd.f32 %v337, %v338
      %348 = vadd.xlane.f32.xlu0 %v347
      %v349 = vpop.xlane.xlu0 %348
      %v350 = vadd.f32 %v339, %v340
      %351 = vadd.xlane.f32.xlu0 %v350
      %v352 = vpop.xlane.xlu0 %351
      %v353 = vrcp.pop 256.0
      %v354 = vmul.f32 256.0, %v353
      %v355 = vsub.f32 1.0, %v354
      %v356 = vmul.f32 %v353, %v355
      %v357 = vadd.f32 %v353, %v356
      %vm358 = vweird.f32 %v353
      %v359 = vsel %vm358, %v353, %v357
      %v360 = vmul.f32 %v343, %v359
      %v361 = vmul.f32 %v346, %v359
      %v362 = vmul.f32 %v349, %v359
      %v363 = vmul.f32 %v352, %v359
      %v364 = vsub.f32 %v333, %v360
      %v365 = vsub.f32 %v334, %v360
      %v366 = vsub.f32 %v335, %v361
      %v367 = vsub.f32 %v336, %v361
      %v368 = vsub.f32 %v337, %v362
      %v369 = vsub.f32 %v338, %v362
      %v370 = vsub.f32 %v339, %v363
      %v371 = vsub.f32 %v340, %v363
      %v372 = vmul.f32 %v364, %v364
      %v373 = vmul.f32 %v365, %v365
      %v374 = vmul.f32 %v366, %v366
      %v375 = vmul.f32 %v367, %v367
      %v376 = vmul.f32 %v368, %v368
      %v377 = vmul.f32 %v369, %v369
      %v378 = vmul.f32 %v370, %v370
      %v379 = vmul.f32 %v371, %v371
      %v380 = vadd.f32 %v372, %v373
      %381 = vadd.xlane.f32.xlu0 %v380
      %v382 = vpop.xlane.xlu0 %381
      %v383 = vadd.f32 %v374, %v375
      %384 = vadd.xlane.f32.xlu0 %v383
      %v385 = vpop.xlane.xlu0 %384
      %v386 = vadd.f32 %v376, %v377
      %387 = vadd.xlane.f32.xlu0 %v386
      %v388 = vpop.xlane.xlu0 %387
      %v389 = vadd.f32 %v378, %v379
      %390 = vadd.xlane.f32.xlu0 %v389
      %v391 = vpop.xlane.xlu0 %390
      %v392 = vmul.f32 %v382, %v359
      %v393 = vmul.f32 %v385, %v359
      %v394 = vmul.f32 %v388, %v359
      %v395 = vmul.f32 %v391, %v359
      %v396 = vadd.f32 %v392, 1e-05
      %v397 = vadd.f32 %v393, 1e-05
      %v398 = vadd.f32 %v394, 1e-05
      %v399 = vadd.f32 %v395, 1e-05
      %v400 = vrsqrt.pop %v396
      %v401 = vmul.f32 %v400, %v396
      %v402 = vmul.f32 %v401, %v400
      %v403 = vmul.f32 0.5, %v402
      %v404 = vsub.f32 1.5, %v403
      %v405 = vmul.f32 %v400, %v404
      %vm406 = vweird.f32 %v396
      %vm407 = vweird.f32 %v400
      %vm408 = vmor %vm406, %vm407
      %v409 = vsel %vm408, %v400, %v405
      %v410 = vrsqrt.pop %v397
      %v411 = vmul.f32 %v410, %v397
      %v412 = vmul.f32 %v411, %v410
      %v413 = vmul.f32 0.5, %v412
      %v414 = vsub.f32 1.5, %v413
      %v415 = vmul.f32 %v410, %v414
      %vm416 = vweird.f32 %v397
      %vm417 = vweird.f32 %v410
      %vm418 = vmor %vm416, %vm417
      %v419 = vsel %vm418, %v410, %v415
      %v420 = vrsqrt.pop %v398
      %v421 = vmul.f32 %v420, %v398
      %v422 = vmul.f32 %v421, %v420
      %v423 = vmul.f32 0.5, %v422
      %v424 = vsub.f32 1.5, %v423
      %v425 = vmul.f32 %v420, %v424
      %vm426 = vweird.f32 %v398
      %vm427 = vweird.f32 %v420
      %vm428 = vmor %vm426, %vm427
      %v429 = vsel %vm428, %v420, %v425
      %v430 = vrsqrt.pop %v399
      %v431 = vmul.f32 %v430, %v399
      %v432 = vmul.f32 %v431, %v430
      %v433 = vmul.f32 0.5, %v432
      %v434 = vsub.f32 1.5, %v433
      %v435 = vmul.f32 %v430, %v434
      %vm436 = vweird.f32 %v399
      %vm437 = vweird.f32 %v430
      %vm438 = vmor %vm436, %vm437
      %v439 = vsel %vm438, %v430, %v435
      %v440 = vmul.f32 %v364, %v409
      %v441 = vmul.f32 %v365, %v409
      %v442 = vmul.f32 %v366, %v419
      %v443 = vmul.f32 %v367, %v419
      %v444 = vmul.f32 %v368, %v429
      %v445 = vmul.f32 %v369, %v429
      %v446 = vmul.f32 %v370, %v439
      %v447 = vmul.f32 %v371, %v439
      %v448 = vmax.f32 %v440, 0.0
      %v449 = vmax.f32 %v441, 0.0
      %v450 = vmax.f32 %v442, 0.0
      %v451 = vmax.f32 %v443, 0.0
      %v452 = vmax.f32 %v444, 0.0
      %v453 = vmax.f32 %v445, 0.0
      %v454 = vmax.f32 %v446, 0.0
      %v455 = vmax.f32 %v447, 0.0
      %456 = vst [vmem:[#allocation2] sm:$0xff] %v448
      %457 = vst [vmem:[#allocation2 + $0x8] sm:$0xff] %v449
      %458 = vst [vmem:[#allocation2 + $0x10] sm:$0xff] %v450
      %459 = vst [vmem:[#allocation2 + $0x18] sm:$0xff] %v451
      %460 = vst [vmem:[#allocation2 + $0x20] sm:$0xff] %v452
      %461 = vst [vmem:[#allocation2 + $0x28] sm:$0xff] %v453
      %462 = vst [vmem:[#allocation2 + $0x30] sm:$0xff] %v454
      %463 = vst [vmem:[#allocation2 + $0x38] sm:$0xff] %v455
      %464 = vrot.lane.b32.xlu0 %v448, 17
      %v465 = vpop.permute.xlu0 %464
      %466 = vrot.lane.b32.xlu0 %v450, 17
      %v467 = vpop.permute.xlu0 %466
      %468 = vrot.lane.b32.xlu0 %v452, 17
      %v469 = vpop.permute.xlu0 %468
      %470 = vrot.lane.b32.xlu0 %v454, 17
      %v471 = vpop.permute.xlu0 %470
      %472 = vrot.lane.b32.xlu0 %v449, 17
      %v473 = vpop.permute.xlu0 %472
      %474 = vrot.lane.b32.xlu0 %v451, 17
      %v475 = vpop.permute.xlu0 %474
      %476 = vrot.lane.b32.xlu0 %v453, 17
      %v477 = vpop.permute.xlu0 %476
      %478 = vrot.lane.b32.xlu0 %v455, 17
      %v479 = vpop.permute.xlu0 %478
      %v480 = vlaneseq
      %v481 = vand.u32 %v480, 127
      %vm482 = vcmp.lt.s32.totalorder %v481, 17
      %v483 = vsel %vm482, %v465, %v473
      %v484 = vsel %vm482, %v467, %v475
      %v485 = vsel %vm482, %v469, %v477
      %v486 = vsel %vm482, %v471, %v479
      %v487 = vsel %vm482, %v473, %v465
      %v488 = vsel %vm482, %v475, %v467
      %v489 = vsel %vm482, %v477, %v469
      %v490 = vsel %vm482, %v479, %v471
      %v491 = vld [vmem:[%s1] ss:$8 sm:$0x3]
      %v493 = vperm.slane %v491, 0
      %v494 = vperm.slane %v491, 1
      %v497 = vmul.f32 %v487, %v493
      %v498 = vmul.f32 %v483, %v494
      %v499 = vmul.f32 %v488, %v493
      %v500 = vmul.f32 %v484, %v494
      %v501 = vmul.f32 %v489, %v493
      %v502 = vmul.f32 %v485, %v494
      %v503 = vmul.f32 %v490, %v493
      %v504 = vmul.f32 %v486, %v494
      %505 = vst [vmem:[#allocation3] sm:$0xff] %v497
      %506 = vst [vmem:[#allocation3 + $0x8] sm:$0xff] %v498
      %507 = vst [vmem:[#allocation3 + $0x10] sm:$0xff] %v499
      %508 = vst [vmem:[#allocation3 + $0x18] sm:$0xff] %v500
      %509 = vst [vmem:[#allocation3 + $0x20] sm:$0xff] %v501
      %510 = vst [vmem:[#allocation3 + $0x28] sm:$0xff] %v502
      %511 = vst [vmem:[#allocation3 + $0x30] sm:$0xff] %v503
      %512 = vst [vmem:[#allocation3 + $0x38] sm:$0xff] %v504
      %513 = vrot.lane.b32.xlu0 %v448, 16
      %v514 = vpop.permute.xlu0 %513
      %515 = vrot.lane.b32.xlu0 %v450, 16
      %v516 = vpop.permute.xlu0 %515
      %517 = vrot.lane.b32.xlu0 %v452, 16
      %v518 = vpop.permute.xlu0 %517
      %519 = vrot.lane.b32.xlu0 %v454, 16
      %v520 = vpop.permute.xlu0 %519
      %521 = vrot.lane.b32.xlu0 %v449, 16
      %v522 = vpop.permute.xlu0 %521
      %523 = vrot.lane.b32.xlu0 %v451, 16
      %v524 = vpop.permute.xlu0 %523
      %525 = vrot.lane.b32.xlu0 %v453, 16
      %v526 = vpop.permute.xlu0 %525
      %527 = vrot.lane.b32.xlu0 %v455, 16
      %v528 = vpop.permute.xlu0 %527
      %vm529 = vcmp.lt.s32.totalorder %v481, 16
      %v530 = vsel %vm529, %v514, %v522
      %v531 = vsel %vm529, %v516, %v524
      %v532 = vsel %vm529, %v518, %v526
      %v533 = vsel %vm529, %v520, %v528
      %v534 = vsel %vm529, %v522, %v514
      %v535 = vsel %vm529, %v524, %v516
      %v536 = vsel %vm529, %v526, %v518
      %v537 = vsel %vm529, %v528, %v520
      %s538 = scalar_lea.vmem %s1, 1
      %v539 = vld [vmem:[%s538] ss:$8 sm:$0x3]
      %v541 = vperm.slane %v539, 0
      %v542 = vperm.slane %v539, 1
      %v545 = vmul.f32 %v534, %v541
      %v546 = vmul.f32 %v530, %v542
      %v547 = vmul.f32 %v535, %v541
      %v548 = vmul.f32 %v531, %v542
      %v549 = vmul.f32 %v536, %v541
      %v550 = vmul.f32 %v532, %v542
      %v551 = vmul.f32 %v537, %v541
      %v552 = vmul.f32 %v533, %v542
      %553 = vst [vmem:[#allocation3 + $0x40] sm:$0xff] %v545
      %554 = vst [vmem:[#allocation3 + $0x48] sm:$0xff] %v546
      %555 = vst [vmem:[#allocation3 + $0x50] sm:$0xff] %v547
      %556 = vst [vmem:[#allocation3 + $0x58] sm:$0xff] %v548
      %557 = vst [vmem:[#allocation3 + $0x60] sm:$0xff] %v549
      %558 = vst [vmem:[#allocation3 + $0x68] sm:$0xff] %v550
      %559 = vst [vmem:[#allocation3 + $0x70] sm:$0xff] %v551
      %560 = vst [vmem:[#allocation3 + $0x78] sm:$0xff] %v552
      %561 = vrot.lane.b32.xlu0 %v448, 15
      %v562 = vpop.permute.xlu0 %561
      %563 = vrot.lane.b32.xlu0 %v450, 15
      %v564 = vpop.permute.xlu0 %563
      %565 = vrot.lane.b32.xlu0 %v452, 15
      %v566 = vpop.permute.xlu0 %565
      %567 = vrot.lane.b32.xlu0 %v454, 15
      %v568 = vpop.permute.xlu0 %567
      %569 = vrot.lane.b32.xlu0 %v449, 15
      %v570 = vpop.permute.xlu0 %569
      %571 = vrot.lane.b32.xlu0 %v451, 15
      %v572 = vpop.permute.xlu0 %571
      %573 = vrot.lane.b32.xlu0 %v453, 15
      %v574 = vpop.permute.xlu0 %573
      %575 = vrot.lane.b32.xlu0 %v455, 15
      %v576 = vpop.permute.xlu0 %575
      %vm577 = vcmp.lt.s32.totalorder %v481, 15
      %v578 = vsel %vm577, %v562, %v570
      %v579 = vsel %vm577, %v564, %v572
      %v580 = vsel %vm577, %v566, %v574
      %v581 = vsel %vm577, %v568, %v576
      %v582 = vsel %vm577, %v570, %v562
      %v583 = vsel %vm577, %v572, %v564
      %v584 = vsel %vm577, %v574, %v566
      %v585 = vsel %vm577, %v576, %v568
      %s586 = scalar_lea.vmem %s1, 2
      %v587 = vld [vmem:[%s586] ss:$8 sm:$0x3]
      %v589 = vperm.slane %v587, 0
      %v590 = vperm.slane %v587, 1
      %v593 = vmul.f32 %v582, %v589
      %v594 = vmul.f32 %v578, %v590
      %v595 = vmul.f32 %v583, %v589
      %v596 = vmul.f32 %v579, %v590
      %v597 = vmul.f32 %v584, %v589
      %v598 = vmul.f32 %v580, %v590
      %v599 = vmul.f32 %v585, %v589
      %v600 = vmul.f32 %v581, %v590
      %601 = vst [vmem:[#allocation3 + $0x80] sm:$0xff] %v593
      %602 = vst [vmem:[#allocation3 + $0x88] sm:$0xff] %v594
      %603 = vst [vmem:[#allocation3 + $0x90] sm:$0xff] %v595
      %604 = vst [vmem:[#allocation3 + $0x98] sm:$0xff] %v596
      %605 = vst [vmem:[#allocation3 + $0xa0] sm:$0xff] %v597
      %606 = vst [vmem:[#allocation3 + $0xa8] sm:$0xff] %v598
      %607 = vst [vmem:[#allocation3 + $0xb0] sm:$0xff] %v599
      %608 = vst [vmem:[#allocation3 + $0xb8] sm:$0xff] %v600
      %609 = vrot.lane.b32.xlu0 %v448, 1
      %v610 = vpop.permute.xlu0 %609
      %611 = vrot.lane.b32.xlu0 %v450, 1
      %v612 = vpop.permute.xlu0 %611
      %613 = vrot.lane.b32.xlu0 %v452, 1
      %v614 = vpop.permute.xlu0 %613
      %615 = vrot.lane.b32.xlu0 %v454, 1
      %v616 = vpop.permute.xlu0 %615
      %617 = vrot.lane.b32.xlu0 %v449, 1
      %v618 = vpop.permute.xlu0 %617
      %619 = vrot.lane.b32.xlu0 %v451, 1
      %v620 = vpop.permute.xlu0 %619
      %621 = vrot.lane.b32.xlu0 %v453, 1
      %v622 = vpop.permute.xlu0 %621
      %623 = vrot.lane.b32.xlu0 %v455, 1
      %v624 = vpop.permute.xlu0 %623
      %vm625 = vcmp.lt.s32.totalorder %v481, 1
      %v626 = vsel %vm625, %v610, %v618
      %v627 = vsel %vm625, %v612, %v620
      %v628 = vsel %vm625, %v614, %v622
      %v629 = vsel %vm625, %v616, %v624
      %v630 = vsel %vm625, %v618, %v610
      %v631 = vsel %vm625, %v620, %v612
      %v632 = vsel %vm625, %v622, %v614
      %v633 = vsel %vm625, %v624, %v616
      %s634 = scalar_lea.vmem %s1, 3
      %v635 = vld [vmem:[%s634] ss:$8 sm:$0x3]
      %v637 = vperm.slane %v635, 0
      %v638 = vperm.slane %v635, 1
      %v641 = vmul.f32 %v630, %v637
      %v642 = vmul.f32 %v626, %v638
      %v643 = vmul.f32 %v631, %v637
      %v644 = vmul.f32 %v627, %v638
      %v645 = vmul.f32 %v632, %v637
      %v646 = vmul.f32 %v628, %v638
      %v647 = vmul.f32 %v633, %v637
      %v648 = vmul.f32 %v629, %v638
      %649 = vst [vmem:[#allocation3 + $0xc0] sm:$0xff] %v641
      %650 = vst [vmem:[#allocation3 + $0xc8] sm:$0xff] %v642
      %651 = vst [vmem:[#allocation3 + $0xd0] sm:$0xff] %v643
      %652 = vst [vmem:[#allocation3 + $0xd8] sm:$0xff] %v644
      %653 = vst [vmem:[#allocation3 + $0xe0] sm:$0xff] %v645
      %654 = vst [vmem:[#allocation3 + $0xe8] sm:$0xff] %v646
      %655 = vst [vmem:[#allocation3 + $0xf0] sm:$0xff] %v647
      %656 = vst [vmem:[#allocation3 + $0xf8] sm:$0xff] %v648
      %657 = vst [vmem:[#allocation3 + $0x100] sm:$0xff] %v448
      %658 = vst [vmem:[#allocation3 + $0x108] sm:$0xff] %v449
      %659 = vst [vmem:[#allocation3 + $0x110] sm:$0xff] %v450
      %660 = vst [vmem:[#allocation3 + $0x118] sm:$0xff] %v451
      %661 = vst [vmem:[#allocation3 + $0x120] sm:$0xff] %v452
      %662 = vst [vmem:[#allocation3 + $0x128] sm:$0xff] %v453
      %663 = vst [vmem:[#allocation3 + $0x130] sm:$0xff] %v454
      %664 = vst [vmem:[#allocation3 + $0x138] sm:$0xff] %v455
      %665 = vrot.lane.b32.xlu0 %v448, 127
      %v666 = vpop.permute.xlu0 %665
      %667 = vrot.lane.b32.xlu0 %v450, 127
      %v668 = vpop.permute.xlu0 %667
      %669 = vrot.lane.b32.xlu0 %v452, 127
      %v670 = vpop.permute.xlu0 %669
      %671 = vrot.lane.b32.xlu0 %v454, 127
      %v672 = vpop.permute.xlu0 %671
      %673 = vrot.lane.b32.xlu0 %v449, 127
      %v674 = vpop.permute.xlu0 %673
      %675 = vrot.lane.b32.xlu0 %v451, 127
      %v676 = vpop.permute.xlu0 %675
      %677 = vrot.lane.b32.xlu0 %v453, 127
      %v678 = vpop.permute.xlu0 %677
      %679 = vrot.lane.b32.xlu0 %v455, 127
      %v680 = vpop.permute.xlu0 %679
      %vm681 = vcmp.lt.s32.totalorder %v481, 127
      %v682 = vsel %vm681, %v666, %v674
      %v683 = vsel %vm681, %v668, %v676
      %v684 = vsel %vm681, %v670, %v678
      %v685 = vsel %vm681, %v672, %v680
      %v686 = vsel %vm681, %v674, %v666
      %v687 = vsel %vm681, %v676, %v668
      %v688 = vsel %vm681, %v678, %v670
      %v689 = vsel %vm681, %v680, %v672
      %s690 = scalar_lea.vmem %s1, 5
      %v691 = vld [vmem:[%s690] ss:$8 sm:$0x3]
      %v693 = vperm.slane %v691, 0
      %v694 = vperm.slane %v691, 1
      %v697 = vmul.f32 %v682, %v693
      %v698 = vmul.f32 %v686, %v694
      %v699 = vmul.f32 %v683, %v693
      %v700 = vmul.f32 %v687, %v694
      %v701 = vmul.f32 %v684, %v693
      %v702 = vmul.f32 %v688, %v694
      %v703 = vmul.f32 %v685, %v693
      %v704 = vmul.f32 %v689, %v694
      %705 = vst [vmem:[#allocation3 + $0x140] sm:$0xff] %v697
      %706 = vst [vmem:[#allocation3 + $0x148] sm:$0xff] %v698
      %707 = vst [vmem:[#allocation3 + $0x150] sm:$0xff] %v699
      %708 = vst [vmem:[#allocation3 + $0x158] sm:$0xff] %v700
      %709 = vst [vmem:[#allocation3 + $0x160] sm:$0xff] %v701
      %710 = vst [vmem:[#allocation3 + $0x168] sm:$0xff] %v702
      %711 = vst [vmem:[#allocation3 + $0x170] sm:$0xff] %v703
      %712 = vst [vmem:[#allocation3 + $0x178] sm:$0xff] %v704
      %713 = vrot.lane.b32.xlu0 %v448, 113
      %v714 = vpop.permute.xlu0 %713
      %715 = vrot.lane.b32.xlu0 %v450, 113
      %v716 = vpop.permute.xlu0 %715
      %717 = vrot.lane.b32.xlu0 %v452, 113
      %v718 = vpop.permute.xlu0 %717
      %719 = vrot.lane.b32.xlu0 %v454, 113
      %v720 = vpop.permute.xlu0 %719
      %721 = vrot.lane.b32.xlu0 %v449, 113
      %v722 = vpop.permute.xlu0 %721
      %723 = vrot.lane.b32.xlu0 %v451, 113
      %v724 = vpop.permute.xlu0 %723
      %725 = vrot.lane.b32.xlu0 %v453, 113
      %v726 = vpop.permute.xlu0 %725
      %727 = vrot.lane.b32.xlu0 %v455, 113
      %v728 = vpop.permute.xlu0 %727
      %vm729 = vcmp.lt.s32.totalorder %v481, 113
      %v730 = vsel %vm729, %v714, %v722
      %v731 = vsel %vm729, %v716, %v724
      %v732 = vsel %vm729, %v718, %v726
      %v733 = vsel %vm729, %v720, %v728
      %v734 = vsel %vm729, %v722, %v714
      %v735 = vsel %vm729, %v724, %v716
      %v736 = vsel %vm729, %v726, %v718
      %v737 = vsel %vm729, %v728, %v720
      %s738 = scalar_lea.vmem %s1, 6
      %v739 = vld [vmem:[%s738] ss:$8 sm:$0x3]
      %v741 = vperm.slane %v739, 0
      %v742 = vperm.slane %v739, 1
      %v745 = vmul.f32 %v730, %v741
      %v746 = vmul.f32 %v734, %v742
      %v747 = vmul.f32 %v731, %v741
      %v748 = vmul.f32 %v735, %v742
      %v749 = vmul.f32 %v732, %v741
      %v750 = vmul.f32 %v736, %v742
      %v751 = vmul.f32 %v733, %v741
      %v752 = vmul.f32 %v737, %v742
      %753 = vst [vmem:[#allocation3 + $0x180] sm:$0xff] %v745
      %754 = vst [vmem:[#allocation3 + $0x188] sm:$0xff] %v746
      %755 = vst [vmem:[#allocation3 + $0x190] sm:$0xff] %v747
      %756 = vst [vmem:[#allocation3 + $0x198] sm:$0xff] %v748
      %757 = vst [vmem:[#allocation3 + $0x1a0] sm:$0xff] %v749
      %758 = vst [vmem:[#allocation3 + $0x1a8] sm:$0xff] %v750
      %759 = vst [vmem:[#allocation3 + $0x1b0] sm:$0xff] %v751
      %760 = vst [vmem:[#allocation3 + $0x1b8] sm:$0xff] %v752
      %761 = vrot.lane.b32.xlu0 %v448, 112
      %v762 = vpop.permute.xlu0 %761
      %763 = vrot.lane.b32.xlu0 %v450, 112
      %v764 = vpop.permute.xlu0 %763
      %765 = vrot.lane.b32.xlu0 %v452, 112
      %v766 = vpop.permute.xlu0 %765
      %767 = vrot.lane.b32.xlu0 %v454, 112
      %v768 = vpop.permute.xlu0 %767
      %769 = vrot.lane.b32.xlu0 %v449, 112
      %v770 = vpop.permute.xlu0 %769
      %771 = vrot.lane.b32.xlu0 %v451, 112
      %v772 = vpop.permute.xlu0 %771
      %773 = vrot.lane.b32.xlu0 %v453, 112
      %v774 = vpop.permute.xlu0 %773
      %775 = vrot.lane.b32.xlu0 %v455, 112
      %v776 = vpop.permute.xlu0 %775
      %vm777 = vcmp.lt.s32.totalorder %v481, 112
      %v778 = vsel %vm777, %v762, %v770
      %v779 = vsel %vm777, %v764, %v772
      %v780 = vsel %vm777, %v766, %v774
      %v781 = vsel %vm777, %v768, %v776
      %v782 = vsel %vm777, %v770, %v762
      %v783 = vsel %vm777, %v772, %v764
      %v784 = vsel %vm777, %v774, %v766
      %v785 = vsel %vm777, %v776, %v768
      %s786 = scalar_lea.vmem %s1, 7
      %v787 = vld [vmem:[%s786] ss:$8 sm:$0x3]
      %v789 = vperm.slane %v787, 0
      %v790 = vperm.slane %v787, 1
      %v793 = vmul.f32 %v778, %v789
      %v794 = vmul.f32 %v782, %v790
      %v795 = vmul.f32 %v779, %v789
      %v796 = vmul.f32 %v783, %v790
      %v797 = vmul.f32 %v780, %v789
      %v798 = vmul.f32 %v784, %v790
      %v799 = vmul.f32 %v781, %v789
      %v800 = vmul.f32 %v785, %v790
      %801 = vst [vmem:[#allocation3 + $0x1c0] sm:$0xff] %v793
      %802 = vst [vmem:[#allocation3 + $0x1c8] sm:$0xff] %v794
      %803 = vst [vmem:[#allocation3 + $0x1d0] sm:$0xff] %v795
      %804 = vst [vmem:[#allocation3 + $0x1d8] sm:$0xff] %v796
      %805 = vst [vmem:[#allocation3 + $0x1e0] sm:$0xff] %v797
      %806 = vst [vmem:[#allocation3 + $0x1e8] sm:$0xff] %v798
      %807 = vst [vmem:[#allocation3 + $0x1f0] sm:$0xff] %v799
      %808 = vst [vmem:[#allocation3 + $0x1f8] sm:$0xff] %v800
      %809 = vrot.lane.b32.xlu0 %v448, 111
      %v810 = vpop.permute.xlu0 %809
      %811 = vrot.lane.b32.xlu0 %v450, 111
      %v812 = vpop.permute.xlu0 %811
      %813 = vrot.lane.b32.xlu0 %v452, 111
      %v814 = vpop.permute.xlu0 %813
      %815 = vrot.lane.b32.xlu0 %v454, 111
      %v816 = vpop.permute.xlu0 %815
      %817 = vrot.lane.b32.xlu0 %v449, 111
      %v818 = vpop.permute.xlu0 %817
      %819 = vrot.lane.b32.xlu0 %v451, 111
      %v820 = vpop.permute.xlu0 %819
      %821 = vrot.lane.b32.xlu0 %v453, 111
      %v822 = vpop.permute.xlu0 %821
      %823 = vrot.lane.b32.xlu0 %v455, 111
      %v824 = vpop.permute.xlu0 %823
      %vm825 = vcmp.lt.s32.totalorder %v481, 111
      %v826 = vsel %vm825, %v810, %v818
      %v827 = vsel %vm825, %v812, %v820
      %v828 = vsel %vm825, %v814, %v822
      %v829 = vsel %vm825, %v816, %v824
      %v830 = vsel %vm825, %v818, %v810
      %v831 = vsel %vm825, %v820, %v812
      %v832 = vsel %vm825, %v822, %v814
      %v833 = vsel %vm825, %v824, %v816
      %s834 = scalar_lea.vmem %s1, 16
      %v835 = vld [vmem:[%s834] ss:$8 sm:$0x3]
      %v837 = vperm.slane %v835, 0
      %v838 = vperm.slane %v835, 1
      %v841 = vmul.f32 %v826, %v837
      %v842 = vmul.f32 %v830, %v838
      %v843 = vmul.f32 %v827, %v837
      %v844 = vmul.f32 %v831, %v838
      %v845 = vmul.f32 %v828, %v837
      %v846 = vmul.f32 %v832, %v838
      %v847 = vmul.f32 %v829, %v837
      %v848 = vmul.f32 %v833, %v838
      %849 = vst [vmem:[#allocation3 + $0x200] sm:$0xff] %v841
      %850 = vst [vmem:[#allocation3 + $0x208] sm:$0xff] %v842
      %851 = vst [vmem:[#allocation3 + $0x210] sm:$0xff] %v843
      %852 = vst [vmem:[#allocation3 + $0x218] sm:$0xff] %v844
      %853 = vst [vmem:[#allocation3 + $0x220] sm:$0xff] %v845
      %854 = vst [vmem:[#allocation3 + $0x228] sm:$0xff] %v846
      %855 = vst [vmem:[#allocation3 + $0x230] sm:$0xff] %v847
      %856 = vst [vmem:[#allocation3 + $0x238] sm:$0xff] %v848
      %v857 = vld [vmem:[%s2] sm:$0xff]
      %v858 = vld [vmem:[%s2 + $0x8] sm:$0xff]
      %v859 = vld [vmem:[%s2 + $0x10] sm:$0xff]
      %v860 = vld [vmem:[%s2 + $0x18] sm:$0xff]
      %v861 = vld [vmem:[%s2 + $0x20] sm:$0xff]
      %v862 = vld [vmem:[%s2 + $0x28] sm:$0xff]
      %v863 = vld [vmem:[%s2 + $0x30] sm:$0xff]
      %v864 = vld [vmem:[%s2 + $0x38] sm:$0xff]
      %v865 = vld [vmem:[%s2 + $0x40] sm:$0xff]
      %v866 = vld [vmem:[%s2 + $0x48] sm:$0xff]
      %v867 = vld [vmem:[%s2 + $0x50] sm:$0xff]
      %v868 = vld [vmem:[%s2 + $0x58] sm:$0xff]
      %v869 = vld [vmem:[#allocation3] sm:$0xff]
      %v870 = vld [vmem:[#allocation3 + $0x8] sm:$0xff]
      %v871 = vld [vmem:[#allocation3 + $0x10] sm:$0xff]
      %v872 = vld [vmem:[#allocation3 + $0x18] sm:$0xff]
      %v873 = vld [vmem:[#allocation3 + $0x20] sm:$0xff]
      %v874 = vld [vmem:[#allocation3 + $0x28] sm:$0xff]
      %v875 = vld [vmem:[#allocation3 + $0x30] sm:$0xff]
      %v876 = vld [vmem:[#allocation3 + $0x38] sm:$0xff]
      %v877 = vld [vmem:[#allocation3 + $0x40] sm:$0xff]
      %v878 = vld [vmem:[#allocation3 + $0x48] sm:$0xff]
      %v879 = vld [vmem:[#allocation3 + $0x50] sm:$0xff]
      %v880 = vld [vmem:[#allocation3 + $0x58] sm:$0xff]
      %v881 = vld [vmem:[#allocation3 + $0x60] sm:$0xff]
      %v882 = vld [vmem:[#allocation3 + $0x68] sm:$0xff]
      %v883 = vld [vmem:[#allocation3 + $0x70] sm:$0xff]
      %v884 = vld [vmem:[#allocation3 + $0x78] sm:$0xff]
      %v885 = vld [vmem:[#allocation3 + $0x80] sm:$0xff]
      %v886 = vld [vmem:[#allocation3 + $0x88] sm:$0xff]
      %v887 = vld [vmem:[#allocation3 + $0x90] sm:$0xff]
      %v888 = vld [vmem:[#allocation3 + $0x98] sm:$0xff]
      %v889 = vld [vmem:[#allocation3 + $0xa0] sm:$0xff]
      %v890 = vld [vmem:[#allocation3 + $0xa8] sm:$0xff]
      %v891 = vld [vmem:[#allocation3 + $0xb0] sm:$0xff]
      %v892 = vld [vmem:[#allocation3 + $0xb8] sm:$0xff]
      %v893 = vld [vmem:[#allocation3 + $0xc0] sm:$0xff]
      %v894 = vld [vmem:[#allocation3 + $0xc8] sm:$0xff]
      %v895 = vld [vmem:[#allocation3 + $0xd0] sm:$0xff]
      %v896 = vld [vmem:[#allocation3 + $0xd8] sm:$0xff]
      %v897 = vld [vmem:[#allocation3 + $0xe0] sm:$0xff]
      %v898 = vld [vmem:[#allocation3 + $0xe8] sm:$0xff]
      %v899 = vld [vmem:[#allocation3 + $0xf0] sm:$0xff]
      %v900 = vld [vmem:[#allocation3 + $0xf8] sm:$0xff]
      %v901 = vld [vmem:[#allocation3 + $0x100] sm:$0xff]
      %v902 = vld [vmem:[#allocation3 + $0x108] sm:$0xff]
      %v903 = vld [vmem:[#allocation3 + $0x110] sm:$0xff]
      %v904 = vld [vmem:[#allocation3 + $0x118] sm:$0xff]
      %v905 = vld [vmem:[#allocation3 + $0x120] sm:$0xff]
      %v906 = vld [vmem:[#allocation3 + $0x128] sm:$0xff]
      %v907 = vld [vmem:[#allocation3 + $0x130] sm:$0xff]
      %v908 = vld [vmem:[#allocation3 + $0x138] sm:$0xff]
      %v909 = vld [vmem:[#allocation3 + $0x140] sm:$0xff]
      %v910 = vld [vmem:[#allocation3 + $0x148] sm:$0xff]
      %v911 = vld [vmem:[#allocation3 + $0x150] sm:$0xff]
      %v912 = vld [vmem:[#allocation3 + $0x158] sm:$0xff]
      %v913 = vld [vmem:[#allocation3 + $0x160] sm:$0xff]
      %v914 = vld [vmem:[#allocation3 + $0x168] sm:$0xff]
      %v915 = vld [vmem:[#allocation3 + $0x170] sm:$0xff]
      %v916 = vld [vmem:[#allocation3 + $0x178] sm:$0xff]
      %v917 = vld [vmem:[#allocation3 + $0x180] sm:$0xff]
      %v918 = vld [vmem:[#allocation3 + $0x188] sm:$0xff]
      %v919 = vld [vmem:[#allocation3 + $0x190] sm:$0xff]
      %v920 = vld [vmem:[#allocation3 + $0x198] sm:$0xff]
      %v921 = vld [vmem:[#allocation3 + $0x1a0] sm:$0xff]
      %v922 = vld [vmem:[#allocation3 + $0x1a8] sm:$0xff]
      %v923 = vld [vmem:[#allocation3 + $0x1b0] sm:$0xff]
      %v924 = vld [vmem:[#allocation3 + $0x1b8] sm:$0xff]
      %v925 = vld [vmem:[#allocation3 + $0x1c0] sm:$0xff]
      %v926 = vld [vmem:[#allocation3 + $0x1c8] sm:$0xff]
      %v927 = vld [vmem:[#allocation3 + $0x1d0] sm:$0xff]
      %v928 = vld [vmem:[#allocation3 + $0x1d8] sm:$0xff]
      %v929 = vld [vmem:[#allocation3 + $0x1e0] sm:$0xff]
      %v930 = vld [vmem:[#allocation3 + $0x1e8] sm:$0xff]
      %v931 = vld [vmem:[#allocation3 + $0x1f0] sm:$0xff]
      %v932 = vld [vmem:[#allocation3 + $0x1f8] sm:$0xff]
      %v933 = vld [vmem:[#allocation3 + $0x200] sm:$0xff]
      %v934 = vld [vmem:[#allocation3 + $0x208] sm:$0xff]
      %v935 = vld [vmem:[#allocation3 + $0x210] sm:$0xff]
      %v936 = vld [vmem:[#allocation3 + $0x218] sm:$0xff]
      %v937 = vld [vmem:[#allocation3 + $0x220] sm:$0xff]
      %v938 = vld [vmem:[#allocation3 + $0x228] sm:$0xff]
      %v939 = vld [vmem:[#allocation3 + $0x230] sm:$0xff]
      %v940 = vld [vmem:[#allocation3 + $0x238] sm:$0xff]
      %vm941 = vcmask 261120
      %v943 = vsel %vm941, %v859, 0
      %v946 = vsel %vm941, %v862, 0
      %v949 = vsel %vm941, %v865, 0
      %v952 = vsel %vm941, %v868, 0
      %954 = vmatpush.msra.mxu0 %v899
      %955 = vmatpush.msra.mxu0 %v897
      %956 = vmatpush.msra.mxu0 %v895
      %957 = vmatpush.msra.mxu0 %v893
      %958 = vmatpush.msra.mxu0 %v891
      %959 = vmatpush.msra.mxu0 %v889
      %960 = vmatpush.msra.mxu0 %v887
      %961 = vmatpush.msra.mxu0 %v885
      %962 = vmatpush.msra.mxu0 %v883
      %963 = vmatpush.msra.mxu0 %v881
      %964 = vmatpush.msra.mxu0 %v879
      %965 = vmatpush.msra.mxu0 %v877
      %966 = vmatpush.msra.mxu0 %v875
      %967 = vmatpush.msra.mxu0 %v873
      %968 = vmatpush.msra.mxu0 %v871
      %969 = vmatpush.msra.mxu0 %v869
      %970 = vmatmul.f32.gmra.mxu0 %v857
      %v971 = vpop.f32.mrf.mxu0
      %v972 = vadd.f32 0.0, %v971
      %973 = vmatmul.f32.gmra.mxu0 %v860
      %v974 = vpop.f32.mrf.mxu0
      %v975 = vadd.f32 0.0, %v974
      %976 = vmatmul.f32.gmra.mxu0 %v863
      %v977 = vpop.f32.mrf.mxu0
      %v978 = vadd.f32 0.0, %v977
      %979 = vmatmul.f32.gmra.mxu0 %v866
      %v980 = vpop.f32.mrf.mxu0
      %v981 = vadd.f32 0.0, %v980
      %982 = vdwg.mxu0
      %983 = vmatpush.msra.mxu0 %v931
      %984 = vmatpush.msra.mxu0 %v929
      %985 = vmatpush.msra.mxu0 %v927
      %986 = vmatpush.msra.mxu0 %v925
      %987 = vmatpush.msra.mxu0 %v923
      %988 = vmatpush.msra.mxu0 %v921
      %989 = vmatpush.msra.mxu0 %v919
      %990 = vmatpush.msra.mxu0 %v917
      %991 = vmatpush.msra.mxu0 %v915
      %992 = vmatpush.msra.mxu0 %v913
      %993 = vmatpush.msra.mxu0 %v911
      %994 = vmatpush.msra.mxu0 %v909
      %995 = vmatpush.msra.mxu0 %v907
      %996 = vmatpush.msra.mxu0 %v905
      %997 = vmatpush.msra.mxu0 %v903
      %998 = vmatpush.msra.mxu0 %v901
      %999 = vmatmul.f32.gmra.mxu0 %v858
      %v1000 = vpop.f32.mrf.mxu0
      %v1001 = vadd.f32 %v972, %v1000
      %1002 = vmatmul.f32.gmra.mxu0 %v861
      %v1003 = vpop.f32.mrf.mxu0
      %v1004 = vadd.f32 %v975, %v1003
      %1005 = vmatmul.f32.gmra.mxu0 %v864
      %v1006 = vpop.f32.mrf.mxu0
      %v1007 = vadd.f32 %v978, %v1006
      %1008 = vmatmul.f32.gmra.mxu0 %v867
      %v1009 = vpop.f32.mrf.mxu0
      %v1010 = vadd.f32 %v981, %v1009
      %1011 = vdwg.mxu0
      %1012 = vmatpush.msra.mxu0 0.0
      %1013 = vmatpush.msra.mxu0 0.0
      %1014 = vmatpush.msra.mxu0 0.0
      %1015 = vmatpush.msra.mxu0 0.0
      %1016 = vmatpush.msra.mxu0 0.0
      %1017 = vmatpush.msra.mxu0 0.0
      %1018 = vmatpush.msra.mxu0 0.0
      %1019 = vmatpush.msra.mxu0 0.0
      %1020 = vmatpush.msra.mxu0 0.0
      %1021 = vmatpush.msra.mxu0 0.0
      %1022 = vmatpush.msra.mxu0 0.0
      %1023 = vmatpush.msra.mxu0 0.0
      %1024 = vmatpush.msra.mxu0 %v939
      %1025 = vmatpush.msra.mxu0 %v937
      %1026 = vmatpush.msra.mxu0 %v935
      %1027 = vmatpush.msra.mxu0 %v933
      %1028 = vmatmul.f32.gmra.mxu0 %v943
      %v1029 = vpop.f32.mrf.mxu0
      %v1030 = vadd.f32 %v1001, %v1029
      %1031 = vmatmul.f32.gmra.mxu0 %v946
      %v1032 = vpop.f32.mrf.mxu0
      %v1033 = vadd.f32 %v1004, %v1032
      %1034 = vmatmul.f32.gmra.mxu0 %v949
      %v1035 = vpop.f32.mrf.mxu0
      %v1036 = vadd.f32 %v1007, %v1035
      %1037 = vmatmul.f32.gmra.mxu0 %v952
      %v1038 = vpop.f32.mrf.mxu0
      %v1039 = vadd.f32 %v1010, %v1038
      %1040 = vdwg.mxu0
      %1041 = vmatpush.msra.mxu0 %v900
      %1042 = vmatpush.msra.mxu0 %v898
      %1043 = vmatpush.msra.mxu0 %v896
      %1044 = vmatpush.msra.mxu0 %v894
      %1045 = vmatpush.msra.mxu0 %v892
      %1046 = vmatpush.msra.mxu0 %v890
      %1047 = vmatpush.msra.mxu0 %v888
      %1048 = vmatpush.msra.mxu0 %v886
      %1049 = vmatpush.msra.mxu0 %v884
      %1050 = vmatpush.msra.mxu0 %v882
      %1051 = vmatpush.msra.mxu0 %v880
      %1052 = vmatpush.msra.mxu0 %v878
      %1053 = vmatpush.msra.mxu0 %v876
      %1054 = vmatpush.msra.mxu0 %v874
      %1055 = vmatpush.msra.mxu0 %v872
      %1056 = vmatpush.msra.mxu0 %v870
      %1057 = vmatmul.f32.gmra.mxu0 %v857
      %v1058 = vpop.f32.mrf.mxu0
      %v1059 = vadd.f32 0.0, %v1058
      %1060 = vmatmul.f32.gmra.mxu0 %v860
      %v1061 = vpop.f32.mrf.mxu0
      %v1062 = vadd.f32 0.0, %v1061
      %1063 = vmatmul.f32.gmra.mxu0 %v863
      %v1064 = vpop.f32.mrf.mxu0
      %v1065 = vadd.f32 0.0, %v1064
      %1066 = vmatmul.f32.gmra.mxu0 %v866
      %v1067 = vpop.f32.mrf.mxu0
      %v1068 = vadd.f32 0.0, %v1067
      %1069 = vdwg.mxu0
      %1070 = vmatpush.msra.mxu0 %v932
      %1071 = vmatpush.msra.mxu0 %v930
      %1072 = vmatpush.msra.mxu0 %v928
      %1073 = vmatpush.msra.mxu0 %v926
      %1074 = vmatpush.msra.mxu0 %v924
      %1075 = vmatpush.msra.mxu0 %v922
      %1076 = vmatpush.msra.mxu0 %v920
      %1077 = vmatpush.msra.mxu0 %v918
      %1078 = vmatpush.msra.mxu0 %v916
      %1079 = vmatpush.msra.mxu0 %v914
      %1080 = vmatpush.msra.mxu0 %v912
      %1081 = vmatpush.msra.mxu0 %v910
      %1082 = vmatpush.msra.mxu0 %v908
      %1083 = vmatpush.msra.mxu0 %v906
      %1084 = vmatpush.msra.mxu0 %v904
      %1085 = vmatpush.msra.mxu0 %v902
      %1086 = vmatmul.f32.gmra.mxu0 %v858
      %v1087 = vpop.f32.mrf.mxu0
      %v1088 = vadd.f32 %v1059, %v1087
      %1089 = vmatmul.f32.gmra.mxu0 %v861
      %v1090 = vpop.f32.mrf.mxu0
      %v1091 = vadd.f32 %v1062, %v1090
      %1092 = vmatmul.f32.gmra.mxu0 %v864
      %v1093 = vpop.f32.mrf.mxu0
      %v1094 = vadd.f32 %v1065, %v1093
      %1095 = vmatmul.f32.gmra.mxu0 %v867
      %v1096 = vpop.f32.mrf.mxu0
      %v1097 = vadd.f32 %v1068, %v1096
      %1098 = vdwg.mxu0
      %1099 = vmatpush.msra.mxu0 0.0
      %1100 = vmatpush.msra.mxu0 0.0
      %1101 = vmatpush.msra.mxu0 0.0
      %1102 = vmatpush.msra.mxu0 0.0
      %1103 = vmatpush.msra.mxu0 0.0
      %1104 = vmatpush.msra.mxu0 0.0
      %1105 = vmatpush.msra.mxu0 0.0
      %1106 = vmatpush.msra.mxu0 0.0
      %1107 = vmatpush.msra.mxu0 0.0
      %1108 = vmatpush.msra.mxu0 0.0
      %1109 = vmatpush.msra.mxu0 0.0
      %1110 = vmatpush.msra.mxu0 0.0
      %1111 = vmatpush.msra.mxu0 %v940
      %1112 = vmatpush.msra.mxu0 %v938
      %1113 = vmatpush.msra.mxu0 %v936
      %1114 = vmatpush.msra.mxu0 %v934
      %1115 = vmatmul.f32.gmra.mxu0 %v943
      %v1116 = vpop.f32.mrf.mxu0
      %v1117 = vadd.f32 %v1088, %v1116
      %1118 = vmatmul.f32.gmra.mxu0 %v946
      %v1119 = vpop.f32.mrf.mxu0
      %v1120 = vadd.f32 %v1091, %v1119
      %1121 = vmatmul.f32.gmra.mxu0 %v949
      %v1122 = vpop.f32.mrf.mxu0
      %v1123 = vadd.f32 %v1094, %v1122
      %1124 = vmatmul.f32.gmra.mxu0 %v952
      %v1125 = vpop.f32.mrf.mxu0
      %v1126 = vadd.f32 %v1097, %v1125
      %1127 = vdwg.mxu0
      %v1128 = vadd.f32 %v1030, %v1117
      %1129 = vadd.xlane.f32.xlu0 %v1128
      %v1130 = vpop.xlane.xlu0 %1129
      %v1131 = vadd.f32 %v1033, %v1120
      %1132 = vadd.xlane.f32.xlu0 %v1131
      %v1133 = vpop.xlane.xlu0 %1132
      %v1134 = vadd.f32 %v1036, %v1123
      %1135 = vadd.xlane.f32.xlu0 %v1134
      %v1136 = vpop.xlane.xlu0 %1135
      %v1137 = vadd.f32 %v1039, %v1126
      %1138 = vadd.xlane.f32.xlu0 %v1137
      %v1139 = vpop.xlane.xlu0 %1138
      %v1140 = vmul.f32 %v1130, %v359
      %v1141 = vmul.f32 %v1133, %v359
      %v1142 = vmul.f32 %v1136, %v359
      %v1143 = vmul.f32 %v1139, %v359
      %v1144 = vsub.f32 %v1030, %v1140
      %v1145 = vsub.f32 %v1117, %v1140
      %v1146 = vsub.f32 %v1033, %v1141
      %v1147 = vsub.f32 %v1120, %v1141
      %v1148 = vsub.f32 %v1036, %v1142
      %v1149 = vsub.f32 %v1123, %v1142
      %v1150 = vsub.f32 %v1039, %v1143
      %v1151 = vsub.f32 %v1126, %v1143
      %v1152 = vmul.f32 %v1144, %v1144
      %v1153 = vmul.f32 %v1145, %v1145
      %v1154 = vmul.f32 %v1146, %v1146
      %v1155 = vmul.f32 %v1147, %v1147
      %v1156 = vmul.f32 %v1148, %v1148
      %v1157 = vmul.f32 %v1149, %v1149
      %v1158 = vmul.f32 %v1150, %v1150
      %v1159 = vmul.f32 %v1151, %v1151
      %v1160 = vadd.f32 %v1152, %v1153
      %1161 = vadd.xlane.f32.xlu0 %v1160
      %v1162 = vpop.xlane.xlu0 %1161
      %v1163 = vadd.f32 %v1154, %v1155
      %1164 = vadd.xlane.f32.xlu0 %v1163
      %v1165 = vpop.xlane.xlu0 %1164
      %v1166 = vadd.f32 %v1156, %v1157
      %1167 = vadd.xlane.f32.xlu0 %v1166
      %v1168 = vpop.xlane.xlu0 %1167
      %v1169 = vadd.f32 %v1158, %v1159
      %1170 = vadd.xlane.f32.xlu0 %v1169
      %v1171 = vpop.xlane.xlu0 %1170
      %v1172 = vmul.f32 %v1162, %v359
      %v1173 = vmul.f32 %v1165, %v359
      %v1174 = vmul.f32 %v1168, %v359
      %v1175 = vmul.f32 %v1171, %v359
      %v1176 = vadd.f32 %v1172, 1e-05
      %v1177 = vadd.f32 %v1173, 1e-05
      %v1178 = vadd.f32 %v1174, 1e-05
      %v1179 = vadd.f32 %v1175, 1e-05
      %v1180 = vrsqrt.pop %v1176
      %v1181 = vmul.f32 %v1180, %v1176
      %v1182 = vmul.f32 %v1181, %v1180
      %v1183 = vmul.f32 0.5, %v1182
      %v1184 = vsub.f32 1.5, %v1183
      %v1185 = vmul.f32 %v1180, %v1184
      %vm1186 = vweird.f32 %v1176
      %vm1187 = vweird.f32 %v1180
      %vm1188 = vmor %vm1186, %vm1187
      %v1189 = vsel %vm1188, %v1180, %v1185
      %v1190 = vrsqrt.pop %v1177
      %v1191 = vmul.f32 %v1190, %v1177
      %v1192 = vmul.f32 %v1191, %v1190
      %v1193 = vmul.f32 0.5, %v1192
      %v1194 = vsub.f32 1.5, %v1193
      %v1195 = vmul.f32 %v1190, %v1194
      %vm1196 = vweird.f32 %v1177
      %vm1197 = vweird.f32 %v1190
      %vm1198 = vmor %vm1196, %vm1197
      %v1199 = vsel %vm1198, %v1190, %v1195
      %v1200 = vrsqrt.pop %v1178
      %v1201 = vmul.f32 %v1200, %v1178
      %v1202 = vmul.f32 %v1201, %v1200
      %v1203 = vmul.f32 0.5, %v1202
      %v1204 = vsub.f32 1.5, %v1203
      %v1205 = vmul.f32 %v1200, %v1204
      %vm1206 = vweird.f32 %v1178
      %vm1207 = vweird.f32 %v1200
      %vm1208 = vmor %vm1206, %vm1207
      %v1209 = vsel %vm1208, %v1200, %v1205
      %v1210 = vrsqrt.pop %v1179
      %v1211 = vmul.f32 %v1210, %v1179
      %v1212 = vmul.f32 %v1211, %v1210
      %v1213 = vmul.f32 0.5, %v1212
      %v1214 = vsub.f32 1.5, %v1213
      %v1215 = vmul.f32 %v1210, %v1214
      %vm1216 = vweird.f32 %v1179
      %vm1217 = vweird.f32 %v1210
      %vm1218 = vmor %vm1216, %vm1217
      %v1219 = vsel %vm1218, %v1210, %v1215
      %v1220 = vmul.f32 %v1144, %v1189
      %v1221 = vmul.f32 %v1145, %v1189
      %v1222 = vmul.f32 %v1146, %v1199
      %v1223 = vmul.f32 %v1147, %v1199
      %v1224 = vmul.f32 %v1148, %v1209
      %v1225 = vmul.f32 %v1149, %v1209
      %v1226 = vmul.f32 %v1150, %v1219
      %v1227 = vmul.f32 %v1151, %v1219
      %v1228 = vmax.f32 %v1220, 0.0
      %v1229 = vmax.f32 %v1221, 0.0
      %v1230 = vmax.f32 %v1222, 0.0
      %v1231 = vmax.f32 %v1223, 0.0
      %v1232 = vmax.f32 %v1224, 0.0
      %v1233 = vmax.f32 %v1225, 0.0
      %v1234 = vmax.f32 %v1226, 0.0
      %v1235 = vmax.f32 %v1227, 0.0
      %1236 = vst [vmem:[#allocation2 + $0x40] sm:$0xff] %v1228
      %1237 = vst [vmem:[#allocation2 + $0x48] sm:$0xff] %v1229
      %1238 = vst [vmem:[#allocation2 + $0x50] sm:$0xff] %v1230
      %1239 = vst [vmem:[#allocation2 + $0x58] sm:$0xff] %v1231
      %1240 = vst [vmem:[#allocation2 + $0x60] sm:$0xff] %v1232
      %1241 = vst [vmem:[#allocation2 + $0x68] sm:$0xff] %v1233
      %1242 = vst [vmem:[#allocation2 + $0x70] sm:$0xff] %v1234
      %1243 = vst [vmem:[#allocation2 + $0x78] sm:$0xff] %v1235
      %1244 = vrot.lane.b32.xlu0 %v1228, 17
      %v1245 = vpop.permute.xlu0 %1244
      %1246 = vrot.lane.b32.xlu0 %v1230, 17
      %v1247 = vpop.permute.xlu0 %1246
      %1248 = vrot.lane.b32.xlu0 %v1232, 17
      %v1249 = vpop.permute.xlu0 %1248
      %1250 = vrot.lane.b32.xlu0 %v1234, 17
      %v1251 = vpop.permute.xlu0 %1250
      %1252 = vrot.lane.b32.xlu0 %v1229, 17
      %v1253 = vpop.permute.xlu0 %1252
      %1254 = vrot.lane.b32.xlu0 %v1231, 17
      %v1255 = vpop.permute.xlu0 %1254
      %1256 = vrot.lane.b32.xlu0 %v1233, 17
      %v1257 = vpop.permute.xlu0 %1256
      %1258 = vrot.lane.b32.xlu0 %v1235, 17
      %v1259 = vpop.permute.xlu0 %1258
      %v1260 = vsel %vm482, %v1245, %v1253
      %v1261 = vsel %vm482, %v1247, %v1255
      %v1262 = vsel %vm482, %v1249, %v1257
      %v1263 = vsel %vm482, %v1251, %v1259
      %v1264 = vsel %vm482, %v1253, %v1245
      %v1265 = vsel %vm482, %v1255, %v1247
      %v1266 = vsel %vm482, %v1257, %v1249
      %v1267 = vsel %vm482, %v1259, %v1251
      %v1268 = vld [vmem:[%s1] ss:$8 sm:$0x3]
      %v1270 = vperm.slane %v1268, 0
      %v1271 = vperm.slane %v1268, 1
      %v1274 = vmul.f32 %v1264, %v1270
      %v1275 = vmul.f32 %v1260, %v1271
      %v1276 = vmul.f32 %v1265, %v1270
      %v1277 = vmul.f32 %v1261, %v1271
      %v1278 = vmul.f32 %v1266, %v1270
      %v1279 = vmul.f32 %v1262, %v1271
      %v1280 = vmul.f32 %v1267, %v1270
      %v1281 = vmul.f32 %v1263, %v1271
      %1282 = vst [vmem:[#allocation3 + $0x240] sm:$0xff] %v1274
      %1283 = vst [vmem:[#allocation3 + $0x248] sm:$0xff] %v1275
      %1284 = vst [vmem:[#allocation3 + $0x250] sm:$0xff] %v1276
      %1285 = vst [vmem:[#allocation3 + $0x258] sm:$0xff] %v1277
      %1286 = vst [vmem:[#allocation3 + $0x260] sm:$0xff] %v1278
      %1287 = vst [vmem:[#allocation3 + $0x268] sm:$0xff] %v1279
      %1288 = vst [vmem:[#allocation3 + $0x270] sm:$0xff] %v1280
      %1289 = vst [vmem:[#allocation3 + $0x278] sm:$0xff] %v1281
      %1290 = vrot.lane.b32.xlu0 %v1228, 16
      %v1291 = vpop.permute.xlu0 %1290
      %1292 = vrot.lane.b32.xlu0 %v1230, 16
      %v1293 = vpop.permute.xlu0 %1292
      %1294 = vrot.lane.b32.xlu0 %v1232, 16
      %v1295 = vpop.permute.xlu0 %1294
      %1296 = vrot.lane.b32.xlu0 %v1234, 16
      %v1297 = vpop.permute.xlu0 %1296
      %1298 = vrot.lane.b32.xlu0 %v1229, 16
      %v1299 = vpop.permute.xlu0 %1298
      %1300 = vrot.lane.b32.xlu0 %v1231, 16
      %v1301 = vpop.permute.xlu0 %1300
      %1302 = vrot.lane.b32.xlu0 %v1233, 16
      %v1303 = vpop.permute.xlu0 %1302
      %1304 = vrot.lane.b32.xlu0 %v1235, 16
      %v1305 = vpop.permute.xlu0 %1304
      %v1306 = vsel %vm529, %v1291, %v1299
      %v1307 = vsel %vm529, %v1293, %v1301
      %v1308 = vsel %vm529, %v1295, %v1303
      %v1309 = vsel %vm529, %v1297, %v1305
      %v1310 = vsel %vm529, %v1299, %v1291
      %v1311 = vsel %vm529, %v1301, %v1293
      %v1312 = vsel %vm529, %v1303, %v1295
      %v1313 = vsel %vm529, %v1305, %v1297
      %v1314 = vld [vmem:[%s538] ss:$8 sm:$0x3]
      %v1316 = vperm.slane %v1314, 0
      %v1317 = vperm.slane %v1314, 1
      %v1320 = vmul.f32 %v1310, %v1316
      %v1321 = vmul.f32 %v1306, %v1317
      %v1322 = vmul.f32 %v1311, %v1316
      %v1323 = vmul.f32 %v1307, %v1317
      %v1324 = vmul.f32 %v1312, %v1316
      %v1325 = vmul.f32 %v1308, %v1317
      %v1326 = vmul.f32 %v1313, %v1316
      %v1327 = vmul.f32 %v1309, %v1317
      %1328 = vst [vmem:[#allocation3 + $0x280] sm:$0xff] %v1320
      %1329 = vst [vmem:[#allocation3 + $0x288] sm:$0xff] %v1321
      %1330 = vst [vmem:[#allocation3 + $0x290] sm:$0xff] %v1322
      %1331 = vst [vmem:[#allocation3 + $0x298] sm:$0xff] %v1323
      %1332 = vst [vmem:[#allocation3 + $0x2a0] sm:$0xff] %v1324
      %1333 = vst [vmem:[#allocation3 + $0x2a8] sm:$0xff] %v1325
      %1334 = vst [vmem:[#allocation3 + $0x2b0] sm:$0xff] %v1326
      %1335 = vst [vmem:[#allocation3 + $0x2b8] sm:$0xff] %v1327
      %1336 = vrot.lane.b32.xlu0 %v1228, 15
      %v1337 = vpop.permute.xlu0 %1336
      %1338 = vrot.lane.b32.xlu0 %v1230, 15
      %v1339 = vpop.permute.xlu0 %1338
      %1340 = vrot.lane.b32.xlu0 %v1232, 15
      %v1341 = vpop.permute.xlu0 %1340
      %1342 = vrot.lane.b32.xlu0 %v1234, 15
      %v1343 = vpop.permute.xlu0 %1342
      %1344 = vrot.lane.b32.xlu0 %v1229, 15
      %v1345 = vpop.permute.xlu0 %1344
      %1346 = vrot.lane.b32.xlu0 %v1231, 15
      %v1347 = vpop.permute.xlu0 %1346
      %1348 = vrot.lane.b32.xlu0 %v1233, 15
      %v1349 = vpop.permute.xlu0 %1348
      %1350 = vrot.lane.b32.xlu0 %v1235, 15
      %v1351 = vpop.permute.xlu0 %1350
      %v1352 = vsel %vm577, %v1337, %v1345
      %v1353 = vsel %vm577, %v1339, %v1347
      %v1354 = vsel %vm577, %v1341, %v1349
      %v1355 = vsel %vm577, %v1343, %v1351
      %v1356 = vsel %vm577, %v1345, %v1337
      %v1357 = vsel %vm577, %v1347, %v1339
      %v1358 = vsel %vm577, %v1349, %v1341
      %v1359 = vsel %vm577, %v1351, %v1343
      %v1360 = vld [vmem:[%s586] ss:$8 sm:$0x3]
      %v1362 = vperm.slane %v1360, 0
      %v1363 = vperm.slane %v1360, 1
      %v1366 = vmul.f32 %v1356, %v1362
      %v1367 = vmul.f32 %v1352, %v1363
      %v1368 = vmul.f32 %v1357, %v1362
      %v1369 = vmul.f32 %v1353, %v1363
      %v1370 = vmul.f32 %v1358, %v1362
      %v1371 = vmul.f32 %v1354, %v1363
      %v1372 = vmul.f32 %v1359, %v1362
      %v1373 = vmul.f32 %v1355, %v1363
      %1374 = vst [vmem:[#allocation3 + $0x2c0] sm:$0xff] %v1366
      %1375 = vst [vmem:[#allocation3 + $0x2c8] sm:$0xff] %v1367
      %1376 = vst [vmem:[#allocation3 + $0x2d0] sm:$0xff] %v1368
      %1377 = vst [vmem:[#allocation3 + $0x2d8] sm:$0xff] %v1369
      %1378 = vst [vmem:[#allocation3 + $0x2e0] sm:$0xff] %v1370
      %1379 = vst [vmem:[#allocation3 + $0x2e8] sm:$0xff] %v1371
      %1380 = vst [vmem:[#allocation3 + $0x2f0] sm:$0xff] %v1372
      %1381 = vst [vmem:[#allocation3 + $0x2f8] sm:$0xff] %v1373
      %1382 = vrot.lane.b32.xlu0 %v1228, 1
      %v1383 = vpop.permute.xlu0 %1382
      %1384 = vrot.lane.b32.xlu0 %v1230, 1
      %v1385 = vpop.permute.xlu0 %1384
      %1386 = vrot.lane.b32.xlu0 %v1232, 1
      %v1387 = vpop.permute.xlu0 %1386
      %1388 = vrot.lane.b32.xlu0 %v1234, 1
      %v1389 = vpop.permute.xlu0 %1388
      %1390 = vrot.lane.b32.xlu0 %v1229, 1
      %v1391 = vpop.permute.xlu0 %1390
      %1392 = vrot.lane.b32.xlu0 %v1231, 1
      %v1393 = vpop.permute.xlu0 %1392
      %1394 = vrot.lane.b32.xlu0 %v1233, 1
      %v1395 = vpop.permute.xlu0 %1394
      %1396 = vrot.lane.b32.xlu0 %v1235, 1
      %v1397 = vpop.permute.xlu0 %1396
      %v1398 = vsel %vm625, %v1383, %v1391
      %v1399 = vsel %vm625, %v1385, %v1393
      %v1400 = vsel %vm625, %v1387, %v1395
      %v1401 = vsel %vm625, %v1389, %v1397
      %v1402 = vsel %vm625, %v1391, %v1383
      %v1403 = vsel %vm625, %v1393, %v1385
      %v1404 = vsel %vm625, %v1395, %v1387
      %v1405 = vsel %vm625, %v1397, %v1389
      %v1406 = vld [vmem:[%s634] ss:$8 sm:$0x3]
      %v1408 = vperm.slane %v1406, 0
      %v1409 = vperm.slane %v1406, 1
      %v1412 = vmul.f32 %v1402, %v1408
      %v1413 = vmul.f32 %v1398, %v1409
      %v1414 = vmul.f32 %v1403, %v1408
      %v1415 = vmul.f32 %v1399, %v1409
      %v1416 = vmul.f32 %v1404, %v1408
      %v1417 = vmul.f32 %v1400, %v1409
      %v1418 = vmul.f32 %v1405, %v1408
      %v1419 = vmul.f32 %v1401, %v1409
      %1420 = vst [vmem:[#allocation3 + $0x300] sm:$0xff] %v1412
      %1421 = vst [vmem:[#allocation3 + $0x308] sm:$0xff] %v1413
      %1422 = vst [vmem:[#allocation3 + $0x310] sm:$0xff] %v1414
      %1423 = vst [vmem:[#allocation3 + $0x318] sm:$0xff] %v1415
      %1424 = vst [vmem:[#allocation3 + $0x320] sm:$0xff] %v1416
      %1425 = vst [vmem:[#allocation3 + $0x328] sm:$0xff] %v1417
      %1426 = vst [vmem:[#allocation3 + $0x330] sm:$0xff] %v1418
      %1427 = vst [vmem:[#allocation3 + $0x338] sm:$0xff] %v1419
      %1428 = vst [vmem:[#allocation3 + $0x340] sm:$0xff] %v1228
      %1429 = vst [vmem:[#allocation3 + $0x348] sm:$0xff] %v1229
      %1430 = vst [vmem:[#allocation3 + $0x350] sm:$0xff] %v1230
      %1431 = vst [vmem:[#allocation3 + $0x358] sm:$0xff] %v1231
      %1432 = vst [vmem:[#allocation3 + $0x360] sm:$0xff] %v1232
      %1433 = vst [vmem:[#allocation3 + $0x368] sm:$0xff] %v1233
      %1434 = vst [vmem:[#allocation3 + $0x370] sm:$0xff] %v1234
      %1435 = vst [vmem:[#allocation3 + $0x378] sm:$0xff] %v1235
      %1436 = vrot.lane.b32.xlu0 %v1228, 127
      %v1437 = vpop.permute.xlu0 %1436
      %1438 = vrot.lane.b32.xlu0 %v1230, 127
      %v1439 = vpop.permute.xlu0 %1438
      %1440 = vrot.lane.b32.xlu0 %v1232, 127
      %v1441 = vpop.permute.xlu0 %1440
      %1442 = vrot.lane.b32.xlu0 %v1234, 127
      %v1443 = vpop.permute.xlu0 %1442
      %1444 = vrot.lane.b32.xlu0 %v1229, 127
      %v1445 = vpop.permute.xlu0 %1444
      %1446 = vrot.lane.b32.xlu0 %v1231, 127
      %v1447 = vpop.permute.xlu0 %1446
      %1448 = vrot.lane.b32.xlu0 %v1233, 127
      %v1449 = vpop.permute.xlu0 %1448
      %1450 = vrot.lane.b32.xlu0 %v1235, 127
      %v1451 = vpop.permute.xlu0 %1450
      %v1452 = vsel %vm681, %v1437, %v1445
      %v1453 = vsel %vm681, %v1439, %v1447
      %v1454 = vsel %vm681, %v1441, %v1449
      %v1455 = vsel %vm681, %v1443, %v1451
      %v1456 = vsel %vm681, %v1445, %v1437
      %v1457 = vsel %vm681, %v1447, %v1439
      %v1458 = vsel %vm681, %v1449, %v1441
      %v1459 = vsel %vm681, %v1451, %v1443
      %v1460 = vld [vmem:[%s690] ss:$8 sm:$0x3]
      %v1462 = vperm.slane %v1460, 0
      %v1463 = vperm.slane %v1460, 1
      %v1466 = vmul.f32 %v1452, %v1462
      %v1467 = vmul.f32 %v1456, %v1463
      %v1468 = vmul.f32 %v1453, %v1462
      %v1469 = vmul.f32 %v1457, %v1463
      %v1470 = vmul.f32 %v1454, %v1462
      %v1471 = vmul.f32 %v1458, %v1463
      %v1472 = vmul.f32 %v1455, %v1462
      %v1473 = vmul.f32 %v1459, %v1463
      %1474 = vst [vmem:[#allocation3 + $0x380] sm:$0xff] %v1466
      %1475 = vst [vmem:[#allocation3 + $0x388] sm:$0xff] %v1467
      %1476 = vst [vmem:[#allocation3 + $0x390] sm:$0xff] %v1468
      %1477 = vst [vmem:[#allocation3 + $0x398] sm:$0xff] %v1469
      %1478 = vst [vmem:[#allocation3 + $0x3a0] sm:$0xff] %v1470
      %1479 = vst [vmem:[#allocation3 + $0x3a8] sm:$0xff] %v1471
      %1480 = vst [vmem:[#allocation3 + $0x3b0] sm:$0xff] %v1472
      %1481 = vst [vmem:[#allocation3 + $0x3b8] sm:$0xff] %v1473
      %1482 = vrot.lane.b32.xlu0 %v1228, 113
      %v1483 = vpop.permute.xlu0 %1482
      %1484 = vrot.lane.b32.xlu0 %v1230, 113
      %v1485 = vpop.permute.xlu0 %1484
      %1486 = vrot.lane.b32.xlu0 %v1232, 113
      %v1487 = vpop.permute.xlu0 %1486
      %1488 = vrot.lane.b32.xlu0 %v1234, 113
      %v1489 = vpop.permute.xlu0 %1488
      %1490 = vrot.lane.b32.xlu0 %v1229, 113
      %v1491 = vpop.permute.xlu0 %1490
      %1492 = vrot.lane.b32.xlu0 %v1231, 113
      %v1493 = vpop.permute.xlu0 %1492
      %1494 = vrot.lane.b32.xlu0 %v1233, 113
      %v1495 = vpop.permute.xlu0 %1494
      %1496 = vrot.lane.b32.xlu0 %v1235, 113
      %v1497 = vpop.permute.xlu0 %1496
      %v1498 = vsel %vm729, %v1483, %v1491
      %v1499 = vsel %vm729, %v1485, %v1493
      %v1500 = vsel %vm729, %v1487, %v1495
      %v1501 = vsel %vm729, %v1489, %v1497
      %v1502 = vsel %vm729, %v1491, %v1483
      %v1503 = vsel %vm729, %v1493, %v1485
      %v1504 = vsel %vm729, %v1495, %v1487
      %v1505 = vsel %vm729, %v1497, %v1489
      %v1506 = vld [vmem:[%s738] ss:$8 sm:$0x3]
      %v1508 = vperm.slane %v1506, 0
      %v1509 = vperm.slane %v1506, 1
      %v1512 = vmul.f32 %v1498, %v1508
      %v1513 = vmul.f32 %v1502, %v1509
      %v1514 = vmul.f32 %v1499, %v1508
      %v1515 = vmul.f32 %v1503, %v1509
      %v1516 = vmul.f32 %v1500, %v1508
      %v1517 = vmul.f32 %v1504, %v1509
      %v1518 = vmul.f32 %v1501, %v1508
      %v1519 = vmul.f32 %v1505, %v1509
      %1520 = vst [vmem:[#allocation3 + $0x3c0] sm:$0xff] %v1512
      %1521 = vst [vmem:[#allocation3 + $0x3c8] sm:$0xff] %v1513
      %1522 = vst [vmem:[#allocation3 + $0x3d0] sm:$0xff] %v1514
      %1523 = vst [vmem:[#allocation3 + $0x3d8] sm:$0xff] %v1515
      %1524 = vst [vmem:[#allocation3 + $0x3e0] sm:$0xff] %v1516
      %1525 = vst [vmem:[#allocation3 + $0x3e8] sm:$0xff] %v1517
      %1526 = vst [vmem:[#allocation3 + $0x3f0] sm:$0xff] %v1518
      %1527 = vst [vmem:[#allocation3 + $0x3f8] sm:$0xff] %v1519
      %1528 = vrot.lane.b32.xlu0 %v1228, 112
      %v1529 = vpop.permute.xlu0 %1528
      %1530 = vrot.lane.b32.xlu0 %v1230, 112
      %v1531 = vpop.permute.xlu0 %1530
      %1532 = vrot.lane.b32.xlu0 %v1232, 112
      %v1533 = vpop.permute.xlu0 %1532
      %1534 = vrot.lane.b32.xlu0 %v1234, 112
      %v1535 = vpop.permute.xlu0 %1534
      %1536 = vrot.lane.b32.xlu0 %v1229, 112
      %v1537 = vpop.permute.xlu0 %1536
      %1538 = vrot.lane.b32.xlu0 %v1231, 112
      %v1539 = vpop.permute.xlu0 %1538
      %1540 = vrot.lane.b32.xlu0 %v1233, 112
      %v1541 = vpop.permute.xlu0 %1540
      %1542 = vrot.lane.b32.xlu0 %v1235, 112
      %v1543 = vpop.permute.xlu0 %1542
      %v1544 = vsel %vm777, %v1529, %v1537
      %v1545 = vsel %vm777, %v1531, %v1539
      %v1546 = vsel %vm777, %v1533, %v1541
      %v1547 = vsel %vm777, %v1535, %v1543
      %v1548 = vsel %vm777, %v1537, %v1529
      %v1549 = vsel %vm777, %v1539, %v1531
      %v1550 = vsel %vm777, %v1541, %v1533
      %v1551 = vsel %vm777, %v1543, %v1535
      %v1552 = vld [vmem:[%s786] ss:$8 sm:$0x3]
      %v1554 = vperm.slane %v1552, 0
      %v1555 = vperm.slane %v1552, 1
      %v1558 = vmul.f32 %v1544, %v1554
      %v1559 = vmul.f32 %v1548, %v1555
      %v1560 = vmul.f32 %v1545, %v1554
      %v1561 = vmul.f32 %v1549, %v1555
      %v1562 = vmul.f32 %v1546, %v1554
      %v1563 = vmul.f32 %v1550, %v1555
      %v1564 = vmul.f32 %v1547, %v1554
      %v1565 = vmul.f32 %v1551, %v1555
      %1566 = vst [vmem:[#allocation3 + $0x400] sm:$0xff] %v1558
      %1567 = vst [vmem:[#allocation3 + $0x408] sm:$0xff] %v1559
      %1568 = vst [vmem:[#allocation3 + $0x410] sm:$0xff] %v1560
      %1569 = vst [vmem:[#allocation3 + $0x418] sm:$0xff] %v1561
      %1570 = vst [vmem:[#allocation3 + $0x420] sm:$0xff] %v1562
      %1571 = vst [vmem:[#allocation3 + $0x428] sm:$0xff] %v1563
      %1572 = vst [vmem:[#allocation3 + $0x430] sm:$0xff] %v1564
      %1573 = vst [vmem:[#allocation3 + $0x438] sm:$0xff] %v1565
      %1574 = vrot.lane.b32.xlu0 %v1228, 111
      %v1575 = vpop.permute.xlu0 %1574
      %1576 = vrot.lane.b32.xlu0 %v1230, 111
      %v1577 = vpop.permute.xlu0 %1576
      %1578 = vrot.lane.b32.xlu0 %v1232, 111
      %v1579 = vpop.permute.xlu0 %1578
      %1580 = vrot.lane.b32.xlu0 %v1234, 111
      %v1581 = vpop.permute.xlu0 %1580
      %1582 = vrot.lane.b32.xlu0 %v1229, 111
      %v1583 = vpop.permute.xlu0 %1582
      %1584 = vrot.lane.b32.xlu0 %v1231, 111
      %v1585 = vpop.permute.xlu0 %1584
      %1586 = vrot.lane.b32.xlu0 %v1233, 111
      %v1587 = vpop.permute.xlu0 %1586
      %1588 = vrot.lane.b32.xlu0 %v1235, 111
      %v1589 = vpop.permute.xlu0 %1588
      %v1590 = vsel %vm825, %v1575, %v1583
      %v1591 = vsel %vm825, %v1577, %v1585
      %v1592 = vsel %vm825, %v1579, %v1587
      %v1593 = vsel %vm825, %v1581, %v1589
      %v1594 = vsel %vm825, %v1583, %v1575
      %v1595 = vsel %vm825, %v1585, %v1577
      %v1596 = vsel %vm825, %v1587, %v1579
      %v1597 = vsel %vm825, %v1589, %v1581
      %v1598 = vld [vmem:[%s834] ss:$8 sm:$0x3]
      %v1600 = vperm.slane %v1598, 0
      %v1601 = vperm.slane %v1598, 1
      %v1604 = vmul.f32 %v1590, %v1600
      %v1605 = vmul.f32 %v1594, %v1601
      %v1606 = vmul.f32 %v1591, %v1600
      %v1607 = vmul.f32 %v1595, %v1601
      %v1608 = vmul.f32 %v1592, %v1600
      %v1609 = vmul.f32 %v1596, %v1601
      %v1610 = vmul.f32 %v1593, %v1600
      %v1611 = vmul.f32 %v1597, %v1601
      %1612 = vst [vmem:[#allocation3 + $0x440] sm:$0xff] %v1604
      %1613 = vst [vmem:[#allocation3 + $0x448] sm:$0xff] %v1605
      %1614 = vst [vmem:[#allocation3 + $0x450] sm:$0xff] %v1606
      %1615 = vst [vmem:[#allocation3 + $0x458] sm:$0xff] %v1607
      %1616 = vst [vmem:[#allocation3 + $0x460] sm:$0xff] %v1608
      %1617 = vst [vmem:[#allocation3 + $0x468] sm:$0xff] %v1609
      %1618 = vst [vmem:[#allocation3 + $0x470] sm:$0xff] %v1610
      %1619 = vst [vmem:[#allocation3 + $0x478] sm:$0xff] %v1611
      %v1620 = vld [vmem:[%s3] sm:$0xff]
      %v1621 = vld [vmem:[%s3 + $0x8] sm:$0xff]
      %v1622 = vld [vmem:[%s3 + $0x10] sm:$0xff]
      %v1623 = vld [vmem:[%s3 + $0x18] sm:$0xff]
      %v1624 = vld [vmem:[%s3 + $0x20] sm:$0xff]
      %v1625 = vld [vmem:[%s3 + $0x28] sm:$0xff]
      %v1626 = vld [vmem:[%s3 + $0x30] sm:$0xff]
      %v1627 = vld [vmem:[%s3 + $0x38] sm:$0xff]
      %v1628 = vld [vmem:[%s3 + $0x40] sm:$0xff]
      %v1629 = vld [vmem:[%s3 + $0x48] sm:$0xff]
      %v1630 = vld [vmem:[%s3 + $0x50] sm:$0xff]
      %v1631 = vld [vmem:[%s3 + $0x58] sm:$0xff]
      %v1632 = vld [vmem:[%s3 + $0x60] sm:$0xff]
      %v1633 = vld [vmem:[%s3 + $0x68] sm:$0xff]
      %v1634 = vld [vmem:[%s3 + $0x70] sm:$0xff]
      %v1635 = vld [vmem:[%s3 + $0x78] sm:$0xff]
      %v1636 = vld [vmem:[%s3 + $0x80] sm:$0xff]
      %v1637 = vld [vmem:[%s3 + $0x88] sm:$0xff]
      %v1638 = vld [vmem:[%s3 + $0x90] sm:$0xff]
      %v1639 = vld [vmem:[%s3 + $0x98] sm:$0xff]
      %v1640 = vld [vmem:[#allocation3] sm:$0xff]
      %v1641 = vld [vmem:[#allocation3 + $0x8] sm:$0xff]
      %v1642 = vld [vmem:[#allocation3 + $0x10] sm:$0xff]
      %v1643 = vld [vmem:[#allocation3 + $0x18] sm:$0xff]
      %v1644 = vld [vmem:[#allocation3 + $0x20] sm:$0xff]
      %v1645 = vld [vmem:[#allocation3 + $0x28] sm:$0xff]
      %v1646 = vld [vmem:[#allocation3 + $0x30] sm:$0xff]
      %v1647 = vld [vmem:[#allocation3 + $0x38] sm:$0xff]
      %v1648 = vld [vmem:[#allocation3 + $0x40] sm:$0xff]
      %v1649 = vld [vmem:[#allocation3 + $0x48] sm:$0xff]
      %v1650 = vld [vmem:[#allocation3 + $0x50] sm:$0xff]
      %v1651 = vld [vmem:[#allocation3 + $0x58] sm:$0xff]
      %v1652 = vld [vmem:[#allocation3 + $0x60] sm:$0xff]
      %v1653 = vld [vmem:[#allocation3 + $0x68] sm:$0xff]
      %v1654 = vld [vmem:[#allocation3 + $0x70] sm:$0xff]
      %v1655 = vld [vmem:[#allocation3 + $0x78] sm:$0xff]
      %v1656 = vld [vmem:[#allocation3 + $0x80] sm:$0xff]
      %v1657 = vld [vmem:[#allocation3 + $0x88] sm:$0xff]
      %v1658 = vld [vmem:[#allocation3 + $0x90] sm:$0xff]
      %v1659 = vld [vmem:[#allocation3 + $0x98] sm:$0xff]
      %v1660 = vld [vmem:[#allocation3 + $0xa0] sm:$0xff]
      %v1661 = vld [vmem:[#allocation3 + $0xa8] sm:$0xff]
      %v1662 = vld [vmem:[#allocation3 + $0xb0] sm:$0xff]
      %v1663 = vld [vmem:[#allocation3 + $0xb8] sm:$0xff]
      %v1664 = vld [vmem:[#allocation3 + $0xc0] sm:$0xff]
      %v1665 = vld [vmem:[#allocation3 + $0xc8] sm:$0xff]
      %v1666 = vld [vmem:[#allocation3 + $0xd0] sm:$0xff]
      %v1667 = vld [vmem:[#allocation3 + $0xd8] sm:$0xff]
      %v1668 = vld [vmem:[#allocation3 + $0xe0] sm:$0xff]
      %v1669 = vld [vmem:[#allocation3 + $0xe8] sm:$0xff]
      %v1670 = vld [vmem:[#allocation3 + $0xf0] sm:$0xff]
      %v1671 = vld [vmem:[#allocation3 + $0xf8] sm:$0xff]
      %v1672 = vld [vmem:[#allocation3 + $0x100] sm:$0xff]
      %v1673 = vld [vmem:[#allocation3 + $0x108] sm:$0xff]
      %v1674 = vld [vmem:[#allocation3 + $0x110] sm:$0xff]
      %v1675 = vld [vmem:[#allocation3 + $0x118] sm:$0xff]
      %v1676 = vld [vmem:[#allocation3 + $0x120] sm:$0xff]
      %v1677 = vld [vmem:[#allocation3 + $0x128] sm:$0xff]
      %v1678 = vld [vmem:[#allocation3 + $0x130] sm:$0xff]
      %v1679 = vld [vmem:[#allocation3 + $0x138] sm:$0xff]
      %v1680 = vld [vmem:[#allocation3 + $0x140] sm:$0xff]
      %v1681 = vld [vmem:[#allocation3 + $0x148] sm:$0xff]
      %v1682 = vld [vmem:[#allocation3 + $0x150] sm:$0xff]
      %v1683 = vld [vmem:[#allocation3 + $0x158] sm:$0xff]
      %v1684 = vld [vmem:[#allocation3 + $0x160] sm:$0xff]
      %v1685 = vld [vmem:[#allocation3 + $0x168] sm:$0xff]
      %v1686 = vld [vmem:[#allocation3 + $0x170] sm:$0xff]
      %v1687 = vld [vmem:[#allocation3 + $0x178] sm:$0xff]
      %v1688 = vld [vmem:[#allocation3 + $0x180] sm:$0xff]
      %v1689 = vld [vmem:[#allocation3 + $0x188] sm:$0xff]
      %v1690 = vld [vmem:[#allocation3 + $0x190] sm:$0xff]
      %v1691 = vld [vmem:[#allocation3 + $0x198] sm:$0xff]
      %v1692 = vld [vmem:[#allocation3 + $0x1a0] sm:$0xff]
      %v1693 = vld [vmem:[#allocation3 + $0x1a8] sm:$0xff]
      %v1694 = vld [vmem:[#allocation3 + $0x1b0] sm:$0xff]
      %v1695 = vld [vmem:[#allocation3 + $0x1b8] sm:$0xff]
      %v1696 = vld [vmem:[#allocation3 + $0x1c0] sm:$0xff]
      %v1697 = vld [vmem:[#allocation3 + $0x1c8] sm:$0xff]
      %v1698 = vld [vmem:[#allocation3 + $0x1d0] sm:$0xff]
      %v1699 = vld [vmem:[#allocation3 + $0x1d8] sm:$0xff]
      %v1700 = vld [vmem:[#allocation3 + $0x1e0] sm:$0xff]
      %v1701 = vld [vmem:[#allocation3 + $0x1e8] sm:$0xff]
      %v1702 = vld [vmem:[#allocation3 + $0x1f0] sm:$0xff]
      %v1703 = vld [vmem:[#allocation3 + $0x1f8] sm:$0xff]
      %v1704 = vld [vmem:[#allocation3 + $0x200] sm:$0xff]
      %v1705 = vld [vmem:[#allocation3 + $0x208] sm:$0xff]
      %v1706 = vld [vmem:[#allocation3 + $0x210] sm:$0xff]
      %v1707 = vld [vmem:[#allocation3 + $0x218] sm:$0xff]
      %v1708 = vld [vmem:[#allocation3 + $0x220] sm:$0xff]
      %v1709 = vld [vmem:[#allocation3 + $0x228] sm:$0xff]
      %v1710 = vld [vmem:[#allocation3 + $0x230] sm:$0xff]
      %v1711 = vld [vmem:[#allocation3 + $0x238] sm:$0xff]
      %v1712 = vld [vmem:[#allocation3 + $0x240] sm:$0xff]
      %v1713 = vld [vmem:[#allocation3 + $0x248] sm:$0xff]
      %v1714 = vld [vmem:[#allocation3 + $0x250] sm:$0xff]
      %v1715 = vld [vmem:[#allocation3 + $0x258] sm:$0xff]
      %v1716 = vld [vmem:[#allocation3 + $0x260] sm:$0xff]
      %v1717 = vld [vmem:[#allocation3 + $0x268] sm:$0xff]
      %v1718 = vld [vmem:[#allocation3 + $0x270] sm:$0xff]
      %v1719 = vld [vmem:[#allocation3 + $0x278] sm:$0xff]
      %v1720 = vld [vmem:[#allocation3 + $0x280] sm:$0xff]
      %v1721 = vld [vmem:[#allocation3 + $0x288] sm:$0xff]
      %v1722 = vld [vmem:[#allocation3 + $0x290] sm:$0xff]
      %v1723 = vld [vmem:[#allocation3 + $0x298] sm:$0xff]
      %v1724 = vld [vmem:[#allocation3 + $0x2a0] sm:$0xff]
      %v1725 = vld [vmem:[#allocation3 + $0x2a8] sm:$0xff]
      %v1726 = vld [vmem:[#allocation3 + $0x2b0] sm:$0xff]
      %v1727 = vld [vmem:[#allocation3 + $0x2b8] sm:$0xff]
      %v1728 = vld [vmem:[#allocation3 + $0x2c0] sm:$0xff]
      %v1729 = vld [vmem:[#allocation3 + $0x2c8] sm:$0xff]
      %v1730 = vld [vmem:[#allocation3 + $0x2d0] sm:$0xff]
      %v1731 = vld [vmem:[#allocation3 + $0x2d8] sm:$0xff]
      %v1732 = vld [vmem:[#allocation3 + $0x2e0] sm:$0xff]
      %v1733 = vld [vmem:[#allocation3 + $0x2e8] sm:$0xff]
      %v1734 = vld [vmem:[#allocation3 + $0x2f0] sm:$0xff]
      %v1735 = vld [vmem:[#allocation3 + $0x2f8] sm:$0xff]
      %v1736 = vld [vmem:[#allocation3 + $0x300] sm:$0xff]
      %v1737 = vld [vmem:[#allocation3 + $0x308] sm:$0xff]
      %v1738 = vld [vmem:[#allocation3 + $0x310] sm:$0xff]
      %v1739 = vld [vmem:[#allocation3 + $0x318] sm:$0xff]
      %v1740 = vld [vmem:[#allocation3 + $0x320] sm:$0xff]
      %v1741 = vld [vmem:[#allocation3 + $0x328] sm:$0xff]
      %v1742 = vld [vmem:[#allocation3 + $0x330] sm:$0xff]
      %v1743 = vld [vmem:[#allocation3 + $0x338] sm:$0xff]
      %v1744 = vld [vmem:[#allocation3 + $0x340] sm:$0xff]
      %v1745 = vld [vmem:[#allocation3 + $0x348] sm:$0xff]
      %v1746 = vld [vmem:[#allocation3 + $0x350] sm:$0xff]
      %v1747 = vld [vmem:[#allocation3 + $0x358] sm:$0xff]
      %v1748 = vld [vmem:[#allocation3 + $0x360] sm:$0xff]
      %v1749 = vld [vmem:[#allocation3 + $0x368] sm:$0xff]
      %v1750 = vld [vmem:[#allocation3 + $0x370] sm:$0xff]
      %v1751 = vld [vmem:[#allocation3 + $0x378] sm:$0xff]
      %v1752 = vld [vmem:[#allocation3 + $0x380] sm:$0xff]
      %v1753 = vld [vmem:[#allocation3 + $0x388] sm:$0xff]
      %v1754 = vld [vmem:[#allocation3 + $0x390] sm:$0xff]
      %v1755 = vld [vmem:[#allocation3 + $0x398] sm:$0xff]
      %v1756 = vld [vmem:[#allocation3 + $0x3a0] sm:$0xff]
      %v1757 = vld [vmem:[#allocation3 + $0x3a8] sm:$0xff]
      %v1758 = vld [vmem:[#allocation3 + $0x3b0] sm:$0xff]
      %v1759 = vld [vmem:[#allocation3 + $0x3b8] sm:$0xff]
      %v1760 = vld [vmem:[#allocation3 + $0x3c0] sm:$0xff]
      %v1761 = vld [vmem:[#allocation3 + $0x3c8] sm:$0xff]
      %v1762 = vld [vmem:[#allocation3 + $0x3d0] sm:$0xff]
      %v1763 = vld [vmem:[#allocation3 + $0x3d8] sm:$0xff]
      %v1764 = vld [vmem:[#allocation3 + $0x3e0] sm:$0xff]
      %v1765 = vld [vmem:[#allocation3 + $0x3e8] sm:$0xff]
      %v1766 = vld [vmem:[#allocation3 + $0x3f0] sm:$0xff]
      %v1767 = vld [vmem:[#allocation3 + $0x3f8] sm:$0xff]
      %v1768 = vld [vmem:[#allocation3 + $0x400] sm:$0xff]
      %v1769 = vld [vmem:[#allocation3 + $0x408] sm:$0xff]
      %v1770 = vld [vmem:[#allocation3 + $0x410] sm:$0xff]
      %v1771 = vld [vmem:[#allocation3 + $0x418] sm:$0xff]
      %v1772 = vld [vmem:[#allocation3 + $0x420] sm:$0xff]
      %v1773 = vld [vmem:[#allocation3 + $0x428] sm:$0xff]
      %v1774 = vld [vmem:[#allocation3 + $0x430] sm:$0xff]
      %v1775 = vld [vmem:[#allocation3 + $0x438] sm:$0xff]
      %v1776 = vld [vmem:[#allocation3 + $0x440] sm:$0xff]
      %v1777 = vld [vmem:[#allocation3 + $0x448] sm:$0xff]
      %v1778 = vld [vmem:[#allocation3 + $0x450] sm:$0xff]
      %v1779 = vld [vmem:[#allocation3 + $0x458] sm:$0xff]
      %v1780 = vld [vmem:[#allocation3 + $0x460] sm:$0xff]
      %v1781 = vld [vmem:[#allocation3 + $0x468] sm:$0xff]
      %v1782 = vld [vmem:[#allocation3 + $0x470] sm:$0xff]
      %v1783 = vld [vmem:[#allocation3 + $0x478] sm:$0xff]
      %vm1784 = vcmask 523264
      %v1786 = vsel %vm1784, %v1624, 0
      %v1789 = vsel %vm1784, %v1629, 0
      %v1792 = vsel %vm1784, %v1634, 0
      %v1795 = vsel %vm1784, %v1639, 0
      %1797 = vmatpush.msra.mxu0 %v1670
      %1798 = vmatpush.msra.mxu0 %v1668
      %1799 = vmatpush.msra.mxu0 %v1666
      %1800 = vmatpush.msra.mxu0 %v1664
      %1801 = vmatpush.msra.mxu0 %v1662
      %1802 = vmatpush.msra.mxu0 %v1660
      %1803 = vmatpush.msra.mxu0 %v1658
      %1804 = vmatpush.msra.mxu0 %v1656
      %1805 = vmatpush.msra.mxu0 %v1654
      %1806 = vmatpush.msra.mxu0 %v1652
      %1807 = vmatpush.msra.mxu0 %v1650
      %1808 = vmatpush.msra.mxu0 %v1648
      %1809 = vmatpush.msra.mxu0 %v1646
      %1810 = vmatpush.msra.mxu0 %v1644
      %1811 = vmatpush.msra.mxu0 %v1642
      %1812 = vmatpush.msra.mxu0 %v1640
      %1813 = vmatmul.f32.gmra.mxu0 %v1620
      %v1814 = vpop.f32.mrf.mxu0
      %v1815 = vadd.f32 0.0, %v1814
      %1816 = vmatmul.f32.gmra.mxu0 %v1625
      %v1817 = vpop.f32.mrf.mxu0
      %v1818 = vadd.f32 0.0, %v1817
      %1819 = vmatmul.f32.gmra.mxu0 %v1630
      %v1820 = vpop.f32.mrf.mxu0
      %v1821 = vadd.f32 0.0, %v1820
      %1822 = vmatmul.f32.gmra.mxu0 %v1635
      %v1823 = vpop.f32.mrf.mxu0
      %v1824 = vadd.f32 0.0, %v1823
      %1825 = vdwg.mxu0
      %1826 = vmatpush.msra.mxu0 %v1702
      %1827 = vmatpush.msra.mxu0 %v1700
      %1828 = vmatpush.msra.mxu0 %v1698
      %1829 = vmatpush.msra.mxu0 %v1696
      %1830 = vmatpush.msra.mxu0 %v1694
      %1831 = vmatpush.msra.mxu0 %v1692
      %1832 = vmatpush.msra.mxu0 %v1690
      %1833 = vmatpush.msra.mxu0 %v1688
      %1834 = vmatpush.msra.mxu0 %v1686
      %1835 = vmatpush.msra.mxu0 %v1684
      %1836 = vmatpush.msra.mxu0 %v1682
      %1837 = vmatpush.msra.mxu0 %v1680
      %1838 = vmatpush.msra.mxu0 %v1678
      %1839 = vmatpush.msra.mxu0 %v1676
      %1840 = vmatpush.msra.mxu0 %v1674
      %1841 = vmatpush.msra.mxu0 %v1672
      %1842 = vmatmul.f32.gmra.mxu0 %v1621
      %v1843 = vpop.f32.mrf.mxu0
      %v1844 = vadd.f32 %v1815, %v1843
      %1845 = vmatmul.f32.gmra.mxu0 %v1626
      %v1846 = vpop.f32.mrf.mxu0
      %v1847 = vadd.f32 %v1818, %v1846
      %1848 = vmatmul.f32.gmra.mxu0 %v1631
      %v1849 = vpop.f32.mrf.mxu0
      %v1850 = vadd.f32 %v1821, %v1849
      %1851 = vmatmul.f32.gmra.mxu0 %v1636
      %v1852 = vpop.f32.mrf.mxu0
      %v1853 = vadd.f32 %v1824, %v1852
      %1854 = vdwg.mxu0
      %1855 = vmatpush.msra.mxu0 %v1734
      %1856 = vmatpush.msra.mxu0 %v1732
      %1857 = vmatpush.msra.mxu0 %v1730
      %1858 = vmatpush.msra.mxu0 %v1728
      %1859 = vmatpush.msra.mxu0 %v1726
      %1860 = vmatpush.msra.mxu0 %v1724
      %1861 = vmatpush.msra.mxu0 %v1722
      %1862 = vmatpush.msra.mxu0 %v1720
      %1863 = vmatpush.msra.mxu0 %v1718
      %1864 = vmatpush.msra.mxu0 %v1716
      %1865 = vmatpush.msra.mxu0 %v1714
      %1866 = vmatpush.msra.mxu0 %v1712
      %1867 = vmatpush.msra.mxu0 %v1710
      %1868 = vmatpush.msra.mxu0 %v1708
      %1869 = vmatpush.msra.mxu0 %v1706
      %1870 = vmatpush.msra.mxu0 %v1704
      %1871 = vmatmul.f32.gmra.mxu0 %v1622
      %v1872 = vpop.f32.mrf.mxu0
      %v1873 = vadd.f32 %v1844, %v1872
      %1874 = vmatmul.f32.gmra.mxu0 %v1627
      %v1875 = vpop.f32.mrf.mxu0
      %v1876 = vadd.f32 %v1847, %v1875
      %1877 = vmatmul.f32.gmra.mxu0 %v1632
      %v1878 = vpop.f32.mrf.mxu0
      %v1879 = vadd.f32 %v1850, %v1878
      %1880 = vmatmul.f32.gmra.mxu0 %v1637
      %v1881 = vpop.f32.mrf.mxu0
      %v1882 = vadd.f32 %v1853, %v1881
      %1883 = vdwg.mxu0
      %1884 = vmatpush.msra.mxu0 %v1766
      %1885 = vmatpush.msra.mxu0 %v1764
      %1886 = vmatpush.msra.mxu0 %v1762
      %1887 = vmatpush.msra.mxu0 %v1760
      %1888 = vmatpush.msra.mxu0 %v1758
      %1889 = vmatpush.msra.mxu0 %v1756
      %1890 = vmatpush.msra.mxu0 %v1754
      %1891 = vmatpush.msra.mxu0 %v1752
      %1892 = vmatpush.msra.mxu0 %v1750
      %1893 = vmatpush.msra.mxu0 %v1748
      %1894 = vmatpush.msra.mxu0 %v1746
      %1895 = vmatpush.msra.mxu0 %v1744
      %1896 = vmatpush.msra.mxu0 %v1742
      %1897 = vmatpush.msra.mxu0 %v1740
      %1898 = vmatpush.msra.mxu0 %v1738
      %1899 = vmatpush.msra.mxu0 %v1736
      %1900 = vmatmul.f32.gmra.mxu0 %v1623
      %v1901 = vpop.f32.mrf.mxu0
      %v1902 = vadd.f32 %v1873, %v1901
      %1903 = vmatmul.f32.gmra.mxu0 %v1628
      %v1904 = vpop.f32.mrf.mxu0
      %v1905 = vadd.f32 %v1876, %v1904
      %1906 = vmatmul.f32.gmra.mxu0 %v1633
      %v1907 = vpop.f32.mrf.mxu0
      %v1908 = vadd.f32 %v1879, %v1907
      %1909 = vmatmul.f32.gmra.mxu0 %v1638
      %v1910 = vpop.f32.mrf.mxu0
      %v1911 = vadd.f32 %v1882, %v1910
      %1912 = vdwg.mxu0
      %1913 = vmatpush.msra.mxu0 0.0
      %1914 = vmatpush.msra.mxu0 0.0
      %1915 = vmatpush.msra.mxu0 0.0
      %1916 = vmatpush.msra.mxu0 0.0
      %1917 = vmatpush.msra.mxu0 0.0
      %1918 = vmatpush.msra.mxu0 0.0
      %1919 = vmatpush.msra.mxu0 0.0
      %1920 = vmatpush.msra.mxu0 0.0
      %1921 = vmatpush.msra.mxu0 %v1782
      %1922 = vmatpush.msra.mxu0 %v1780
      %1923 = vmatpush.msra.mxu0 %v1778
      %1924 = vmatpush.msra.mxu0 %v1776
      %1925 = vmatpush.msra.mxu0 %v1774
      %1926 = vmatpush.msra.mxu0 %v1772
      %1927 = vmatpush.msra.mxu0 %v1770
      %1928 = vmatpush.msra.mxu0 %v1768
      %1929 = vmatmul.f32.gmra.mxu0 %v1786
      %v1930 = vpop.f32.mrf.mxu0
      %v1931 = vadd.f32 %v1902, %v1930
      %1932 = vmatmul.f32.gmra.mxu0 %v1789
      %v1933 = vpop.f32.mrf.mxu0
      %v1934 = vadd.f32 %v1905, %v1933
      %1935 = vmatmul.f32.gmra.mxu0 %v1792
      %v1936 = vpop.f32.mrf.mxu0
      %v1937 = vadd.f32 %v1908, %v1936
      %1938 = vmatmul.f32.gmra.mxu0 %v1795
      %v1939 = vpop.f32.mrf.mxu0
      %v1940 = vadd.f32 %v1911, %v1939
      %1941 = vdwg.mxu0
      %1942 = vmatpush.msra.mxu0 %v1671
      %1943 = vmatpush.msra.mxu0 %v1669
      %1944 = vmatpush.msra.mxu0 %v1667
      %1945 = vmatpush.msra.mxu0 %v1665
      %1946 = vmatpush.msra.mxu0 %v1663
      %1947 = vmatpush.msra.mxu0 %v1661
      %1948 = vmatpush.msra.mxu0 %v1659
      %1949 = vmatpush.msra.mxu0 %v1657
      %1950 = vmatpush.msra.mxu0 %v1655
      %1951 = vmatpush.msra.mxu0 %v1653
      %1952 = vmatpush.msra.mxu0 %v1651
      %1953 = vmatpush.msra.mxu0 %v1649
      %1954 = vmatpush.msra.mxu0 %v1647
      %1955 = vmatpush.msra.mxu0 %v1645
      %1956 = vmatpush.msra.mxu0 %v1643
      %1957 = vmatpush.msra.mxu0 %v1641
      %1958 = vmatmul.f32.gmra.mxu0 %v1620
      %v1959 = vpop.f32.mrf.mxu0
      %v1960 = vadd.f32 0.0, %v1959
      %1961 = vmatmul.f32.gmra.mxu0 %v1625
      %v1962 = vpop.f32.mrf.mxu0
      %v1963 = vadd.f32 0.0, %v1962
      %1964 = vmatmul.f32.gmra.mxu0 %v1630
      %v1965 = vpop.f32.mrf.mxu0
      %v1966 = vadd.f32 0.0, %v1965
      %1967 = vmatmul.f32.gmra.mxu0 %v1635
      %v1968 = vpop.f32.mrf.mxu0
      %v1969 = vadd.f32 0.0, %v1968
      %1970 = vdwg.mxu0
      %1971 = vmatpush.msra.mxu0 %v1703
      %1972 = vmatpush.msra.mxu0 %v1701
      %1973 = vmatpush.msra.mxu0 %v1699
      %1974 = vmatpush.msra.mxu0 %v1697
      %1975 = vmatpush.msra.mxu0 %v1695
      %1976 = vmatpush.msra.mxu0 %v1693
      %1977 = vmatpush.msra.mxu0 %v1691
      %1978 = vmatpush.msra.mxu0 %v1689
      %1979 = vmatpush.msra.mxu0 %v1687
      %1980 = vmatpush.msra.mxu0 %v1685
      %1981 = vmatpush.msra.mxu0 %v1683
      %1982 = vmatpush.msra.mxu0 %v1681
      %1983 = vmatpush.msra.mxu0 %v1679
      %1984 = vmatpush.msra.mxu0 %v1677
      %1985 = vmatpush.msra.mxu0 %v1675
      %1986 = vmatpush.msra.mxu0 %v1673
      %1987 = vmatmul.f32.gmra.mxu0 %v1621
      %v1988 = vpop.f32.mrf.mxu0
      %v1989 = vadd.f32 %v1960, %v1988
      %1990 = vmatmul.f32.gmra.mxu0 %v1626
      %v1991 = vpop.f32.mrf.mxu0
      %v1992 = vadd.f32 %v1963, %v1991
      %1993 = vmatmul.f32.gmra.mxu0 %v1631
      %v1994 = vpop.f32.mrf.mxu0
      %v1995 = vadd.f32 %v1966, %v1994
      %1996 = vmatmul.f32.gmra.mxu0 %v1636
      %v1997 = vpop.f32.mrf.mxu0
      %v1998 = vadd.f32 %v1969, %v1997
      %1999 = vdwg.mxu0
      %2000 = vmatpush.msra.mxu0 %v1735
      %2001 = vmatpush.msra.mxu0 %v1733
      %2002 = vmatpush.msra.mxu0 %v1731
      %2003 = vmatpush.msra.mxu0 %v1729
      %2004 = vmatpush.msra.mxu0 %v1727
      %2005 = vmatpush.msra.mxu0 %v1725
      %2006 = vmatpush.msra.mxu0 %v1723
      %2007 = vmatpush.msra.mxu0 %v1721
      %2008 = vmatpush.msra.mxu0 %v1719
      %2009 = vmatpush.msra.mxu0 %v1717
      %2010 = vmatpush.msra.mxu0 %v1715
      %2011 = vmatpush.msra.mxu0 %v1713
      %2012 = vmatpush.msra.mxu0 %v1711
      %2013 = vmatpush.msra.mxu0 %v1709
      %2014 = vmatpush.msra.mxu0 %v1707
      %2015 = vmatpush.msra.mxu0 %v1705
      %2016 = vmatmul.f32.gmra.mxu0 %v1622
      %v2017 = vpop.f32.mrf.mxu0
      %v2018 = vadd.f32 %v1989, %v2017
      %2019 = vmatmul.f32.gmra.mxu0 %v1627
      %v2020 = vpop.f32.mrf.mxu0
      %v2021 = vadd.f32 %v1992, %v2020
      %2022 = vmatmul.f32.gmra.mxu0 %v1632
      %v2023 = vpop.f32.mrf.mxu0
      %v2024 = vadd.f32 %v1995, %v2023
      %2025 = vmatmul.f32.gmra.mxu0 %v1637
      %v2026 = vpop.f32.mrf.mxu0
      %v2027 = vadd.f32 %v1998, %v2026
      %2028 = vdwg.mxu0
      %2029 = vmatpush.msra.mxu0 %v1767
      %2030 = vmatpush.msra.mxu0 %v1765
      %2031 = vmatpush.msra.mxu0 %v1763
      %2032 = vmatpush.msra.mxu0 %v1761
      %2033 = vmatpush.msra.mxu0 %v1759
      %2034 = vmatpush.msra.mxu0 %v1757
      %2035 = vmatpush.msra.mxu0 %v1755
      %2036 = vmatpush.msra.mxu0 %v1753
      %2037 = vmatpush.msra.mxu0 %v1751
      %2038 = vmatpush.msra.mxu0 %v1749
      %2039 = vmatpush.msra.mxu0 %v1747
      %2040 = vmatpush.msra.mxu0 %v1745
      %2041 = vmatpush.msra.mxu0 %v1743
      %2042 = vmatpush.msra.mxu0 %v1741
      %2043 = vmatpush.msra.mxu0 %v1739
      %2044 = vmatpush.msra.mxu0 %v1737
      %2045 = vmatmul.f32.gmra.mxu0 %v1623
      %v2046 = vpop.f32.mrf.mxu0
      %v2047 = vadd.f32 %v2018, %v2046
      %2048 = vmatmul.f32.gmra.mxu0 %v1628
      %v2049 = vpop.f32.mrf.mxu0
      %v2050 = vadd.f32 %v2021, %v2049
      %2051 = vmatmul.f32.gmra.mxu0 %v1633
      %v2052 = vpop.f32.mrf.mxu0
      %v2053 = vadd.f32 %v2024, %v2052
      %2054 = vmatmul.f32.gmra.mxu0 %v1638
      %v2055 = vpop.f32.mrf.mxu0
      %v2056 = vadd.f32 %v2027, %v2055
      %2057 = vdwg.mxu0
      %2058 = vmatpush.msra.mxu0 0.0
      %2059 = vmatpush.msra.mxu0 0.0
      %2060 = vmatpush.msra.mxu0 0.0
      %2061 = vmatpush.msra.mxu0 0.0
      %2062 = vmatpush.msra.mxu0 0.0
      %2063 = vmatpush.msra.mxu0 0.0
      %2064 = vmatpush.msra.mxu0 0.0
      %2065 = vmatpush.msra.mxu0 0.0
      %2066 = vmatpush.msra.mxu0 %v1783
      %2067 = vmatpush.msra.mxu0 %v1781
      %2068 = vmatpush.msra.mxu0 %v1779
      %2069 = vmatpush.msra.mxu0 %v1777
      %2070 = vmatpush.msra.mxu0 %v1775
      %2071 = vmatpush.msra.mxu0 %v1773
      %2072 = vmatpush.msra.mxu0 %v1771
      %2073 = vmatpush.msra.mxu0 %v1769
      %2074 = vmatmul.f32.gmra.mxu0 %v1786
      %v2075 = vpop.f32.mrf.mxu0
      %v2076 = vadd.f32 %v2047, %v2075
      %2077 = vmatmul.f32.gmra.mxu0 %v1789
      %v2078 = vpop.f32.mrf.mxu0
      %v2079 = vadd.f32 %v2050, %v2078
      %2080 = vmatmul.f32.gmra.mxu0 %v1792
      %v2081 = vpop.f32.mrf.mxu0
      %v2082 = vadd.f32 %v2053, %v2081
      %2083 = vmatmul.f32.gmra.mxu0 %v1795
      %v2084 = vpop.f32.mrf.mxu0
      %v2085 = vadd.f32 %v2056, %v2084
      %2086 = vdwg.mxu0
      %v2087 = vadd.f32 %v1931, %v2076
      %2088 = vadd.xlane.f32.xlu0 %v2087
      %v2089 = vpop.xlane.xlu0 %2088
      %v2090 = vadd.f32 %v1934, %v2079
      %2091 = vadd.xlane.f32.xlu0 %v2090
      %v2092 = vpop.xlane.xlu0 %2091
      %v2093 = vadd.f32 %v1937, %v2082
      %2094 = vadd.xlane.f32.xlu0 %v2093
      %v2095 = vpop.xlane.xlu0 %2094
      %v2096 = vadd.f32 %v1940, %v2085
      %2097 = vadd.xlane.f32.xlu0 %v2096
      %v2098 = vpop.xlane.xlu0 %2097
      %v2099 = vmul.f32 %v2089, %v359
      %v2100 = vmul.f32 %v2092, %v359
      %v2101 = vmul.f32 %v2095, %v359
      %v2102 = vmul.f32 %v2098, %v359
      %v2103 = vsub.f32 %v1931, %v2099
      %v2104 = vsub.f32 %v2076, %v2099
      %v2105 = vsub.f32 %v1934, %v2100
      %v2106 = vsub.f32 %v2079, %v2100
      %v2107 = vsub.f32 %v1937, %v2101
      %v2108 = vsub.f32 %v2082, %v2101
      %v2109 = vsub.f32 %v1940, %v2102
      %v2110 = vsub.f32 %v2085, %v2102
      %v2111 = vmul.f32 %v2103, %v2103
      %v2112 = vmul.f32 %v2104, %v2104
      %v2113 = vmul.f32 %v2105, %v2105
      %v2114 = vmul.f32 %v2106, %v2106
      %v2115 = vmul.f32 %v2107, %v2107
      %v2116 = vmul.f32 %v2108, %v2108
      %v2117 = vmul.f32 %v2109, %v2109
      %v2118 = vmul.f32 %v2110, %v2110
      %v2119 = vadd.f32 %v2111, %v2112
      %2120 = vadd.xlane.f32.xlu0 %v2119
      %v2121 = vpop.xlane.xlu0 %2120
      %v2122 = vadd.f32 %v2113, %v2114
      %2123 = vadd.xlane.f32.xlu0 %v2122
      %v2124 = vpop.xlane.xlu0 %2123
      %v2125 = vadd.f32 %v2115, %v2116
      %2126 = vadd.xlane.f32.xlu0 %v2125
      %v2127 = vpop.xlane.xlu0 %2126
      %v2128 = vadd.f32 %v2117, %v2118
      %2129 = vadd.xlane.f32.xlu0 %v2128
      %v2130 = vpop.xlane.xlu0 %2129
      %v2131 = vmul.f32 %v2121, %v359
      %v2132 = vmul.f32 %v2124, %v359
      %v2133 = vmul.f32 %v2127, %v359
      %v2134 = vmul.f32 %v2130, %v359
      %v2135 = vadd.f32 %v2131, 1e-05
      %v2136 = vadd.f32 %v2132, 1e-05
      %v2137 = vadd.f32 %v2133, 1e-05
      %v2138 = vadd.f32 %v2134, 1e-05
      %v2139 = vrsqrt.pop %v2135
      %v2140 = vmul.f32 %v2139, %v2135
      %v2141 = vmul.f32 %v2140, %v2139
      %v2142 = vmul.f32 0.5, %v2141
      %v2143 = vsub.f32 1.5, %v2142
      %v2144 = vmul.f32 %v2139, %v2143
      %vm2145 = vweird.f32 %v2135
      %vm2146 = vweird.f32 %v2139
      %vm2147 = vmor %vm2145, %vm2146
      %v2148 = vsel %vm2147, %v2139, %v2144
      %v2149 = vrsqrt.pop %v2136
      %v2150 = vmul.f32 %v2149, %v2136
      %v2151 = vmul.f32 %v2150, %v2149
      %v2152 = vmul.f32 0.5, %v2151
      %v2153 = vsub.f32 1.5, %v2152
      %v2154 = vmul.f32 %v2149, %v2153
      %vm2155 = vweird.f32 %v2136
      %vm2156 = vweird.f32 %v2149
      %vm2157 = vmor %vm2155, %vm2156
      %v2158 = vsel %vm2157, %v2149, %v2154
      %v2159 = vrsqrt.pop %v2137
      %v2160 = vmul.f32 %v2159, %v2137
      %v2161 = vmul.f32 %v2160, %v2159
      %v2162 = vmul.f32 0.5, %v2161
      %v2163 = vsub.f32 1.5, %v2162
      %v2164 = vmul.f32 %v2159, %v2163
      %vm2165 = vweird.f32 %v2137
      %vm2166 = vweird.f32 %v2159
      %vm2167 = vmor %vm2165, %vm2166
      %v2168 = vsel %vm2167, %v2159, %v2164
      %v2169 = vrsqrt.pop %v2138
      %v2170 = vmul.f32 %v2169, %v2138
      %v2171 = vmul.f32 %v2170, %v2169
      %v2172 = vmul.f32 0.5, %v2171
      %v2173 = vsub.f32 1.5, %v2172
      %v2174 = vmul.f32 %v2169, %v2173
      %vm2175 = vweird.f32 %v2138
      %vm2176 = vweird.f32 %v2169
      %vm2177 = vmor %vm2175, %vm2176
      %v2178 = vsel %vm2177, %v2169, %v2174
      %v2179 = vmul.f32 %v2103, %v2148
      %v2180 = vmul.f32 %v2104, %v2148
      %v2181 = vmul.f32 %v2105, %v2158
      %v2182 = vmul.f32 %v2106, %v2158
      %v2183 = vmul.f32 %v2107, %v2168
      %v2184 = vmul.f32 %v2108, %v2168
      %v2185 = vmul.f32 %v2109, %v2178
      %v2186 = vmul.f32 %v2110, %v2178
      %v2187 = vmax.f32 %v2179, 0.0
      %v2188 = vmax.f32 %v2180, 0.0
      %v2189 = vmax.f32 %v2181, 0.0
      %v2190 = vmax.f32 %v2182, 0.0
      %v2191 = vmax.f32 %v2183, 0.0
      %v2192 = vmax.f32 %v2184, 0.0
      %v2193 = vmax.f32 %v2185, 0.0
      %v2194 = vmax.f32 %v2186, 0.0
      %2195 = vst [vmem:[#allocation2 + $0x80] sm:$0xff] %v2187
      %2196 = vst [vmem:[#allocation2 + $0x88] sm:$0xff] %v2188
      %2197 = vst [vmem:[#allocation2 + $0x90] sm:$0xff] %v2189
      %2198 = vst [vmem:[#allocation2 + $0x98] sm:$0xff] %v2190
      %2199 = vst [vmem:[#allocation2 + $0xa0] sm:$0xff] %v2191
      %2200 = vst [vmem:[#allocation2 + $0xa8] sm:$0xff] %v2192
      %2201 = vst [vmem:[#allocation2 + $0xb0] sm:$0xff] %v2193
      %2202 = vst [vmem:[#allocation2 + $0xb8] sm:$0xff] %v2194
      %2203 = vrot.lane.b32.xlu0 %v2187, 17
      %v2204 = vpop.permute.xlu0 %2203
      %2205 = vrot.lane.b32.xlu0 %v2189, 17
      %v2206 = vpop.permute.xlu0 %2205
      %2207 = vrot.lane.b32.xlu0 %v2191, 17
      %v2208 = vpop.permute.xlu0 %2207
      %2209 = vrot.lane.b32.xlu0 %v2193, 17
      %v2210 = vpop.permute.xlu0 %2209
      %2211 = vrot.lane.b32.xlu0 %v2188, 17
      %v2212 = vpop.permute.xlu0 %2211
      %2213 = vrot.lane.b32.xlu0 %v2190, 17
      %v2214 = vpop.permute.xlu0 %2213
      %2215 = vrot.lane.b32.xlu0 %v2192, 17
      %v2216 = vpop.permute.xlu0 %2215
      %2217 = vrot.lane.b32.xlu0 %v2194, 17
      %v2218 = vpop.permute.xlu0 %2217
      %v2219 = vsel %vm482, %v2204, %v2212
      %v2220 = vsel %vm482, %v2206, %v2214
      %v2221 = vsel %vm482, %v2208, %v2216
      %v2222 = vsel %vm482, %v2210, %v2218
      %v2223 = vsel %vm482, %v2212, %v2204
      %v2224 = vsel %vm482, %v2214, %v2206
      %v2225 = vsel %vm482, %v2216, %v2208
      %v2226 = vsel %vm482, %v2218, %v2210
      %v2227 = vld [vmem:[%s1] ss:$8 sm:$0x3]
      %v2229 = vperm.slane %v2227, 0
      %v2230 = vperm.slane %v2227, 1
      %v2233 = vmul.f32 %v2223, %v2229
      %v2234 = vmul.f32 %v2219, %v2230
      %v2235 = vmul.f32 %v2224, %v2229
      %v2236 = vmul.f32 %v2220, %v2230
      %v2237 = vmul.f32 %v2225, %v2229
      %v2238 = vmul.f32 %v2221, %v2230
      %v2239 = vmul.f32 %v2226, %v2229
      %v2240 = vmul.f32 %v2222, %v2230
      %2241 = vst [vmem:[#allocation3 + $0x480] sm:$0xff] %v2233
      %2242 = vst [vmem:[#allocation3 + $0x488] sm:$0xff] %v2234
      %2243 = vst [vmem:[#allocation3 + $0x490] sm:$0xff] %v2235
      %2244 = vst [vmem:[#allocation3 + $0x498] sm:$0xff] %v2236
      %2245 = vst [vmem:[#allocation3 + $0x4a0] sm:$0xff] %v2237
      %2246 = vst [vmem:[#allocation3 + $0x4a8] sm:$0xff] %v2238
      %2247 = vst [vmem:[#allocation3 + $0x4b0] sm:$0xff] %v2239
      %2248 = vst [vmem:[#allocation3 + $0x4b8] sm:$0xff] %v2240
      %2249 = vrot.lane.b32.xlu0 %v2187, 16
      %v2250 = vpop.permute.xlu0 %2249
      %2251 = vrot.lane.b32.xlu0 %v2189, 16
      %v2252 = vpop.permute.xlu0 %2251
      %2253 = vrot.lane.b32.xlu0 %v2191, 16
      %v2254 = vpop.permute.xlu0 %2253
      %2255 = vrot.lane.b32.xlu0 %v2193, 16
      %v2256 = vpop.permute.xlu0 %2255
      %2257 = vrot.lane.b32.xlu0 %v2188, 16
      %v2258 = vpop.permute.xlu0 %2257
      %2259 = vrot.lane.b32.xlu0 %v2190, 16
      %v2260 = vpop.permute.xlu0 %2259
      %2261 = vrot.lane.b32.xlu0 %v2192, 16
      %v2262 = vpop.permute.xlu0 %2261
      %2263 = vrot.lane.b32.xlu0 %v2194, 16
      %v2264 = vpop.permute.xlu0 %2263
      %v2265 = vsel %vm529, %v2250, %v2258
      %v2266 = vsel %vm529, %v2252, %v2260
      %v2267 = vsel %vm529, %v2254, %v2262
      %v2268 = vsel %vm529, %v2256, %v2264
      %v2269 = vsel %vm529, %v2258, %v2250
      %v2270 = vsel %vm529, %v2260, %v2252
      %v2271 = vsel %vm529, %v2262, %v2254
      %v2272 = vsel %vm529, %v2264, %v2256
      %v2273 = vld [vmem:[%s538] ss:$8 sm:$0x3]
      %v2275 = vperm.slane %v2273, 0
      %v2276 = vperm.slane %v2273, 1
      %v2279 = vmul.f32 %v2269, %v2275
      %v2280 = vmul.f32 %v2265, %v2276
      %v2281 = vmul.f32 %v2270, %v2275
      %v2282 = vmul.f32 %v2266, %v2276
      %v2283 = vmul.f32 %v2271, %v2275
      %v2284 = vmul.f32 %v2267, %v2276
      %v2285 = vmul.f32 %v2272, %v2275
      %v2286 = vmul.f32 %v2268, %v2276
      %2287 = vst [vmem:[#allocation3 + $0x4c0] sm:$0xff] %v2279
      %2288 = vst [vmem:[#allocation3 + $0x4c8] sm:$0xff] %v2280
      %2289 = vst [vmem:[#allocation3 + $0x4d0] sm:$0xff] %v2281
      %2290 = vst [vmem:[#allocation3 + $0x4d8] sm:$0xff] %v2282
      %2291 = vst [vmem:[#allocation3 + $0x4e0] sm:$0xff] %v2283
      %2292 = vst [vmem:[#allocation3 + $0x4e8] sm:$0xff] %v2284
      %2293 = vst [vmem:[#allocation3 + $0x4f0] sm:$0xff] %v2285
      %2294 = vst [vmem:[#allocation3 + $0x4f8] sm:$0xff] %v2286
      %2295 = vrot.lane.b32.xlu0 %v2187, 15
      %v2296 = vpop.permute.xlu0 %2295
      %2297 = vrot.lane.b32.xlu0 %v2189, 15
      %v2298 = vpop.permute.xlu0 %2297
      %2299 = vrot.lane.b32.xlu0 %v2191, 15
      %v2300 = vpop.permute.xlu0 %2299
      %2301 = vrot.lane.b32.xlu0 %v2193, 15
      %v2302 = vpop.permute.xlu0 %2301
      %2303 = vrot.lane.b32.xlu0 %v2188, 15
      %v2304 = vpop.permute.xlu0 %2303
      %2305 = vrot.lane.b32.xlu0 %v2190, 15
      %v2306 = vpop.permute.xlu0 %2305
      %2307 = vrot.lane.b32.xlu0 %v2192, 15
      %v2308 = vpop.permute.xlu0 %2307
      %2309 = vrot.lane.b32.xlu0 %v2194, 15
      %v2310 = vpop.permute.xlu0 %2309
      %v2311 = vsel %vm577, %v2296, %v2304
      %v2312 = vsel %vm577, %v2298, %v2306
      %v2313 = vsel %vm577, %v2300, %v2308
      %v2314 = vsel %vm577, %v2302, %v2310
      %v2315 = vsel %vm577, %v2304, %v2296
      %v2316 = vsel %vm577, %v2306, %v2298
      %v2317 = vsel %vm577, %v2308, %v2300
      %v2318 = vsel %vm577, %v2310, %v2302
      %v2319 = vld [vmem:[%s586] ss:$8 sm:$0x3]
      %v2321 = vperm.slane %v2319, 0
      %v2322 = vperm.slane %v2319, 1
      %v2325 = vmul.f32 %v2315, %v2321
      %v2326 = vmul.f32 %v2311, %v2322
      %v2327 = vmul.f32 %v2316, %v2321
      %v2328 = vmul.f32 %v2312, %v2322
      %v2329 = vmul.f32 %v2317, %v2321
      %v2330 = vmul.f32 %v2313, %v2322
      %v2331 = vmul.f32 %v2318, %v2321
      %v2332 = vmul.f32 %v2314, %v2322
      %2333 = vst [vmem:[#allocation3 + $0x500] sm:$0xff] %v2325
      %2334 = vst [vmem:[#allocation3 + $0x508] sm:$0xff] %v2326
      %2335 = vst [vmem:[#allocation3 + $0x510] sm:$0xff] %v2327
      %2336 = vst [vmem:[#allocation3 + $0x518] sm:$0xff] %v2328
      %2337 = vst [vmem:[#allocation3 + $0x520] sm:$0xff] %v2329
      %2338 = vst [vmem:[#allocation3 + $0x528] sm:$0xff] %v2330
      %2339 = vst [vmem:[#allocation3 + $0x530] sm:$0xff] %v2331
      %2340 = vst [vmem:[#allocation3 + $0x538] sm:$0xff] %v2332
      %2341 = vrot.lane.b32.xlu0 %v2187, 1
      %v2342 = vpop.permute.xlu0 %2341
      %2343 = vrot.lane.b32.xlu0 %v2189, 1
      %v2344 = vpop.permute.xlu0 %2343
      %2345 = vrot.lane.b32.xlu0 %v2191, 1
      %v2346 = vpop.permute.xlu0 %2345
      %2347 = vrot.lane.b32.xlu0 %v2193, 1
      %v2348 = vpop.permute.xlu0 %2347
      %2349 = vrot.lane.b32.xlu0 %v2188, 1
      %v2350 = vpop.permute.xlu0 %2349
      %2351 = vrot.lane.b32.xlu0 %v2190, 1
      %v2352 = vpop.permute.xlu0 %2351
      %2353 = vrot.lane.b32.xlu0 %v2192, 1
      %v2354 = vpop.permute.xlu0 %2353
      %2355 = vrot.lane.b32.xlu0 %v2194, 1
      %v2356 = vpop.permute.xlu0 %2355
      %v2357 = vsel %vm625, %v2342, %v2350
      %v2358 = vsel %vm625, %v2344, %v2352
      %v2359 = vsel %vm625, %v2346, %v2354
      %v2360 = vsel %vm625, %v2348, %v2356
      %v2361 = vsel %vm625, %v2350, %v2342
      %v2362 = vsel %vm625, %v2352, %v2344
      %v2363 = vsel %vm625, %v2354, %v2346
      %v2364 = vsel %vm625, %v2356, %v2348
      %v2365 = vld [vmem:[%s634] ss:$8 sm:$0x3]
      %v2367 = vperm.slane %v2365, 0
      %v2368 = vperm.slane %v2365, 1
      %v2371 = vmul.f32 %v2361, %v2367
      %v2372 = vmul.f32 %v2357, %v2368
      %v2373 = vmul.f32 %v2362, %v2367
      %v2374 = vmul.f32 %v2358, %v2368
      %v2375 = vmul.f32 %v2363, %v2367
      %v2376 = vmul.f32 %v2359, %v2368
      %v2377 = vmul.f32 %v2364, %v2367
      %v2378 = vmul.f32 %v2360, %v2368
      %2379 = vst [vmem:[#allocation3 + $0x540] sm:$0xff] %v2371
      %2380 = vst [vmem:[#allocation3 + $0x548] sm:$0xff] %v2372
      %2381 = vst [vmem:[#allocation3 + $0x550] sm:$0xff] %v2373
      %2382 = vst [vmem:[#allocation3 + $0x558] sm:$0xff] %v2374
      %2383 = vst [vmem:[#allocation3 + $0x560] sm:$0xff] %v2375
      %2384 = vst [vmem:[#allocation3 + $0x568] sm:$0xff] %v2376
      %2385 = vst [vmem:[#allocation3 + $0x570] sm:$0xff] %v2377
      %2386 = vst [vmem:[#allocation3 + $0x578] sm:$0xff] %v2378
      %2387 = vst [vmem:[#allocation3 + $0x580] sm:$0xff] %v2187
      %2388 = vst [vmem:[#allocation3 + $0x588] sm:$0xff] %v2188
      %2389 = vst [vmem:[#allocation3 + $0x590] sm:$0xff] %v2189
      %2390 = vst [vmem:[#allocation3 + $0x598] sm:$0xff] %v2190
      %2391 = vst [vmem:[#allocation3 + $0x5a0] sm:$0xff] %v2191
      %2392 = vst [vmem:[#allocation3 + $0x5a8] sm:$0xff] %v2192
      %2393 = vst [vmem:[#allocation3 + $0x5b0] sm:$0xff] %v2193
      %2394 = vst [vmem:[#allocation3 + $0x5b8] sm:$0xff] %v2194
      %2395 = vrot.lane.b32.xlu0 %v2187, 127
      %v2396 = vpop.permute.xlu0 %2395
      %2397 = vrot.lane.b32.xlu0 %v2189, 127
      %v2398 = vpop.permute.xlu0 %2397
      %2399 = vrot.lane.b32.xlu0 %v2191, 127
      %v2400 = vpop.permute.xlu0 %2399
      %2401 = vrot.lane.b32.xlu0 %v2193, 127
      %v2402 = vpop.permute.xlu0 %2401
      %2403 = vrot.lane.b32.xlu0 %v2188, 127
      %v2404 = vpop.permute.xlu0 %2403
      %2405 = vrot.lane.b32.xlu0 %v2190, 127
      %v2406 = vpop.permute.xlu0 %2405
      %2407 = vrot.lane.b32.xlu0 %v2192, 127
      %v2408 = vpop.permute.xlu0 %2407
      %2409 = vrot.lane.b32.xlu0 %v2194, 127
      %v2410 = vpop.permute.xlu0 %2409
      %v2411 = vsel %vm681, %v2396, %v2404
      %v2412 = vsel %vm681, %v2398, %v2406
      %v2413 = vsel %vm681, %v2400, %v2408
      %v2414 = vsel %vm681, %v2402, %v2410
      %v2415 = vsel %vm681, %v2404, %v2396
      %v2416 = vsel %vm681, %v2406, %v2398
      %v2417 = vsel %vm681, %v2408, %v2400
      %v2418 = vsel %vm681, %v2410, %v2402
      %v2419 = vld [vmem:[%s690] ss:$8 sm:$0x3]
      %v2421 = vperm.slane %v2419, 0
      %v2422 = vperm.slane %v2419, 1
      %v2425 = vmul.f32 %v2411, %v2421
      %v2426 = vmul.f32 %v2415, %v2422
      %v2427 = vmul.f32 %v2412, %v2421
      %v2428 = vmul.f32 %v2416, %v2422
      %v2429 = vmul.f32 %v2413, %v2421
      %v2430 = vmul.f32 %v2417, %v2422
      %v2431 = vmul.f32 %v2414, %v2421
      %v2432 = vmul.f32 %v2418, %v2422
      %2433 = vst [vmem:[#allocation3 + $0x5c0] sm:$0xff] %v2425
      %2434 = vst [vmem:[#allocation3 + $0x5c8] sm:$0xff] %v2426
      %2435 = vst [vmem:[#allocation3 + $0x5d0] sm:$0xff] %v2427
      %2436 = vst [vmem:[#allocation3 + $0x5d8] sm:$0xff] %v2428
      %2437 = vst [vmem:[#allocation3 + $0x5e0] sm:$0xff] %v2429
      %2438 = vst [vmem:[#allocation3 + $0x5e8] sm:$0xff] %v2430
      %2439 = vst [vmem:[#allocation3 + $0x5f0] sm:$0xff] %v2431
      %2440 = vst [vmem:[#allocation3 + $0x5f8] sm:$0xff] %v2432
      %2441 = vrot.lane.b32.xlu0 %v2187, 113
      %v2442 = vpop.permute.xlu0 %2441
      %2443 = vrot.lane.b32.xlu0 %v2189, 113
      %v2444 = vpop.permute.xlu0 %2443
      %2445 = vrot.lane.b32.xlu0 %v2191, 113
      %v2446 = vpop.permute.xlu0 %2445
      %2447 = vrot.lane.b32.xlu0 %v2193, 113
      %v2448 = vpop.permute.xlu0 %2447
      %2449 = vrot.lane.b32.xlu0 %v2188, 113
      %v2450 = vpop.permute.xlu0 %2449
      %2451 = vrot.lane.b32.xlu0 %v2190, 113
      %v2452 = vpop.permute.xlu0 %2451
      %2453 = vrot.lane.b32.xlu0 %v2192, 113
      %v2454 = vpop.permute.xlu0 %2453
      %2455 = vrot.lane.b32.xlu0 %v2194, 113
      %v2456 = vpop.permute.xlu0 %2455
      %v2457 = vsel %vm729, %v2442, %v2450
      %v2458 = vsel %vm729, %v2444, %v2452
      %v2459 = vsel %vm729, %v2446, %v2454
      %v2460 = vsel %vm729, %v2448, %v2456
      %v2461 = vsel %vm729, %v2450, %v2442
      %v2462 = vsel %vm729, %v2452, %v2444
      %v2463 = vsel %vm729, %v2454, %v2446
      %v2464 = vsel %vm729, %v2456, %v2448
      %v2465 = vld [vmem:[%s738] ss:$8 sm:$0x3]
      %v2467 = vperm.slane %v2465, 0
      %v2468 = vperm.slane %v2465, 1
      %v2471 = vmul.f32 %v2457, %v2467
      %v2472 = vmul.f32 %v2461, %v2468
      %v2473 = vmul.f32 %v2458, %v2467
      %v2474 = vmul.f32 %v2462, %v2468
      %v2475 = vmul.f32 %v2459, %v2467
      %v2476 = vmul.f32 %v2463, %v2468
      %v2477 = vmul.f32 %v2460, %v2467
      %v2478 = vmul.f32 %v2464, %v2468
      %2479 = vst [vmem:[#allocation3 + $0x600] sm:$0xff] %v2471
      %2480 = vst [vmem:[#allocation3 + $0x608] sm:$0xff] %v2472
      %2481 = vst [vmem:[#allocation3 + $0x610] sm:$0xff] %v2473
      %2482 = vst [vmem:[#allocation3 + $0x618] sm:$0xff] %v2474
      %2483 = vst [vmem:[#allocation3 + $0x620] sm:$0xff] %v2475
      %2484 = vst [vmem:[#allocation3 + $0x628] sm:$0xff] %v2476
      %2485 = vst [vmem:[#allocation3 + $0x630] sm:$0xff] %v2477
      %2486 = vst [vmem:[#allocation3 + $0x638] sm:$0xff] %v2478
      %2487 = vrot.lane.b32.xlu0 %v2187, 112
      %v2488 = vpop.permute.xlu0 %2487
      %2489 = vrot.lane.b32.xlu0 %v2189, 112
      %v2490 = vpop.permute.xlu0 %2489
      %2491 = vrot.lane.b32.xlu0 %v2191, 112
      %v2492 = vpop.permute.xlu0 %2491
      %2493 = vrot.lane.b32.xlu0 %v2193, 112
      %v2494 = vpop.permute.xlu0 %2493
      %2495 = vrot.lane.b32.xlu0 %v2188, 112
      %v2496 = vpop.permute.xlu0 %2495
      %2497 = vrot.lane.b32.xlu0 %v2190, 112
      %v2498 = vpop.permute.xlu0 %2497
      %2499 = vrot.lane.b32.xlu0 %v2192, 112
      %v2500 = vpop.permute.xlu0 %2499
      %2501 = vrot.lane.b32.xlu0 %v2194, 112
      %v2502 = vpop.permute.xlu0 %2501
      %v2503 = vsel %vm777, %v2488, %v2496
      %v2504 = vsel %vm777, %v2490, %v2498
      %v2505 = vsel %vm777, %v2492, %v2500
      %v2506 = vsel %vm777, %v2494, %v2502
      %v2507 = vsel %vm777, %v2496, %v2488
      %v2508 = vsel %vm777, %v2498, %v2490
      %v2509 = vsel %vm777, %v2500, %v2492
      %v2510 = vsel %vm777, %v2502, %v2494
      %v2511 = vld [vmem:[%s786] ss:$8 sm:$0x3]
      %v2513 = vperm.slane %v2511, 0
      %v2514 = vperm.slane %v2511, 1
      %v2517 = vmul.f32 %v2503, %v2513
      %v2518 = vmul.f32 %v2507, %v2514
      %v2519 = vmul.f32 %v2504, %v2513
      %v2520 = vmul.f32 %v2508, %v2514
      %v2521 = vmul.f32 %v2505, %v2513
      %v2522 = vmul.f32 %v2509, %v2514
      %v2523 = vmul.f32 %v2506, %v2513
      %v2524 = vmul.f32 %v2510, %v2514
      %2525 = vst [vmem:[#allocation3 + $0x640] sm:$0xff] %v2517
      %2526 = vst [vmem:[#allocation3 + $0x648] sm:$0xff] %v2518
      %2527 = vst [vmem:[#allocation3 + $0x650] sm:$0xff] %v2519
      %2528 = vst [vmem:[#allocation3 + $0x658] sm:$0xff] %v2520
      %2529 = vst [vmem:[#allocation3 + $0x660] sm:$0xff] %v2521
      %2530 = vst [vmem:[#allocation3 + $0x668] sm:$0xff] %v2522
      %2531 = vst [vmem:[#allocation3 + $0x670] sm:$0xff] %v2523
      %2532 = vst [vmem:[#allocation3 + $0x678] sm:$0xff] %v2524
      %2533 = vrot.lane.b32.xlu0 %v2187, 111
      %v2534 = vpop.permute.xlu0 %2533
      %2535 = vrot.lane.b32.xlu0 %v2189, 111
      %v2536 = vpop.permute.xlu0 %2535
      %2537 = vrot.lane.b32.xlu0 %v2191, 111
      %v2538 = vpop.permute.xlu0 %2537
      %2539 = vrot.lane.b32.xlu0 %v2193, 111
      %v2540 = vpop.permute.xlu0 %2539
      %2541 = vrot.lane.b32.xlu0 %v2188, 111
      %v2542 = vpop.permute.xlu0 %2541
      %2543 = vrot.lane.b32.xlu0 %v2190, 111
      %v2544 = vpop.permute.xlu0 %2543
      %2545 = vrot.lane.b32.xlu0 %v2192, 111
      %v2546 = vpop.permute.xlu0 %2545
      %2547 = vrot.lane.b32.xlu0 %v2194, 111
      %v2548 = vpop.permute.xlu0 %2547
      %v2549 = vsel %vm825, %v2534, %v2542
      %v2550 = vsel %vm825, %v2536, %v2544
      %v2551 = vsel %vm825, %v2538, %v2546
      %v2552 = vsel %vm825, %v2540, %v2548
      %v2553 = vsel %vm825, %v2542, %v2534
      %v2554 = vsel %vm825, %v2544, %v2536
      %v2555 = vsel %vm825, %v2546, %v2538
      %v2556 = vsel %vm825, %v2548, %v2540
      %v2557 = vld [vmem:[%s834] ss:$8 sm:$0x3]
      %v2559 = vperm.slane %v2557, 0
      %v2560 = vperm.slane %v2557, 1
      %v2563 = vmul.f32 %v2549, %v2559
      %v2564 = vmul.f32 %v2553, %v2560
      %v2565 = vmul.f32 %v2550, %v2559
      %v2566 = vmul.f32 %v2554, %v2560
      %v2567 = vmul.f32 %v2551, %v2559
      %v2568 = vmul.f32 %v2555, %v2560
      %v2569 = vmul.f32 %v2552, %v2559
      %v2570 = vmul.f32 %v2556, %v2560
      %2571 = vst [vmem:[#allocation3 + $0x680] sm:$0xff] %v2563
      %2572 = vst [vmem:[#allocation3 + $0x688] sm:$0xff] %v2564
      %2573 = vst [vmem:[#allocation3 + $0x690] sm:$0xff] %v2565
      %2574 = vst [vmem:[#allocation3 + $0x698] sm:$0xff] %v2566
      %2575 = vst [vmem:[#allocation3 + $0x6a0] sm:$0xff] %v2567
      %2576 = vst [vmem:[#allocation3 + $0x6a8] sm:$0xff] %v2568
      %2577 = vst [vmem:[#allocation3 + $0x6b0] sm:$0xff] %v2569
      %2578 = vst [vmem:[#allocation3 + $0x6b8] sm:$0xff] %v2570
      %v2579 = vld [vmem:[%s4] sm:$0xff]
      %v2580 = vld [vmem:[%s4 + $0x8] sm:$0xff]
      %v2581 = vld [vmem:[%s4 + $0x10] sm:$0xff]
      %v2582 = vld [vmem:[%s4 + $0x18] sm:$0xff]
      %v2583 = vld [vmem:[%s4 + $0x20] sm:$0xff]
      %v2584 = vld [vmem:[%s4 + $0x28] sm:$0xff]
      %v2585 = vld [vmem:[%s4 + $0x30] sm:$0xff]
      %v2586 = vld [vmem:[%s4 + $0x38] sm:$0xff]
      %v2587 = vld [vmem:[%s4 + $0x40] sm:$0xff]
      %v2588 = vld [vmem:[%s4 + $0x48] sm:$0xff]
      %v2589 = vld [vmem:[%s4 + $0x50] sm:$0xff]
      %v2590 = vld [vmem:[%s4 + $0x58] sm:$0xff]
      %v2591 = vld [vmem:[%s4 + $0x60] sm:$0xff]
      %v2592 = vld [vmem:[%s4 + $0x68] sm:$0xff]
      %v2593 = vld [vmem:[%s4 + $0x70] sm:$0xff]
      %v2594 = vld [vmem:[%s4 + $0x78] sm:$0xff]
      %v2595 = vld [vmem:[%s4 + $0x80] sm:$0xff]
      %v2596 = vld [vmem:[%s4 + $0x88] sm:$0xff]
      %v2597 = vld [vmem:[%s4 + $0x90] sm:$0xff]
      %v2598 = vld [vmem:[%s4 + $0x98] sm:$0xff]
      %v2599 = vld [vmem:[%s4 + $0xa0] sm:$0xff]
      %v2600 = vld [vmem:[%s4 + $0xa8] sm:$0xff]
      %v2601 = vld [vmem:[%s4 + $0xb0] sm:$0xff]
      %v2602 = vld [vmem:[%s4 + $0xb8] sm:$0xff]
      %v2603 = vld [vmem:[%s4 + $0xc0] sm:$0xff]
      %v2604 = vld [vmem:[%s4 + $0xc8] sm:$0xff]
      %v2605 = vld [vmem:[%s4 + $0xd0] sm:$0xff]
      %v2606 = vld [vmem:[%s4 + $0xd8] sm:$0xff]
      %v2607 = vld [vmem:[#allocation3] sm:$0xff]
      %v2608 = vld [vmem:[#allocation3 + $0x8] sm:$0xff]
      %v2609 = vld [vmem:[#allocation3 + $0x10] sm:$0xff]
      %v2610 = vld [vmem:[#allocation3 + $0x18] sm:$0xff]
      %v2611 = vld [vmem:[#allocation3 + $0x20] sm:$0xff]
      %v2612 = vld [vmem:[#allocation3 + $0x28] sm:$0xff]
      %v2613 = vld [vmem:[#allocation3 + $0x30] sm:$0xff]
      %v2614 = vld [vmem:[#allocation3 + $0x38] sm:$0xff]
      %v2615 = vld [vmem:[#allocation3 + $0x40] sm:$0xff]
      %v2616 = vld [vmem:[#allocation3 + $0x48] sm:$0xff]
      %v2617 = vld [vmem:[#allocation3 + $0x50] sm:$0xff]
      %v2618 = vld [vmem:[#allocation3 + $0x58] sm:$0xff]
      %v2619 = vld [vmem:[#allocation3 + $0x60] sm:$0xff]
      %v2620 = vld [vmem:[#allocation3 + $0x68] sm:$0xff]
      %v2621 = vld [vmem:[#allocation3 + $0x70] sm:$0xff]
      %v2622 = vld [vmem:[#allocation3 + $0x78] sm:$0xff]
      %v2623 = vld [vmem:[#allocation3 + $0x80] sm:$0xff]
      %v2624 = vld [vmem:[#allocation3 + $0x88] sm:$0xff]
      %v2625 = vld [vmem:[#allocation3 + $0x90] sm:$0xff]
      %v2626 = vld [vmem:[#allocation3 + $0x98] sm:$0xff]
      %v2627 = vld [vmem:[#allocation3 + $0xa0] sm:$0xff]
      %v2628 = vld [vmem:[#allocation3 + $0xa8] sm:$0xff]
      %v2629 = vld [vmem:[#allocation3 + $0xb0] sm:$0xff]
      %v2630 = vld [vmem:[#allocation3 + $0xb8] sm:$0xff]
      %v2631 = vld [vmem:[#allocation3 + $0xc0] sm:$0xff]
      %v2632 = vld [vmem:[#allocation3 + $0xc8] sm:$0xff]
      %v2633 = vld [vmem:[#allocation3 + $0xd0] sm:$0xff]
      %v2634 = vld [vmem:[#allocation3 + $0xd8] sm:$0xff]
      %v2635 = vld [vmem:[#allocation3 + $0xe0] sm:$0xff]
      %v2636 = vld [vmem:[#allocation3 + $0xe8] sm:$0xff]
      %v2637 = vld [vmem:[#allocation3 + $0xf0] sm:$0xff]
      %v2638 = vld [vmem:[#allocation3 + $0xf8] sm:$0xff]
      %v2639 = vld [vmem:[#allocation3 + $0x100] sm:$0xff]
      %v2640 = vld [vmem:[#allocation3 + $0x108] sm:$0xff]
      %v2641 = vld [vmem:[#allocation3 + $0x110] sm:$0xff]
      %v2642 = vld [vmem:[#allocation3 + $0x118] sm:$0xff]
      %v2643 = vld [vmem:[#allocation3 + $0x120] sm:$0xff]
      %v2644 = vld [vmem:[#allocation3 + $0x128] sm:$0xff]
      %v2645 = vld [vmem:[#allocation3 + $0x130] sm:$0xff]
      %v2646 = vld [vmem:[#allocation3 + $0x138] sm:$0xff]
      %v2647 = vld [vmem:[#allocation3 + $0x140] sm:$0xff]
      %v2648 = vld [vmem:[#allocation3 + $0x148] sm:$0xff]
      %v2649 = vld [vmem:[#allocation3 + $0x150] sm:$0xff]
      %v2650 = vld [vmem:[#allocation3 + $0x158] sm:$0xff]
      %v2651 = vld [vmem:[#allocation3 + $0x160] sm:$0xff]
      %v2652 = vld [vmem:[#allocation3 + $0x168] sm:$0xff]
      %v2653 = vld [vmem:[#allocation3 + $0x170] sm:$0xff]
      %v2654 = vld [vmem:[#allocation3 + $0x178] sm:$0xff]
      %v2655 = vld [vmem:[#allocation3 + $0x180] sm:$0xff]
      %v2656 = vld [vmem:[#allocation3 + $0x188] sm:$0xff]
      %v2657 = vld [vmem:[#allocation3 + $0x190] sm:$0xff]
      %v2658 = vld [vmem:[#allocation3 + $0x198] sm:$0xff]
      %v2659 = vld [vmem:[#allocation3 + $0x1a0] sm:$0xff]
      %v2660 = vld [vmem:[#allocation3 + $0x1a8] sm:$0xff]
      %v2661 = vld [vmem:[#allocation3 + $0x1b0] sm:$0xff]
      %v2662 = vld [vmem:[#allocation3 + $0x1b8] sm:$0xff]
      %v2663 = vld [vmem:[#allocation3 + $0x1c0] sm:$0xff]
      %v2664 = vld [vmem:[#allocation3 + $0x1c8] sm:$0xff]
      %v2665 = vld [vmem:[#allocation3 + $0x1d0] sm:$0xff]
      %v2666 = vld [vmem:[#allocation3 + $0x1d8] sm:$0xff]
      %v2667 = vld [vmem:[#allocation3 + $0x1e0] sm:$0xff]
      %v2668 = vld [vmem:[#allocation3 + $0x1e8] sm:$0xff]
      %v2669 = vld [vmem:[#allocation3 + $0x1f0] sm:$0xff]
      %v2670 = vld [vmem:[#allocation3 + $0x1f8] sm:$0xff]
      %v2671 = vld [vmem:[#allocation3 + $0x200] sm:$0xff]
      %v2672 = vld [vmem:[#allocation3 + $0x208] sm:$0xff]
      %v2673 = vld [vmem:[#allocation3 + $0x210] sm:$0xff]
      %v2674 = vld [vmem:[#allocation3 + $0x218] sm:$0xff]
      %v2675 = vld [vmem:[#allocation3 + $0x220] sm:$0xff]
      %v2676 = vld [vmem:[#allocation3 + $0x228] sm:$0xff]
      %v2677 = vld [vmem:[#allocation3 + $0x230] sm:$0xff]
      %v2678 = vld [vmem:[#allocation3 + $0x238] sm:$0xff]
      %v2679 = vld [vmem:[#allocation3 + $0x240] sm:$0xff]
      %v2680 = vld [vmem:[#allocation3 + $0x248] sm:$0xff]
      %v2681 = vld [vmem:[#allocation3 + $0x250] sm:$0xff]
      %v2682 = vld [vmem:[#allocation3 + $0x258] sm:$0xff]
      %v2683 = vld [vmem:[#allocation3 + $0x260] sm:$0xff]
      %v2684 = vld [vmem:[#allocation3 + $0x268] sm:$0xff]
      %v2685 = vld [vmem:[#allocation3 + $0x270] sm:$0xff]
      %v2686 = vld [vmem:[#allocation3 + $0x278] sm:$0xff]
      %v2687 = vld [vmem:[#allocation3 + $0x280] sm:$0xff]
      %v2688 = vld [vmem:[#allocation3 + $0x288] sm:$0xff]
      %v2689 = vld [vmem:[#allocation3 + $0x290] sm:$0xff]
      %v2690 = vld [vmem:[#allocation3 + $0x298] sm:$0xff]
      %v2691 = vld [vmem:[#allocation3 + $0x2a0] sm:$0xff]
      %v2692 = vld [vmem:[#allocation3 + $0x2a8] sm:$0xff]
      %v2693 = vld [vmem:[#allocation3 + $0x2b0] sm:$0xff]
      %v2694 = vld [vmem:[#allocation3 + $0x2b8] sm:$0xff]
      %v2695 = vld [vmem:[#allocation3 + $0x2c0] sm:$0xff]
      %v2696 = vld [vmem:[#allocation3 + $0x2c8] sm:$0xff]
      %v2697 = vld [vmem:[#allocation3 + $0x2d0] sm:$0xff]
      %v2698 = vld [vmem:[#allocation3 + $0x2d8] sm:$0xff]
      %v2699 = vld [vmem:[#allocation3 + $0x2e0] sm:$0xff]
      %v2700 = vld [vmem:[#allocation3 + $0x2e8] sm:$0xff]
      %v2701 = vld [vmem:[#allocation3 + $0x2f0] sm:$0xff]
      %v2702 = vld [vmem:[#allocation3 + $0x2f8] sm:$0xff]
      %v2703 = vld [vmem:[#allocation3 + $0x300] sm:$0xff]
      %v2704 = vld [vmem:[#allocation3 + $0x308] sm:$0xff]
      %v2705 = vld [vmem:[#allocation3 + $0x310] sm:$0xff]
      %v2706 = vld [vmem:[#allocation3 + $0x318] sm:$0xff]
      %v2707 = vld [vmem:[#allocation3 + $0x320] sm:$0xff]
      %v2708 = vld [vmem:[#allocation3 + $0x328] sm:$0xff]
      %v2709 = vld [vmem:[#allocation3 + $0x330] sm:$0xff]
      %v2710 = vld [vmem:[#allocation3 + $0x338] sm:$0xff]
      %v2711 = vld [vmem:[#allocation3 + $0x340] sm:$0xff]
      %v2712 = vld [vmem:[#allocation3 + $0x348] sm:$0xff]
      %v2713 = vld [vmem:[#allocation3 + $0x350] sm:$0xff]
      %v2714 = vld [vmem:[#allocation3 + $0x358] sm:$0xff]
      %v2715 = vld [vmem:[#allocation3 + $0x360] sm:$0xff]
      %v2716 = vld [vmem:[#allocation3 + $0x368] sm:$0xff]
      %v2717 = vld [vmem:[#allocation3 + $0x370] sm:$0xff]
      %v2718 = vld [vmem:[#allocation3 + $0x378] sm:$0xff]
      %v2719 = vld [vmem:[#allocation3 + $0x380] sm:$0xff]
      %v2720 = vld [vmem:[#allocation3 + $0x388] sm:$0xff]
      %v2721 = vld [vmem:[#allocation3 + $0x390] sm:$0xff]
      %v2722 = vld [vmem:[#allocation3 + $0x398] sm:$0xff]
      %v2723 = vld [vmem:[#allocation3 + $0x3a0] sm:$0xff]
      %v2724 = vld [vmem:[#allocation3 + $0x3a8] sm:$0xff]
      %v2725 = vld [vmem:[#allocation3 + $0x3b0] sm:$0xff]
      %v2726 = vld [vmem:[#allocation3 + $0x3b8] sm:$0xff]
      %v2727 = vld [vmem:[#allocation3 + $0x3c0] sm:$0xff]
      %v2728 = vld [vmem:[#allocation3 + $0x3c8] sm:$0xff]
      %v2729 = vld [vmem:[#allocation3 + $0x3d0] sm:$0xff]
      %v2730 = vld [vmem:[#allocation3 + $0x3d8] sm:$0xff]
      %v2731 = vld [vmem:[#allocation3 + $0x3e0] sm:$0xff]
      %v2732 = vld [vmem:[#allocation3 + $0x3e8] sm:$0xff]
      %v2733 = vld [vmem:[#allocation3 + $0x3f0] sm:$0xff]
      %v2734 = vld [vmem:[#allocation3 + $0x3f8] sm:$0xff]
      %v2735 = vld [vmem:[#allocation3 + $0x400] sm:$0xff]
      %v2736 = vld [vmem:[#allocation3 + $0x408] sm:$0xff]
      %v2737 = vld [vmem:[#allocation3 + $0x410] sm:$0xff]
      %v2738 = vld [vmem:[#allocation3 + $0x418] sm:$0xff]
      %v2739 = vld [vmem:[#allocation3 + $0x420] sm:$0xff]
      %v2740 = vld [vmem:[#allocation3 + $0x428] sm:$0xff]
      %v2741 = vld [vmem:[#allocation3 + $0x430] sm:$0xff]
      %v2742 = vld [vmem:[#allocation3 + $0x438] sm:$0xff]
      %v2743 = vld [vmem:[#allocation3 + $0x440] sm:$0xff]
      %v2744 = vld [vmem:[#allocation3 + $0x448] sm:$0xff]
      %v2745 = vld [vmem:[#allocation3 + $0x450] sm:$0xff]
      %v2746 = vld [vmem:[#allocation3 + $0x458] sm:$0xff]
      %v2747 = vld [vmem:[#allocation3 + $0x460] sm:$0xff]
      %v2748 = vld [vmem:[#allocation3 + $0x468] sm:$0xff]
      %v2749 = vld [vmem:[#allocation3 + $0x470] sm:$0xff]
      %v2750 = vld [vmem:[#allocation3 + $0x478] sm:$0xff]
      %v2751 = vld [vmem:[#allocation3 + $0x480] sm:$0xff]
      %v2752 = vld [vmem:[#allocation3 + $0x488] sm:$0xff]
      %v2753 = vld [vmem:[#allocation3 + $0x490] sm:$0xff]
      %v2754 = vld [vmem:[#allocation3 + $0x498] sm:$0xff]
      %v2755 = vld [vmem:[#allocation3 + $0x4a0] sm:$0xff]
      %v2756 = vld [vmem:[#allocation3 + $0x4a8] sm:$0xff]
      %v2757 = vld [vmem:[#allocation3 + $0x4b0] sm:$0xff]
      %v2758 = vld [vmem:[#allocation3 + $0x4b8] sm:$0xff]
      %v2759 = vld [vmem:[#allocation3 + $0x4c0] sm:$0xff]
      %v2760 = vld [vmem:[#allocation3 + $0x4c8] sm:$0xff]
      %v2761 = vld [vmem:[#allocation3 + $0x4d0] sm:$0xff]
      %v2762 = vld [vmem:[#allocation3 + $0x4d8] sm:$0xff]
      %v2763 = vld [vmem:[#allocation3 + $0x4e0] sm:$0xff]
      %v2764 = vld [vmem:[#allocation3 + $0x4e8] sm:$0xff]
      %v2765 = vld [vmem:[#allocation3 + $0x4f0] sm:$0xff]
      %v2766 = vld [vmem:[#allocation3 + $0x4f8] sm:$0xff]
      %v2767 = vld [vmem:[#allocation3 + $0x500] sm:$0xff]
      %v2768 = vld [vmem:[#allocation3 + $0x508] sm:$0xff]
      %v2769 = vld [vmem:[#allocation3 + $0x510] sm:$0xff]
      %v2770 = vld [vmem:[#allocation3 + $0x518] sm:$0xff]
      %v2771 = vld [vmem:[#allocation3 + $0x520] sm:$0xff]
      %v2772 = vld [vmem:[#allocation3 + $0x528] sm:$0xff]
      %v2773 = vld [vmem:[#allocation3 + $0x530] sm:$0xff]
      %v2774 = vld [vmem:[#allocation3 + $0x538] sm:$0xff]
      %v2775 = vld [vmem:[#allocation3 + $0x540] sm:$0xff]
      %v2776 = vld [vmem:[#allocation3 + $0x548] sm:$0xff]
      %v2777 = vld [vmem:[#allocation3 + $0x550] sm:$0xff]
      %v2778 = vld [vmem:[#allocation3 + $0x558] sm:$0xff]
      %v2779 = vld [vmem:[#allocation3 + $0x560] sm:$0xff]
      %v2780 = vld [vmem:[#allocation3 + $0x568] sm:$0xff]
      %v2781 = vld [vmem:[#allocation3 + $0x570] sm:$0xff]
      %v2782 = vld [vmem:[#allocation3 + $0x578] sm:$0xff]
      %v2783 = vld [vmem:[#allocation3 + $0x580] sm:$0xff]
      %v2784 = vld [vmem:[#allocation3 + $0x588] sm:$0xff]
      %v2785 = vld [vmem:[#allocation3 + $0x590] sm:$0xff]
      %v2786 = vld [vmem:[#allocation3 + $0x598] sm:$0xff]
      %v2787 = vld [vmem:[#allocation3 + $0x5a0] sm:$0xff]
      %v2788 = vld [vmem:[#allocation3 + $0x5a8] sm:$0xff]
      %v2789 = vld [vmem:[#allocation3 + $0x5b0] sm:$0xff]
      %v2790 = vld [vmem:[#allocation3 + $0x5b8] sm:$0xff]
      %v2791 = vld [vmem:[#allocation3 + $0x5c0] sm:$0xff]
      %v2792 = vld [vmem:[#allocation3 + $0x5c8] sm:$0xff]
      %v2793 = vld [vmem:[#allocation3 + $0x5d0] sm:$0xff]
      %v2794 = vld [vmem:[#allocation3 + $0x5d8] sm:$0xff]
      %v2795 = vld [vmem:[#allocation3 + $0x5e0] sm:$0xff]
      %v2796 = vld [vmem:[#allocation3 + $0x5e8] sm:$0xff]
      %v2797 = vld [vmem:[#allocation3 + $0x5f0] sm:$0xff]
      %v2798 = vld [vmem:[#allocation3 + $0x5f8] sm:$0xff]
      %v2799 = vld [vmem:[#allocation3 + $0x600] sm:$0xff]
      %v2800 = vld [vmem:[#allocation3 + $0x608] sm:$0xff]
      %v2801 = vld [vmem:[#allocation3 + $0x610] sm:$0xff]
      %v2802 = vld [vmem:[#allocation3 + $0x618] sm:$0xff]
      %v2803 = vld [vmem:[#allocation3 + $0x620] sm:$0xff]
      %v2804 = vld [vmem:[#allocation3 + $0x628] sm:$0xff]
      %v2805 = vld [vmem:[#allocation3 + $0x630] sm:$0xff]
      %v2806 = vld [vmem:[#allocation3 + $0x638] sm:$0xff]
      %v2807 = vld [vmem:[#allocation3 + $0x640] sm:$0xff]
      %v2808 = vld [vmem:[#allocation3 + $0x648] sm:$0xff]
      %v2809 = vld [vmem:[#allocation3 + $0x650] sm:$0xff]
      %v2810 = vld [vmem:[#allocation3 + $0x658] sm:$0xff]
      %v2811 = vld [vmem:[#allocation3 + $0x660] sm:$0xff]
      %v2812 = vld [vmem:[#allocation3 + $0x668] sm:$0xff]
      %v2813 = vld [vmem:[#allocation3 + $0x670] sm:$0xff]
      %v2814 = vld [vmem:[#allocation3 + $0x678] sm:$0xff]
      %v2815 = vld [vmem:[#allocation3 + $0x680] sm:$0xff]
      %v2816 = vld [vmem:[#allocation3 + $0x688] sm:$0xff]
      %v2817 = vld [vmem:[#allocation3 + $0x690] sm:$0xff]
      %v2818 = vld [vmem:[#allocation3 + $0x698] sm:$0xff]
      %v2819 = vld [vmem:[#allocation3 + $0x6a0] sm:$0xff]
      %v2820 = vld [vmem:[#allocation3 + $0x6a8] sm:$0xff]
      %v2821 = vld [vmem:[#allocation3 + $0x6b0] sm:$0xff]
      %v2822 = vld [vmem:[#allocation3 + $0x6b8] sm:$0xff]
      %vm2823 = vcmask 785408
      %v2825 = vsel %vm2823, %v2585, 0
      %v2828 = vsel %vm2823, %v2592, 0
      %v2831 = vsel %vm2823, %v2599, 0
      %v2834 = vsel %vm2823, %v2606, 0
      %2836 = vmatpush.msra.mxu0 %v2637
      %2837 = vmatpush.msra.mxu0 %v2635
      %2838 = vmatpush.msra.mxu0 %v2633
      %2839 = vmatpush.msra.mxu0 %v2631
      %2840 = vmatpush.msra.mxu0 %v2629
      %2841 = vmatpush.msra.mxu0 %v2627
      %2842 = vmatpush.msra.mxu0 %v2625
      %2843 = vmatpush.msra.mxu0 %v2623
      %2844 = vmatpush.msra.mxu0 %v2621
      %2845 = vmatpush.msra.mxu0 %v2619
      %2846 = vmatpush.msra.mxu0 %v2617
      %2847 = vmatpush.msra.mxu0 %v2615
      %2848 = vmatpush.msra.mxu0 %v2613
      %2849 = vmatpush.msra.mxu0 %v2611
      %2850 = vmatpush.msra.mxu0 %v2609
      %2851 = vmatpush.msra.mxu0 %v2607
      %2852 = vmatmul.f32.gmra.mxu0 %v2579
      %v2853 = vpop.f32.mrf.mxu0
      %v2854 = vadd.f32 0.0, %v2853
      %2855 = vmatmul.f32.gmra.mxu0 %v2586
      %v2856 = vpop.f32.mrf.mxu0
      %v2857 = vadd.f32 0.0, %v2856
      %2858 = vmatmul.f32.gmra.mxu0 %v2593
      %v2859 = vpop.f32.mrf.mxu0
      %v2860 = vadd.f32 0.0, %v2859
      %2861 = vmatmul.f32.gmra.mxu0 %v2600
      %v2862 = vpop.f32.mrf.mxu0
      %v2863 = vadd.f32 0.0, %v2862
      %2864 = vdwg.mxu0
      %2865 = vmatpush.msra.mxu0 %v2669
      %2866 = vmatpush.msra.mxu0 %v2667
      %2867 = vmatpush.msra.mxu0 %v2665
      %2868 = vmatpush.msra.mxu0 %v2663
      %2869 = vmatpush.msra.mxu0 %v2661
      %2870 = vmatpush.msra.mxu0 %v2659
      %2871 = vmatpush.msra.mxu0 %v2657
      %2872 = vmatpush.msra.mxu0 %v2655
      %2873 = vmatpush.msra.mxu0 %v2653
      %2874 = vmatpush.msra.mxu0 %v2651
      %2875 = vmatpush.msra.mxu0 %v2649
      %2876 = vmatpush.msra.mxu0 %v2647
      %2877 = vmatpush.msra.mxu0 %v2645
      %2878 = vmatpush.msra.mxu0 %v2643
      %2879 = vmatpush.msra.mxu0 %v2641
      %2880 = vmatpush.msra.mxu0 %v2639
      %2881 = vmatmul.f32.gmra.mxu0 %v2580
      %v2882 = vpop.f32.mrf.mxu0
      %v2883 = vadd.f32 %v2854, %v2882
      %2884 = vmatmul.f32.gmra.mxu0 %v2587
      %v2885 = vpop.f32.mrf.mxu0
      %v2886 = vadd.f32 %v2857, %v2885
      %2887 = vmatmul.f32.gmra.mxu0 %v2594
      %v2888 = vpop.f32.mrf.mxu0
      %v2889 = vadd.f32 %v2860, %v2888
      %2890 = vmatmul.f32.gmra.mxu0 %v2601
      %v2891 = vpop.f32.mrf.mxu0
      %v2892 = vadd.f32 %v2863, %v2891
      %2893 = vdwg.mxu0
      %2894 = vmatpush.msra.mxu0 %v2701
      %2895 = vmatpush.msra.mxu0 %v2699
      %2896 = vmatpush.msra.mxu0 %v2697
      %2897 = vmatpush.msra.mxu0 %v2695
      %2898 = vmatpush.msra.mxu0 %v2693
      %2899 = vmatpush.msra.mxu0 %v2691
      %2900 = vmatpush.msra.mxu0 %v2689
      %2901 = vmatpush.msra.mxu0 %v2687
      %2902 = vmatpush.msra.mxu0 %v2685
      %2903 = vmatpush.msra.mxu0 %v2683
      %2904 = vmatpush.msra.mxu0 %v2681
      %2905 = vmatpush.msra.mxu0 %v2679
      %2906 = vmatpush.msra.mxu0 %v2677
      %2907 = vmatpush.msra.mxu0 %v2675
      %2908 = vmatpush.msra.mxu0 %v2673
      %2909 = vmatpush.msra.mxu0 %v2671
      %2910 = vmatmul.f32.gmra.mxu0 %v2581
      %v2911 = vpop.f32.mrf.mxu0
      %v2912 = vadd.f32 %v2883, %v2911
      %2913 = vmatmul.f32.gmra.mxu0 %v2588
      %v2914 = vpop.f32.mrf.mxu0
      %v2915 = vadd.f32 %v2886, %v2914
      %2916 = vmatmul.f32.gmra.mxu0 %v2595
      %v2917 = vpop.f32.mrf.mxu0
      %v2918 = vadd.f32 %v2889, %v2917
      %2919 = vmatmul.f32.gmra.mxu0 %v2602
      %v2920 = vpop.f32.mrf.mxu0
      %v2921 = vadd.f32 %v2892, %v2920
      %2922 = vdwg.mxu0
      %2923 = vmatpush.msra.mxu0 %v2733
      %2924 = vmatpush.msra.mxu0 %v2731
      %2925 = vmatpush.msra.mxu0 %v2729
      %2926 = vmatpush.msra.mxu0 %v2727
      %2927 = vmatpush.msra.mxu0 %v2725
      %2928 = vmatpush.msra.mxu0 %v2723
      %2929 = vmatpush.msra.mxu0 %v2721
      %2930 = vmatpush.msra.mxu0 %v2719
      %2931 = vmatpush.msra.mxu0 %v2717
      %2932 = vmatpush.msra.mxu0 %v2715
      %2933 = vmatpush.msra.mxu0 %v2713
      %2934 = vmatpush.msra.mxu0 %v2711
      %2935 = vmatpush.msra.mxu0 %v2709
      %2936 = vmatpush.msra.mxu0 %v2707
      %2937 = vmatpush.msra.mxu0 %v2705
      %2938 = vmatpush.msra.mxu0 %v2703
      %2939 = vmatmul.f32.gmra.mxu0 %v2582
      %v2940 = vpop.f32.mrf.mxu0
      %v2941 = vadd.f32 %v2912, %v2940
      %2942 = vmatmul.f32.gmra.mxu0 %v2589
      %v2943 = vpop.f32.mrf.mxu0
      %v2944 = vadd.f32 %v2915, %v2943
      %2945 = vmatmul.f32.gmra.mxu0 %v2596
      %v2946 = vpop.f32.mrf.mxu0
      %v2947 = vadd.f32 %v2918, %v2946
      %2948 = vmatmul.f32.gmra.mxu0 %v2603
      %v2949 = vpop.f32.mrf.mxu0
      %v2950 = vadd.f32 %v2921, %v2949
      %2951 = vdwg.mxu0
      %2952 = vmatpush.msra.mxu0 %v2765
      %2953 = vmatpush.msra.mxu0 %v2763
      %2954 = vmatpush.msra.mxu0 %v2761
      %2955 = vmatpush.msra.mxu0 %v2759
      %2956 = vmatpush.msra.mxu0 %v2757
      %2957 = vmatpush.msra.mxu0 %v2755
      %2958 = vmatpush.msra.mxu0 %v2753
      %2959 = vmatpush.msra.mxu0 %v2751
      %2960 = vmatpush.msra.mxu0 %v2749
      %2961 = vmatpush.msra.mxu0 %v2747
      %2962 = vmatpush.msra.mxu0 %v2745
      %2963 = vmatpush.msra.mxu0 %v2743
      %2964 = vmatpush.msra.mxu0 %v2741
      %2965 = vmatpush.msra.mxu0 %v2739
      %2966 = vmatpush.msra.mxu0 %v2737
      %2967 = vmatpush.msra.mxu0 %v2735
      %2968 = vmatmul.f32.gmra.mxu0 %v2583
      %v2969 = vpop.f32.mrf.mxu0
      %v2970 = vadd.f32 %v2941, %v2969
      %2971 = vmatmul.f32.gmra.mxu0 %v2590
      %v2972 = vpop.f32.mrf.mxu0
      %v2973 = vadd.f32 %v2944, %v2972
      %2974 = vmatmul.f32.gmra.mxu0 %v2597
      %v2975 = vpop.f32.mrf.mxu0
      %v2976 = vadd.f32 %v2947, %v2975
      %2977 = vmatmul.f32.gmra.mxu0 %v2604
      %v2978 = vpop.f32.mrf.mxu0
      %v2979 = vadd.f32 %v2950, %v2978
      %2980 = vdwg.mxu0
      %2981 = vmatpush.msra.mxu0 %v2797
      %2982 = vmatpush.msra.mxu0 %v2795
      %2983 = vmatpush.msra.mxu0 %v2793
      %2984 = vmatpush.msra.mxu0 %v2791
      %2985 = vmatpush.msra.mxu0 %v2789
      %2986 = vmatpush.msra.mxu0 %v2787
      %2987 = vmatpush.msra.mxu0 %v2785
      %2988 = vmatpush.msra.mxu0 %v2783
      %2989 = vmatpush.msra.mxu0 %v2781
      %2990 = vmatpush.msra.mxu0 %v2779
      %2991 = vmatpush.msra.mxu0 %v2777
      %2992 = vmatpush.msra.mxu0 %v2775
      %2993 = vmatpush.msra.mxu0 %v2773
      %2994 = vmatpush.msra.mxu0 %v2771
      %2995 = vmatpush.msra.mxu0 %v2769
      %2996 = vmatpush.msra.mxu0 %v2767
      %2997 = vmatmul.f32.gmra.mxu0 %v2584
      %v2998 = vpop.f32.mrf.mxu0
      %v2999 = vadd.f32 %v2970, %v2998
      %3000 = vmatmul.f32.gmra.mxu0 %v2591
      %v3001 = vpop.f32.mrf.mxu0
      %v3002 = vadd.f32 %v2973, %v3001
      %3003 = vmatmul.f32.gmra.mxu0 %v2598
      %v3004 = vpop.f32.mrf.mxu0
      %v3005 = vadd.f32 %v2976, %v3004
      %3006 = vmatmul.f32.gmra.mxu0 %v2605
      %v3007 = vpop.f32.mrf.mxu0
      %v3008 = vadd.f32 %v2979, %v3007
      %3009 = vdwg.mxu0
      %3010 = vmatpush.msra.mxu0 0.0
      %3011 = vmatpush.msra.mxu0 0.0
      %3012 = vmatpush.msra.mxu0 0.0
      %3013 = vmatpush.msra.mxu0 0.0
      %3014 = vmatpush.msra.mxu0 %v2821
      %3015 = vmatpush.msra.mxu0 %v2819
      %3016 = vmatpush.msra.mxu0 %v2817
      %3017 = vmatpush.msra.mxu0 %v2815
      %3018 = vmatpush.msra.mxu0 %v2813
      %3019 = vmatpush.msra.mxu0 %v2811
      %3020 = vmatpush.msra.mxu0 %v2809
      %3021 = vmatpush.msra.mxu0 %v2807
      %3022 = vmatpush.msra.mxu0 %v2805
      %3023 = vmatpush.msra.mxu0 %v2803
      %3024 = vmatpush.msra.mxu0 %v2801
      %3025 = vmatpush.msra.mxu0 %v2799
      %3026 = vmatmul.f32.gmra.mxu0 %v2825
      %v3027 = vpop.f32.mrf.mxu0
      %v3028 = vadd.f32 %v2999, %v3027
      %3029 = vmatmul.f32.gmra.mxu0 %v2828
      %v3030 = vpop.f32.mrf.mxu0
      %v3031 = vadd.f32 %v3002, %v3030
      %3032 = vmatmul.f32.gmra.mxu0 %v2831
      %v3033 = vpop.f32.mrf.mxu0
      %v3034 = vadd.f32 %v3005, %v3033
      %3035 = vmatmul.f32.gmra.mxu0 %v2834
      %v3036 = vpop.f32.mrf.mxu0
      %v3037 = vadd.f32 %v3008, %v3036
      %3038 = vdwg.mxu0
      %3039 = vmatpush.msra.mxu0 %v2638
      %3040 = vmatpush.msra.mxu0 %v2636
      %3041 = vmatpush.msra.mxu0 %v2634
      %3042 = vmatpush.msra.mxu0 %v2632
      %3043 = vmatpush.msra.mxu0 %v2630
      %3044 = vmatpush.msra.mxu0 %v2628
      %3045 = vmatpush.msra.mxu0 %v2626
      %3046 = vmatpush.msra.mxu0 %v2624
      %3047 = vmatpush.msra.mxu0 %v2622
      %3048 = vmatpush.msra.mxu0 %v2620
      %3049 = vmatpush.msra.mxu0 %v2618
      %3050 = vmatpush.msra.mxu0 %v2616
      %3051 = vmatpush.msra.mxu0 %v2614
      %3052 = vmatpush.msra.mxu0 %v2612
      %3053 = vmatpush.msra.mxu0 %v2610
      %3054 = vmatpush.msra.mxu0 %v2608
      %3055 = vmatmul.f32.gmra.mxu0 %v2579
      %v3056 = vpop.f32.mrf.mxu0
      %v3057 = vadd.f32 0.0, %v3056
      %3058 = vmatmul.f32.gmra.mxu0 %v2586
      %v3059 = vpop.f32.mrf.mxu0
      %v3060 = vadd.f32 0.0, %v3059
      %3061 = vmatmul.f32.gmra.mxu0 %v2593
      %v3062 = vpop.f32.mrf.mxu0
      %v3063 = vadd.f32 0.0, %v3062
      %3064 = vmatmul.f32.gmra.mxu0 %v2600
      %v3065 = vpop.f32.mrf.mxu0
      %v3066 = vadd.f32 0.0, %v3065
      %3067 = vdwg.mxu0
      %3068 = vmatpush.msra.mxu0 %v2670
      %3069 = vmatpush.msra.mxu0 %v2668
      %3070 = vmatpush.msra.mxu0 %v2666
      %3071 = vmatpush.msra.mxu0 %v2664
      %3072 = vmatpush.msra.mxu0 %v2662
      %3073 = vmatpush.msra.mxu0 %v2660
      %3074 = vmatpush.msra.mxu0 %v2658
      %3075 = vmatpush.msra.mxu0 %v2656
      %3076 = vmatpush.msra.mxu0 %v2654
      %3077 = vmatpush.msra.mxu0 %v2652
      %3078 = vmatpush.msra.mxu0 %v2650
      %3079 = vmatpush.msra.mxu0 %v2648
      %3080 = vmatpush.msra.mxu0 %v2646
      %3081 = vmatpush.msra.mxu0 %v2644
      %3082 = vmatpush.msra.mxu0 %v2642
      %3083 = vmatpush.msra.mxu0 %v2640
      %3084 = vmatmul.f32.gmra.mxu0 %v2580
      %v3085 = vpop.f32.mrf.mxu0
      %v3086 = vadd.f32 %v3057, %v3085
      %3087 = vmatmul.f32.gmra.mxu0 %v2587
      %v3088 = vpop.f32.mrf.mxu0
      %v3089 = vadd.f32 %v3060, %v3088
      %3090 = vmatmul.f32.gmra.mxu0 %v2594
      %v3091 = vpop.f32.mrf.mxu0
      %v3092 = vadd.f32 %v3063, %v3091
      %3093 = vmatmul.f32.gmra.mxu0 %v2601
      %v3094 = vpop.f32.mrf.mxu0
      %v3095 = vadd.f32 %v3066, %v3094
      %3096 = vdwg.mxu0
      %3097 = vmatpush.msra.mxu0 %v2702
      %3098 = vmatpush.msra.mxu0 %v2700
      %3099 = vmatpush.msra.mxu0 %v2698
      %3100 = vmatpush.msra.mxu0 %v2696
      %3101 = vmatpush.msra.mxu0 %v2694
      %3102 = vmatpush.msra.mxu0 %v2692
      %3103 = vmatpush.msra.mxu0 %v2690
      %3104 = vmatpush.msra.mxu0 %v2688
      %3105 = vmatpush.msra.mxu0 %v2686
      %3106 = vmatpush.msra.mxu0 %v2684
      %3107 = vmatpush.msra.mxu0 %v2682
      %3108 = vmatpush.msra.mxu0 %v2680
      %3109 = vmatpush.msra.mxu0 %v2678
      %3110 = vmatpush.msra.mxu0 %v2676
      %3111 = vmatpush.msra.mxu0 %v2674
      %3112 = vmatpush.msra.mxu0 %v2672
      %3113 = vmatmul.f32.gmra.mxu0 %v2581
      %v3114 = vpop.f32.mrf.mxu0
      %v3115 = vadd.f32 %v3086, %v3114
      %3116 = vmatmul.f32.gmra.mxu0 %v2588
      %v3117 = vpop.f32.mrf.mxu0
      %v3118 = vadd.f32 %v3089, %v3117
      %3119 = vmatmul.f32.gmra.mxu0 %v2595
      %v3120 = vpop.f32.mrf.mxu0
      %v3121 = vadd.f32 %v3092, %v3120
      %3122 = vmatmul.f32.gmra.mxu0 %v2602
      %v3123 = vpop.f32.mrf.mxu0
      %v3124 = vadd.f32 %v3095, %v3123
      %3125 = vdwg.mxu0
      %3126 = vmatpush.msra.mxu0 %v2734
      %3127 = vmatpush.msra.mxu0 %v2732
      %3128 = vmatpush.msra.mxu0 %v2730
      %3129 = vmatpush.msra.mxu0 %v2728
      %3130 = vmatpush.msra.mxu0 %v2726
      %3131 = vmatpush.msra.mxu0 %v2724
      %3132 = vmatpush.msra.mxu0 %v2722
      %3133 = vmatpush.msra.mxu0 %v2720
      %3134 = vmatpush.msra.mxu0 %v2718
      %3135 = vmatpush.msra.mxu0 %v2716
      %3136 = vmatpush.msra.mxu0 %v2714
      %3137 = vmatpush.msra.mxu0 %v2712
      %3138 = vmatpush.msra.mxu0 %v2710
      %3139 = vmatpush.msra.mxu0 %v2708
      %3140 = vmatpush.msra.mxu0 %v2706
      %3141 = vmatpush.msra.mxu0 %v2704
      %3142 = vmatmul.f32.gmra.mxu0 %v2582
      %v3143 = vpop.f32.mrf.mxu0
      %v3144 = vadd.f32 %v3115, %v3143
      %3145 = vmatmul.f32.gmra.mxu0 %v2589
      %v3146 = vpop.f32.mrf.mxu0
      %v3147 = vadd.f32 %v3118, %v3146
      %3148 = vmatmul.f32.gmra.mxu0 %v2596
      %v3149 = vpop.f32.mrf.mxu0
      %v3150 = vadd.f32 %v3121, %v3149
      %3151 = vmatmul.f32.gmra.mxu0 %v2603
      %v3152 = vpop.f32.mrf.mxu0
      %v3153 = vadd.f32 %v3124, %v3152
      %3154 = vdwg.mxu0
      %3155 = vmatpush.msra.mxu0 %v2766
      %3156 = vmatpush.msra.mxu0 %v2764
      %3157 = vmatpush.msra.mxu0 %v2762
      %3158 = vmatpush.msra.mxu0 %v2760
      %3159 = vmatpush.msra.mxu0 %v2758
      %3160 = vmatpush.msra.mxu0 %v2756
      %3161 = vmatpush.msra.mxu0 %v2754
      %3162 = vmatpush.msra.mxu0 %v2752
      %3163 = vmatpush.msra.mxu0 %v2750
      %3164 = vmatpush.msra.mxu0 %v2748
      %3165 = vmatpush.msra.mxu0 %v2746
      %3166 = vmatpush.msra.mxu0 %v2744
      %3167 = vmatpush.msra.mxu0 %v2742
      %3168 = vmatpush.msra.mxu0 %v2740
      %3169 = vmatpush.msra.mxu0 %v2738
      %3170 = vmatpush.msra.mxu0 %v2736
      %3171 = vmatmul.f32.gmra.mxu0 %v2583
      %v3172 = vpop.f32.mrf.mxu0
      %v3173 = vadd.f32 %v3144, %v3172
      %3174 = vmatmul.f32.gmra.mxu0 %v2590
      %v3175 = vpop.f32.mrf.mxu0
      %v3176 = vadd.f32 %v3147, %v3175
      %3177 = vmatmul.f32.gmra.mxu0 %v2597
      %v3178 = vpop.f32.mrf.mxu0
      %v3179 = vadd.f32 %v3150, %v3178
      %3180 = vmatmul.f32.gmra.mxu0 %v2604
      %v3181 = vpop.f32.mrf.mxu0
      %v3182 = vadd.f32 %v3153, %v3181
      %3183 = vdwg.mxu0
      %3184 = vmatpush.msra.mxu0 %v2798
      %3185 = vmatpush.msra.mxu0 %v2796
      %3186 = vmatpush.msra.mxu0 %v2794
      %3187 = vmatpush.msra.mxu0 %v2792
      %3188 = vmatpush.msra.mxu0 %v2790
      %3189 = vmatpush.msra.mxu0 %v2788
      %3190 = vmatpush.msra.mxu0 %v2786
      %3191 = vmatpush.msra.mxu0 %v2784
      %3192 = vmatpush.msra.mxu0 %v2782
      %3193 = vmatpush.msra.mxu0 %v2780
      %3194 = vmatpush.msra.mxu0 %v2778
      %3195 = vmatpush.msra.mxu0 %v2776
      %3196 = vmatpush.msra.mxu0 %v2774
      %3197 = vmatpush.msra.mxu0 %v2772
      %3198 = vmatpush.msra.mxu0 %v2770
      %3199 = vmatpush.msra.mxu0 %v2768
      %3200 = vmatmul.f32.gmra.mxu0 %v2584
      %v3201 = vpop.f32.mrf.mxu0
      %v3202 = vadd.f32 %v3173, %v3201
      %3203 = vmatmul.f32.gmra.mxu0 %v2591
      %v3204 = vpop.f32.mrf.mxu0
      %v3205 = vadd.f32 %v3176, %v3204
      %3206 = vmatmul.f32.gmra.mxu0 %v2598
      %v3207 = vpop.f32.mrf.mxu0
      %v3208 = vadd.f32 %v3179, %v3207
      %3209 = vmatmul.f32.gmra.mxu0 %v2605
      %v3210 = vpop.f32.mrf.mxu0
      %v3211 = vadd.f32 %v3182, %v3210
      %3212 = vdwg.mxu0
      %3213 = vmatpush.msra.mxu0 0.0
      %3214 = vmatpush.msra.mxu0 0.0
      %3215 = vmatpush.msra.mxu0 0.0
      %3216 = vmatpush.msra.mxu0 0.0
      %3217 = vmatpush.msra.mxu0 %v2822
      %3218 = vmatpush.msra.mxu0 %v2820
      %3219 = vmatpush.msra.mxu0 %v2818
      %3220 = vmatpush.msra.mxu0 %v2816
      %3221 = vmatpush.msra.mxu0 %v2814
      %3222 = vmatpush.msra.mxu0 %v2812
      %3223 = vmatpush.msra.mxu0 %v2810
      %3224 = vmatpush.msra.mxu0 %v2808
      %3225 = vmatpush.msra.mxu0 %v2806
      %3226 = vmatpush.msra.mxu0 %v2804
      %3227 = vmatpush.msra.mxu0 %v2802
      %3228 = vmatpush.msra.mxu0 %v2800
      %3229 = vmatmul.f32.gmra.mxu0 %v2825
      %v3230 = vpop.f32.mrf.mxu0
      %v3231 = vadd.f32 %v3202, %v3230
      %3232 = vmatmul.f32.gmra.mxu0 %v2828
      %v3233 = vpop.f32.mrf.mxu0
      %v3234 = vadd.f32 %v3205, %v3233
      %3235 = vmatmul.f32.gmra.mxu0 %v2831
      %v3236 = vpop.f32.mrf.mxu0
      %v3237 = vadd.f32 %v3208, %v3236
      %3238 = vmatmul.f32.gmra.mxu0 %v2834
      %v3239 = vpop.f32.mrf.mxu0
      %v3240 = vadd.f32 %v3211, %v3239
      %3241 = vdwg.mxu0
      %v3242 = vadd.f32 %v3028, %v3231
      %3243 = vadd.xlane.f32.xlu0 %v3242
      %v3244 = vpop.xlane.xlu0 %3243
      %v3245 = vadd.f32 %v3031, %v3234
      %3246 = vadd.xlane.f32.xlu0 %v3245
      %v3247 = vpop.xlane.xlu0 %3246
      %v3248 = vadd.f32 %v3034, %v3237
      %3249 = vadd.xlane.f32.xlu0 %v3248
      %v3250 = vpop.xlane.xlu0 %3249
      %v3251 = vadd.f32 %v3037, %v3240
      %3252 = vadd.xlane.f32.xlu0 %v3251
      %v3253 = vpop.xlane.xlu0 %3252
      %v3254 = vmul.f32 %v3244, %v359
      %v3255 = vmul.f32 %v3247, %v359
      %v3256 = vmul.f32 %v3250, %v359
      %v3257 = vmul.f32 %v3253, %v359
      %v3258 = vsub.f32 %v3028, %v3254
      %v3259 = vsub.f32 %v3231, %v3254
      %v3260 = vsub.f32 %v3031, %v3255
      %v3261 = vsub.f32 %v3234, %v3255
      %v3262 = vsub.f32 %v3034, %v3256
      %v3263 = vsub.f32 %v3237, %v3256
      %v3264 = vsub.f32 %v3037, %v3257
      %v3265 = vsub.f32 %v3240, %v3257
      %v3266 = vmul.f32 %v3258, %v3258
      %v3267 = vmul.f32 %v3259, %v3259
      %v3268 = vmul.f32 %v3260, %v3260
      %v3269 = vmul.f32 %v3261, %v3261
      %v3270 = vmul.f32 %v3262, %v3262
      %v3271 = vmul.f32 %v3263, %v3263
      %v3272 = vmul.f32 %v3264, %v3264
      %v3273 = vmul.f32 %v3265, %v3265
      %v3274 = vadd.f32 %v3266, %v3267
      %3275 = vadd.xlane.f32.xlu0 %v3274
      %v3276 = vpop.xlane.xlu0 %3275
      %v3277 = vadd.f32 %v3268, %v3269
      %3278 = vadd.xlane.f32.xlu0 %v3277
      %v3279 = vpop.xlane.xlu0 %3278
      %v3280 = vadd.f32 %v3270, %v3271
      %3281 = vadd.xlane.f32.xlu0 %v3280
      %v3282 = vpop.xlane.xlu0 %3281
      %v3283 = vadd.f32 %v3272, %v3273
      %3284 = vadd.xlane.f32.xlu0 %v3283
      %v3285 = vpop.xlane.xlu0 %3284
      %v3286 = vmul.f32 %v3276, %v359
      %v3287 = vmul.f32 %v3279, %v359
      %v3288 = vmul.f32 %v3282, %v359
      %v3289 = vmul.f32 %v3285, %v359
      %v3290 = vadd.f32 %v3286, 1e-05
      %v3291 = vadd.f32 %v3287, 1e-05
      %v3292 = vadd.f32 %v3288, 1e-05
      %v3293 = vadd.f32 %v3289, 1e-05
      %v3294 = vrsqrt.pop %v3290
      %v3295 = vmul.f32 %v3294, %v3290
      %v3296 = vmul.f32 %v3295, %v3294
      %v3297 = vmul.f32 0.5, %v3296
      %v3298 = vsub.f32 1.5, %v3297
      %v3299 = vmul.f32 %v3294, %v3298
      %vm3300 = vweird.f32 %v3290
      %vm3301 = vweird.f32 %v3294
      %vm3302 = vmor %vm3300, %vm3301
      %v3303 = vsel %vm3302, %v3294, %v3299
      %v3304 = vrsqrt.pop %v3291
      %v3305 = vmul.f32 %v3304, %v3291
      %v3306 = vmul.f32 %v3305, %v3304
      %v3307 = vmul.f32 0.5, %v3306
      %v3308 = vsub.f32 1.5, %v3307
      %v3309 = vmul.f32 %v3304, %v3308
      %vm3310 = vweird.f32 %v3291
      %vm3311 = vweird.f32 %v3304
      %vm3312 = vmor %vm3310, %vm3311
      %v3313 = vsel %vm3312, %v3304, %v3309
      %v3314 = vrsqrt.pop %v3292
      %v3315 = vmul.f32 %v3314, %v3292
      %v3316 = vmul.f32 %v3315, %v3314
      %v3317 = vmul.f32 0.5, %v3316
      %v3318 = vsub.f32 1.5, %v3317
      %v3319 = vmul.f32 %v3314, %v3318
      %vm3320 = vweird.f32 %v3292
      %vm3321 = vweird.f32 %v3314
      %vm3322 = vmor %vm3320, %vm3321
      %v3323 = vsel %vm3322, %v3314, %v3319
      %v3324 = vrsqrt.pop %v3293
      %v3325 = vmul.f32 %v3324, %v3293
      %v3326 = vmul.f32 %v3325, %v3324
      %v3327 = vmul.f32 0.5, %v3326
      %v3328 = vsub.f32 1.5, %v3327
      %v3329 = vmul.f32 %v3324, %v3328
      %vm3330 = vweird.f32 %v3293
      %vm3331 = vweird.f32 %v3324
      %vm3332 = vmor %vm3330, %vm3331
      %v3333 = vsel %vm3332, %v3324, %v3329
      %v3334 = vmul.f32 %v3258, %v3303
      %v3335 = vmul.f32 %v3259, %v3303
      %v3336 = vmul.f32 %v3260, %v3313
      %v3337 = vmul.f32 %v3261, %v3313
      %v3338 = vmul.f32 %v3262, %v3323
      %v3339 = vmul.f32 %v3263, %v3323
      %v3340 = vmul.f32 %v3264, %v3333
      %v3341 = vmul.f32 %v3265, %v3333
      %v3342 = vmax.f32 %v3334, 0.0
      %v3343 = vmax.f32 %v3335, 0.0
      %v3344 = vmax.f32 %v3336, 0.0
      %v3345 = vmax.f32 %v3337, 0.0
      %v3346 = vmax.f32 %v3338, 0.0
      %v3347 = vmax.f32 %v3339, 0.0
      %v3348 = vmax.f32 %v3340, 0.0
      %v3349 = vmax.f32 %v3341, 0.0
      %3350 = vst [vmem:[#allocation2 + $0xc0] sm:$0xff] %v3342
      %3351 = vst [vmem:[#allocation2 + $0xc8] sm:$0xff] %v3343
      %3352 = vst [vmem:[#allocation2 + $0xd0] sm:$0xff] %v3344
      %3353 = vst [vmem:[#allocation2 + $0xd8] sm:$0xff] %v3345
      %3354 = vst [vmem:[#allocation2 + $0xe0] sm:$0xff] %v3346
      %3355 = vst [vmem:[#allocation2 + $0xe8] sm:$0xff] %v3347
      %3356 = vst [vmem:[#allocation2 + $0xf0] sm:$0xff] %v3348
      %3357 = vst [vmem:[#allocation2 + $0xf8] sm:$0xff] %v3349
      %3358 = vrot.lane.b32.xlu0 %v3342, 17
      %v3359 = vpop.permute.xlu0 %3358
      %3360 = vrot.lane.b32.xlu0 %v3344, 17
      %v3361 = vpop.permute.xlu0 %3360
      %3362 = vrot.lane.b32.xlu0 %v3346, 17
      %v3363 = vpop.permute.xlu0 %3362
      %3364 = vrot.lane.b32.xlu0 %v3348, 17
      %v3365 = vpop.permute.xlu0 %3364
      %3366 = vrot.lane.b32.xlu0 %v3343, 17
      %v3367 = vpop.permute.xlu0 %3366
      %3368 = vrot.lane.b32.xlu0 %v3345, 17
      %v3369 = vpop.permute.xlu0 %3368
      %3370 = vrot.lane.b32.xlu0 %v3347, 17
      %v3371 = vpop.permute.xlu0 %3370
      %3372 = vrot.lane.b32.xlu0 %v3349, 17
      %v3373 = vpop.permute.xlu0 %3372
      %v3374 = vsel %vm482, %v3359, %v3367
      %v3375 = vsel %vm482, %v3361, %v3369
      %v3376 = vsel %vm482, %v3363, %v3371
      %v3377 = vsel %vm482, %v3365, %v3373
      %v3378 = vsel %vm482, %v3367, %v3359
      %v3379 = vsel %vm482, %v3369, %v3361
      %v3380 = vsel %vm482, %v3371, %v3363
      %v3381 = vsel %vm482, %v3373, %v3365
      %v3382 = vld [vmem:[%s1] ss:$8 sm:$0x3]
      %v3384 = vperm.slane %v3382, 0
      %v3385 = vperm.slane %v3382, 1
      %v3388 = vmul.f32 %v3378, %v3384
      %v3389 = vmul.f32 %v3374, %v3385
      %v3390 = vmul.f32 %v3379, %v3384
      %v3391 = vmul.f32 %v3375, %v3385
      %v3392 = vmul.f32 %v3380, %v3384
      %v3393 = vmul.f32 %v3376, %v3385
      %v3394 = vmul.f32 %v3381, %v3384
      %v3395 = vmul.f32 %v3377, %v3385
      %3396 = vst [vmem:[#allocation3 + $0x6c0] sm:$0xff] %v3388
      %3397 = vst [vmem:[#allocation3 + $0x6c8] sm:$0xff] %v3389
      %3398 = vst [vmem:[#allocation3 + $0x6d0] sm:$0xff] %v3390
      %3399 = vst [vmem:[#allocation3 + $0x6d8] sm:$0xff] %v3391
      %3400 = vst [vmem:[#allocation3 + $0x6e0] sm:$0xff] %v3392
      %3401 = vst [vmem:[#allocation3 + $0x6e8] sm:$0xff] %v3393
      %3402 = vst [vmem:[#allocation3 + $0x6f0] sm:$0xff] %v3394
      %3403 = vst [vmem:[#allocation3 + $0x6f8] sm:$0xff] %v3395
      %3404 = vrot.lane.b32.xlu0 %v3342, 16
      %v3405 = vpop.permute.xlu0 %3404
      %3406 = vrot.lane.b32.xlu0 %v3344, 16
      %v3407 = vpop.permute.xlu0 %3406
      %3408 = vrot.lane.b32.xlu0 %v3346, 16
      %v3409 = vpop.permute.xlu0 %3408
      %3410 = vrot.lane.b32.xlu0 %v3348, 16
      %v3411 = vpop.permute.xlu0 %3410
      %3412 = vrot.lane.b32.xlu0 %v3343, 16
      %v3413 = vpop.permute.xlu0 %3412
      %3414 = vrot.lane.b32.xlu0 %v3345, 16
      %v3415 = vpop.permute.xlu0 %3414
      %3416 = vrot.lane.b32.xlu0 %v3347, 16
      %v3417 = vpop.permute.xlu0 %3416
      %3418 = vrot.lane.b32.xlu0 %v3349, 16
      %v3419 = vpop.permute.xlu0 %3418
      %v3420 = vsel %vm529, %v3405, %v3413
      %v3421 = vsel %vm529, %v3407, %v3415
      %v3422 = vsel %vm529, %v3409, %v3417
      %v3423 = vsel %vm529, %v3411, %v3419
      %v3424 = vsel %vm529, %v3413, %v3405
      %v3425 = vsel %vm529, %v3415, %v3407
      %v3426 = vsel %vm529, %v3417, %v3409
      %v3427 = vsel %vm529, %v3419, %v3411
      %v3428 = vld [vmem:[%s538] ss:$8 sm:$0x3]
      %v3430 = vperm.slane %v3428, 0
      %v3431 = vperm.slane %v3428, 1
      %v3434 = vmul.f32 %v3424, %v3430
      %v3435 = vmul.f32 %v3420, %v3431
      %v3436 = vmul.f32 %v3425, %v3430
      %v3437 = vmul.f32 %v3421, %v3431
      %v3438 = vmul.f32 %v3426, %v3430
      %v3439 = vmul.f32 %v3422, %v3431
      %v3440 = vmul.f32 %v3427, %v3430
      %v3441 = vmul.f32 %v3423, %v3431
      %3442 = vst [vmem:[#allocation3 + $0x700] sm:$0xff] %v3434
      %3443 = vst [vmem:[#allocation3 + $0x708] sm:$0xff] %v3435
      %3444 = vst [vmem:[#allocation3 + $0x710] sm:$0xff] %v3436
      %3445 = vst [vmem:[#allocation3 + $0x718] sm:$0xff] %v3437
      %3446 = vst [vmem:[#allocation3 + $0x720] sm:$0xff] %v3438
      %3447 = vst [vmem:[#allocation3 + $0x728] sm:$0xff] %v3439
      %3448 = vst [vmem:[#allocation3 + $0x730] sm:$0xff] %v3440
      %3449 = vst [vmem:[#allocation3 + $0x738] sm:$0xff] %v3441
      %3450 = vrot.lane.b32.xlu0 %v3342, 15
      %v3451 = vpop.permute.xlu0 %3450
      %3452 = vrot.lane.b32.xlu0 %v3344, 15
      %v3453 = vpop.permute.xlu0 %3452
      %3454 = vrot.lane.b32.xlu0 %v3346, 15
      %v3455 = vpop.permute.xlu0 %3454
      %3456 = vrot.lane.b32.xlu0 %v3348, 15
      %v3457 = vpop.permute.xlu0 %3456
      %3458 = vrot.lane.b32.xlu0 %v3343, 15
      %v3459 = vpop.permute.xlu0 %3458
      %3460 = vrot.lane.b32.xlu0 %v3345, 15
      %v3461 = vpop.permute.xlu0 %3460
      %3462 = vrot.lane.b32.xlu0 %v3347, 15
      %v3463 = vpop.permute.xlu0 %3462
      %3464 = vrot.lane.b32.xlu0 %v3349, 15
      %v3465 = vpop.permute.xlu0 %3464
      %v3466 = vsel %vm577, %v3451, %v3459
      %v3467 = vsel %vm577, %v3453, %v3461
      %v3468 = vsel %vm577, %v3455, %v3463
      %v3469 = vsel %vm577, %v3457, %v3465
      %v3470 = vsel %vm577, %v3459, %v3451
      %v3471 = vsel %vm577, %v3461, %v3453
      %v3472 = vsel %vm577, %v3463, %v3455
      %v3473 = vsel %vm577, %v3465, %v3457
      %v3474 = vld [vmem:[%s586] ss:$8 sm:$0x3]
      %v3476 = vperm.slane %v3474, 0
      %v3477 = vperm.slane %v3474, 1
      %v3480 = vmul.f32 %v3470, %v3476
      %v3481 = vmul.f32 %v3466, %v3477
      %v3482 = vmul.f32 %v3471, %v3476
      %v3483 = vmul.f32 %v3467, %v3477
      %v3484 = vmul.f32 %v3472, %v3476
      %v3485 = vmul.f32 %v3468, %v3477
      %v3486 = vmul.f32 %v3473, %v3476
      %v3487 = vmul.f32 %v3469, %v3477
      %3488 = vst [vmem:[#allocation3 + $0x740] sm:$0xff] %v3480
      %3489 = vst [vmem:[#allocation3 + $0x748] sm:$0xff] %v3481
      %3490 = vst [vmem:[#allocation3 + $0x750] sm:$0xff] %v3482
      %3491 = vst [vmem:[#allocation3 + $0x758] sm:$0xff] %v3483
      %3492 = vst [vmem:[#allocation3 + $0x760] sm:$0xff] %v3484
      %3493 = vst [vmem:[#allocation3 + $0x768] sm:$0xff] %v3485
      %3494 = vst [vmem:[#allocation3 + $0x770] sm:$0xff] %v3486
      %3495 = vst [vmem:[#allocation3 + $0x778] sm:$0xff] %v3487
      %3496 = vrot.lane.b32.xlu0 %v3342, 1
      %v3497 = vpop.permute.xlu0 %3496
      %3498 = vrot.lane.b32.xlu0 %v3344, 1
      %v3499 = vpop.permute.xlu0 %3498
      %3500 = vrot.lane.b32.xlu0 %v3346, 1
      %v3501 = vpop.permute.xlu0 %3500
      %3502 = vrot.lane.b32.xlu0 %v3348, 1
      %v3503 = vpop.permute.xlu0 %3502
      %3504 = vrot.lane.b32.xlu0 %v3343, 1
      %v3505 = vpop.permute.xlu0 %3504
      %3506 = vrot.lane.b32.xlu0 %v3345, 1
      %v3507 = vpop.permute.xlu0 %3506
      %3508 = vrot.lane.b32.xlu0 %v3347, 1
      %v3509 = vpop.permute.xlu0 %3508
      %3510 = vrot.lane.b32.xlu0 %v3349, 1
      %v3511 = vpop.permute.xlu0 %3510
      %v3512 = vsel %vm625, %v3497, %v3505
      %v3513 = vsel %vm625, %v3499, %v3507
      %v3514 = vsel %vm625, %v3501, %v3509
      %v3515 = vsel %vm625, %v3503, %v3511
      %v3516 = vsel %vm625, %v3505, %v3497
      %v3517 = vsel %vm625, %v3507, %v3499
      %v3518 = vsel %vm625, %v3509, %v3501
      %v3519 = vsel %vm625, %v3511, %v3503
      %v3520 = vld [vmem:[%s634] ss:$8 sm:$0x3]
      %v3522 = vperm.slane %v3520, 0
      %v3523 = vperm.slane %v3520, 1
      %v3526 = vmul.f32 %v3516, %v3522
      %v3527 = vmul.f32 %v3512, %v3523
      %v3528 = vmul.f32 %v3517, %v3522
      %v3529 = vmul.f32 %v3513, %v3523
      %v3530 = vmul.f32 %v3518, %v3522
      %v3531 = vmul.f32 %v3514, %v3523
      %v3532 = vmul.f32 %v3519, %v3522
      %v3533 = vmul.f32 %v3515, %v3523
      %3534 = vst [vmem:[#allocation3 + $0x780] sm:$0xff] %v3526
      %3535 = vst [vmem:[#allocation3 + $0x788] sm:$0xff] %v3527
      %3536 = vst [vmem:[#allocation3 + $0x790] sm:$0xff] %v3528
      %3537 = vst [vmem:[#allocation3 + $0x798] sm:$0xff] %v3529
      %3538 = vst [vmem:[#allocation3 + $0x7a0] sm:$0xff] %v3530
      %3539 = vst [vmem:[#allocation3 + $0x7a8] sm:$0xff] %v3531
      %3540 = vst [vmem:[#allocation3 + $0x7b0] sm:$0xff] %v3532
      %3541 = vst [vmem:[#allocation3 + $0x7b8] sm:$0xff] %v3533
      %3542 = vst [vmem:[#allocation3 + $0x7c0] sm:$0xff] %v3342
      %3543 = vst [vmem:[#allocation3 + $0x7c8] sm:$0xff] %v3343
      %3544 = vst [vmem:[#allocation3 + $0x7d0] sm:$0xff] %v3344
      %3545 = vst [vmem:[#allocation3 + $0x7d8] sm:$0xff] %v3345
      %3546 = vst [vmem:[#allocation3 + $0x7e0] sm:$0xff] %v3346
      %3547 = vst [vmem:[#allocation3 + $0x7e8] sm:$0xff] %v3347
      %3548 = vst [vmem:[#allocation3 + $0x7f0] sm:$0xff] %v3348
      %3549 = vst [vmem:[#allocation3 + $0x7f8] sm:$0xff] %v3349
      %3550 = vrot.lane.b32.xlu0 %v3342, 127
      %v3551 = vpop.permute.xlu0 %3550
      %3552 = vrot.lane.b32.xlu0 %v3344, 127
      %v3553 = vpop.permute.xlu0 %3552
      %3554 = vrot.lane.b32.xlu0 %v3346, 127
      %v3555 = vpop.permute.xlu0 %3554
      %3556 = vrot.lane.b32.xlu0 %v3348, 127
      %v3557 = vpop.permute.xlu0 %3556
      %3558 = vrot.lane.b32.xlu0 %v3343, 127
      %v3559 = vpop.permute.xlu0 %3558
      %3560 = vrot.lane.b32.xlu0 %v3345, 127
      %v3561 = vpop.permute.xlu0 %3560
      %3562 = vrot.lane.b32.xlu0 %v3347, 127
      %v3563 = vpop.permute.xlu0 %3562
      %3564 = vrot.lane.b32.xlu0 %v3349, 127
      %v3565 = vpop.permute.xlu0 %3564
      %v3566 = vsel %vm681, %v3551, %v3559
      %v3567 = vsel %vm681, %v3553, %v3561
      %v3568 = vsel %vm681, %v3555, %v3563
      %v3569 = vsel %vm681, %v3557, %v3565
      %v3570 = vsel %vm681, %v3559, %v3551
      %v3571 = vsel %vm681, %v3561, %v3553
      %v3572 = vsel %vm681, %v3563, %v3555
      %v3573 = vsel %vm681, %v3565, %v3557
      %v3574 = vld [vmem:[%s690] ss:$8 sm:$0x3]
      %v3576 = vperm.slane %v3574, 0
      %v3577 = vperm.slane %v3574, 1
      %v3580 = vmul.f32 %v3566, %v3576
      %v3581 = vmul.f32 %v3570, %v3577
      %v3582 = vmul.f32 %v3567, %v3576
      %v3583 = vmul.f32 %v3571, %v3577
      %v3584 = vmul.f32 %v3568, %v3576
      %v3585 = vmul.f32 %v3572, %v3577
      %v3586 = vmul.f32 %v3569, %v3576
      %v3587 = vmul.f32 %v3573, %v3577
      %3588 = vst [vmem:[#allocation3 + $0x800] sm:$0xff] %v3580
      %3589 = vst [vmem:[#allocation3 + $0x808] sm:$0xff] %v3581
      %3590 = vst [vmem:[#allocation3 + $0x810] sm:$0xff] %v3582
      %3591 = vst [vmem:[#allocation3 + $0x818] sm:$0xff] %v3583
      %3592 = vst [vmem:[#allocation3 + $0x820] sm:$0xff] %v3584
      %3593 = vst [vmem:[#allocation3 + $0x828] sm:$0xff] %v3585
      %3594 = vst [vmem:[#allocation3 + $0x830] sm:$0xff] %v3586
      %3595 = vst [vmem:[#allocation3 + $0x838] sm:$0xff] %v3587
      %3596 = vrot.lane.b32.xlu0 %v3342, 113
      %v3597 = vpop.permute.xlu0 %3596
      %3598 = vrot.lane.b32.xlu0 %v3344, 113
      %v3599 = vpop.permute.xlu0 %3598
      %3600 = vrot.lane.b32.xlu0 %v3346, 113
      %v3601 = vpop.permute.xlu0 %3600
      %3602 = vrot.lane.b32.xlu0 %v3348, 113
      %v3603 = vpop.permute.xlu0 %3602
      %3604 = vrot.lane.b32.xlu0 %v3343, 113
      %v3605 = vpop.permute.xlu0 %3604
      %3606 = vrot.lane.b32.xlu0 %v3345, 113
      %v3607 = vpop.permute.xlu0 %3606
      %3608 = vrot.lane.b32.xlu0 %v3347, 113
      %v3609 = vpop.permute.xlu0 %3608
      %3610 = vrot.lane.b32.xlu0 %v3349, 113
      %v3611 = vpop.permute.xlu0 %3610
      %v3612 = vsel %vm729, %v3597, %v3605
      %v3613 = vsel %vm729, %v3599, %v3607
      %v3614 = vsel %vm729, %v3601, %v3609
      %v3615 = vsel %vm729, %v3603, %v3611
      %v3616 = vsel %vm729, %v3605, %v3597
      %v3617 = vsel %vm729, %v3607, %v3599
      %v3618 = vsel %vm729, %v3609, %v3601
      %v3619 = vsel %vm729, %v3611, %v3603
      %v3620 = vld [vmem:[%s738] ss:$8 sm:$0x3]
      %v3622 = vperm.slane %v3620, 0
      %v3623 = vperm.slane %v3620, 1
      %v3626 = vmul.f32 %v3612, %v3622
      %v3627 = vmul.f32 %v3616, %v3623
      %v3628 = vmul.f32 %v3613, %v3622
      %v3629 = vmul.f32 %v3617, %v3623
      %v3630 = vmul.f32 %v3614, %v3622
      %v3631 = vmul.f32 %v3618, %v3623
      %v3632 = vmul.f32 %v3615, %v3622
      %v3633 = vmul.f32 %v3619, %v3623
      %3634 = vst [vmem:[#allocation3 + $0x840] sm:$0xff] %v3626
      %3635 = vst [vmem:[#allocation3 + $0x848] sm:$0xff] %v3627
      %3636 = vst [vmem:[#allocation3 + $0x850] sm:$0xff] %v3628
      %3637 = vst [vmem:[#allocation3 + $0x858] sm:$0xff] %v3629
      %3638 = vst [vmem:[#allocation3 + $0x860] sm:$0xff] %v3630
      %3639 = vst [vmem:[#allocation3 + $0x868] sm:$0xff] %v3631
      %3640 = vst [vmem:[#allocation3 + $0x870] sm:$0xff] %v3632
      %3641 = vst [vmem:[#allocation3 + $0x878] sm:$0xff] %v3633
      %3642 = vrot.lane.b32.xlu0 %v3342, 112
      %v3643 = vpop.permute.xlu0 %3642
      %3644 = vrot.lane.b32.xlu0 %v3344, 112
      %v3645 = vpop.permute.xlu0 %3644
      %3646 = vrot.lane.b32.xlu0 %v3346, 112
      %v3647 = vpop.permute.xlu0 %3646
      %3648 = vrot.lane.b32.xlu0 %v3348, 112
      %v3649 = vpop.permute.xlu0 %3648
      %3650 = vrot.lane.b32.xlu0 %v3343, 112
      %v3651 = vpop.permute.xlu0 %3650
      %3652 = vrot.lane.b32.xlu0 %v3345, 112
      %v3653 = vpop.permute.xlu0 %3652
      %3654 = vrot.lane.b32.xlu0 %v3347, 112
      %v3655 = vpop.permute.xlu0 %3654
      %3656 = vrot.lane.b32.xlu0 %v3349, 112
      %v3657 = vpop.permute.xlu0 %3656
      %v3658 = vsel %vm777, %v3643, %v3651
      %v3659 = vsel %vm777, %v3645, %v3653
      %v3660 = vsel %vm777, %v3647, %v3655
      %v3661 = vsel %vm777, %v3649, %v3657
      %v3662 = vsel %vm777, %v3651, %v3643
      %v3663 = vsel %vm777, %v3653, %v3645
      %v3664 = vsel %vm777, %v3655, %v3647
      %v3665 = vsel %vm777, %v3657, %v3649
      %v3666 = vld [vmem:[%s786] ss:$8 sm:$0x3]
      %v3668 = vperm.slane %v3666, 0
      %v3669 = vperm.slane %v3666, 1
      %v3672 = vmul.f32 %v3658, %v3668
      %v3673 = vmul.f32 %v3662, %v3669
      %v3674 = vmul.f32 %v3659, %v3668
      %v3675 = vmul.f32 %v3663, %v3669
      %v3676 = vmul.f32 %v3660, %v3668
      %v3677 = vmul.f32 %v3664, %v3669
      %v3678 = vmul.f32 %v3661, %v3668
      %v3679 = vmul.f32 %v3665, %v3669
      %3680 = vst [vmem:[#allocation3 + $0x880] sm:$0xff] %v3672
      %3681 = vst [vmem:[#allocation3 + $0x888] sm:$0xff] %v3673
      %3682 = vst [vmem:[#allocation3 + $0x890] sm:$0xff] %v3674
      %3683 = vst [vmem:[#allocation3 + $0x898] sm:$0xff] %v3675
      %3684 = vst [vmem:[#allocation3 + $0x8a0] sm:$0xff] %v3676
      %3685 = vst [vmem:[#allocation3 + $0x8a8] sm:$0xff] %v3677
      %3686 = vst [vmem:[#allocation3 + $0x8b0] sm:$0xff] %v3678
      %3687 = vst [vmem:[#allocation3 + $0x8b8] sm:$0xff] %v3679
      %3688 = vrot.lane.b32.xlu0 %v3342, 111
      %v3689 = vpop.permute.xlu0 %3688
      %3690 = vrot.lane.b32.xlu0 %v3344, 111
      %v3691 = vpop.permute.xlu0 %3690
      %3692 = vrot.lane.b32.xlu0 %v3346, 111
      %v3693 = vpop.permute.xlu0 %3692
      %3694 = vrot.lane.b32.xlu0 %v3348, 111
      %v3695 = vpop.permute.xlu0 %3694
      %3696 = vrot.lane.b32.xlu0 %v3343, 111
      %v3697 = vpop.permute.xlu0 %3696
      %3698 = vrot.lane.b32.xlu0 %v3345, 111
      %v3699 = vpop.permute.xlu0 %3698
      %3700 = vrot.lane.b32.xlu0 %v3347, 111
      %v3701 = vpop.permute.xlu0 %3700
      %3702 = vrot.lane.b32.xlu0 %v3349, 111
      %v3703 = vpop.permute.xlu0 %3702
      %v3704 = vsel %vm825, %v3689, %v3697
      %v3705 = vsel %vm825, %v3691, %v3699
      %v3706 = vsel %vm825, %v3693, %v3701
      %v3707 = vsel %vm825, %v3695, %v3703
      %v3708 = vsel %vm825, %v3697, %v3689
      %v3709 = vsel %vm825, %v3699, %v3691
      %v3710 = vsel %vm825, %v3701, %v3693
      %v3711 = vsel %vm825, %v3703, %v3695
      %v3712 = vld [vmem:[%s834] ss:$8 sm:$0x3]
      %v3714 = vperm.slane %v3712, 0
      %v3715 = vperm.slane %v3712, 1
      %v3718 = vmul.f32 %v3704, %v3714
      %v3719 = vmul.f32 %v3708, %v3715
      %v3720 = vmul.f32 %v3705, %v3714
      %v3721 = vmul.f32 %v3709, %v3715
      %v3722 = vmul.f32 %v3706, %v3714
      %v3723 = vmul.f32 %v3710, %v3715
      %v3724 = vmul.f32 %v3707, %v3714
      %v3725 = vmul.f32 %v3711, %v3715
      %3726 = vst [vmem:[#allocation3 + $0x8c0] sm:$0xff] %v3718
      %3727 = vst [vmem:[#allocation3 + $0x8c8] sm:$0xff] %v3719
      %3728 = vst [vmem:[#allocation3 + $0x8d0] sm:$0xff] %v3720
      %3729 = vst [vmem:[#allocation3 + $0x8d8] sm:$0xff] %v3721
      %3730 = vst [vmem:[#allocation3 + $0x8e0] sm:$0xff] %v3722
      %3731 = vst [vmem:[#allocation3 + $0x8e8] sm:$0xff] %v3723
      %3732 = vst [vmem:[#allocation3 + $0x8f0] sm:$0xff] %v3724
      %3733 = vst [vmem:[#allocation3 + $0x8f8] sm:$0xff] %v3725
      %v3734 = vld [vmem:[%s5] sm:$0xff]
      %v3735 = vld [vmem:[%s5 + $0x8] sm:$0xff]
      %v3736 = vld [vmem:[%s5 + $0x10] sm:$0xff]
      %v3737 = vld [vmem:[%s5 + $0x18] sm:$0xff]
      %v3738 = vld [vmem:[%s5 + $0x20] sm:$0xff]
      %v3739 = vld [vmem:[%s5 + $0x28] sm:$0xff]
      %v3740 = vld [vmem:[%s5 + $0x30] sm:$0xff]
      %v3741 = vld [vmem:[%s5 + $0x38] sm:$0xff]
      %v3742 = vld [vmem:[%s5 + $0x40] sm:$0xff]
      %v3743 = vld [vmem:[%s5 + $0x48] sm:$0xff]
      %v3744 = vld [vmem:[%s5 + $0x50] sm:$0xff]
      %v3745 = vld [vmem:[%s5 + $0x58] sm:$0xff]
      %v3746 = vld [vmem:[%s5 + $0x60] sm:$0xff]
      %v3747 = vld [vmem:[%s5 + $0x68] sm:$0xff]
      %v3748 = vld [vmem:[%s5 + $0x70] sm:$0xff]
      %v3749 = vld [vmem:[%s5 + $0x78] sm:$0xff]
      %v3750 = vld [vmem:[%s5 + $0x80] sm:$0xff]
      %v3751 = vld [vmem:[%s5 + $0x88] sm:$0xff]
      %v3752 = vld [vmem:[%s5 + $0x90] sm:$0xff]
      %v3753 = vld [vmem:[%s5 + $0x98] sm:$0xff]
      %v3754 = vld [vmem:[%s5 + $0xa0] sm:$0xff]
      %v3755 = vld [vmem:[%s5 + $0xa8] sm:$0xff]
      %v3756 = vld [vmem:[%s5 + $0xb0] sm:$0xff]
      %v3757 = vld [vmem:[%s5 + $0xb8] sm:$0xff]
      %v3758 = vld [vmem:[%s5 + $0xc0] sm:$0xff]
      %v3759 = vld [vmem:[%s5 + $0xc8] sm:$0xff]
      %v3760 = vld [vmem:[%s5 + $0xd0] sm:$0xff]
      %v3761 = vld [vmem:[%s5 + $0xd8] sm:$0xff]
      %v3762 = vld [vmem:[%s5 + $0xe0] sm:$0xff]
      %v3763 = vld [vmem:[%s5 + $0xe8] sm:$0xff]
      %v3764 = vld [vmem:[%s5 + $0xf0] sm:$0xff]
      %v3765 = vld [vmem:[%s5 + $0xf8] sm:$0xff]
      %v3766 = vld [vmem:[%s5 + $0x100] sm:$0xff]
      %v3767 = vld [vmem:[%s5 + $0x108] sm:$0xff]
      %v3768 = vld [vmem:[%s5 + $0x110] sm:$0xff]
      %v3769 = vld [vmem:[%s5 + $0x118] sm:$0xff]
      %v3770 = vld [vmem:[#allocation3] sm:$0xff]
      %v3771 = vld [vmem:[#allocation3 + $0x8] sm:$0xff]
      %v3772 = vld [vmem:[#allocation3 + $0x10] sm:$0xff]
      %v3773 = vld [vmem:[#allocation3 + $0x18] sm:$0xff]
      %v3774 = vld [vmem:[#allocation3 + $0x20] sm:$0xff]
      %v3775 = vld [vmem:[#allocation3 + $0x28] sm:$0xff]
      %v3776 = vld [vmem:[#allocation3 + $0x30] sm:$0xff]
      %v3777 = vld [vmem:[#allocation3 + $0x38] sm:$0xff]
      %v3778 = vld [vmem:[#allocation3 + $0x40] sm:$0xff]
      %v3779 = vld [vmem:[#allocation3 + $0x48] sm:$0xff]
      %v3780 = vld [vmem:[#allocation3 + $0x50] sm:$0xff]
      %v3781 = vld [vmem:[#allocation3 + $0x58] sm:$0xff]
      %v3782 = vld [vmem:[#allocation3 + $0x60] sm:$0xff]
      %v3783 = vld [vmem:[#allocation3 + $0x68] sm:$0xff]
      %v3784 = vld [vmem:[#allocation3 + $0x70] sm:$0xff]
      %v3785 = vld [vmem:[#allocation3 + $0x78] sm:$0xff]
      %v3786 = vld [vmem:[#allocation3 + $0x80] sm:$0xff]
      %v3787 = vld [vmem:[#allocation3 + $0x88] sm:$0xff]
      %v3788 = vld [vmem:[#allocation3 + $0x90] sm:$0xff]
      %v3789 = vld [vmem:[#allocation3 + $0x98] sm:$0xff]
      %v3790 = vld [vmem:[#allocation3 + $0xa0] sm:$0xff]
      %v3791 = vld [vmem:[#allocation3 + $0xa8] sm:$0xff]
      %v3792 = vld [vmem:[#allocation3 + $0xb0] sm:$0xff]
      %v3793 = vld [vmem:[#allocation3 + $0xb8] sm:$0xff]
      %v3794 = vld [vmem:[#allocation3 + $0xc0] sm:$0xff]
      %v3795 = vld [vmem:[#allocation3 + $0xc8] sm:$0xff]
      %v3796 = vld [vmem:[#allocation3 + $0xd0] sm:$0xff]
      %v3797 = vld [vmem:[#allocation3 + $0xd8] sm:$0xff]
      %v3798 = vld [vmem:[#allocation3 + $0xe0] sm:$0xff]
      %v3799 = vld [vmem:[#allocation3 + $0xe8] sm:$0xff]
      %v3800 = vld [vmem:[#allocation3 + $0xf0] sm:$0xff]
      %v3801 = vld [vmem:[#allocation3 + $0xf8] sm:$0xff]
      %v3802 = vld [vmem:[#allocation3 + $0x100] sm:$0xff]
      %v3803 = vld [vmem:[#allocation3 + $0x108] sm:$0xff]
      %v3804 = vld [vmem:[#allocation3 + $0x110] sm:$0xff]
      %v3805 = vld [vmem:[#allocation3 + $0x118] sm:$0xff]
      %v3806 = vld [vmem:[#allocation3 + $0x120] sm:$0xff]
      %v3807 = vld [vmem:[#allocation3 + $0x128] sm:$0xff]
      %v3808 = vld [vmem:[#allocation3 + $0x130] sm:$0xff]
      %v3809 = vld [vmem:[#allocation3 + $0x138] sm:$0xff]
      %v3810 = vld [vmem:[#allocation3 + $0x140] sm:$0xff]
      %v3811 = vld [vmem:[#allocation3 + $0x148] sm:$0xff]
      %v3812 = vld [vmem:[#allocation3 + $0x150] sm:$0xff]
      %v3813 = vld [vmem:[#allocation3 + $0x158] sm:$0xff]
      %v3814 = vld [vmem:[#allocation3 + $0x160] sm:$0xff]
      %v3815 = vld [vmem:[#allocation3 + $0x168] sm:$0xff]
      %v3816 = vld [vmem:[#allocation3 + $0x170] sm:$0xff]
      %v3817 = vld [vmem:[#allocation3 + $0x178] sm:$0xff]
      %v3818 = vld [vmem:[#allocation3 + $0x180] sm:$0xff]
      %v3819 = vld [vmem:[#allocation3 + $0x188] sm:$0xff]
      %v3820 = vld [vmem:[#allocation3 + $0x190] sm:$0xff]
      %v3821 = vld [vmem:[#allocation3 + $0x198] sm:$0xff]
      %v3822 = vld [vmem:[#allocation3 + $0x1a0] sm:$0xff]
      %v3823 = vld [vmem:[#allocation3 + $0x1a8] sm:$0xff]
      %v3824 = vld [vmem:[#allocation3 + $0x1b0] sm:$0xff]
      %v3825 = vld [vmem:[#allocation3 + $0x1b8] sm:$0xff]
      %v3826 = vld [vmem:[#allocation3 + $0x1c0] sm:$0xff]
      %v3827 = vld [vmem:[#allocation3 + $0x1c8] sm:$0xff]
      %v3828 = vld [vmem:[#allocation3 + $0x1d0] sm:$0xff]
      %v3829 = vld [vmem:[#allocation3 + $0x1d8] sm:$0xff]
      %v3830 = vld [vmem:[#allocation3 + $0x1e0] sm:$0xff]
      %v3831 = vld [vmem:[#allocation3 + $0x1e8] sm:$0xff]
      %v3832 = vld [vmem:[#allocation3 + $0x1f0] sm:$0xff]
      %v3833 = vld [vmem:[#allocation3 + $0x1f8] sm:$0xff]
      %v3834 = vld [vmem:[#allocation3 + $0x200] sm:$0xff]
      %v3835 = vld [vmem:[#allocation3 + $0x208] sm:$0xff]
      %v3836 = vld [vmem:[#allocation3 + $0x210] sm:$0xff]
      %v3837 = vld [vmem:[#allocation3 + $0x218] sm:$0xff]
      %v3838 = vld [vmem:[#allocation3 + $0x220] sm:$0xff]
      %v3839 = vld [vmem:[#allocation3 + $0x228] sm:$0xff]
      %v3840 = vld [vmem:[#allocation3 + $0x230] sm:$0xff]
      %v3841 = vld [vmem:[#allocation3 + $0x238] sm:$0xff]
      %v3842 = vld [vmem:[#allocation3 + $0x240] sm:$0xff]
      %v3843 = vld [vmem:[#allocation3 + $0x248] sm:$0xff]
      %v3844 = vld [vmem:[#allocation3 + $0x250] sm:$0xff]
      %v3845 = vld [vmem:[#allocation3 + $0x258] sm:$0xff]
      %v3846 = vld [vmem:[#allocation3 + $0x260] sm:$0xff]
      %v3847 = vld [vmem:[#allocation3 + $0x268] sm:$0xff]
      %v3848 = vld [vmem:[#allocation3 + $0x270] sm:$0xff]
      %v3849 = vld [vmem:[#allocation3 + $0x278] sm:$0xff]
      %v3850 = vld [vmem:[#allocation3 + $0x280] sm:$0xff]
      %v3851 = vld [vmem:[#allocation3 + $0x288] sm:$0xff]
      %v3852 = vld [vmem:[#allocation3 + $0x290] sm:$0xff]
      %v3853 = vld [vmem:[#allocation3 + $0x298] sm:$0xff]
      %v3854 = vld [vmem:[#allocation3 + $0x2a0] sm:$0xff]
      %v3855 = vld [vmem:[#allocation3 + $0x2a8] sm:$0xff]
      %v3856 = vld [vmem:[#allocation3 + $0x2b0] sm:$0xff]
      %v3857 = vld [vmem:[#allocation3 + $0x2b8] sm:$0xff]
      %v3858 = vld [vmem:[#allocation3 + $0x2c0] sm:$0xff]
      %v3859 = vld [vmem:[#allocation3 + $0x2c8] sm:$0xff]
      %v3860 = vld [vmem:[#allocation3 + $0x2d0] sm:$0xff]
      %v3861 = vld [vmem:[#allocation3 + $0x2d8] sm:$0xff]
      %v3862 = vld [vmem:[#allocation3 + $0x2e0] sm:$0xff]
      %v3863 = vld [vmem:[#allocation3 + $0x2e8] sm:$0xff]
      %v3864 = vld [vmem:[#allocation3 + $0x2f0] sm:$0xff]
      %v3865 = vld [vmem:[#allocation3 + $0x2f8] sm:$0xff]
      %v3866 = vld [vmem:[#allocation3 + $0x300] sm:$0xff]
      %v3867 = vld [vmem:[#allocation3 + $0x308] sm:$0xff]
      %v3868 = vld [vmem:[#allocation3 + $0x310] sm:$0xff]
      %v3869 = vld [vmem:[#allocation3 + $0x318] sm:$0xff]
      %v3870 = vld [vmem:[#allocation3 + $0x320] sm:$0xff]
      %v3871 = vld [vmem:[#allocation3 + $0x328] sm:$0xff]
      %v3872 = vld [vmem:[#allocation3 + $0x330] sm:$0xff]
      %v3873 = vld [vmem:[#allocation3 + $0x338] sm:$0xff]
      %v3874 = vld [vmem:[#allocation3 + $0x340] sm:$0xff]
      %v3875 = vld [vmem:[#allocation3 + $0x348] sm:$0xff]
      %v3876 = vld [vmem:[#allocation3 + $0x350] sm:$0xff]
      %v3877 = vld [vmem:[#allocation3 + $0x358] sm:$0xff]
      %v3878 = vld [vmem:[#allocation3 + $0x360] sm:$0xff]
      %v3879 = vld [vmem:[#allocation3 + $0x368] sm:$0xff]
      %v3880 = vld [vmem:[#allocation3 + $0x370] sm:$0xff]
      %v3881 = vld [vmem:[#allocation3 + $0x378] sm:$0xff]
      %v3882 = vld [vmem:[#allocation3 + $0x380] sm:$0xff]
      %v3883 = vld [vmem:[#allocation3 + $0x388] sm:$0xff]
      %v3884 = vld [vmem:[#allocation3 + $0x390] sm:$0xff]
      %v3885 = vld [vmem:[#allocation3 + $0x398] sm:$0xff]
      %v3886 = vld [vmem:[#allocation3 + $0x3a0] sm:$0xff]
      %v3887 = vld [vmem:[#allocation3 + $0x3a8] sm:$0xff]
      %v3888 = vld [vmem:[#allocation3 + $0x3b0] sm:$0xff]
      %v3889 = vld [vmem:[#allocation3 + $0x3b8] sm:$0xff]
      %v3890 = vld [vmem:[#allocation3 + $0x3c0] sm:$0xff]
      %v3891 = vld [vmem:[#allocation3 + $0x3c8] sm:$0xff]
      %v3892 = vld [vmem:[#allocation3 + $0x3d0] sm:$0xff]
      %v3893 = vld [vmem:[#allocation3 + $0x3d8] sm:$0xff]
      %v3894 = vld [vmem:[#allocation3 + $0x3e0] sm:$0xff]
      %v3895 = vld [vmem:[#allocation3 + $0x3e8] sm:$0xff]
      %v3896 = vld [vmem:[#allocation3 + $0x3f0] sm:$0xff]
      %v3897 = vld [vmem:[#allocation3 + $0x3f8] sm:$0xff]
      %v3898 = vld [vmem:[#allocation3 + $0x400] sm:$0xff]
      %v3899 = vld [vmem:[#allocation3 + $0x408] sm:$0xff]
      %v3900 = vld [vmem:[#allocation3 + $0x410] sm:$0xff]
      %v3901 = vld [vmem:[#allocation3 + $0x418] sm:$0xff]
      %v3902 = vld [vmem:[#allocation3 + $0x420] sm:$0xff]
      %v3903 = vld [vmem:[#allocation3 + $0x428] sm:$0xff]
      %v3904 = vld [vmem:[#allocation3 + $0x430] sm:$0xff]
      %v3905 = vld [vmem:[#allocation3 + $0x438] sm:$0xff]
      %v3906 = vld [vmem:[#allocation3 + $0x440] sm:$0xff]
      %v3907 = vld [vmem:[#allocation3 + $0x448] sm:$0xff]
      %v3908 = vld [vmem:[#allocation3 + $0x450] sm:$0xff]
      %v3909 = vld [vmem:[#allocation3 + $0x458] sm:$0xff]
      %v3910 = vld [vmem:[#allocation3 + $0x460] sm:$0xff]
      %v3911 = vld [vmem:[#allocation3 + $0x468] sm:$0xff]
      %v3912 = vld [vmem:[#allocation3 + $0x470] sm:$0xff]
      %v3913 = vld [vmem:[#allocation3 + $0x478] sm:$0xff]
      %v3914 = vld [vmem:[#allocation3 + $0x480] sm:$0xff]
      %v3915 = vld [vmem:[#allocation3 + $0x488] sm:$0xff]
      %v3916 = vld [vmem:[#allocation3 + $0x490] sm:$0xff]
      %v3917 = vld [vmem:[#allocation3 + $0x498] sm:$0xff]
      %v3918 = vld [vmem:[#allocation3 + $0x4a0] sm:$0xff]
      %v3919 = vld [vmem:[#allocation3 + $0x4a8] sm:$0xff]
      %v3920 = vld [vmem:[#allocation3 + $0x4b0] sm:$0xff]
      %v3921 = vld [vmem:[#allocation3 + $0x4b8] sm:$0xff]
      %v3922 = vld [vmem:[#allocation3 + $0x4c0] sm:$0xff]
      %v3923 = vld [vmem:[#allocation3 + $0x4c8] sm:$0xff]
      %v3924 = vld [vmem:[#allocation3 + $0x4d0] sm:$0xff]
      %v3925 = vld [vmem:[#allocation3 + $0x4d8] sm:$0xff]
      %v3926 = vld [vmem:[#allocation3 + $0x4e0] sm:$0xff]
      %v3927 = vld [vmem:[#allocation3 + $0x4e8] sm:$0xff]
      %v3928 = vld [vmem:[#allocation3 + $0x4f0] sm:$0xff]
      %v3929 = vld [vmem:[#allocation3 + $0x4f8] sm:$0xff]
      %v3930 = vld [vmem:[#allocation3 + $0x500] sm:$0xff]
      %v3931 = vld [vmem:[#allocation3 + $0x508] sm:$0xff]
      %v3932 = vld [vmem:[#allocation3 + $0x510] sm:$0xff]
      %v3933 = vld [vmem:[#allocation3 + $0x518] sm:$0xff]
      %v3934 = vld [vmem:[#allocation3 + $0x520] sm:$0xff]
      %v3935 = vld [vmem:[#allocation3 + $0x528] sm:$0xff]
      %v3936 = vld [vmem:[#allocation3 + $0x530] sm:$0xff]
      %v3937 = vld [vmem:[#allocation3 + $0x538] sm:$0xff]
      %v3938 = vld [vmem:[#allocation3 + $0x540] sm:$0xff]
      %v3939 = vld [vmem:[#allocation3 + $0x548] sm:$0xff]
      %v3940 = vld [vmem:[#allocation3 + $0x550] sm:$0xff]
      %v3941 = vld [vmem:[#allocation3 + $0x558] sm:$0xff]
      %v3942 = vld [vmem:[#allocation3 + $0x560] sm:$0xff]
      %v3943 = vld [vmem:[#allocation3 + $0x568] sm:$0xff]
      %v3944 = vld [vmem:[#allocation3 + $0x570] sm:$0xff]
      %v3945 = vld [vmem:[#allocation3 + $0x578] sm:$0xff]
      %v3946 = vld [vmem:[#allocation3 + $0x580] sm:$0xff]
      %v3947 = vld [vmem:[#allocation3 + $0x588] sm:$0xff]
      %v3948 = vld [vmem:[#allocation3 + $0x590] sm:$0xff]
      %v3949 = vld [vmem:[#allocation3 + $0x598] sm:$0xff]
      %v3950 = vld [vmem:[#allocation3 + $0x5a0] sm:$0xff]
      %v3951 = vld [vmem:[#allocation3 + $0x5a8] sm:$0xff]
      %v3952 = vld [vmem:[#allocation3 + $0x5b0] sm:$0xff]
      %v3953 = vld [vmem:[#allocation3 + $0x5b8] sm:$0xff]
      %v3954 = vld [vmem:[#allocation3 + $0x5c0] sm:$0xff]
      %v3955 = vld [vmem:[#allocation3 + $0x5c8] sm:$0xff]
      %v3956 = vld [vmem:[#allocation3 + $0x5d0] sm:$0xff]
      %v3957 = vld [vmem:[#allocation3 + $0x5d8] sm:$0xff]
      %v3958 = vld [vmem:[#allocation3 + $0x5e0] sm:$0xff]
      %v3959 = vld [vmem:[#allocation3 + $0x5e8] sm:$0xff]
      %v3960 = vld [vmem:[#allocation3 + $0x5f0] sm:$0xff]
      %v3961 = vld [vmem:[#allocation3 + $0x5f8] sm:$0xff]
      %v3962 = vld [vmem:[#allocation3 + $0x600] sm:$0xff]
      %v3963 = vld [vmem:[#allocation3 + $0x608] sm:$0xff]
      %v3964 = vld [vmem:[#allocation3 + $0x610] sm:$0xff]
      %v3965 = vld [vmem:[#allocation3 + $0x618] sm:$0xff]
      %v3966 = vld [vmem:[#allocation3 + $0x620] sm:$0xff]
      %v3967 = vld [vmem:[#allocation3 + $0x628] sm:$0xff]
      %v3968 = vld [vmem:[#allocation3 + $0x630] sm:$0xff]
      %v3969 = vld [vmem:[#allocation3 + $0x638] sm:$0xff]
      %v3970 = vld [vmem:[#allocation3 + $0x640] sm:$0xff]
      %v3971 = vld [vmem:[#allocation3 + $0x648] sm:$0xff]
      %v3972 = vld [vmem:[#allocation3 + $0x650] sm:$0xff]
      %v3973 = vld [vmem:[#allocation3 + $0x658] sm:$0xff]
      %v3974 = vld [vmem:[#allocation3 + $0x660] sm:$0xff]
      %v3975 = vld [vmem:[#allocation3 + $0x668] sm:$0xff]
      %v3976 = vld [vmem:[#allocation3 + $0x670] sm:$0xff]
      %v3977 = vld [vmem:[#allocation3 + $0x678] sm:$0xff]
      %v3978 = vld [vmem:[#allocation3 + $0x680] sm:$0xff]
      %v3979 = vld [vmem:[#allocation3 + $0x688] sm:$0xff]
      %v3980 = vld [vmem:[#allocation3 + $0x690] sm:$0xff]
      %v3981 = vld [vmem:[#allocation3 + $0x698] sm:$0xff]
      %v3982 = vld [vmem:[#allocation3 + $0x6a0] sm:$0xff]
      %v3983 = vld [vmem:[#allocation3 + $0x6a8] sm:$0xff]
      %v3984 = vld [vmem:[#allocation3 + $0x6b0] sm:$0xff]
      %v3985 = vld [vmem:[#allocation3 + $0x6b8] sm:$0xff]
      %v3986 = vld [vmem:[#allocation3 + $0x6c0] sm:$0xff]
      %v3987 = vld [vmem:[#allocation3 + $0x6c8] sm:$0xff]
      %v3988 = vld [vmem:[#allocation3 + $0x6d0] sm:$0xff]
      %v3989 = vld [vmem:[#allocation3 + $0x6d8] sm:$0xff]
      %v3990 = vld [vmem:[#allocation3 + $0x6e0] sm:$0xff]
      %v3991 = vld [vmem:[#allocation3 + $0x6e8] sm:$0xff]
      %v3992 = vld [vmem:[#allocation3 + $0x6f0] sm:$0xff]
      %v3993 = vld [vmem:[#allocation3 + $0x6f8] sm:$0xff]
      %v3994 = vld [vmem:[#allocation3 + $0x700] sm:$0xff]
      %v3995 = vld [vmem:[#allocation3 + $0x708] sm:$0xff]
      %v3996 = vld [vmem:[#allocation3 + $0x710] sm:$0xff]
      %v3997 = vld [vmem:[#allocation3 + $0x718] sm:$0xff]
      %v3998 = vld [vmem:[#allocation3 + $0x720] sm:$0xff]
      %v3999 = vld [vmem:[#allocation3 + $0x728] sm:$0xff]
      %v4000 = vld [vmem:[#allocation3 + $0x730] sm:$0xff]
      %v4001 = vld [vmem:[#allocation3 + $0x738] sm:$0xff]
      %v4002 = vld [vmem:[#allocation3 + $0x740] sm:$0xff]
      %v4003 = vld [vmem:[#allocation3 + $0x748] sm:$0xff]
      %v4004 = vld [vmem:[#allocation3 + $0x750] sm:$0xff]
      %v4005 = vld [vmem:[#allocation3 + $0x758] sm:$0xff]
      %v4006 = vld [vmem:[#allocation3 + $0x760] sm:$0xff]
      %v4007 = vld [vmem:[#allocation3 + $0x768] sm:$0xff]
      %v4008 = vld [vmem:[#allocation3 + $0x770] sm:$0xff]
      %v4009 = vld [vmem:[#allocation3 + $0x778] sm:$0xff]
      %v4010 = vld [vmem:[#allocation3 + $0x780] sm:$0xff]
      %v4011 = vld [vmem:[#allocation3 + $0x788] sm:$0xff]
      %v4012 = vld [vmem:[#allocation3 + $0x790] sm:$0xff]
      %v4013 = vld [vmem:[#allocation3 + $0x798] sm:$0xff]
      %v4014 = vld [vmem:[#allocation3 + $0x7a0] sm:$0xff]
      %v4015 = vld [vmem:[#allocation3 + $0x7a8] sm:$0xff]
      %v4016 = vld [vmem:[#allocation3 + $0x7b0] sm:$0xff]
      %v4017 = vld [vmem:[#allocation3 + $0x7b8] sm:$0xff]
      %v4018 = vld [vmem:[#allocation3 + $0x7c0] sm:$0xff]
      %v4019 = vld [vmem:[#allocation3 + $0x7c8] sm:$0xff]
      %v4020 = vld [vmem:[#allocation3 + $0x7d0] sm:$0xff]
      %v4021 = vld [vmem:[#allocation3 + $0x7d8] sm:$0xff]
      %v4022 = vld [vmem:[#allocation3 + $0x7e0] sm:$0xff]
      %v4023 = vld [vmem:[#allocation3 + $0x7e8] sm:$0xff]
      %v4024 = vld [vmem:[#allocation3 + $0x7f0] sm:$0xff]
      %v4025 = vld [vmem:[#allocation3 + $0x7f8] sm:$0xff]
      %v4026 = vld [vmem:[#allocation3 + $0x800] sm:$0xff]
      %v4027 = vld [vmem:[#allocation3 + $0x808] sm:$0xff]
      %v4028 = vld [vmem:[#allocation3 + $0x810] sm:$0xff]
      %v4029 = vld [vmem:[#allocation3 + $0x818] sm:$0xff]
      %v4030 = vld [vmem:[#allocation3 + $0x820] sm:$0xff]
      %v4031 = vld [vmem:[#allocation3 + $0x828] sm:$0xff]
      %v4032 = vld [vmem:[#allocation3 + $0x830] sm:$0xff]
      %v4033 = vld [vmem:[#allocation3 + $0x838] sm:$0xff]
      %v4034 = vld [vmem:[#allocation3 + $0x840] sm:$0xff]
      %v4035 = vld [vmem:[#allocation3 + $0x848] sm:$0xff]
      %v4036 = vld [vmem:[#allocation3 + $0x850] sm:$0xff]
      %v4037 = vld [vmem:[#allocation3 + $0x858] sm:$0xff]
      %v4038 = vld [vmem:[#allocation3 + $0x860] sm:$0xff]
      %v4039 = vld [vmem:[#allocation3 + $0x868] sm:$0xff]
      %v4040 = vld [vmem:[#allocation3 + $0x870] sm:$0xff]
      %v4041 = vld [vmem:[#allocation3 + $0x878] sm:$0xff]
      %v4042 = vld [vmem:[#allocation3 + $0x880] sm:$0xff]
      %v4043 = vld [vmem:[#allocation3 + $0x888] sm:$0xff]
      %v4044 = vld [vmem:[#allocation3 + $0x890] sm:$0xff]
      %v4045 = vld [vmem:[#allocation3 + $0x898] sm:$0xff]
      %v4046 = vld [vmem:[#allocation3 + $0x8a0] sm:$0xff]
      %v4047 = vld [vmem:[#allocation3 + $0x8a8] sm:$0xff]
      %v4048 = vld [vmem:[#allocation3 + $0x8b0] sm:$0xff]
      %v4049 = vld [vmem:[#allocation3 + $0x8b8] sm:$0xff]
      %v4050 = vld [vmem:[#allocation3 + $0x8c0] sm:$0xff]
      %v4051 = vld [vmem:[#allocation3 + $0x8c8] sm:$0xff]
      %v4052 = vld [vmem:[#allocation3 + $0x8d0] sm:$0xff]
      %v4053 = vld [vmem:[#allocation3 + $0x8d8] sm:$0xff]
      %v4054 = vld [vmem:[#allocation3 + $0x8e0] sm:$0xff]
      %v4055 = vld [vmem:[#allocation3 + $0x8e8] sm:$0xff]
      %v4056 = vld [vmem:[#allocation3 + $0x8f0] sm:$0xff]
      %v4057 = vld [vmem:[#allocation3 + $0x8f8] sm:$0xff]
      %4058 = vmatpush.msra.mxu0 %v3800
      %4059 = vmatpush.msra.mxu0 %v3798
      %4060 = vmatpush.msra.mxu0 %v3796
      %4061 = vmatpush.msra.mxu0 %v3794
      %4062 = vmatpush.msra.mxu0 %v3792
      %4063 = vmatpush.msra.mxu0 %v3790
      %4064 = vmatpush.msra.mxu0 %v3788
      %4065 = vmatpush.msra.mxu0 %v3786
      %4066 = vmatpush.msra.mxu0 %v3784
      %4067 = vmatpush.msra.mxu0 %v3782
      %4068 = vmatpush.msra.mxu0 %v3780
      %4069 = vmatpush.msra.mxu0 %v3778
      %4070 = vmatpush.msra.mxu0 %v3776
      %4071 = vmatpush.msra.mxu0 %v3774
      %4072 = vmatpush.msra.mxu0 %v3772
      %4073 = vmatpush.msra.mxu0 %v3770
      %4074 = vmatmul.f32.gmra.mxu0 %v3734
      %v4075 = vpop.f32.mrf.mxu0
      %v4076 = vadd.f32 0.0, %v4075
      %4077 = vmatmul.f32.gmra.mxu0 %v3743
      %v4078 = vpop.f32.mrf.mxu0
      %v4079 = vadd.f32 0.0, %v4078
      %4080 = vmatmul.f32.gmra.mxu0 %v3752
      %v4081 = vpop.f32.mrf.mxu0
      %v4082 = vadd.f32 0.0, %v4081
      %4083 = vmatmul.f32.gmra.mxu0 %v3761
      %v4084 = vpop.f32.mrf.mxu0
      %v4085 = vadd.f32 0.0, %v4084
      %4086 = vdwg.mxu0
      %4087 = vmatpush.msra.mxu0 %v3832
      %4088 = vmatpush.msra.mxu0 %v3830
      %4089 = vmatpush.msra.mxu0 %v3828
      %4090 = vmatpush.msra.mxu0 %v3826
      %4091 = vmatpush.msra.mxu0 %v3824
      %4092 = vmatpush.msra.mxu0 %v3822
      %4093 = vmatpush.msra.mxu0 %v3820
      %4094 = vmatpush.msra.mxu0 %v3818
      %4095 = vmatpush.msra.mxu0 %v3816
      %4096 = vmatpush.msra.mxu0 %v3814
      %4097 = vmatpush.msra.mxu0 %v3812
      %4098 = vmatpush.msra.mxu0 %v3810
      %4099 = vmatpush.msra.mxu0 %v3808
      %4100 = vmatpush.msra.mxu0 %v3806
      %4101 = vmatpush.msra.mxu0 %v3804
      %4102 = vmatpush.msra.mxu0 %v3802
      %4103 = vmatmul.f32.gmra.mxu0 %v3735
      %v4104 = vpop.f32.mrf.mxu0
      %v4105 = vadd.f32 %v4076, %v4104
      %4106 = vmatmul.f32.gmra.mxu0 %v3744
      %v4107 = vpop.f32.mrf.mxu0
      %v4108 = vadd.f32 %v4079, %v4107
      %4109 = vmatmul.f32.gmra.mxu0 %v3753
      %v4110 = vpop.f32.mrf.mxu0
      %v4111 = vadd.f32 %v4082, %v4110
      %4112 = vmatmul.f32.gmra.mxu0 %v3762
      %v4113 = vpop.f32.mrf.mxu0
      %v4114 = vadd.f32 %v4085, %v4113
      %4115 = vdwg.mxu0
      %4116 = vmatpush.msra.mxu0 %v3864
      %4117 = vmatpush.msra.mxu0 %v3862
      %4118 = vmatpush.msra.mxu0 %v3860
      %4119 = vmatpush.msra.mxu0 %v3858
      %4120 = vmatpush.msra.mxu0 %v3856
      %4121 = vmatpush.msra.mxu0 %v3854
      %4122 = vmatpush.msra.mxu0 %v3852
      %4123 = vmatpush.msra.mxu0 %v3850
      %4124 = vmatpush.msra.mxu0 %v3848
      %4125 = vmatpush.msra.mxu0 %v3846
      %4126 = vmatpush.msra.mxu0 %v3844
      %4127 = vmatpush.msra.mxu0 %v3842
      %4128 = vmatpush.msra.mxu0 %v3840
      %4129 = vmatpush.msra.mxu0 %v3838
      %4130 = vmatpush.msra.mxu0 %v3836
      %4131 = vmatpush.msra.mxu0 %v3834
      %4132 = vmatmul.f32.gmra.mxu0 %v3736
      %v4133 = vpop.f32.mrf.mxu0
      %v4134 = vadd.f32 %v4105, %v4133
      %4135 = vmatmul.f32.gmra.mxu0 %v3745
      %v4136 = vpop.f32.mrf.mxu0
      %v4137 = vadd.f32 %v4108, %v4136
      %4138 = vmatmul.f32.gmra.mxu0 %v3754
      %v4139 = vpop.f32.mrf.mxu0
      %v4140 = vadd.f32 %v4111, %v4139
      %4141 = vmatmul.f32.gmra.mxu0 %v3763
      %v4142 = vpop.f32.mrf.mxu0
      %v4143 = vadd.f32 %v4114, %v4142
      %4144 = vdwg.mxu0
      %4145 = vmatpush.msra.mxu0 %v3896
      %4146 = vmatpush.msra.mxu0 %v3894
      %4147 = vmatpush.msra.mxu0 %v3892
      %4148 = vmatpush.msra.mxu0 %v3890
      %4149 = vmatpush.msra.mxu0 %v3888
      %4150 = vmatpush.msra.mxu0 %v3886
      %4151 = vmatpush.msra.mxu0 %v3884
      %4152 = vmatpush.msra.mxu0 %v3882
      %4153 = vmatpush.msra.mxu0 %v3880
      %4154 = vmatpush.msra.mxu0 %v3878
      %4155 = vmatpush.msra.mxu0 %v3876
      %4156 = vmatpush.msra.mxu0 %v3874
      %4157 = vmatpush.msra.mxu0 %v3872
      %4158 = vmatpush.msra.mxu0 %v3870
      %4159 = vmatpush.msra.mxu0 %v3868
      %4160 = vmatpush.msra.mxu0 %v3866
      %4161 = vmatmul.f32.gmra.mxu0 %v3737
      %v4162 = vpop.f32.mrf.mxu0
      %v4163 = vadd.f32 %v4134, %v4162
      %4164 = vmatmul.f32.gmra.mxu0 %v3746
      %v4165 = vpop.f32.mrf.mxu0
      %v4166 = vadd.f32 %v4137, %v4165
      %4167 = vmatmul.f32.gmra.mxu0 %v3755
      %v4168 = vpop.f32.mrf.mxu0
      %v4169 = vadd.f32 %v4140, %v4168
      %4170 = vmatmul.f32.gmra.mxu0 %v3764
      %v4171 = vpop.f32.mrf.mxu0
      %v4172 = vadd.f32 %v4143, %v4171
      %4173 = vdwg.mxu0
      %4174 = vmatpush.msra.mxu0 %v3928
      %4175 = vmatpush.msra.mxu0 %v3926
      %4176 = vmatpush.msra.mxu0 %v3924
      %4177 = vmatpush.msra.mxu0 %v3922
      %4178 = vmatpush.msra.mxu0 %v3920
      %4179 = vmatpush.msra.mxu0 %v3918
      %4180 = vmatpush.msra.mxu0 %v3916
      %4181 = vmatpush.msra.mxu0 %v3914
      %4182 = vmatpush.msra.mxu0 %v3912
      %4183 = vmatpush.msra.mxu0 %v3910
      %4184 = vmatpush.msra.mxu0 %v3908
      %4185 = vmatpush.msra.mxu0 %v3906
      %4186 = vmatpush.msra.mxu0 %v3904
      %4187 = vmatpush.msra.mxu0 %v3902
      %4188 = vmatpush.msra.mxu0 %v3900
      %4189 = vmatpush.msra.mxu0 %v3898
      %4190 = vmatmul.f32.gmra.mxu0 %v3738
      %v4191 = vpop.f32.mrf.mxu0
      %v4192 = vadd.f32 %v4163, %v4191
      %4193 = vmatmul.f32.gmra.mxu0 %v3747
      %v4194 = vpop.f32.mrf.mxu0
      %v4195 = vadd.f32 %v4166, %v4194
      %4196 = vmatmul.f32.gmra.mxu0 %v3756
      %v4197 = vpop.f32.mrf.mxu0
      %v4198 = vadd.f32 %v4169, %v4197
      %4199 = vmatmul.f32.gmra.mxu0 %v3765
      %v4200 = vpop.f32.mrf.mxu0
      %v4201 = vadd.f32 %v4172, %v4200
      %4202 = vdwg.mxu0
      %4203 = vmatpush.msra.mxu0 %v3960
      %4204 = vmatpush.msra.mxu0 %v3958
      %4205 = vmatpush.msra.mxu0 %v3956
      %4206 = vmatpush.msra.mxu0 %v3954
      %4207 = vmatpush.msra.mxu0 %v3952
      %4208 = vmatpush.msra.mxu0 %v3950
      %4209 = vmatpush.msra.mxu0 %v3948
      %4210 = vmatpush.msra.mxu0 %v3946
      %4211 = vmatpush.msra.mxu0 %v3944
      %4212 = vmatpush.msra.mxu0 %v3942
      %4213 = vmatpush.msra.mxu0 %v3940
      %4214 = vmatpush.msra.mxu0 %v3938
      %4215 = vmatpush.msra.mxu0 %v3936
      %4216 = vmatpush.msra.mxu0 %v3934
      %4217 = vmatpush.msra.mxu0 %v3932
      %4218 = vmatpush.msra.mxu0 %v3930
      %4219 = vmatmul.f32.gmra.mxu0 %v3739
      %v4220 = vpop.f32.mrf.mxu0
      %v4221 = vadd.f32 %v4192, %v4220
      %4222 = vmatmul.f32.gmra.mxu0 %v3748
      %v4223 = vpop.f32.mrf.mxu0
      %v4224 = vadd.f32 %v4195, %v4223
      %4225 = vmatmul.f32.gmra.mxu0 %v3757
      %v4226 = vpop.f32.mrf.mxu0
      %v4227 = vadd.f32 %v4198, %v4226
      %4228 = vmatmul.f32.gmra.mxu0 %v3766
      %v4229 = vpop.f32.mrf.mxu0
      %v4230 = vadd.f32 %v4201, %v4229
      %4231 = vdwg.mxu0
      %4232 = vmatpush.msra.mxu0 %v3992
      %4233 = vmatpush.msra.mxu0 %v3990
      %4234 = vmatpush.msra.mxu0 %v3988
      %4235 = vmatpush.msra.mxu0 %v3986
      %4236 = vmatpush.msra.mxu0 %v3984
      %4237 = vmatpush.msra.mxu0 %v3982
      %4238 = vmatpush.msra.mxu0 %v3980
      %4239 = vmatpush.msra.mxu0 %v3978
      %4240 = vmatpush.msra.mxu0 %v3976
      %4241 = vmatpush.msra.mxu0 %v3974
      %4242 = vmatpush.msra.mxu0 %v3972
      %4243 = vmatpush.msra.mxu0 %v3970
      %4244 = vmatpush.msra.mxu0 %v3968
      %4245 = vmatpush.msra.mxu0 %v3966
      %4246 = vmatpush.msra.mxu0 %v3964
      %4247 = vmatpush.msra.mxu0 %v3962
      %4248 = vmatmul.f32.gmra.mxu0 %v3740
      %v4249 = vpop.f32.mrf.mxu0
      %v4250 = vadd.f32 %v4221, %v4249
      %4251 = vmatmul.f32.gmra.mxu0 %v3749
      %v4252 = vpop.f32.mrf.mxu0
      %v4253 = vadd.f32 %v4224, %v4252
      %4254 = vmatmul.f32.gmra.mxu0 %v3758
      %v4255 = vpop.f32.mrf.mxu0
      %v4256 = vadd.f32 %v4227, %v4255
      %4257 = vmatmul.f32.gmra.mxu0 %v3767
      %v4258 = vpop.f32.mrf.mxu0
      %v4259 = vadd.f32 %v4230, %v4258
      %4260 = vdwg.mxu0
      %4261 = vmatpush.msra.mxu0 %v4024
      %4262 = vmatpush.msra.mxu0 %v4022
      %4263 = vmatpush.msra.mxu0 %v4020
      %4264 = vmatpush.msra.mxu0 %v4018
      %4265 = vmatpush.msra.mxu0 %v4016
      %4266 = vmatpush.msra.mxu0 %v4014
      %4267 = vmatpush.msra.mxu0 %v4012
      %4268 = vmatpush.msra.mxu0 %v4010
      %4269 = vmatpush.msra.mxu0 %v4008
      %4270 = vmatpush.msra.mxu0 %v4006
      %4271 = vmatpush.msra.mxu0 %v4004
      %4272 = vmatpush.msra.mxu0 %v4002
      %4273 = vmatpush.msra.mxu0 %v4000
      %4274 = vmatpush.msra.mxu0 %v3998
      %4275 = vmatpush.msra.mxu0 %v3996
      %4276 = vmatpush.msra.mxu0 %v3994
      %4277 = vmatmul.f32.gmra.mxu0 %v3741
      %v4278 = vpop.f32.mrf.mxu0
      %v4279 = vadd.f32 %v4250, %v4278
      %4280 = vmatmul.f32.gmra.mxu0 %v3750
      %v4281 = vpop.f32.mrf.mxu0
      %v4282 = vadd.f32 %v4253, %v4281
      %4283 = vmatmul.f32.gmra.mxu0 %v3759
      %v4284 = vpop.f32.mrf.mxu0
      %v4285 = vadd.f32 %v4256, %v4284
      %4286 = vmatmul.f32.gmra.mxu0 %v3768
      %v4287 = vpop.f32.mrf.mxu0
      %v4288 = vadd.f32 %v4259, %v4287
      %4289 = vdwg.mxu0
      %4290 = vmatpush.msra.mxu0 %v4056
      %4291 = vmatpush.msra.mxu0 %v4054
      %4292 = vmatpush.msra.mxu0 %v4052
      %4293 = vmatpush.msra.mxu0 %v4050
      %4294 = vmatpush.msra.mxu0 %v4048
      %4295 = vmatpush.msra.mxu0 %v4046
      %4296 = vmatpush.msra.mxu0 %v4044
      %4297 = vmatpush.msra.mxu0 %v4042
      %4298 = vmatpush.msra.mxu0 %v4040
      %4299 = vmatpush.msra.mxu0 %v4038
      %4300 = vmatpush.msra.mxu0 %v4036
      %4301 = vmatpush.msra.mxu0 %v4034
      %4302 = vmatpush.msra.mxu0 %v4032
      %4303 = vmatpush.msra.mxu0 %v4030
      %4304 = vmatpush.msra.mxu0 %v4028
      %4305 = vmatpush.msra.mxu0 %v4026
      %4306 = vmatmul.f32.gmra.mxu0 %v3742
      %v4307 = vpop.f32.mrf.mxu0
      %v4308 = vadd.f32 %v4279, %v4307
      %4309 = vmatmul.f32.gmra.mxu0 %v3751
      %v4310 = vpop.f32.mrf.mxu0
      %v4311 = vadd.f32 %v4282, %v4310
      %4312 = vmatmul.f32.gmra.mxu0 %v3760
      %v4313 = vpop.f32.mrf.mxu0
      %v4314 = vadd.f32 %v4285, %v4313
      %4315 = vmatmul.f32.gmra.mxu0 %v3769
      %v4316 = vpop.f32.mrf.mxu0
      %v4317 = vadd.f32 %v4288, %v4316
      %4318 = vdwg.mxu0
      %4319 = vmatpush.msra.mxu0 %v3801
      %4320 = vmatpush.msra.mxu0 %v3799
      %4321 = vmatpush.msra.mxu0 %v3797
      %4322 = vmatpush.msra.mxu0 %v3795
      %4323 = vmatpush.msra.mxu0 %v3793
      %4324 = vmatpush.msra.mxu0 %v3791
      %4325 = vmatpush.msra.mxu0 %v3789
      %4326 = vmatpush.msra.mxu0 %v3787
      %4327 = vmatpush.msra.mxu0 %v3785
      %4328 = vmatpush.msra.mxu0 %v3783
      %4329 = vmatpush.msra.mxu0 %v3781
      %4330 = vmatpush.msra.mxu0 %v3779
      %4331 = vmatpush.msra.mxu0 %v3777
      %4332 = vmatpush.msra.mxu0 %v3775
      %4333 = vmatpush.msra.mxu0 %v3773
      %4334 = vmatpush.msra.mxu0 %v3771
      %4335 = vmatmul.f32.gmra.mxu0 %v3734
      %v4336 = vpop.f32.mrf.mxu0
      %v4337 = vadd.f32 0.0, %v4336
      %4338 = vmatmul.f32.gmra.mxu0 %v3743
      %v4339 = vpop.f32.mrf.mxu0
      %v4340 = vadd.f32 0.0, %v4339
      %4341 = vmatmul.f32.gmra.mxu0 %v3752
      %v4342 = vpop.f32.mrf.mxu0
      %v4343 = vadd.f32 0.0, %v4342
      %4344 = vmatmul.f32.gmra.mxu0 %v3761
      %v4345 = vpop.f32.mrf.mxu0
      %v4346 = vadd.f32 0.0, %v4345
      %4347 = vdwg.mxu0
      %4348 = vmatpush.msra.mxu0 %v3833
      %4349 = vmatpush.msra.mxu0 %v3831
      %4350 = vmatpush.msra.mxu0 %v3829
      %4351 = vmatpush.msra.mxu0 %v3827
      %4352 = vmatpush.msra.mxu0 %v3825
      %4353 = vmatpush.msra.mxu0 %v3823
      %4354 = vmatpush.msra.mxu0 %v3821
      %4355 = vmatpush.msra.mxu0 %v3819
      %4356 = vmatpush.msra.mxu0 %v3817
      %4357 = vmatpush.msra.mxu0 %v3815
      %4358 = vmatpush.msra.mxu0 %v3813
      %4359 = vmatpush.msra.mxu0 %v3811
      %4360 = vmatpush.msra.mxu0 %v3809
      %4361 = vmatpush.msra.mxu0 %v3807
      %4362 = vmatpush.msra.mxu0 %v3805
      %4363 = vmatpush.msra.mxu0 %v3803
      %4364 = vmatmul.f32.gmra.mxu0 %v3735
      %v4365 = vpop.f32.mrf.mxu0
      %v4366 = vadd.f32 %v4337, %v4365
      %4367 = vmatmul.f32.gmra.mxu0 %v3744
      %v4368 = vpop.f32.mrf.mxu0
      %v4369 = vadd.f32 %v4340, %v4368
      %4370 = vmatmul.f32.gmra.mxu0 %v3753
      %v4371 = vpop.f32.mrf.mxu0
      %v4372 = vadd.f32 %v4343, %v4371
      %4373 = vmatmul.f32.gmra.mxu0 %v3762
      %v4374 = vpop.f32.mrf.mxu0
      %v4375 = vadd.f32 %v4346, %v4374
      %4376 = vdwg.mxu0
      %4377 = vmatpush.msra.mxu0 %v3865
      %4378 = vmatpush.msra.mxu0 %v3863
      %4379 = vmatpush.msra.mxu0 %v3861
      %4380 = vmatpush.msra.mxu0 %v3859
      %4381 = vmatpush.msra.mxu0 %v3857
      %4382 = vmatpush.msra.mxu0 %v3855
      %4383 = vmatpush.msra.mxu0 %v3853
      %4384 = vmatpush.msra.mxu0 %v3851
      %4385 = vmatpush.msra.mxu0 %v3849
      %4386 = vmatpush.msra.mxu0 %v3847
      %4387 = vmatpush.msra.mxu0 %v3845
      %4388 = vmatpush.msra.mxu0 %v3843
      %4389 = vmatpush.msra.mxu0 %v3841
      %4390 = vmatpush.msra.mxu0 %v3839
      %4391 = vmatpush.msra.mxu0 %v3837
      %4392 = vmatpush.msra.mxu0 %v3835
      %4393 = vmatmul.f32.gmra.mxu0 %v3736
      %v4394 = vpop.f32.mrf.mxu0
      %v4395 = vadd.f32 %v4366, %v4394
      %4396 = vmatmul.f32.gmra.mxu0 %v3745
      %v4397 = vpop.f32.mrf.mxu0
      %v4398 = vadd.f32 %v4369, %v4397
      %4399 = vmatmul.f32.gmra.mxu0 %v3754
      %v4400 = vpop.f32.mrf.mxu0
      %v4401 = vadd.f32 %v4372, %v4400
      %4402 = vmatmul.f32.gmra.mxu0 %v3763
      %v4403 = vpop.f32.mrf.mxu0
      %v4404 = vadd.f32 %v4375, %v4403
      %4405 = vdwg.mxu0
      %4406 = vmatpush.msra.mxu0 %v3897
      %4407 = vmatpush.msra.mxu0 %v3895
      %4408 = vmatpush.msra.mxu0 %v3893
      %4409 = vmatpush.msra.mxu0 %v3891
      %4410 = vmatpush.msra.mxu0 %v3889
      %4411 = vmatpush.msra.mxu0 %v3887
      %4412 = vmatpush.msra.mxu0 %v3885
      %4413 = vmatpush.msra.mxu0 %v3883
      %4414 = vmatpush.msra.mxu0 %v3881
      %4415 = vmatpush.msra.mxu0 %v3879
      %4416 = vmatpush.msra.mxu0 %v3877
      %4417 = vmatpush.msra.mxu0 %v3875
      %4418 = vmatpush.msra.mxu0 %v3873
      %4419 = vmatpush.msra.mxu0 %v3871
      %4420 = vmatpush.msra.mxu0 %v3869
      %4421 = vmatpush.msra.mxu0 %v3867
      %4422 = vmatmul.f32.gmra.mxu0 %v3737
      %v4423 = vpop.f32.mrf.mxu0
      %v4424 = vadd.f32 %v4395, %v4423
      %4425 = vmatmul.f32.gmra.mxu0 %v3746
      %v4426 = vpop.f32.mrf.mxu0
      %v4427 = vadd.f32 %v4398, %v4426
      %4428 = vmatmul.f32.gmra.mxu0 %v3755
      %v4429 = vpop.f32.mrf.mxu0
      %v4430 = vadd.f32 %v4401, %v4429
      %4431 = vmatmul.f32.gmra.mxu0 %v3764
      %v4432 = vpop.f32.mrf.mxu0
      %v4433 = vadd.f32 %v4404, %v4432
      %4434 = vdwg.mxu0
      %4435 = vmatpush.msra.mxu0 %v3929
      %4436 = vmatpush.msra.mxu0 %v3927
      %4437 = vmatpush.msra.mxu0 %v3925
      %4438 = vmatpush.msra.mxu0 %v3923
      %4439 = vmatpush.msra.mxu0 %v3921
      %4440 = vmatpush.msra.mxu0 %v3919
      %4441 = vmatpush.msra.mxu0 %v3917
      %4442 = vmatpush.msra.mxu0 %v3915
      %4443 = vmatpush.msra.mxu0 %v3913
      %4444 = vmatpush.msra.mxu0 %v3911
      %4445 = vmatpush.msra.mxu0 %v3909
      %4446 = vmatpush.msra.mxu0 %v3907
      %4447 = vmatpush.msra.mxu0 %v3905
      %4448 = vmatpush.msra.mxu0 %v3903
      %4449 = vmatpush.msra.mxu0 %v3901
      %4450 = vmatpush.msra.mxu0 %v3899
      %4451 = vmatmul.f32.gmra.mxu0 %v3738
      %v4452 = vpop.f32.mrf.mxu0
      %v4453 = vadd.f32 %v4424, %v4452
      %4454 = vmatmul.f32.gmra.mxu0 %v3747
      %v4455 = vpop.f32.mrf.mxu0
      %v4456 = vadd.f32 %v4427, %v4455
      %4457 = vmatmul.f32.gmra.mxu0 %v3756
      %v4458 = vpop.f32.mrf.mxu0
      %v4459 = vadd.f32 %v4430, %v4458
      %4460 = vmatmul.f32.gmra.mxu0 %v3765
      %v4461 = vpop.f32.mrf.mxu0
      %v4462 = vadd.f32 %v4433, %v4461
      %4463 = vdwg.mxu0
      %4464 = vmatpush.msra.mxu0 %v3961
      %4465 = vmatpush.msra.mxu0 %v3959
      %4466 = vmatpush.msra.mxu0 %v3957
      %4467 = vmatpush.msra.mxu0 %v3955
      %4468 = vmatpush.msra.mxu0 %v3953
      %4469 = vmatpush.msra.mxu0 %v3951
      %4470 = vmatpush.msra.mxu0 %v3949
      %4471 = vmatpush.msra.mxu0 %v3947
      %4472 = vmatpush.msra.mxu0 %v3945
      %4473 = vmatpush.msra.mxu0 %v3943
      %4474 = vmatpush.msra.mxu0 %v3941
      %4475 = vmatpush.msra.mxu0 %v3939
      %4476 = vmatpush.msra.mxu0 %v3937
      %4477 = vmatpush.msra.mxu0 %v3935
      %4478 = vmatpush.msra.mxu0 %v3933
      %4479 = vmatpush.msra.mxu0 %v3931
      %4480 = vmatmul.f32.gmra.mxu0 %v3739
      %v4481 = vpop.f32.mrf.mxu0
      %v4482 = vadd.f32 %v4453, %v4481
      %4483 = vmatmul.f32.gmra.mxu0 %v3748
      %v4484 = vpop.f32.mrf.mxu0
      %v4485 = vadd.f32 %v4456, %v4484
      %4486 = vmatmul.f32.gmra.mxu0 %v3757
      %v4487 = vpop.f32.mrf.mxu0
      %v4488 = vadd.f32 %v4459, %v4487
      %4489 = vmatmul.f32.gmra.mxu0 %v3766
      %v4490 = vpop.f32.mrf.mxu0
      %v4491 = vadd.f32 %v4462, %v4490
      %4492 = vdwg.mxu0
      %4493 = vmatpush.msra.mxu0 %v3993
      %4494 = vmatpush.msra.mxu0 %v3991
      %4495 = vmatpush.msra.mxu0 %v3989
      %4496 = vmatpush.msra.mxu0 %v3987
      %4497 = vmatpush.msra.mxu0 %v3985
      %4498 = vmatpush.msra.mxu0 %v3983
      %4499 = vmatpush.msra.mxu0 %v3981
      %4500 = vmatpush.msra.mxu0 %v3979
      %4501 = vmatpush.msra.mxu0 %v3977
      %4502 = vmatpush.msra.mxu0 %v3975
      %4503 = vmatpush.msra.mxu0 %v3973
      %4504 = vmatpush.msra.mxu0 %v3971
      %4505 = vmatpush.msra.mxu0 %v3969
      %4506 = vmatpush.msra.mxu0 %v3967
      %4507 = vmatpush.msra.mxu0 %v3965
      %4508 = vmatpush.msra.mxu0 %v3963
      %4509 = vmatmul.f32.gmra.mxu0 %v3740
      %v4510 = vpop.f32.mrf.mxu0
      %v4511 = vadd.f32 %v4482, %v4510
      %4512 = vmatmul.f32.gmra.mxu0 %v3749
      %v4513 = vpop.f32.mrf.mxu0
      %v4514 = vadd.f32 %v4485, %v4513
      %4515 = vmatmul.f32.gmra.mxu0 %v3758
      %v4516 = vpop.f32.mrf.mxu0
      %v4517 = vadd.f32 %v4488, %v4516
      %4518 = vmatmul.f32.gmra.mxu0 %v3767
      %v4519 = vpop.f32.mrf.mxu0
      %v4520 = vadd.f32 %v4491, %v4519
      %4521 = vdwg.mxu0
      %4522 = vmatpush.msra.mxu0 %v4025
      %4523 = vmatpush.msra.mxu0 %v4023
      %4524 = vmatpush.msra.mxu0 %v4021
      %4525 = vmatpush.msra.mxu0 %v4019
      %4526 = vmatpush.msra.mxu0 %v4017
      %4527 = vmatpush.msra.mxu0 %v4015
      %4528 = vmatpush.msra.mxu0 %v4013
      %4529 = vmatpush.msra.mxu0 %v4011
      %4530 = vmatpush.msra.mxu0 %v4009
      %4531 = vmatpush.msra.mxu0 %v4007
      %4532 = vmatpush.msra.mxu0 %v4005
      %4533 = vmatpush.msra.mxu0 %v4003
      %4534 = vmatpush.msra.mxu0 %v4001
      %4535 = vmatpush.msra.mxu0 %v3999
      %4536 = vmatpush.msra.mxu0 %v3997
      %4537 = vmatpush.msra.mxu0 %v3995
      %4538 = vmatmul.f32.gmra.mxu0 %v3741
      %v4539 = vpop.f32.mrf.mxu0
      %v4540 = vadd.f32 %v4511, %v4539
      %4541 = vmatmul.f32.gmra.mxu0 %v3750
      %v4542 = vpop.f32.mrf.mxu0
      %v4543 = vadd.f32 %v4514, %v4542
      %4544 = vmatmul.f32.gmra.mxu0 %v3759
      %v4545 = vpop.f32.mrf.mxu0
      %v4546 = vadd.f32 %v4517, %v4545
      %4547 = vmatmul.f32.gmra.mxu0 %v3768
      %v4548 = vpop.f32.mrf.mxu0
      %v4549 = vadd.f32 %v4520, %v4548
      %4550 = vdwg.mxu0
      %4551 = vmatpush.msra.mxu0 %v4057
      %4552 = vmatpush.msra.mxu0 %v4055
      %4553 = vmatpush.msra.mxu0 %v4053
      %4554 = vmatpush.msra.mxu0 %v4051
      %4555 = vmatpush.msra.mxu0 %v4049
      %4556 = vmatpush.msra.mxu0 %v4047
      %4557 = vmatpush.msra.mxu0 %v4045
      %4558 = vmatpush.msra.mxu0 %v4043
      %4559 = vmatpush.msra.mxu0 %v4041
      %4560 = vmatpush.msra.mxu0 %v4039
      %4561 = vmatpush.msra.mxu0 %v4037
      %4562 = vmatpush.msra.mxu0 %v4035
      %4563 = vmatpush.msra.mxu0 %v4033
      %4564 = vmatpush.msra.mxu0 %v4031
      %4565 = vmatpush.msra.mxu0 %v4029
      %4566 = vmatpush.msra.mxu0 %v4027
      %4567 = vmatmul.f32.gmra.mxu0 %v3742
      %v4568 = vpop.f32.mrf.mxu0
      %v4569 = vadd.f32 %v4540, %v4568
      %4570 = vmatmul.f32.gmra.mxu0 %v3751
      %v4571 = vpop.f32.mrf.mxu0
      %v4572 = vadd.f32 %v4543, %v4571
      %4573 = vmatmul.f32.gmra.mxu0 %v3760
      %v4574 = vpop.f32.mrf.mxu0
      %v4575 = vadd.f32 %v4546, %v4574
      %4576 = vmatmul.f32.gmra.mxu0 %v3769
      %v4577 = vpop.f32.mrf.mxu0
      %v4578 = vadd.f32 %v4549, %v4577
      %4579 = vdwg.mxu0
      %v4580 = vadd.f32 %v4308, %v4569
      %4581 = vadd.xlane.f32.xlu0 %v4580
      %v4582 = vpop.xlane.xlu0 %4581
      %v4583 = vadd.f32 %v4311, %v4572
      %4584 = vadd.xlane.f32.xlu0 %v4583
      %v4585 = vpop.xlane.xlu0 %4584
      %v4586 = vadd.f32 %v4314, %v4575
      %4587 = vadd.xlane.f32.xlu0 %v4586
      %v4588 = vpop.xlane.xlu0 %4587
      %v4589 = vadd.f32 %v4317, %v4578
      %4590 = vadd.xlane.f32.xlu0 %v4589
      %v4591 = vpop.xlane.xlu0 %4590
      %v4592 = vmul.f32 %v4582, %v359
      %v4593 = vmul.f32 %v4585, %v359
      %v4594 = vmul.f32 %v4588, %v359
      %v4595 = vmul.f32 %v4591, %v359
      %v4596 = vsub.f32 %v4308, %v4592
      %v4597 = vsub.f32 %v4569, %v4592
      %v4598 = vsub.f32 %v4311, %v4593
      %v4599 = vsub.f32 %v4572, %v4593
      %v4600 = vsub.f32 %v4314, %v4594
      %v4601 = vsub.f32 %v4575, %v4594
      %v4602 = vsub.f32 %v4317, %v4595
      %v4603 = vsub.f32 %v4578, %v4595
      %v4604 = vmul.f32 %v4596, %v4596
      %v4605 = vmul.f32 %v4597, %v4597
      %v4606 = vmul.f32 %v4598, %v4598
      %v4607 = vmul.f32 %v4599, %v4599
      %v4608 = vmul.f32 %v4600, %v4600
      %v4609 = vmul.f32 %v4601, %v4601
      %v4610 = vmul.f32 %v4602, %v4602
      %v4611 = vmul.f32 %v4603, %v4603
      %v4612 = vadd.f32 %v4604, %v4605
      %4613 = vadd.xlane.f32.xlu0 %v4612
      %v4614 = vpop.xlane.xlu0 %4613
      %v4615 = vadd.f32 %v4606, %v4607
      %4616 = vadd.xlane.f32.xlu0 %v4615
      %v4617 = vpop.xlane.xlu0 %4616
      %v4618 = vadd.f32 %v4608, %v4609
      %4619 = vadd.xlane.f32.xlu0 %v4618
      %v4620 = vpop.xlane.xlu0 %4619
      %v4621 = vadd.f32 %v4610, %v4611
      %4622 = vadd.xlane.f32.xlu0 %v4621
      %v4623 = vpop.xlane.xlu0 %4622
      %v4624 = vmul.f32 %v4614, %v359
      %v4625 = vmul.f32 %v4617, %v359
      %v4626 = vmul.f32 %v4620, %v359
      %v4627 = vmul.f32 %v4623, %v359
      %v4628 = vadd.f32 %v4624, 1e-05
      %v4629 = vadd.f32 %v4625, 1e-05
      %v4630 = vadd.f32 %v4626, 1e-05
      %v4631 = vadd.f32 %v4627, 1e-05
      %v4632 = vrsqrt.pop %v4628
      %v4633 = vmul.f32 %v4632, %v4628
      %v4634 = vmul.f32 %v4633, %v4632
      %v4635 = vmul.f32 0.5, %v4634
      %v4636 = vsub.f32 1.5, %v4635
      %v4637 = vmul.f32 %v4632, %v4636
      %vm4638 = vweird.f32 %v4628
      %vm4639 = vweird.f32 %v4632
      %vm4640 = vmor %vm4638, %vm4639
      %v4641 = vsel %vm4640, %v4632, %v4637
      %v4642 = vrsqrt.pop %v4629
      %v4643 = vmul.f32 %v4642, %v4629
      %v4644 = vmul.f32 %v4643, %v4642
      %v4645 = vmul.f32 0.5, %v4644
      %v4646 = vsub.f32 1.5, %v4645
      %v4647 = vmul.f32 %v4642, %v4646
      %vm4648 = vweird.f32 %v4629
      %vm4649 = vweird.f32 %v4642
      %vm4650 = vmor %vm4648, %vm4649
      %v4651 = vsel %vm4650, %v4642, %v4647
      %v4652 = vrsqrt.pop %v4630
      %v4653 = vmul.f32 %v4652, %v4630
      %v4654 = vmul.f32 %v4653, %v4652
      %v4655 = vmul.f32 0.5, %v4654
      %v4656 = vsub.f32 1.5, %v4655
      %v4657 = vmul.f32 %v4652, %v4656
      %vm4658 = vweird.f32 %v4630
      %vm4659 = vweird.f32 %v4652
      %vm4660 = vmor %vm4658, %vm4659
      %v4661 = vsel %vm4660, %v4652, %v4657
      %v4662 = vrsqrt.pop %v4631
      %v4663 = vmul.f32 %v4662, %v4631
      %v4664 = vmul.f32 %v4663, %v4662
      %v4665 = vmul.f32 0.5, %v4664
      %v4666 = vsub.f32 1.5, %v4665
      %v4667 = vmul.f32 %v4662, %v4666
      %vm4668 = vweird.f32 %v4631
      %vm4669 = vweird.f32 %v4662
      %vm4670 = vmor %vm4668, %vm4669
      %v4671 = vsel %vm4670, %v4662, %v4667
      %v4672 = vmul.f32 %v4596, %v4641
      %v4673 = vmul.f32 %v4597, %v4641
      %v4674 = vmul.f32 %v4598, %v4651
      %v4675 = vmul.f32 %v4599, %v4651
      %v4676 = vmul.f32 %v4600, %v4661
      %v4677 = vmul.f32 %v4601, %v4661
      %v4678 = vmul.f32 %v4602, %v4671
      %v4679 = vmul.f32 %v4603, %v4671
      %v4680 = vmax.f32 %v4672, 0.0
      %v4681 = vmax.f32 %v4673, 0.0
      %v4682 = vmax.f32 %v4674, 0.0
      %v4683 = vmax.f32 %v4675, 0.0
      %v4684 = vmax.f32 %v4676, 0.0
      %v4685 = vmax.f32 %v4677, 0.0
      %v4686 = vmax.f32 %v4678, 0.0
      %v4687 = vmax.f32 %v4679, 0.0
      %4688 = vst [vmem:[#allocation2 + $0x100] sm:$0xff] %v4680
      %4689 = vst [vmem:[#allocation2 + $0x108] sm:$0xff] %v4681
      %4690 = vst [vmem:[#allocation2 + $0x110] sm:$0xff] %v4682
      %4691 = vst [vmem:[#allocation2 + $0x118] sm:$0xff] %v4683
      %4692 = vst [vmem:[#allocation2 + $0x120] sm:$0xff] %v4684
      %4693 = vst [vmem:[#allocation2 + $0x128] sm:$0xff] %v4685
      %4694 = vst [vmem:[#allocation2 + $0x130] sm:$0xff] %v4686
      %4695 = vst [vmem:[#allocation2 + $0x138] sm:$0xff] %v4687
      %4696 = vrot.lane.b32.xlu0 %v4680, 17
      %v4697 = vpop.permute.xlu0 %4696
      %4698 = vrot.lane.b32.xlu0 %v4682, 17
      %v4699 = vpop.permute.xlu0 %4698
      %4700 = vrot.lane.b32.xlu0 %v4684, 17
      %v4701 = vpop.permute.xlu0 %4700
      %4702 = vrot.lane.b32.xlu0 %v4686, 17
      %v4703 = vpop.permute.xlu0 %4702
      %4704 = vrot.lane.b32.xlu0 %v4681, 17
      %v4705 = vpop.permute.xlu0 %4704
      %4706 = vrot.lane.b32.xlu0 %v4683, 17
      %v4707 = vpop.permute.xlu0 %4706
      %4708 = vrot.lane.b32.xlu0 %v4685, 17
      %v4709 = vpop.permute.xlu0 %4708
      %4710 = vrot.lane.b32.xlu0 %v4687, 17
      %v4711 = vpop.permute.xlu0 %4710
      %v4712 = vsel %vm482, %v4697, %v4705
      %v4713 = vsel %vm482, %v4699, %v4707
      %v4714 = vsel %vm482, %v4701, %v4709
      %v4715 = vsel %vm482, %v4703, %v4711
      %v4716 = vsel %vm482, %v4705, %v4697
      %v4717 = vsel %vm482, %v4707, %v4699
      %v4718 = vsel %vm482, %v4709, %v4701
      %v4719 = vsel %vm482, %v4711, %v4703
      %v4720 = vld [vmem:[%s1] ss:$8 sm:$0x3]
      %v4722 = vperm.slane %v4720, 0
      %v4723 = vperm.slane %v4720, 1
      %v4726 = vmul.f32 %v4716, %v4722
      %v4727 = vmul.f32 %v4712, %v4723
      %v4728 = vmul.f32 %v4717, %v4722
      %v4729 = vmul.f32 %v4713, %v4723
      %v4730 = vmul.f32 %v4718, %v4722
      %v4731 = vmul.f32 %v4714, %v4723
      %v4732 = vmul.f32 %v4719, %v4722
      %v4733 = vmul.f32 %v4715, %v4723
      %4734 = vst [vmem:[#allocation3 + $0x900] sm:$0xff] %v4726
      %4735 = vst [vmem:[#allocation3 + $0x908] sm:$0xff] %v4727
      %4736 = vst [vmem:[#allocation3 + $0x910] sm:$0xff] %v4728
      %4737 = vst [vmem:[#allocation3 + $0x918] sm:$0xff] %v4729
      %4738 = vst [vmem:[#allocation3 + $0x920] sm:$0xff] %v4730
      %4739 = vst [vmem:[#allocation3 + $0x928] sm:$0xff] %v4731
      %4740 = vst [vmem:[#allocation3 + $0x930] sm:$0xff] %v4732
      %4741 = vst [vmem:[#allocation3 + $0x938] sm:$0xff] %v4733
      %4742 = vrot.lane.b32.xlu0 %v4680, 16
      %v4743 = vpop.permute.xlu0 %4742
      %4744 = vrot.lane.b32.xlu0 %v4682, 16
      %v4745 = vpop.permute.xlu0 %4744
      %4746 = vrot.lane.b32.xlu0 %v4684, 16
      %v4747 = vpop.permute.xlu0 %4746
      %4748 = vrot.lane.b32.xlu0 %v4686, 16
      %v4749 = vpop.permute.xlu0 %4748
      %4750 = vrot.lane.b32.xlu0 %v4681, 16
      %v4751 = vpop.permute.xlu0 %4750
      %4752 = vrot.lane.b32.xlu0 %v4683, 16
      %v4753 = vpop.permute.xlu0 %4752
      %4754 = vrot.lane.b32.xlu0 %v4685, 16
      %v4755 = vpop.permute.xlu0 %4754
      %4756 = vrot.lane.b32.xlu0 %v4687, 16
      %v4757 = vpop.permute.xlu0 %4756
      %v4758 = vsel %vm529, %v4743, %v4751
      %v4759 = vsel %vm529, %v4745, %v4753
      %v4760 = vsel %vm529, %v4747, %v4755
      %v4761 = vsel %vm529, %v4749, %v4757
      %v4762 = vsel %vm529, %v4751, %v4743
      %v4763 = vsel %vm529, %v4753, %v4745
      %v4764 = vsel %vm529, %v4755, %v4747
      %v4765 = vsel %vm529, %v4757, %v4749
      %v4766 = vld [vmem:[%s538] ss:$8 sm:$0x3]
      %v4768 = vperm.slane %v4766, 0
      %v4769 = vperm.slane %v4766, 1
      %v4772 = vmul.f32 %v4762, %v4768
      %v4773 = vmul.f32 %v4758, %v4769
      %v4774 = vmul.f32 %v4763, %v4768
      %v4775 = vmul.f32 %v4759, %v4769
      %v4776 = vmul.f32 %v4764, %v4768
      %v4777 = vmul.f32 %v4760, %v4769
      %v4778 = vmul.f32 %v4765, %v4768
      %v4779 = vmul.f32 %v4761, %v4769
      %4780 = vst [vmem:[#allocation3 + $0x940] sm:$0xff] %v4772
      %4781 = vst [vmem:[#allocation3 + $0x948] sm:$0xff] %v4773
      %4782 = vst [vmem:[#allocation3 + $0x950] sm:$0xff] %v4774
      %4783 = vst [vmem:[#allocation3 + $0x958] sm:$0xff] %v4775
      %4784 = vst [vmem:[#allocation3 + $0x960] sm:$0xff] %v4776
      %4785 = vst [vmem:[#allocation3 + $0x968] sm:$0xff] %v4777
      %4786 = vst [vmem:[#allocation3 + $0x970] sm:$0xff] %v4778
      %4787 = vst [vmem:[#allocation3 + $0x978] sm:$0xff] %v4779
      %4788 = vrot.lane.b32.xlu0 %v4680, 15
      %v4789 = vpop.permute.xlu0 %4788
      %4790 = vrot.lane.b32.xlu0 %v4682, 15
      %v4791 = vpop.permute.xlu0 %4790
      %4792 = vrot.lane.b32.xlu0 %v4684, 15
      %v4793 = vpop.permute.xlu0 %4792
      %4794 = vrot.lane.b32.xlu0 %v4686, 15
      %v4795 = vpop.permute.xlu0 %4794
      %4796 = vrot.lane.b32.xlu0 %v4681, 15
      %v4797 = vpop.permute.xlu0 %4796
      %4798 = vrot.lane.b32.xlu0 %v4683, 15
      %v4799 = vpop.permute.xlu0 %4798
      %4800 = vrot.lane.b32.xlu0 %v4685, 15
      %v4801 = vpop.permute.xlu0 %4800
      %4802 = vrot.lane.b32.xlu0 %v4687, 15
      %v4803 = vpop.permute.xlu0 %4802
      %v4804 = vsel %vm577, %v4789, %v4797
      %v4805 = vsel %vm577, %v4791, %v4799
      %v4806 = vsel %vm577, %v4793, %v4801
      %v4807 = vsel %vm577, %v4795, %v4803
      %v4808 = vsel %vm577, %v4797, %v4789
      %v4809 = vsel %vm577, %v4799, %v4791
      %v4810 = vsel %vm577, %v4801, %v4793
      %v4811 = vsel %vm577, %v4803, %v4795
      %v4812 = vld [vmem:[%s586] ss:$8 sm:$0x3]
      %v4814 = vperm.slane %v4812, 0
      %v4815 = vperm.slane %v4812, 1
      %v4818 = vmul.f32 %v4808, %v4814
      %v4819 = vmul.f32 %v4804, %v4815
      %v4820 = vmul.f32 %v4809, %v4814
      %v4821 = vmul.f32 %v4805, %v4815
      %v4822 = vmul.f32 %v4810, %v4814
      %v4823 = vmul.f32 %v4806, %v4815
      %v4824 = vmul.f32 %v4811, %v4814
      %v4825 = vmul.f32 %v4807, %v4815
      %4826 = vst [vmem:[#allocation3 + $0x980] sm:$0xff] %v4818
      %4827 = vst [vmem:[#allocation3 + $0x988] sm:$0xff] %v4819
      %4828 = vst [vmem:[#allocation3 + $0x990] sm:$0xff] %v4820
      %4829 = vst [vmem:[#allocation3 + $0x998] sm:$0xff] %v4821
      %4830 = vst [vmem:[#allocation3 + $0x9a0] sm:$0xff] %v4822
      %4831 = vst [vmem:[#allocation3 + $0x9a8] sm:$0xff] %v4823
      %4832 = vst [vmem:[#allocation3 + $0x9b0] sm:$0xff] %v4824
      %4833 = vst [vmem:[#allocation3 + $0x9b8] sm:$0xff] %v4825
      %4834 = vrot.lane.b32.xlu0 %v4680, 1
      %v4835 = vpop.permute.xlu0 %4834
      %4836 = vrot.lane.b32.xlu0 %v4682, 1
      %v4837 = vpop.permute.xlu0 %4836
      %4838 = vrot.lane.b32.xlu0 %v4684, 1
      %v4839 = vpop.permute.xlu0 %4838
      %4840 = vrot.lane.b32.xlu0 %v4686, 1
      %v4841 = vpop.permute.xlu0 %4840
      %4842 = vrot.lane.b32.xlu0 %v4681, 1
      %v4843 = vpop.permute.xlu0 %4842
      %4844 = vrot.lane.b32.xlu0 %v4683, 1
      %v4845 = vpop.permute.xlu0 %4844
      %4846 = vrot.lane.b32.xlu0 %v4685, 1
      %v4847 = vpop.permute.xlu0 %4846
      %4848 = vrot.lane.b32.xlu0 %v4687, 1
      %v4849 = vpop.permute.xlu0 %4848
      %v4850 = vsel %vm625, %v4835, %v4843
      %v4851 = vsel %vm625, %v4837, %v4845
      %v4852 = vsel %vm625, %v4839, %v4847
      %v4853 = vsel %vm625, %v4841, %v4849
      %v4854 = vsel %vm625, %v4843, %v4835
      %v4855 = vsel %vm625, %v4845, %v4837
      %v4856 = vsel %vm625, %v4847, %v4839
      %v4857 = vsel %vm625, %v4849, %v4841
      %v4858 = vld [vmem:[%s634] ss:$8 sm:$0x3]
      %v4860 = vperm.slane %v4858, 0
      %v4861 = vperm.slane %v4858, 1
      %v4864 = vmul.f32 %v4854, %v4860
      %v4865 = vmul.f32 %v4850, %v4861
      %v4866 = vmul.f32 %v4855, %v4860
      %v4867 = vmul.f32 %v4851, %v4861
      %v4868 = vmul.f32 %v4856, %v4860
      %v4869 = vmul.f32 %v4852, %v4861
      %v4870 = vmul.f32 %v4857, %v4860
      %v4871 = vmul.f32 %v4853, %v4861
      %4872 = vst [vmem:[#allocation3 + $0x9c0] sm:$0xff] %v4864
      %4873 = vst [vmem:[#allocation3 + $0x9c8] sm:$0xff] %v4865
      %4874 = vst [vmem:[#allocation3 + $0x9d0] sm:$0xff] %v4866
      %4875 = vst [vmem:[#allocation3 + $0x9d8] sm:$0xff] %v4867
      %4876 = vst [vmem:[#allocation3 + $0x9e0] sm:$0xff] %v4868
      %4877 = vst [vmem:[#allocation3 + $0x9e8] sm:$0xff] %v4869
      %4878 = vst [vmem:[#allocation3 + $0x9f0] sm:$0xff] %v4870
      %4879 = vst [vmem:[#allocation3 + $0x9f8] sm:$0xff] %v4871
      %4880 = vst [vmem:[#allocation3 + $0xa00] sm:$0xff] %v4680
      %4881 = vst [vmem:[#allocation3 + $0xa08] sm:$0xff] %v4681
      %4882 = vst [vmem:[#allocation3 + $0xa10] sm:$0xff] %v4682
      %4883 = vst [vmem:[#allocation3 + $0xa18] sm:$0xff] %v4683
      %4884 = vst [vmem:[#allocation3 + $0xa20] sm:$0xff] %v4684
      %4885 = vst [vmem:[#allocation3 + $0xa28] sm:$0xff] %v4685
      %4886 = vst [vmem:[#allocation3 + $0xa30] sm:$0xff] %v4686
      %4887 = vst [vmem:[#allocation3 + $0xa38] sm:$0xff] %v4687
      %4888 = vrot.lane.b32.xlu0 %v4680, 127
      %v4889 = vpop.permute.xlu0 %4888
      %4890 = vrot.lane.b32.xlu0 %v4682, 127
      %v4891 = vpop.permute.xlu0 %4890
      %4892 = vrot.lane.b32.xlu0 %v4684, 127
      %v4893 = vpop.permute.xlu0 %4892
      %4894 = vrot.lane.b32.xlu0 %v4686, 127
      %v4895 = vpop.permute.xlu0 %4894
      %4896 = vrot.lane.b32.xlu0 %v4681, 127
      %v4897 = vpop.permute.xlu0 %4896
      %4898 = vrot.lane.b32.xlu0 %v4683, 127
      %v4899 = vpop.permute.xlu0 %4898
      %4900 = vrot.lane.b32.xlu0 %v4685, 127
      %v4901 = vpop.permute.xlu0 %4900
      %4902 = vrot.lane.b32.xlu0 %v4687, 127
      %v4903 = vpop.permute.xlu0 %4902
      %v4904 = vsel %vm681, %v4889, %v4897
      %v4905 = vsel %vm681, %v4891, %v4899
      %v4906 = vsel %vm681, %v4893, %v4901
      %v4907 = vsel %vm681, %v4895, %v4903
      %v4908 = vsel %vm681, %v4897, %v4889
      %v4909 = vsel %vm681, %v4899, %v4891
      %v4910 = vsel %vm681, %v4901, %v4893
      %v4911 = vsel %vm681, %v4903, %v4895
      %v4912 = vld [vmem:[%s690] ss:$8 sm:$0x3]
      %v4914 = vperm.slane %v4912, 0
      %v4915 = vperm.slane %v4912, 1
      %v4918 = vmul.f32 %v4904, %v4914
      %v4919 = vmul.f32 %v4908, %v4915
      %v4920 = vmul.f32 %v4905, %v4914
      %v4921 = vmul.f32 %v4909, %v4915
      %v4922 = vmul.f32 %v4906, %v4914
      %v4923 = vmul.f32 %v4910, %v4915
      %v4924 = vmul.f32 %v4907, %v4914
      %v4925 = vmul.f32 %v4911, %v4915
      %4926 = vst [vmem:[#allocation3 + $0xa40] sm:$0xff] %v4918
      %4927 = vst [vmem:[#allocation3 + $0xa48] sm:$0xff] %v4919
      %4928 = vst [vmem:[#allocation3 + $0xa50] sm:$0xff] %v4920
      %4929 = vst [vmem:[#allocation3 + $0xa58] sm:$0xff] %v4921
      %4930 = vst [vmem:[#allocation3 + $0xa60] sm:$0xff] %v4922
      %4931 = vst [vmem:[#allocation3 + $0xa68] sm:$0xff] %v4923
      %4932 = vst [vmem:[#allocation3 + $0xa70] sm:$0xff] %v4924
      %4933 = vst [vmem:[#allocation3 + $0xa78] sm:$0xff] %v4925
      %4934 = vrot.lane.b32.xlu0 %v4680, 113
      %v4935 = vpop.permute.xlu0 %4934
      %4936 = vrot.lane.b32.xlu0 %v4682, 113
      %v4937 = vpop.permute.xlu0 %4936
      %4938 = vrot.lane.b32.xlu0 %v4684, 113
      %v4939 = vpop.permute.xlu0 %4938
      %4940 = vrot.lane.b32.xlu0 %v4686, 113
      %v4941 = vpop.permute.xlu0 %4940
      %4942 = vrot.lane.b32.xlu0 %v4681, 113
      %v4943 = vpop.permute.xlu0 %4942
      %4944 = vrot.lane.b32.xlu0 %v4683, 113
      %v4945 = vpop.permute.xlu0 %4944
      %4946 = vrot.lane.b32.xlu0 %v4685, 113
      %v4947 = vpop.permute.xlu0 %4946
      %4948 = vrot.lane.b32.xlu0 %v4687, 113
      %v4949 = vpop.permute.xlu0 %4948
      %v4950 = vsel %vm729, %v4935, %v4943
      %v4951 = vsel %vm729, %v4937, %v4945
      %v4952 = vsel %vm729, %v4939, %v4947
      %v4953 = vsel %vm729, %v4941, %v4949
      %v4954 = vsel %vm729, %v4943, %v4935
      %v4955 = vsel %vm729, %v4945, %v4937
      %v4956 = vsel %vm729, %v4947, %v4939
      %v4957 = vsel %vm729, %v4949, %v4941
      %v4958 = vld [vmem:[%s738] ss:$8 sm:$0x3]
      %v4960 = vperm.slane %v4958, 0
      %v4961 = vperm.slane %v4958, 1
      %v4964 = vmul.f32 %v4950, %v4960
      %v4965 = vmul.f32 %v4954, %v4961
      %v4966 = vmul.f32 %v4951, %v4960
      %v4967 = vmul.f32 %v4955, %v4961
      %v4968 = vmul.f32 %v4952, %v4960
      %v4969 = vmul.f32 %v4956, %v4961
      %v4970 = vmul.f32 %v4953, %v4960
      %v4971 = vmul.f32 %v4957, %v4961
      %4972 = vst [vmem:[#allocation3 + $0xa80] sm:$0xff] %v4964
      %4973 = vst [vmem:[#allocation3 + $0xa88] sm:$0xff] %v4965
      %4974 = vst [vmem:[#allocation3 + $0xa90] sm:$0xff] %v4966
      %4975 = vst [vmem:[#allocation3 + $0xa98] sm:$0xff] %v4967
      %4976 = vst [vmem:[#allocation3 + $0xaa0] sm:$0xff] %v4968
      %4977 = vst [vmem:[#allocation3 + $0xaa8] sm:$0xff] %v4969
      %4978 = vst [vmem:[#allocation3 + $0xab0] sm:$0xff] %v4970
      %4979 = vst [vmem:[#allocation3 + $0xab8] sm:$0xff] %v4971
      %4980 = vrot.lane.b32.xlu0 %v4680, 112
      %v4981 = vpop.permute.xlu0 %4980
      %4982 = vrot.lane.b32.xlu0 %v4682, 112
      %v4983 = vpop.permute.xlu0 %4982
      %4984 = vrot.lane.b32.xlu0 %v4684, 112
      %v4985 = vpop.permute.xlu0 %4984
      %4986 = vrot.lane.b32.xlu0 %v4686, 112
      %v4987 = vpop.permute.xlu0 %4986
      %4988 = vrot.lane.b32.xlu0 %v4681, 112
      %v4989 = vpop.permute.xlu0 %4988
      %4990 = vrot.lane.b32.xlu0 %v4683, 112
      %v4991 = vpop.permute.xlu0 %4990
      %4992 = vrot.lane.b32.xlu0 %v4685, 112
      %v4993 = vpop.permute.xlu0 %4992
      %4994 = vrot.lane.b32.xlu0 %v4687, 112
      %v4995 = vpop.permute.xlu0 %4994
      %v4996 = vsel %vm777, %v4981, %v4989
      %v4997 = vsel %vm777, %v4983, %v4991
      %v4998 = vsel %vm777, %v4985, %v4993
      %v4999 = vsel %vm777, %v4987, %v4995
      %v5000 = vsel %vm777, %v4989, %v4981
      %v5001 = vsel %vm777, %v4991, %v4983
      %v5002 = vsel %vm777, %v4993, %v4985
      %v5003 = vsel %vm777, %v4995, %v4987
      %v5004 = vld [vmem:[%s786] ss:$8 sm:$0x3]
      %v5006 = vperm.slane %v5004, 0
      %v5007 = vperm.slane %v5004, 1
      %v5010 = vmul.f32 %v4996, %v5006
      %v5011 = vmul.f32 %v5000, %v5007
      %v5012 = vmul.f32 %v4997, %v5006
      %v5013 = vmul.f32 %v5001, %v5007
      %v5014 = vmul.f32 %v4998, %v5006
      %v5015 = vmul.f32 %v5002, %v5007
      %v5016 = vmul.f32 %v4999, %v5006
      %v5017 = vmul.f32 %v5003, %v5007
      %5018 = vst [vmem:[#allocation3 + $0xac0] sm:$0xff] %v5010
      %5019 = vst [vmem:[#allocation3 + $0xac8] sm:$0xff] %v5011
      %5020 = vst [vmem:[#allocation3 + $0xad0] sm:$0xff] %v5012
      %5021 = vst [vmem:[#allocation3 + $0xad8] sm:$0xff] %v5013
      %5022 = vst [vmem:[#allocation3 + $0xae0] sm:$0xff] %v5014
      %5023 = vst [vmem:[#allocation3 + $0xae8] sm:$0xff] %v5015
      %5024 = vst [vmem:[#allocation3 + $0xaf0] sm:$0xff] %v5016
      %5025 = vst [vmem:[#allocation3 + $0xaf8] sm:$0xff] %v5017
      %5026 = vrot.lane.b32.xlu0 %v4680, 111
      %v5027 = vpop.permute.xlu0 %5026
      %5028 = vrot.lane.b32.xlu0 %v4682, 111
      %v5029 = vpop.permute.xlu0 %5028
      %5030 = vrot.lane.b32.xlu0 %v4684, 111
      %v5031 = vpop.permute.xlu0 %5030
      %5032 = vrot.lane.b32.xlu0 %v4686, 111
      %v5033 = vpop.permute.xlu0 %5032
      %5034 = vrot.lane.b32.xlu0 %v4681, 111
      %v5035 = vpop.permute.xlu0 %5034
      %5036 = vrot.lane.b32.xlu0 %v4683, 111
      %v5037 = vpop.permute.xlu0 %5036
      %5038 = vrot.lane.b32.xlu0 %v4685, 111
      %v5039 = vpop.permute.xlu0 %5038
      %5040 = vrot.lane.b32.xlu0 %v4687, 111
      %v5041 = vpop.permute.xlu0 %5040
      %v5042 = vsel %vm825, %v5027, %v5035
      %v5043 = vsel %vm825, %v5029, %v5037
      %v5044 = vsel %vm825, %v5031, %v5039
      %v5045 = vsel %vm825, %v5033, %v5041
      %v5046 = vsel %vm825, %v5035, %v5027
      %v5047 = vsel %vm825, %v5037, %v5029
      %v5048 = vsel %vm825, %v5039, %v5031
      %v5049 = vsel %vm825, %v5041, %v5033
      %v5050 = vld [vmem:[%s834] ss:$8 sm:$0x3]
      %v5052 = vperm.slane %v5050, 0
      %v5053 = vperm.slane %v5050, 1
      %v5056 = vmul.f32 %v5042, %v5052
      %v5057 = vmul.f32 %v5046, %v5053
      %v5058 = vmul.f32 %v5043, %v5052
      %v5059 = vmul.f32 %v5047, %v5053
      %v5060 = vmul.f32 %v5044, %v5052
      %v5061 = vmul.f32 %v5048, %v5053
      %v5062 = vmul.f32 %v5045, %v5052
      %v5063 = vmul.f32 %v5049, %v5053
      %5064 = vst [vmem:[#allocation3 + $0xb00] sm:$0xff] %v5056
      %5065 = vst [vmem:[#allocation3 + $0xb08] sm:$0xff] %v5057
      %5066 = vst [vmem:[#allocation3 + $0xb10] sm:$0xff] %v5058
      %5067 = vst [vmem:[#allocation3 + $0xb18] sm:$0xff] %v5059
      %5068 = vst [vmem:[#allocation3 + $0xb20] sm:$0xff] %v5060
      %5069 = vst [vmem:[#allocation3 + $0xb28] sm:$0xff] %v5061
      %5070 = vst [vmem:[#allocation3 + $0xb30] sm:$0xff] %v5062
      %5071 = vst [vmem:[#allocation3 + $0xb38] sm:$0xff] %v5063
      %v5072 = vld [vmem:[%s6] sm:$0xff]
      %v5073 = vld [vmem:[%s6 + $0x8] sm:$0xff]
      %v5074 = vld [vmem:[%s6 + $0x10] sm:$0xff]
      %v5075 = vld [vmem:[%s6 + $0x18] sm:$0xff]
      %v5076 = vld [vmem:[%s6 + $0x20] sm:$0xff]
      %v5077 = vld [vmem:[%s6 + $0x28] sm:$0xff]
      %v5078 = vld [vmem:[%s6 + $0x30] sm:$0xff]
      %v5079 = vld [vmem:[%s6 + $0x38] sm:$0xff]
      %v5080 = vld [vmem:[%s6 + $0x40] sm:$0xff]
      %v5081 = vld [vmem:[%s6 + $0x48] sm:$0xff]
      %v5082 = vld [vmem:[%s6 + $0x50] sm:$0xff]
      %v5083 = vld [vmem:[%s6 + $0x58] sm:$0xff]
      %v5084 = vld [vmem:[%s6 + $0x60] sm:$0xff]
      %v5085 = vld [vmem:[%s6 + $0x68] sm:$0xff]
      %v5086 = vld [vmem:[%s6 + $0x70] sm:$0xff]
      %v5087 = vld [vmem:[%s6 + $0x78] sm:$0xff]
      %v5088 = vld [vmem:[%s6 + $0x80] sm:$0xff]
      %v5089 = vld [vmem:[%s6 + $0x88] sm:$0xff]
      %v5090 = vld [vmem:[%s6 + $0x90] sm:$0xff]
      %v5091 = vld [vmem:[%s6 + $0x98] sm:$0xff]
      %v5092 = vld [vmem:[%s6 + $0xa0] sm:$0xff]
      %v5093 = vld [vmem:[%s6 + $0xa8] sm:$0xff]
      %v5094 = vld [vmem:[%s6 + $0xb0] sm:$0xff]
      %v5095 = vld [vmem:[%s6 + $0xb8] sm:$0xff]
      %v5096 = vld [vmem:[%s6 + $0xc0] sm:$0xff]
      %v5097 = vld [vmem:[%s6 + $0xc8] sm:$0xff]
      %v5098 = vld [vmem:[%s6 + $0xd0] sm:$0xff]
      %v5099 = vld [vmem:[%s6 + $0xd8] sm:$0xff]
      %v5100 = vld [vmem:[%s6 + $0xe0] sm:$0xff]
      %v5101 = vld [vmem:[%s6 + $0xe8] sm:$0xff]
      %v5102 = vld [vmem:[%s6 + $0xf0] sm:$0xff]
      %v5103 = vld [vmem:[%s6 + $0xf8] sm:$0xff]
      %v5104 = vld [vmem:[%s6 + $0x100] sm:$0xff]
      %v5105 = vld [vmem:[%s6 + $0x108] sm:$0xff]
      %v5106 = vld [vmem:[%s6 + $0x110] sm:$0xff]
      %v5107 = vld [vmem:[%s6 + $0x118] sm:$0xff]
      %v5108 = vld [vmem:[%s6 + $0x120] sm:$0xff]
      %v5109 = vld [vmem:[%s6 + $0x128] sm:$0xff]
      %v5110 = vld [vmem:[%s6 + $0x130] sm:$0xff]
      %v5111 = vld [vmem:[%s6 + $0x138] sm:$0xff]
      %v5112 = vld [vmem:[%s6 + $0x140] sm:$0xff]
      %v5113 = vld [vmem:[%s6 + $0x148] sm:$0xff]
      %v5114 = vld [vmem:[%s6 + $0x150] sm:$0xff]
      %v5115 = vld [vmem:[%s6 + $0x158] sm:$0xff]
      %v5116 = vld [vmem:[%s6 + $0x160] sm:$0xff]
      %v5117 = vld [vmem:[%s6 + $0x168] sm:$0xff]
      %v5118 = vld [vmem:[%s6 + $0x170] sm:$0xff]
      %v5119 = vld [vmem:[%s6 + $0x178] sm:$0xff]
      %v5120 = vld [vmem:[#allocation3] sm:$0xff]
      %v5121 = vld [vmem:[#allocation3 + $0x8] sm:$0xff]
      %v5122 = vld [vmem:[#allocation3 + $0x10] sm:$0xff]
      %v5123 = vld [vmem:[#allocation3 + $0x18] sm:$0xff]
      %v5124 = vld [vmem:[#allocation3 + $0x20] sm:$0xff]
      %v5125 = vld [vmem:[#allocation3 + $0x28] sm:$0xff]
      %v5126 = vld [vmem:[#allocation3 + $0x30] sm:$0xff]
      %v5127 = vld [vmem:[#allocation3 + $0x38] sm:$0xff]
      %v5128 = vld [vmem:[#allocation3 + $0x40] sm:$0xff]
      %v5129 = vld [vmem:[#allocation3 + $0x48] sm:$0xff]
      %v5130 = vld [vmem:[#allocation3 + $0x50] sm:$0xff]
      %v5131 = vld [vmem:[#allocation3 + $0x58] sm:$0xff]
      %v5132 = vld [vmem:[#allocation3 + $0x60] sm:$0xff]
      %v5133 = vld [vmem:[#allocation3 + $0x68] sm:$0xff]
      %v5134 = vld [vmem:[#allocation3 + $0x70] sm:$0xff]
      %v5135 = vld [vmem:[#allocation3 + $0x78] sm:$0xff]
      %v5136 = vld [vmem:[#allocation3 + $0x80] sm:$0xff]
      %v5137 = vld [vmem:[#allocation3 + $0x88] sm:$0xff]
      %v5138 = vld [vmem:[#allocation3 + $0x90] sm:$0xff]
      %v5139 = vld [vmem:[#allocation3 + $0x98] sm:$0xff]
      %v5140 = vld [vmem:[#allocation3 + $0xa0] sm:$0xff]
      %v5141 = vld [vmem:[#allocation3 + $0xa8] sm:$0xff]
      %v5142 = vld [vmem:[#allocation3 + $0xb0] sm:$0xff]
      %v5143 = vld [vmem:[#allocation3 + $0xb8] sm:$0xff]
      %v5144 = vld [vmem:[#allocation3 + $0xc0] sm:$0xff]
      %v5145 = vld [vmem:[#allocation3 + $0xc8] sm:$0xff]
      %v5146 = vld [vmem:[#allocation3 + $0xd0] sm:$0xff]
      %v5147 = vld [vmem:[#allocation3 + $0xd8] sm:$0xff]
      %v5148 = vld [vmem:[#allocation3 + $0xe0] sm:$0xff]
      %v5149 = vld [vmem:[#allocation3 + $0xe8] sm:$0xff]
      %v5150 = vld [vmem:[#allocation3 + $0xf0] sm:$0xff]
      %v5151 = vld [vmem:[#allocation3 + $0xf8] sm:$0xff]
      %v5152 = vld [vmem:[#allocation3 + $0x100] sm:$0xff]
      %v5153 = vld [vmem:[#allocation3 + $0x108] sm:$0xff]
      %v5154 = vld [vmem:[#allocation3 + $0x110] sm:$0xff]
      %v5155 = vld [vmem:[#allocation3 + $0x118] sm:$0xff]
      %v5156 = vld [vmem:[#allocation3 + $0x120] sm:$0xff]
      %v5157 = vld [vmem:[#allocation3 + $0x128] sm:$0xff]
      %v5158 = vld [vmem:[#allocation3 + $0x130] sm:$0xff]
      %v5159 = vld [vmem:[#allocation3 + $0x138] sm:$0xff]
      %v5160 = vld [vmem:[#allocation3 + $0x140] sm:$0xff]
      %v5161 = vld [vmem:[#allocation3 + $0x148] sm:$0xff]
      %v5162 = vld [vmem:[#allocation3 + $0x150] sm:$0xff]
      %v5163 = vld [vmem:[#allocation3 + $0x158] sm:$0xff]
      %v5164 = vld [vmem:[#allocation3 + $0x160] sm:$0xff]
      %v5165 = vld [vmem:[#allocation3 + $0x168] sm:$0xff]
      %v5166 = vld [vmem:[#allocation3 + $0x170] sm:$0xff]
      %v5167 = vld [vmem:[#allocation3 + $0x178] sm:$0xff]
      %v5168 = vld [vmem:[#allocation3 + $0x180] sm:$0xff]
      %v5169 = vld [vmem:[#allocation3 + $0x188] sm:$0xff]
      %v5170 = vld [vmem:[#allocation3 + $0x190] sm:$0xff]
      %v5171 = vld [vmem:[#allocation3 + $0x198] sm:$0xff]
      %v5172 = vld [vmem:[#allocation3 + $0x1a0] sm:$0xff]
      %v5173 = vld [vmem:[#allocation3 + $0x1a8] sm:$0xff]
      %v5174 = vld [vmem:[#allocation3 + $0x1b0] sm:$0xff]
      %v5175 = vld [vmem:[#allocation3 + $0x1b8] sm:$0xff]
      %v5176 = vld [vmem:[#allocation3 + $0x1c0] sm:$0xff]
      %v5177 = vld [vmem:[#allocation3 + $0x1c8] sm:$0xff]
      %v5178 = vld [vmem:[#allocation3 + $0x1d0] sm:$0xff]
      %v5179 = vld [vmem:[#allocation3 + $0x1d8] sm:$0xff]
      %v5180 = vld [vmem:[#allocation3 + $0x1e0] sm:$0xff]
      %v5181 = vld [vmem:[#allocation3 + $0x1e8] sm:$0xff]
      %v5182 = vld [vmem:[#allocation3 + $0x1f0] sm:$0xff]
      %v5183 = vld [vmem:[#allocation3 + $0x1f8] sm:$0xff]
      %v5184 = vld [vmem:[#allocation3 + $0x200] sm:$0xff]
      %v5185 = vld [vmem:[#allocation3 + $0x208] sm:$0xff]
      %v5186 = vld [vmem:[#allocation3 + $0x210] sm:$0xff]
      %v5187 = vld [vmem:[#allocation3 + $0x218] sm:$0xff]
      %v5188 = vld [vmem:[#allocation3 + $0x220] sm:$0xff]
      %v5189 = vld [vmem:[#allocation3 + $0x228] sm:$0xff]
      %v5190 = vld [vmem:[#allocation3 + $0x230] sm:$0xff]
      %v5191 = vld [vmem:[#allocation3 + $0x238] sm:$0xff]
      %v5192 = vld [vmem:[#allocation3 + $0x240] sm:$0xff]
      %v5193 = vld [vmem:[#allocation3 + $0x248] sm:$0xff]
      %v5194 = vld [vmem:[#allocation3 + $0x250] sm:$0xff]
      %v5195 = vld [vmem:[#allocation3 + $0x258] sm:$0xff]
      %v5196 = vld [vmem:[#allocation3 + $0x260] sm:$0xff]
      %v5197 = vld [vmem:[#allocation3 + $0x268] sm:$0xff]
      %v5198 = vld [vmem:[#allocation3 + $0x270] sm:$0xff]
      %v5199 = vld [vmem:[#allocation3 + $0x278] sm:$0xff]
      %v5200 = vld [vmem:[#allocation3 + $0x280] sm:$0xff]
      %v5201 = vld [vmem:[#allocation3 + $0x288] sm:$0xff]
      %v5202 = vld [vmem:[#allocation3 + $0x290] sm:$0xff]
      %v5203 = vld [vmem:[#allocation3 + $0x298] sm:$0xff]
      %v5204 = vld [vmem:[#allocation3 + $0x2a0] sm:$0xff]
      %v5205 = vld [vmem:[#allocation3 + $0x2a8] sm:$0xff]
      %v5206 = vld [vmem:[#allocation3 + $0x2b0] sm:$0xff]
      %v5207 = vld [vmem:[#allocation3 + $0x2b8] sm:$0xff]
      %v5208 = vld [vmem:[#allocation3 + $0x2c0] sm:$0xff]
      %v5209 = vld [vmem:[#allocation3 + $0x2c8] sm:$0xff]
      %v5210 = vld [vmem:[#allocation3 + $0x2d0] sm:$0xff]
      %v5211 = vld [vmem:[#allocation3 + $0x2d8] sm:$0xff]
      %v5212 = vld [vmem:[#allocation3 + $0x2e0] sm:$0xff]
      %v5213 = vld [vmem:[#allocation3 + $0x2e8] sm:$0xff]
      %v5214 = vld [vmem:[#allocation3 + $0x2f0] sm:$0xff]
      %v5215 = vld [vmem:[#allocation3 + $0x2f8] sm:$0xff]
      %v5216 = vld [vmem:[#allocation3 + $0x300] sm:$0xff]
      %v5217 = vld [vmem:[#allocation3 + $0x308] sm:$0xff]
      %v5218 = vld [vmem:[#allocation3 + $0x310] sm:$0xff]
      %v5219 = vld [vmem:[#allocation3 + $0x318] sm:$0xff]
      %v5220 = vld [vmem:[#allocation3 + $0x320] sm:$0xff]
      %v5221 = vld [vmem:[#allocation3 + $0x328] sm:$0xff]
      %v5222 = vld [vmem:[#allocation3 + $0x330] sm:$0xff]
      %v5223 = vld [vmem:[#allocation3 + $0x338] sm:$0xff]
      %v5224 = vld [vmem:[#allocation3 + $0x340] sm:$0xff]
      %v5225 = vld [vmem:[#allocation3 + $0x348] sm:$0xff]
      %v5226 = vld [vmem:[#allocation3 + $0x350] sm:$0xff]
      %v5227 = vld [vmem:[#allocation3 + $0x358] sm:$0xff]
      %v5228 = vld [vmem:[#allocation3 + $0x360] sm:$0xff]
      %v5229 = vld [vmem:[#allocation3 + $0x368] sm:$0xff]
      %v5230 = vld [vmem:[#allocation3 + $0x370] sm:$0xff]
      %v5231 = vld [vmem:[#allocation3 + $0x378] sm:$0xff]
      %v5232 = vld [vmem:[#allocation3 + $0x380] sm:$0xff]
      %v5233 = vld [vmem:[#allocation3 + $0x388] sm:$0xff]
      %v5234 = vld [vmem:[#allocation3 + $0x390] sm:$0xff]
      %v5235 = vld [vmem:[#allocation3 + $0x398] sm:$0xff]
      %v5236 = vld [vmem:[#allocation3 + $0x3a0] sm:$0xff]
      %v5237 = vld [vmem:[#allocation3 + $0x3a8] sm:$0xff]
      %v5238 = vld [vmem:[#allocation3 + $0x3b0] sm:$0xff]
      %v5239 = vld [vmem:[#allocation3 + $0x3b8] sm:$0xff]
      %v5240 = vld [vmem:[#allocation3 + $0x3c0] sm:$0xff]
      %v5241 = vld [vmem:[#allocation3 + $0x3c8] sm:$0xff]
      %v5242 = vld [vmem:[#allocation3 + $0x3d0] sm:$0xff]
      %v5243 = vld [vmem:[#allocation3 + $0x3d8] sm:$0xff]
      %v5244 = vld [vmem:[#allocation3 + $0x3e0] sm:$0xff]
      %v5245 = vld [vmem:[#allocation3 + $0x3e8] sm:$0xff]
      %v5246 = vld [vmem:[#allocation3 + $0x3f0] sm:$0xff]
      %v5247 = vld [vmem:[#allocation3 + $0x3f8] sm:$0xff]
      %v5248 = vld [vmem:[#allocation3 + $0x400] sm:$0xff]
      %v5249 = vld [vmem:[#allocation3 + $0x408] sm:$0xff]
      %v5250 = vld [vmem:[#allocation3 + $0x410] sm:$0xff]
      %v5251 = vld [vmem:[#allocation3 + $0x418] sm:$0xff]
      %v5252 = vld [vmem:[#allocation3 + $0x420] sm:$0xff]
      %v5253 = vld [vmem:[#allocation3 + $0x428] sm:$0xff]
      %v5254 = vld [vmem:[#allocation3 + $0x430] sm:$0xff]
      %v5255 = vld [vmem:[#allocation3 + $0x438] sm:$0xff]
      %v5256 = vld [vmem:[#allocation3 + $0x440] sm:$0xff]
      %v5257 = vld [vmem:[#allocation3 + $0x448] sm:$0xff]
      %v5258 = vld [vmem:[#allocation3 + $0x450] sm:$0xff]
      %v5259 = vld [vmem:[#allocation3 + $0x458] sm:$0xff]
      %v5260 = vld [vmem:[#allocation3 + $0x460] sm:$0xff]
      %v5261 = vld [vmem:[#allocation3 + $0x468] sm:$0xff]
      %v5262 = vld [vmem:[#allocation3 + $0x470] sm:$0xff]
      %v5263 = vld [vmem:[#allocation3 + $0x478] sm:$0xff]
      %v5264 = vld [vmem:[#allocation3 + $0x480] sm:$0xff]
      %v5265 = vld [vmem:[#allocation3 + $0x488] sm:$0xff]
      %v5266 = vld [vmem:[#allocation3 + $0x490] sm:$0xff]
      %v5267 = vld [vmem:[#allocation3 + $0x498] sm:$0xff]
      %v5268 = vld [vmem:[#allocation3 + $0x4a0] sm:$0xff]
      %v5269 = vld [vmem:[#allocation3 + $0x4a8] sm:$0xff]
      %v5270 = vld [vmem:[#allocation3 + $0x4b0] sm:$0xff]
      %v5271 = vld [vmem:[#allocation3 + $0x4b8] sm:$0xff]
      %v5272 = vld [vmem:[#allocation3 + $0x4c0] sm:$0xff]
      %v5273 = vld [vmem:[#allocation3 + $0x4c8] sm:$0xff]
      %v5274 = vld [vmem:[#allocation3 + $0x4d0] sm:$0xff]
      %v5275 = vld [vmem:[#allocation3 + $0x4d8] sm:$0xff]
      %v5276 = vld [vmem:[#allocation3 + $0x4e0] sm:$0xff]
      %v5277 = vld [vmem:[#allocation3 + $0x4e8] sm:$0xff]
      %v5278 = vld [vmem:[#allocation3 + $0x4f0] sm:$0xff]
      %v5279 = vld [vmem:[#allocation3 + $0x4f8] sm:$0xff]
      %v5280 = vld [vmem:[#allocation3 + $0x500] sm:$0xff]
      %v5281 = vld [vmem:[#allocation3 + $0x508] sm:$0xff]
      %v5282 = vld [vmem:[#allocation3 + $0x510] sm:$0xff]
      %v5283 = vld [vmem:[#allocation3 + $0x518] sm:$0xff]
      %v5284 = vld [vmem:[#allocation3 + $0x520] sm:$0xff]
      %v5285 = vld [vmem:[#allocation3 + $0x528] sm:$0xff]
      %v5286 = vld [vmem:[#allocation3 + $0x530] sm:$0xff]
      %v5287 = vld [vmem:[#allocation3 + $0x538] sm:$0xff]
      %v5288 = vld [vmem:[#allocation3 + $0x540] sm:$0xff]
      %v5289 = vld [vmem:[#allocation3 + $0x548] sm:$0xff]
      %v5290 = vld [vmem:[#allocation3 + $0x550] sm:$0xff]
      %v5291 = vld [vmem:[#allocation3 + $0x558] sm:$0xff]
      %v5292 = vld [vmem:[#allocation3 + $0x560] sm:$0xff]
      %v5293 = vld [vmem:[#allocation3 + $0x568] sm:$0xff]
      %v5294 = vld [vmem:[#allocation3 + $0x570] sm:$0xff]
      %v5295 = vld [vmem:[#allocation3 + $0x578] sm:$0xff]
      %v5296 = vld [vmem:[#allocation3 + $0x580] sm:$0xff]
      %v5297 = vld [vmem:[#allocation3 + $0x588] sm:$0xff]
      %v5298 = vld [vmem:[#allocation3 + $0x590] sm:$0xff]
      %v5299 = vld [vmem:[#allocation3 + $0x598] sm:$0xff]
      %v5300 = vld [vmem:[#allocation3 + $0x5a0] sm:$0xff]
      %v5301 = vld [vmem:[#allocation3 + $0x5a8] sm:$0xff]
      %v5302 = vld [vmem:[#allocation3 + $0x5b0] sm:$0xff]
      %v5303 = vld [vmem:[#allocation3 + $0x5b8] sm:$0xff]
      %v5304 = vld [vmem:[#allocation3 + $0x5c0] sm:$0xff]
      %v5305 = vld [vmem:[#allocation3 + $0x5c8] sm:$0xff]
      %v5306 = vld [vmem:[#allocation3 + $0x5d0] sm:$0xff]
      %v5307 = vld [vmem:[#allocation3 + $0x5d8] sm:$0xff]
      %v5308 = vld [vmem:[#allocation3 + $0x5e0] sm:$0xff]
      %v5309 = vld [vmem:[#allocation3 + $0x5e8] sm:$0xff]
      %v5310 = vld [vmem:[#allocation3 + $0x5f0] sm:$0xff]
      %v5311 = vld [vmem:[#allocation3 + $0x5f8] sm:$0xff]
      %v5312 = vld [vmem:[#allocation3 + $0x600] sm:$0xff]
      %v5313 = vld [vmem:[#allocation3 + $0x608] sm:$0xff]
      %v5314 = vld [vmem:[#allocation3 + $0x610] sm:$0xff]
      %v5315 = vld [vmem:[#allocation3 + $0x618] sm:$0xff]
      %v5316 = vld [vmem:[#allocation3 + $0x620] sm:$0xff]
      %v5317 = vld [vmem:[#allocation3 + $0x628] sm:$0xff]
      %v5318 = vld [vmem:[#allocation3 + $0x630] sm:$0xff]
      %v5319 = vld [vmem:[#allocation3 + $0x638] sm:$0xff]
      %v5320 = vld [vmem:[#allocation3 + $0x640] sm:$0xff]
      %v5321 = vld [vmem:[#allocation3 + $0x648] sm:$0xff]
      %v5322 = vld [vmem:[#allocation3 + $0x650] sm:$0xff]
      %v5323 = vld [vmem:[#allocation3 + $0x658] sm:$0xff]
      %v5324 = vld [vmem:[#allocation3 + $0x660] sm:$0xff]
      %v5325 = vld [vmem:[#allocation3 + $0x668] sm:$0xff]
      %v5326 = vld [vmem:[#allocation3 + $0x670] sm:$0xff]
      %v5327 = vld [vmem:[#allocation3 + $0x678] sm:$0xff]
      %v5328 = vld [vmem:[#allocation3 + $0x680] sm:$0xff]
      %v5329 = vld [vmem:[#allocation3 + $0x688] sm:$0xff]
      %v5330 = vld [vmem:[#allocation3 + $0x690] sm:$0xff]
      %v5331 = vld [vmem:[#allocation3 + $0x698] sm:$0xff]
      %v5332 = vld [vmem:[#allocation3 + $0x6a0] sm:$0xff]
      %v5333 = vld [vmem:[#allocation3 + $0x6a8] sm:$0xff]
      %v5334 = vld [vmem:[#allocation3 + $0x6b0] sm:$0xff]
      %v5335 = vld [vmem:[#allocation3 + $0x6b8] sm:$0xff]
      %v5336 = vld [vmem:[#allocation3 + $0x6c0] sm:$0xff]
      %v5337 = vld [vmem:[#allocation3 + $0x6c8] sm:$0xff]
      %v5338 = vld [vmem:[#allocation3 + $0x6d0] sm:$0xff]
      %v5339 = vld [vmem:[#allocation3 + $0x6d8] sm:$0xff]
      %v5340 = vld [vmem:[#allocation3 + $0x6e0] sm:$0xff]
      %v5341 = vld [vmem:[#allocation3 + $0x6e8] sm:$0xff]
      %v5342 = vld [vmem:[#allocation3 + $0x6f0] sm:$0xff]
      %v5343 = vld [vmem:[#allocation3 + $0x6f8] sm:$0xff]
      %v5344 = vld [vmem:[#allocation3 + $0x700] sm:$0xff]
      %v5345 = vld [vmem:[#allocation3 + $0x708] sm:$0xff]
      %v5346 = vld [vmem:[#allocation3 + $0x710] sm:$0xff]
      %v5347 = vld [vmem:[#allocation3 + $0x718] sm:$0xff]
      %v5348 = vld [vmem:[#allocation3 + $0x720] sm:$0xff]
      %v5349 = vld [vmem:[#allocation3 + $0x728] sm:$0xff]
      %v5350 = vld [vmem:[#allocation3 + $0x730] sm:$0xff]
      %v5351 = vld [vmem:[#allocation3 + $0x738] sm:$0xff]
      %v5352 = vld [vmem:[#allocation3 + $0x740] sm:$0xff]
      %v5353 = vld [vmem:[#allocation3 + $0x748] sm:$0xff]
      %v5354 = vld [vmem:[#allocation3 + $0x750] sm:$0xff]
      %v5355 = vld [vmem:[#allocation3 + $0x758] sm:$0xff]
      %v5356 = vld [vmem:[#allocation3 + $0x760] sm:$0xff]
      %v5357 = vld [vmem:[#allocation3 + $0x768] sm:$0xff]
      %v5358 = vld [vmem:[#allocation3 + $0x770] sm:$0xff]
      %v5359 = vld [vmem:[#allocation3 + $0x778] sm:$0xff]
      %v5360 = vld [vmem:[#allocation3 + $0x780] sm:$0xff]
      %v5361 = vld [vmem:[#allocation3 + $0x788] sm:$0xff]
      %v5362 = vld [vmem:[#allocation3 + $0x790] sm:$0xff]
      %v5363 = vld [vmem:[#allocation3 + $0x798] sm:$0xff]
      %v5364 = vld [vmem:[#allocation3 + $0x7a0] sm:$0xff]
      %v5365 = vld [vmem:[#allocation3 + $0x7a8] sm:$0xff]
      %v5366 = vld [vmem:[#allocation3 + $0x7b0] sm:$0xff]
      %v5367 = vld [vmem:[#allocation3 + $0x7b8] sm:$0xff]
      %v5368 = vld [vmem:[#allocation3 + $0x7c0] sm:$0xff]
      %v5369 = vld [vmem:[#allocation3 + $0x7c8] sm:$0xff]
      %v5370 = vld [vmem:[#allocation3 + $0x7d0] sm:$0xff]
      %v5371 = vld [vmem:[#allocation3 + $0x7d8] sm:$0xff]
      %v5372 = vld [vmem:[#allocation3 + $0x7e0] sm:$0xff]
      %v5373 = vld [vmem:[#allocation3 + $0x7e8] sm:$0xff]
      %v5374 = vld [vmem:[#allocation3 + $0x7f0] sm:$0xff]
      %v5375 = vld [vmem:[#allocation3 + $0x7f8] sm:$0xff]
      %v5376 = vld [vmem:[#allocation3 + $0x800] sm:$0xff]
      %v5377 = vld [vmem:[#allocation3 + $0x808] sm:$0xff]
      %v5378 = vld [vmem:[#allocation3 + $0x810] sm:$0xff]
      %v5379 = vld [vmem:[#allocation3 + $0x818] sm:$0xff]
      %v5380 = vld [vmem:[#allocation3 + $0x820] sm:$0xff]
      %v5381 = vld [vmem:[#allocation3 + $0x828] sm:$0xff]
      %v5382 = vld [vmem:[#allocation3 + $0x830] sm:$0xff]
      %v5383 = vld [vmem:[#allocation3 + $0x838] sm:$0xff]
      %v5384 = vld [vmem:[#allocation3 + $0x840] sm:$0xff]
      %v5385 = vld [vmem:[#allocation3 + $0x848] sm:$0xff]
      %v5386 = vld [vmem:[#allocation3 + $0x850] sm:$0xff]
      %v5387 = vld [vmem:[#allocation3 + $0x858] sm:$0xff]
      %v5388 = vld [vmem:[#allocation3 + $0x860] sm:$0xff]
      %v5389 = vld [vmem:[#allocation3 + $0x868] sm:$0xff]
      %v5390 = vld [vmem:[#allocation3 + $0x870] sm:$0xff]
      %v5391 = vld [vmem:[#allocation3 + $0x878] sm:$0xff]
      %v5392 = vld [vmem:[#allocation3 + $0x880] sm:$0xff]
      %v5393 = vld [vmem:[#allocation3 + $0x888] sm:$0xff]
      %v5394 = vld [vmem:[#allocation3 + $0x890] sm:$0xff]
      %v5395 = vld [vmem:[#allocation3 + $0x898] sm:$0xff]
      %v5396 = vld [vmem:[#allocation3 + $0x8a0] sm:$0xff]
      %v5397 = vld [vmem:[#allocation3 + $0x8a8] sm:$0xff]
      %v5398 = vld [vmem:[#allocation3 + $0x8b0] sm:$0xff]
      %v5399 = vld [vmem:[#allocation3 + $0x8b8] sm:$0xff]
      %v5400 = vld [vmem:[#allocation3 + $0x8c0] sm:$0xff]
      %v5401 = vld [vmem:[#allocation3 + $0x8c8] sm:$0xff]
      %v5402 = vld [vmem:[#allocation3 + $0x8d0] sm:$0xff]
      %v5403 = vld [vmem:[#allocation3 + $0x8d8] sm:$0xff]
      %v5404 = vld [vmem:[#allocation3 + $0x8e0] sm:$0xff]
      %v5405 = vld [vmem:[#allocation3 + $0x8e8] sm:$0xff]
      %v5406 = vld [vmem:[#allocation3 + $0x8f0] sm:$0xff]
      %v5407 = vld [vmem:[#allocation3 + $0x8f8] sm:$0xff]
      %v5408 = vld [vmem:[#allocation3 + $0x900] sm:$0xff]
      %v5409 = vld [vmem:[#allocation3 + $0x908] sm:$0xff]
      %v5410 = vld [vmem:[#allocation3 + $0x910] sm:$0xff]
      %v5411 = vld [vmem:[#allocation3 + $0x918] sm:$0xff]
      %v5412 = vld [vmem:[#allocation3 + $0x920] sm:$0xff]
      %v5413 = vld [vmem:[#allocation3 + $0x928] sm:$0xff]
      %v5414 = vld [vmem:[#allocation3 + $0x930] sm:$0xff]
      %v5415 = vld [vmem:[#allocation3 + $0x938] sm:$0xff]
      %v5416 = vld [vmem:[#allocation3 + $0x940] sm:$0xff]
      %v5417 = vld [vmem:[#allocation3 + $0x948] sm:$0xff]
      %v5418 = vld [vmem:[#allocation3 + $0x950] sm:$0xff]
      %v5419 = vld [vmem:[#allocation3 + $0x958] sm:$0xff]
      %v5420 = vld [vmem:[#allocation3 + $0x960] sm:$0xff]
      %v5421 = vld [vmem:[#allocation3 + $0x968] sm:$0xff]
      %v5422 = vld [vmem:[#allocation3 + $0x970] sm:$0xff]
      %v5423 = vld [vmem:[#allocation3 + $0x978] sm:$0xff]
      %v5424 = vld [vmem:[#allocation3 + $0x980] sm:$0xff]
      %v5425 = vld [vmem:[#allocation3 + $0x988] sm:$0xff]
      %v5426 = vld [vmem:[#allocation3 + $0x990] sm:$0xff]
      %v5427 = vld [vmem:[#allocation3 + $0x998] sm:$0xff]
      %v5428 = vld [vmem:[#allocation3 + $0x9a0] sm:$0xff]
      %v5429 = vld [vmem:[#allocation3 + $0x9a8] sm:$0xff]
      %v5430 = vld [vmem:[#allocation3 + $0x9b0] sm:$0xff]
      %v5431 = vld [vmem:[#allocation3 + $0x9b8] sm:$0xff]
      %v5432 = vld [vmem:[#allocation3 + $0x9c0] sm:$0xff]
      %v5433 = vld [vmem:[#allocation3 + $0x9c8] sm:$0xff]
      %v5434 = vld [vmem:[#allocation3 + $0x9d0] sm:$0xff]
      %v5435 = vld [vmem:[#allocation3 + $0x9d8] sm:$0xff]
      %v5436 = vld [vmem:[#allocation3 + $0x9e0] sm:$0xff]
      %v5437 = vld [vmem:[#allocation3 + $0x9e8] sm:$0xff]
      %v5438 = vld [vmem:[#allocation3 + $0x9f0] sm:$0xff]
      %v5439 = vld [vmem:[#allocation3 + $0x9f8] sm:$0xff]
      %v5440 = vld [vmem:[#allocation3 + $0xa00] sm:$0xff]
      %v5441 = vld [vmem:[#allocation3 + $0xa08] sm:$0xff]
      %v5442 = vld [vmem:[#allocation3 + $0xa10] sm:$0xff]
      %v5443 = vld [vmem:[#allocation3 + $0xa18] sm:$0xff]
      %v5444 = vld [vmem:[#allocation3 + $0xa20] sm:$0xff]
      %v5445 = vld [vmem:[#allocation3 + $0xa28] sm:$0xff]
      %v5446 = vld [vmem:[#allocation3 + $0xa30] sm:$0xff]
      %v5447 = vld [vmem:[#allocation3 + $0xa38] sm:$0xff]
      %v5448 = vld [vmem:[#allocation3 + $0xa40] sm:$0xff]
      %v5449 = vld [vmem:[#allocation3 + $0xa48] sm:$0xff]
      %v5450 = vld [vmem:[#allocation3 + $0xa50] sm:$0xff]
      %v5451 = vld [vmem:[#allocation3 + $0xa58] sm:$0xff]
      %v5452 = vld [vmem:[#allocation3 + $0xa60] sm:$0xff]
      %v5453 = vld [vmem:[#allocation3 + $0xa68] sm:$0xff]
      %v5454 = vld [vmem:[#allocation3 + $0xa70] sm:$0xff]
      %v5455 = vld [vmem:[#allocation3 + $0xa78] sm:$0xff]
      %v5456 = vld [vmem:[#allocation3 + $0xa80] sm:$0xff]
      %v5457 = vld [vmem:[#allocation3 + $0xa88] sm:$0xff]
      %v5458 = vld [vmem:[#allocation3 + $0xa90] sm:$0xff]
      %v5459 = vld [vmem:[#allocation3 + $0xa98] sm:$0xff]
      %v5460 = vld [vmem:[#allocation3 + $0xaa0] sm:$0xff]
      %v5461 = vld [vmem:[#allocation3 + $0xaa8] sm:$0xff]
      %v5462 = vld [vmem:[#allocation3 + $0xab0] sm:$0xff]
      %v5463 = vld [vmem:[#allocation3 + $0xab8] sm:$0xff]
      %v5464 = vld [vmem:[#allocation3 + $0xac0] sm:$0xff]
      %v5465 = vld [vmem:[#allocation3 + $0xac8] sm:$0xff]
      %v5466 = vld [vmem:[#allocation3 + $0xad0] sm:$0xff]
      %v5467 = vld [vmem:[#allocation3 + $0xad8] sm:$0xff]
      %v5468 = vld [vmem:[#allocation3 + $0xae0] sm:$0xff]
      %v5469 = vld [vmem:[#allocation3 + $0xae8] sm:$0xff]
      %v5470 = vld [vmem:[#allocation3 + $0xaf0] sm:$0xff]
      %v5471 = vld [vmem:[#allocation3 + $0xaf8] sm:$0xff]
      %v5472 = vld [vmem:[#allocation3 + $0xb00] sm:$0xff]
      %v5473 = vld [vmem:[#allocation3 + $0xb08] sm:$0xff]
      %v5474 = vld [vmem:[#allocation3 + $0xb10] sm:$0xff]
      %v5475 = vld [vmem:[#allocation3 + $0xb18] sm:$0xff]
      %v5476 = vld [vmem:[#allocation3 + $0xb20] sm:$0xff]
      %v5477 = vld [vmem:[#allocation3 + $0xb28] sm:$0xff]
      %v5478 = vld [vmem:[#allocation3 + $0xb30] sm:$0xff]
      %v5479 = vld [vmem:[#allocation3 + $0xb38] sm:$0xff]
      %v5481 = vsel %vm941, %v5083, 0
      %v5484 = vsel %vm941, %v5095, 0
      %v5487 = vsel %vm941, %v5107, 0
      %v5490 = vsel %vm941, %v5119, 0
      %5492 = vmatpush.msra.mxu0 %v5150
      %5493 = vmatpush.msra.mxu0 %v5148
      %5494 = vmatpush.msra.mxu0 %v5146
      %5495 = vmatpush.msra.mxu0 %v5144
      %5496 = vmatpush.msra.mxu0 %v5142
      %5497 = vmatpush.msra.mxu0 %v5140
      %5498 = vmatpush.msra.mxu0 %v5138
      %5499 = vmatpush.msra.mxu0 %v5136
      %5500 = vmatpush.msra.mxu0 %v5134
      %5501 = vmatpush.msra.mxu0 %v5132
      %5502 = vmatpush.msra.mxu0 %v5130
      %5503 = vmatpush.msra.mxu0 %v5128
      %5504 = vmatpush.msra.mxu0 %v5126
      %5505 = vmatpush.msra.mxu0 %v5124
      %5506 = vmatpush.msra.mxu0 %v5122
      %5507 = vmatpush.msra.mxu0 %v5120
      %5508 = vmatmul.f32.gmra.mxu0 %v5072
      %v5509 = vpop.f32.mrf.mxu0
      %v5510 = vadd.f32 0.0, %v5509
      %5511 = vmatmul.f32.gmra.mxu0 %v5084
      %v5512 = vpop.f32.mrf.mxu0
      %v5513 = vadd.f32 0.0, %v5512
      %5514 = vmatmul.f32.gmra.mxu0 %v5096
      %v5515 = vpop.f32.mrf.mxu0
      %v5516 = vadd.f32 0.0, %v5515
      %5517 = vmatmul.f32.gmra.mxu0 %v5108
      %v5518 = vpop.f32.mrf.mxu0
      %v5519 = vadd.f32 0.0, %v5518
      %5520 = vdwg.mxu0
      %5521 = vmatpush.msra.mxu0 %v5182
      %5522 = vmatpush.msra.mxu0 %v5180
      %5523 = vmatpush.msra.mxu0 %v5178
      %5524 = vmatpush.msra.mxu0 %v5176
      %5525 = vmatpush.msra.mxu0 %v5174
      %5526 = vmatpush.msra.mxu0 %v5172
      %5527 = vmatpush.msra.mxu0 %v5170
      %5528 = vmatpush.msra.mxu0 %v5168
      %5529 = vmatpush.msra.mxu0 %v5166
      %5530 = vmatpush.msra.mxu0 %v5164
      %5531 = vmatpush.msra.mxu0 %v5162
      %5532 = vmatpush.msra.mxu0 %v5160
      %5533 = vmatpush.msra.mxu0 %v5158
      %5534 = vmatpush.msra.mxu0 %v5156
      %5535 = vmatpush.msra.mxu0 %v5154
      %5536 = vmatpush.msra.mxu0 %v5152
      %5537 = vmatmul.f32.gmra.mxu0 %v5073
      %v5538 = vpop.f32.mrf.mxu0
      %v5539 = vadd.f32 %v5510, %v5538
      %5540 = vmatmul.f32.gmra.mxu0 %v5085
      %v5541 = vpop.f32.mrf.mxu0
      %v5542 = vadd.f32 %v5513, %v5541
      %5543 = vmatmul.f32.gmra.mxu0 %v5097
      %v5544 = vpop.f32.mrf.mxu0
      %v5545 = vadd.f32 %v5516, %v5544
      %5546 = vmatmul.f32.gmra.mxu0 %v5109
      %v5547 = vpop.f32.mrf.mxu0
      %v5548 = vadd.f32 %v5519, %v5547
      %5549 = vdwg.mxu0
      %5550 = vmatpush.msra.mxu0 %v5214
      %5551 = vmatpush.msra.mxu0 %v5212
      %5552 = vmatpush.msra.mxu0 %v5210
      %5553 = vmatpush.msra.mxu0 %v5208
      %5554 = vmatpush.msra.mxu0 %v5206
      %5555 = vmatpush.msra.mxu0 %v5204
      %5556 = vmatpush.msra.mxu0 %v5202
      %5557 = vmatpush.msra.mxu0 %v5200
      %5558 = vmatpush.msra.mxu0 %v5198
      %5559 = vmatpush.msra.mxu0 %v5196
      %5560 = vmatpush.msra.mxu0 %v5194
      %5561 = vmatpush.msra.mxu0 %v5192
      %5562 = vmatpush.msra.mxu0 %v5190
      %5563 = vmatpush.msra.mxu0 %v5188
      %5564 = vmatpush.msra.mxu0 %v5186
      %5565 = vmatpush.msra.mxu0 %v5184
      %5566 = vmatmul.f32.gmra.mxu0 %v5074
      %v5567 = vpop.f32.mrf.mxu0
      %v5568 = vadd.f32 %v5539, %v5567
      %5569 = vmatmul.f32.gmra.mxu0 %v5086
      %v5570 = vpop.f32.mrf.mxu0
      %v5571 = vadd.f32 %v5542, %v5570
      %5572 = vmatmul.f32.gmra.mxu0 %v5098
      %v5573 = vpop.f32.mrf.mxu0
      %v5574 = vadd.f32 %v5545, %v5573
      %5575 = vmatmul.f32.gmra.mxu0 %v5110
      %v5576 = vpop.f32.mrf.mxu0
      %v5577 = vadd.f32 %v5548, %v5576
      %5578 = vdwg.mxu0
      %5579 = vmatpush.msra.mxu0 %v5246
      %5580 = vmatpush.msra.mxu0 %v5244
      %5581 = vmatpush.msra.mxu0 %v5242
      %5582 = vmatpush.msra.mxu0 %v5240
      %5583 = vmatpush.msra.mxu0 %v5238
      %5584 = vmatpush.msra.mxu0 %v5236
      %5585 = vmatpush.msra.mxu0 %v5234
      %5586 = vmatpush.msra.mxu0 %v5232
      %5587 = vmatpush.msra.mxu0 %v5230
      %5588 = vmatpush.msra.mxu0 %v5228
      %5589 = vmatpush.msra.mxu0 %v5226
      %5590 = vmatpush.msra.mxu0 %v5224
      %5591 = vmatpush.msra.mxu0 %v5222
      %5592 = vmatpush.msra.mxu0 %v5220
      %5593 = vmatpush.msra.mxu0 %v5218
      %5594 = vmatpush.msra.mxu0 %v5216
      %5595 = vmatmul.f32.gmra.mxu0 %v5075
      %v5596 = vpop.f32.mrf.mxu0
      %v5597 = vadd.f32 %v5568, %v5596
      %5598 = vmatmul.f32.gmra.mxu0 %v5087
      %v5599 = vpop.f32.mrf.mxu0
      %v5600 = vadd.f32 %v5571, %v5599
      %5601 = vmatmul.f32.gmra.mxu0 %v5099
      %v5602 = vpop.f32.mrf.mxu0
      %v5603 = vadd.f32 %v5574, %v5602
      %5604 = vmatmul.f32.gmra.mxu0 %v5111
      %v5605 = vpop.f32.mrf.mxu0
      %v5606 = vadd.f32 %v5577, %v5605
      %5607 = vdwg.mxu0
      %5608 = vmatpush.msra.mxu0 %v5278
      %5609 = vmatpush.msra.mxu0 %v5276
      %5610 = vmatpush.msra.mxu0 %v5274
      %5611 = vmatpush.msra.mxu0 %v5272
      %5612 = vmatpush.msra.mxu0 %v5270
      %5613 = vmatpush.msra.mxu0 %v5268
      %5614 = vmatpush.msra.mxu0 %v5266
      %5615 = vmatpush.msra.mxu0 %v5264
      %5616 = vmatpush.msra.mxu0 %v5262
      %5617 = vmatpush.msra.mxu0 %v5260
      %5618 = vmatpush.msra.mxu0 %v5258
      %5619 = vmatpush.msra.mxu0 %v5256
      %5620 = vmatpush.msra.mxu0 %v5254
      %5621 = vmatpush.msra.mxu0 %v5252
      %5622 = vmatpush.msra.mxu0 %v5250
      %5623 = vmatpush.msra.mxu0 %v5248
      %5624 = vmatmul.f32.gmra.mxu0 %v5076
      %v5625 = vpop.f32.mrf.mxu0
      %v5626 = vadd.f32 %v5597, %v5625
      %5627 = vmatmul.f32.gmra.mxu0 %v5088
      %v5628 = vpop.f32.mrf.mxu0
      %v5629 = vadd.f32 %v5600, %v5628
      %5630 = vmatmul.f32.gmra.mxu0 %v5100
      %v5631 = vpop.f32.mrf.mxu0
      %v5632 = vadd.f32 %v5603, %v5631
      %5633 = vmatmul.f32.gmra.mxu0 %v5112
      %v5634 = vpop.f32.mrf.mxu0
      %v5635 = vadd.f32 %v5606, %v5634
      %5636 = vdwg.mxu0
      %5637 = vmatpush.msra.mxu0 %v5310
      %5638 = vmatpush.msra.mxu0 %v5308
      %5639 = vmatpush.msra.mxu0 %v5306
      %5640 = vmatpush.msra.mxu0 %v5304
      %5641 = vmatpush.msra.mxu0 %v5302
      %5642 = vmatpush.msra.mxu0 %v5300
      %5643 = vmatpush.msra.mxu0 %v5298
      %5644 = vmatpush.msra.mxu0 %v5296
      %5645 = vmatpush.msra.mxu0 %v5294
      %5646 = vmatpush.msra.mxu0 %v5292
      %5647 = vmatpush.msra.mxu0 %v5290
      %5648 = vmatpush.msra.mxu0 %v5288
      %5649 = vmatpush.msra.mxu0 %v5286
      %5650 = vmatpush.msra.mxu0 %v5284
      %5651 = vmatpush.msra.mxu0 %v5282
      %5652 = vmatpush.msra.mxu0 %v5280
      %5653 = vmatmul.f32.gmra.mxu0 %v5077
      %v5654 = vpop.f32.mrf.mxu0
      %v5655 = vadd.f32 %v5626, %v5654
      %5656 = vmatmul.f32.gmra.mxu0 %v5089
      %v5657 = vpop.f32.mrf.mxu0
      %v5658 = vadd.f32 %v5629, %v5657
      %5659 = vmatmul.f32.gmra.mxu0 %v5101
      %v5660 = vpop.f32.mrf.mxu0
      %v5661 = vadd.f32 %v5632, %v5660
      %5662 = vmatmul.f32.gmra.mxu0 %v5113
      %v5663 = vpop.f32.mrf.mxu0
      %v5664 = vadd.f32 %v5635, %v5663
      %5665 = vdwg.mxu0
      %5666 = vmatpush.msra.mxu0 %v5342
      %5667 = vmatpush.msra.mxu0 %v5340
      %5668 = vmatpush.msra.mxu0 %v5338
      %5669 = vmatpush.msra.mxu0 %v5336
      %5670 = vmatpush.msra.mxu0 %v5334
      %5671 = vmatpush.msra.mxu0 %v5332
      %5672 = vmatpush.msra.mxu0 %v5330
      %5673 = vmatpush.msra.mxu0 %v5328
      %5674 = vmatpush.msra.mxu0 %v5326
      %5675 = vmatpush.msra.mxu0 %v5324
      %5676 = vmatpush.msra.mxu0 %v5322
      %5677 = vmatpush.msra.mxu0 %v5320
      %5678 = vmatpush.msra.mxu0 %v5318
      %5679 = vmatpush.msra.mxu0 %v5316
      %5680 = vmatpush.msra.mxu0 %v5314
      %5681 = vmatpush.msra.mxu0 %v5312
      %5682 = vmatmul.f32.gmra.mxu0 %v5078
      %v5683 = vpop.f32.mrf.mxu0
      %v5684 = vadd.f32 %v5655, %v5683
      %5685 = vmatmul.f32.gmra.mxu0 %v5090
      %v5686 = vpop.f32.mrf.mxu0
      %v5687 = vadd.f32 %v5658, %v5686
      %5688 = vmatmul.f32.gmra.mxu0 %v5102
      %v5689 = vpop.f32.mrf.mxu0
      %v5690 = vadd.f32 %v5661, %v5689
      %5691 = vmatmul.f32.gmra.mxu0 %v5114
      %v5692 = vpop.f32.mrf.mxu0
      %v5693 = vadd.f32 %v5664, %v5692
      %5694 = vdwg.mxu0
      %5695 = vmatpush.msra.mxu0 %v5374
      %5696 = vmatpush.msra.mxu0 %v5372
      %5697 = vmatpush.msra.mxu0 %v5370
      %5698 = vmatpush.msra.mxu0 %v5368
      %5699 = vmatpush.msra.mxu0 %v5366
      %5700 = vmatpush.msra.mxu0 %v5364
      %5701 = vmatpush.msra.mxu0 %v5362
      %5702 = vmatpush.msra.mxu0 %v5360
      %5703 = vmatpush.msra.mxu0 %v5358
      %5704 = vmatpush.msra.mxu0 %v5356
      %5705 = vmatpush.msra.mxu0 %v5354
      %5706 = vmatpush.msra.mxu0 %v5352
      %5707 = vmatpush.msra.mxu0 %v5350
      %5708 = vmatpush.msra.mxu0 %v5348
      %5709 = vmatpush.msra.mxu0 %v5346
      %5710 = vmatpush.msra.mxu0 %v5344
      %5711 = vmatmul.f32.gmra.mxu0 %v5079
      %v5712 = vpop.f32.mrf.mxu0
      %v5713 = vadd.f32 %v5684, %v5712
      %5714 = vmatmul.f32.gmra.mxu0 %v5091
      %v5715 = vpop.f32.mrf.mxu0
      %v5716 = vadd.f32 %v5687, %v5715
      %5717 = vmatmul.f32.gmra.mxu0 %v5103
      %v5718 = vpop.f32.mrf.mxu0
      %v5719 = vadd.f32 %v5690, %v5718
      %5720 = vmatmul.f32.gmra.mxu0 %v5115
      %v5721 = vpop.f32.mrf.mxu0
      %v5722 = vadd.f32 %v5693, %v5721
      %5723 = vdwg.mxu0
      %5724 = vmatpush.msra.mxu0 %v5406
      %5725 = vmatpush.msra.mxu0 %v5404
      %5726 = vmatpush.msra.mxu0 %v5402
      %5727 = vmatpush.msra.mxu0 %v5400
      %5728 = vmatpush.msra.mxu0 %v5398
      %5729 = vmatpush.msra.mxu0 %v5396
      %5730 = vmatpush.msra.mxu0 %v5394
      %5731 = vmatpush.msra.mxu0 %v5392
      %5732 = vmatpush.msra.mxu0 %v5390
      %5733 = vmatpush.msra.mxu0 %v5388
      %5734 = vmatpush.msra.mxu0 %v5386
      %5735 = vmatpush.msra.mxu0 %v5384
      %5736 = vmatpush.msra.mxu0 %v5382
      %5737 = vmatpush.msra.mxu0 %v5380
      %5738 = vmatpush.msra.mxu0 %v5378
      %5739 = vmatpush.msra.mxu0 %v5376
      %5740 = vmatmul.f32.gmra.mxu0 %v5080
      %v5741 = vpop.f32.mrf.mxu0
      %v5742 = vadd.f32 %v5713, %v5741
      %5743 = vmatmul.f32.gmra.mxu0 %v5092
      %v5744 = vpop.f32.mrf.mxu0
      %v5745 = vadd.f32 %v5716, %v5744
      %5746 = vmatmul.f32.gmra.mxu0 %v5104
      %v5747 = vpop.f32.mrf.mxu0
      %v5748 = vadd.f32 %v5719, %v5747
      %5749 = vmatmul.f32.gmra.mxu0 %v5116
      %v5750 = vpop.f32.mrf.mxu0
      %v5751 = vadd.f32 %v5722, %v5750
      %5752 = vdwg.mxu0
      %5753 = vmatpush.msra.mxu0 %v5438
      %5754 = vmatpush.msra.mxu0 %v5436
      %5755 = vmatpush.msra.mxu0 %v5434
      %5756 = vmatpush.msra.mxu0 %v5432
      %5757 = vmatpush.msra.mxu0 %v5430
      %5758 = vmatpush.msra.mxu0 %v5428
      %5759 = vmatpush.msra.mxu0 %v5426
      %5760 = vmatpush.msra.mxu0 %v5424
      %5761 = vmatpush.msra.mxu0 %v5422
      %5762 = vmatpush.msra.mxu0 %v5420
      %5763 = vmatpush.msra.mxu0 %v5418
      %5764 = vmatpush.msra.mxu0 %v5416
      %5765 = vmatpush.msra.mxu0 %v5414
      %5766 = vmatpush.msra.mxu0 %v5412
      %5767 = vmatpush.msra.mxu0 %v5410
      %5768 = vmatpush.msra.mxu0 %v5408
      %5769 = vmatmul.f32.gmra.mxu0 %v5081
      %v5770 = vpop.f32.mrf.mxu0
      %v5771 = vadd.f32 %v5742, %v5770
      %5772 = vmatmul.f32.gmra.mxu0 %v5093
      %v5773 = vpop.f32.mrf.mxu0
      %v5774 = vadd.f32 %v5745, %v5773
      %5775 = vmatmul.f32.gmra.mxu0 %v5105
      %v5776 = vpop.f32.mrf.mxu0
      %v5777 = vadd.f32 %v5748, %v5776
      %5778 = vmatmul.f32.gmra.mxu0 %v5117
      %v5779 = vpop.f32.mrf.mxu0
      %v5780 = vadd.f32 %v5751, %v5779
      %5781 = vdwg.mxu0
      %5782 = vmatpush.msra.mxu0 %v5470
      %5783 = vmatpush.msra.mxu0 %v5468
      %5784 = vmatpush.msra.mxu0 %v5466
      %5785 = vmatpush.msra.mxu0 %v5464
      %5786 = vmatpush.msra.mxu0 %v5462
      %5787 = vmatpush.msra.mxu0 %v5460
      %5788 = vmatpush.msra.mxu0 %v5458
      %5789 = vmatpush.msra.mxu0 %v5456
      %5790 = vmatpush.msra.mxu0 %v5454
      %5791 = vmatpush.msra.mxu0 %v5452
      %5792 = vmatpush.msra.mxu0 %v5450
      %5793 = vmatpush.msra.mxu0 %v5448
      %5794 = vmatpush.msra.mxu0 %v5446
      %5795 = vmatpush.msra.mxu0 %v5444
      %5796 = vmatpush.msra.mxu0 %v5442
      %5797 = vmatpush.msra.mxu0 %v5440
      %5798 = vmatmul.f32.gmra.mxu0 %v5082
      %v5799 = vpop.f32.mrf.mxu0
      %v5800 = vadd.f32 %v5771, %v5799
      %5801 = vmatmul.f32.gmra.mxu0 %v5094
      %v5802 = vpop.f32.mrf.mxu0
      %v5803 = vadd.f32 %v5774, %v5802
      %5804 = vmatmul.f32.gmra.mxu0 %v5106
      %v5805 = vpop.f32.mrf.mxu0
      %v5806 = vadd.f32 %v5777, %v5805
      %5807 = vmatmul.f32.gmra.mxu0 %v5118
      %v5808 = vpop.f32.mrf.mxu0
      %v5809 = vadd.f32 %v5780, %v5808
      %5810 = vdwg.mxu0
      %5811 = vmatpush.msra.mxu0 0.0
      %5812 = vmatpush.msra.mxu0 0.0
      %5813 = vmatpush.msra.mxu0 0.0
      %5814 = vmatpush.msra.mxu0 0.0
      %5815 = vmatpush.msra.mxu0 0.0
      %5816 = vmatpush.msra.mxu0 0.0
      %5817 = vmatpush.msra.mxu0 0.0
      %5818 = vmatpush.msra.mxu0 0.0
      %5819 = vmatpush.msra.mxu0 0.0
      %5820 = vmatpush.msra.mxu0 0.0
      %5821 = vmatpush.msra.mxu0 0.0
      %5822 = vmatpush.msra.mxu0 0.0
      %5823 = vmatpush.msra.mxu0 %v5478
      %5824 = vmatpush.msra.mxu0 %v5476
      %5825 = vmatpush.msra.mxu0 %v5474
      %5826 = vmatpush.msra.mxu0 %v5472
      %5827 = vmatmul.f32.gmra.mxu0 %v5481
      %v5828 = vpop.f32.mrf.mxu0
      %v5829 = vadd.f32 %v5800, %v5828
      %5830 = vmatmul.f32.gmra.mxu0 %v5484
      %v5831 = vpop.f32.mrf.mxu0
      %v5832 = vadd.f32 %v5803, %v5831
      %5833 = vmatmul.f32.gmra.mxu0 %v5487
      %v5834 = vpop.f32.mrf.mxu0
      %v5835 = vadd.f32 %v5806, %v5834
      %5836 = vmatmul.f32.gmra.mxu0 %v5490
      %v5837 = vpop.f32.mrf.mxu0
      %v5838 = vadd.f32 %v5809, %v5837
      %5839 = vdwg.mxu0
      %5840 = vmatpush.msra.mxu0 %v5151
      %5841 = vmatpush.msra.mxu0 %v5149
      %5842 = vmatpush.msra.mxu0 %v5147
      %5843 = vmatpush.msra.mxu0 %v5145
      %5844 = vmatpush.msra.mxu0 %v5143
      %5845 = vmatpush.msra.mxu0 %v5141
      %5846 = vmatpush.msra.mxu0 %v5139
      %5847 = vmatpush.msra.mxu0 %v5137
      %5848 = vmatpush.msra.mxu0 %v5135
      %5849 = vmatpush.msra.mxu0 %v5133
      %5850 = vmatpush.msra.mxu0 %v5131
      %5851 = vmatpush.msra.mxu0 %v5129
      %5852 = vmatpush.msra.mxu0 %v5127
      %5853 = vmatpush.msra.mxu0 %v5125
      %5854 = vmatpush.msra.mxu0 %v5123
      %5855 = vmatpush.msra.mxu0 %v5121
      %5856 = vmatmul.f32.gmra.mxu0 %v5072
      %v5857 = vpop.f32.mrf.mxu0
      %v5858 = vadd.f32 0.0, %v5857
      %5859 = vmatmul.f32.gmra.mxu0 %v5084
      %v5860 = vpop.f32.mrf.mxu0
      %v5861 = vadd.f32 0.0, %v5860
      %5862 = vmatmul.f32.gmra.mxu0 %v5096
      %v5863 = vpop.f32.mrf.mxu0
      %v5864 = vadd.f32 0.0, %v5863
      %5865 = vmatmul.f32.gmra.mxu0 %v5108
      %v5866 = vpop.f32.mrf.mxu0
      %v5867 = vadd.f32 0.0, %v5866
      %5868 = vdwg.mxu0
      %5869 = vmatpush.msra.mxu0 %v5183
      %5870 = vmatpush.msra.mxu0 %v5181
      %5871 = vmatpush.msra.mxu0 %v5179
      %5872 = vmatpush.msra.mxu0 %v5177
      %5873 = vmatpush.msra.mxu0 %v5175
      %5874 = vmatpush.msra.mxu0 %v5173
      %5875 = vmatpush.msra.mxu0 %v5171
      %5876 = vmatpush.msra.mxu0 %v5169
      %5877 = vmatpush.msra.mxu0 %v5167
      %5878 = vmatpush.msra.mxu0 %v5165
      %5879 = vmatpush.msra.mxu0 %v5163
      %5880 = vmatpush.msra.mxu0 %v5161
      %5881 = vmatpush.msra.mxu0 %v5159
      %5882 = vmatpush.msra.mxu0 %v5157
      %5883 = vmatpush.msra.mxu0 %v5155
      %5884 = vmatpush.msra.mxu0 %v5153
      %5885 = vmatmul.f32.gmra.mxu0 %v5073
      %v5886 = vpop.f32.mrf.mxu0
      %v5887 = vadd.f32 %v5858, %v5886
      %5888 = vmatmul.f32.gmra.mxu0 %v5085
      %v5889 = vpop.f32.mrf.mxu0
      %v5890 = vadd.f32 %v5861, %v5889
      %5891 = vmatmul.f32.gmra.mxu0 %v5097
      %v5892 = vpop.f32.mrf.mxu0
      %v5893 = vadd.f32 %v5864, %v5892
      %5894 = vmatmul.f32.gmra.mxu0 %v5109
      %v5895 = vpop.f32.mrf.mxu0
      %v5896 = vadd.f32 %v5867, %v5895
      %5897 = vdwg.mxu0
      %5898 = vmatpush.msra.mxu0 %v5215
      %5899 = vmatpush.msra.mxu0 %v5213
      %5900 = vmatpush.msra.mxu0 %v5211
      %5901 = vmatpush.msra.mxu0 %v5209
      %5902 = vmatpush.msra.mxu0 %v5207
      %5903 = vmatpush.msra.mxu0 %v5205
      %5904 = vmatpush.msra.mxu0 %v5203
      %5905 = vmatpush.msra.mxu0 %v5201
      %5906 = vmatpush.msra.mxu0 %v5199
      %5907 = vmatpush.msra.mxu0 %v5197
      %5908 = vmatpush.msra.mxu0 %v5195
      %5909 = vmatpush.msra.mxu0 %v5193
      %5910 = vmatpush.msra.mxu0 %v5191
      %5911 = vmatpush.msra.mxu0 %v5189
      %5912 = vmatpush.msra.mxu0 %v5187
      %5913 = vmatpush.msra.mxu0 %v5185
      %5914 = vmatmul.f32.gmra.mxu0 %v5074
      %v5915 = vpop.f32.mrf.mxu0
      %v5916 = vadd.f32 %v5887, %v5915
      %5917 = vmatmul.f32.gmra.mxu0 %v5086
      %v5918 = vpop.f32.mrf.mxu0
      %v5919 = vadd.f32 %v5890, %v5918
      %5920 = vmatmul.f32.gmra.mxu0 %v5098
      %v5921 = vpop.f32.mrf.mxu0
      %v5922 = vadd.f32 %v5893, %v5921
      %5923 = vmatmul.f32.gmra.mxu0 %v5110
      %v5924 = vpop.f32.mrf.mxu0
      %v5925 = vadd.f32 %v5896, %v5924
      %5926 = vdwg.mxu0
      %5927 = vmatpush.msra.mxu0 %v5247
      %5928 = vmatpush.msra.mxu0 %v5245
      %5929 = vmatpush.msra.mxu0 %v5243
      %5930 = vmatpush.msra.mxu0 %v5241
      %5931 = vmatpush.msra.mxu0 %v5239
      %5932 = vmatpush.msra.mxu0 %v5237
      %5933 = vmatpush.msra.mxu0 %v5235
      %5934 = vmatpush.msra.mxu0 %v5233
      %5935 = vmatpush.msra.mxu0 %v5231
      %5936 = vmatpush.msra.mxu0 %v5229
      %5937 = vmatpush.msra.mxu0 %v5227
      %5938 = vmatpush.msra.mxu0 %v5225
      %5939 = vmatpush.msra.mxu0 %v5223
      %5940 = vmatpush.msra.mxu0 %v5221
      %5941 = vmatpush.msra.mxu0 %v5219
      %5942 = vmatpush.msra.mxu0 %v5217
      %5943 = vmatmul.f32.gmra.mxu0 %v5075
      %v5944 = vpop.f32.mrf.mxu0
      %v5945 = vadd.f32 %v5916, %v5944
      %5946 = vmatmul.f32.gmra.mxu0 %v5087
      %v5947 = vpop.f32.mrf.mxu0
      %v5948 = vadd.f32 %v5919, %v5947
      %5949 = vmatmul.f32.gmra.mxu0 %v5099
      %v5950 = vpop.f32.mrf.mxu0
      %v5951 = vadd.f32 %v5922, %v5950
      %5952 = vmatmul.f32.gmra.mxu0 %v5111
      %v5953 = vpop.f32.mrf.mxu0
      %v5954 = vadd.f32 %v5925, %v5953
      %5955 = vdwg.mxu0
      %5956 = vmatpush.msra.mxu0 %v5279
      %5957 = vmatpush.msra.mxu0 %v5277
      %5958 = vmatpush.msra.mxu0 %v5275
      %5959 = vmatpush.msra.mxu0 %v5273
      %5960 = vmatpush.msra.mxu0 %v5271
      %5961 = vmatpush.msra.mxu0 %v5269
      %5962 = vmatpush.msra.mxu0 %v5267
      %5963 = vmatpush.msra.mxu0 %v5265
      %5964 = vmatpush.msra.mxu0 %v5263
      %5965 = vmatpush.msra.mxu0 %v5261
      %5966 = vmatpush.msra.mxu0 %v5259
      %5967 = vmatpush.msra.mxu0 %v5257
      %5968 = vmatpush.msra.mxu0 %v5255
      %5969 = vmatpush.msra.mxu0 %v5253
      %5970 = vmatpush.msra.mxu0 %v5251
      %5971 = vmatpush.msra.mxu0 %v5249
      %5972 = vmatmul.f32.gmra.mxu0 %v5076
      %v5973 = vpop.f32.mrf.mxu0
      %v5974 = vadd.f32 %v5945, %v5973
      %5975 = vmatmul.f32.gmra.mxu0 %v5088
      %v5976 = vpop.f32.mrf.mxu0
      %v5977 = vadd.f32 %v5948, %v5976
      %5978 = vmatmul.f32.gmra.mxu0 %v5100
      %v5979 = vpop.f32.mrf.mxu0
      %v5980 = vadd.f32 %v5951, %v5979
      %5981 = vmatmul.f32.gmra.mxu0 %v5112
      %v5982 = vpop.f32.mrf.mxu0
      %v5983 = vadd.f32 %v5954, %v5982
      %5984 = vdwg.mxu0
      %5985 = vmatpush.msra.mxu0 %v5311
      %5986 = vmatpush.msra.mxu0 %v5309
      %5987 = vmatpush.msra.mxu0 %v5307
      %5988 = vmatpush.msra.mxu0 %v5305
      %5989 = vmatpush.msra.mxu0 %v5303
      %5990 = vmatpush.msra.mxu0 %v5301
      %5991 = vmatpush.msra.mxu0 %v5299
      %5992 = vmatpush.msra.mxu0 %v5297
      %5993 = vmatpush.msra.mxu0 %v5295
      %5994 = vmatpush.msra.mxu0 %v5293
      %5995 = vmatpush.msra.mxu0 %v5291
      %5996 = vmatpush.msra.mxu0 %v5289
      %5997 = vmatpush.msra.mxu0 %v5287
      %5998 = vmatpush.msra.mxu0 %v5285
      %5999 = vmatpush.msra.mxu0 %v5283
      %6000 = vmatpush.msra.mxu0 %v5281
      %6001 = vmatmul.f32.gmra.mxu0 %v5077
      %v6002 = vpop.f32.mrf.mxu0
      %v6003 = vadd.f32 %v5974, %v6002
      %6004 = vmatmul.f32.gmra.mxu0 %v5089
      %v6005 = vpop.f32.mrf.mxu0
      %v6006 = vadd.f32 %v5977, %v6005
      %6007 = vmatmul.f32.gmra.mxu0 %v5101
      %v6008 = vpop.f32.mrf.mxu0
      %v6009 = vadd.f32 %v5980, %v6008
      %6010 = vmatmul.f32.gmra.mxu0 %v5113
      %v6011 = vpop.f32.mrf.mxu0
      %v6012 = vadd.f32 %v5983, %v6011
      %6013 = vdwg.mxu0
      %6014 = vmatpush.msra.mxu0 %v5343
      %6015 = vmatpush.msra.mxu0 %v5341
      %6016 = vmatpush.msra.mxu0 %v5339
      %6017 = vmatpush.msra.mxu0 %v5337
      %6018 = vmatpush.msra.mxu0 %v5335
      %6019 = vmatpush.msra.mxu0 %v5333
      %6020 = vmatpush.msra.mxu0 %v5331
      %6021 = vmatpush.msra.mxu0 %v5329
      %6022 = vmatpush.msra.mxu0 %v5327
      %6023 = vmatpush.msra.mxu0 %v5325
      %6024 = vmatpush.msra.mxu0 %v5323
      %6025 = vmatpush.msra.mxu0 %v5321
      %6026 = vmatpush.msra.mxu0 %v5319
      %6027 = vmatpush.msra.mxu0 %v5317
      %6028 = vmatpush.msra.mxu0 %v5315
      %6029 = vmatpush.msra.mxu0 %v5313
      %6030 = vmatmul.f32.gmra.mxu0 %v5078
      %v6031 = vpop.f32.mrf.mxu0
      %v6032 = vadd.f32 %v6003, %v6031
      %6033 = vmatmul.f32.gmra.mxu0 %v5090
      %v6034 = vpop.f32.mrf.mxu0
      %v6035 = vadd.f32 %v6006, %v6034
      %6036 = vmatmul.f32.gmra.mxu0 %v5102
      %v6037 = vpop.f32.mrf.mxu0
      %v6038 = vadd.f32 %v6009, %v6037
      %6039 = vmatmul.f32.gmra.mxu0 %v5114
      %v6040 = vpop.f32.mrf.mxu0
      %v6041 = vadd.f32 %v6012, %v6040
      %6042 = vdwg.mxu0
      %6043 = vmatpush.msra.mxu0 %v5375
      %6044 = vmatpush.msra.mxu0 %v5373
      %6045 = vmatpush.msra.mxu0 %v5371
      %6046 = vmatpush.msra.mxu0 %v5369
      %6047 = vmatpush.msra.mxu0 %v5367
      %6048 = vmatpush.msra.mxu0 %v5365
      %6049 = vmatpush.msra.mxu0 %v5363
      %6050 = vmatpush.msra.mxu0 %v5361
      %6051 = vmatpush.msra.mxu0 %v5359
      %6052 = vmatpush.msra.mxu0 %v5357
      %6053 = vmatpush.msra.mxu0 %v5355
      %6054 = vmatpush.msra.mxu0 %v5353
      %6055 = vmatpush.msra.mxu0 %v5351
      %6056 = vmatpush.msra.mxu0 %v5349
      %6057 = vmatpush.msra.mxu0 %v5347
      %6058 = vmatpush.msra.mxu0 %v5345
      %6059 = vmatmul.f32.gmra.mxu0 %v5079
      %v6060 = vpop.f32.mrf.mxu0
      %v6061 = vadd.f32 %v6032, %v6060
      %6062 = vmatmul.f32.gmra.mxu0 %v5091
      %v6063 = vpop.f32.mrf.mxu0
      %v6064 = vadd.f32 %v6035, %v6063
      %6065 = vmatmul.f32.gmra.mxu0 %v5103
      %v6066 = vpop.f32.mrf.mxu0
      %v6067 = vadd.f32 %v6038, %v6066
      %6068 = vmatmul.f32.gmra.mxu0 %v5115
      %v6069 = vpop.f32.mrf.mxu0
      %v6070 = vadd.f32 %v6041, %v6069
      %6071 = vdwg.mxu0
      %6072 = vmatpush.msra.mxu0 %v5407
      %6073 = vmatpush.msra.mxu0 %v5405
      %6074 = vmatpush.msra.mxu0 %v5403
      %6075 = vmatpush.msra.mxu0 %v5401
      %6076 = vmatpush.msra.mxu0 %v5399
      %6077 = vmatpush.msra.mxu0 %v5397
      %6078 = vmatpush.msra.mxu0 %v5395
      %6079 = vmatpush.msra.mxu0 %v5393
      %6080 = vmatpush.msra.mxu0 %v5391
      %6081 = vmatpush.msra.mxu0 %v5389
      %6082 = vmatpush.msra.mxu0 %v5387
      %6083 = vmatpush.msra.mxu0 %v5385
      %6084 = vmatpush.msra.mxu0 %v5383
      %6085 = vmatpush.msra.mxu0 %v5381
      %6086 = vmatpush.msra.mxu0 %v5379
      %6087 = vmatpush.msra.mxu0 %v5377
      %6088 = vmatmul.f32.gmra.mxu0 %v5080
      %v6089 = vpop.f32.mrf.mxu0
      %v6090 = vadd.f32 %v6061, %v6089
      %6091 = vmatmul.f32.gmra.mxu0 %v5092
      %v6092 = vpop.f32.mrf.mxu0
      %v6093 = vadd.f32 %v6064, %v6092
      %6094 = vmatmul.f32.gmra.mxu0 %v5104
      %v6095 = vpop.f32.mrf.mxu0
      %v6096 = vadd.f32 %v6067, %v6095
      %6097 = vmatmul.f32.gmra.mxu0 %v5116
      %v6098 = vpop.f32.mrf.mxu0
      %v6099 = vadd.f32 %v6070, %v6098
      %6100 = vdwg.mxu0
      %6101 = vmatpush.msra.mxu0 %v5439
      %6102 = vmatpush.msra.mxu0 %v5437
      %6103 = vmatpush.msra.mxu0 %v5435
      %6104 = vmatpush.msra.mxu0 %v5433
      %6105 = vmatpush.msra.mxu0 %v5431
      %6106 = vmatpush.msra.mxu0 %v5429
      %6107 = vmatpush.msra.mxu0 %v5427
      %6108 = vmatpush.msra.mxu0 %v5425
      %6109 = vmatpush.msra.mxu0 %v5423
      %6110 = vmatpush.msra.mxu0 %v5421
      %6111 = vmatpush.msra.mxu0 %v5419
      %6112 = vmatpush.msra.mxu0 %v5417
      %6113 = vmatpush.msra.mxu0 %v5415
      %6114 = vmatpush.msra.mxu0 %v5413
      %6115 = vmatpush.msra.mxu0 %v5411
      %6116 = vmatpush.msra.mxu0 %v5409
      %6117 = vmatmul.f32.gmra.mxu0 %v5081
      %v6118 = vpop.f32.mrf.mxu0
      %v6119 = vadd.f32 %v6090, %v6118
      %6120 = vmatmul.f32.gmra.mxu0 %v5093
      %v6121 = vpop.f32.mrf.mxu0
      %v6122 = vadd.f32 %v6093, %v6121
      %6123 = vmatmul.f32.gmra.mxu0 %v5105
      %v6124 = vpop.f32.mrf.mxu0
      %v6125 = vadd.f32 %v6096, %v6124
      %6126 = vmatmul.f32.gmra.mxu0 %v5117
      %v6127 = vpop.f32.mrf.mxu0
      %v6128 = vadd.f32 %v6099, %v6127
      %6129 = vdwg.mxu0
      %6130 = vmatpush.msra.mxu0 %v5471
      %6131 = vmatpush.msra.mxu0 %v5469
      %6132 = vmatpush.msra.mxu0 %v5467
      %6133 = vmatpush.msra.mxu0 %v5465
      %6134 = vmatpush.msra.mxu0 %v5463
      %6135 = vmatpush.msra.mxu0 %v5461
      %6136 = vmatpush.msra.mxu0 %v5459
      %6137 = vmatpush.msra.mxu0 %v5457
      %6138 = vmatpush.msra.mxu0 %v5455
      %6139 = vmatpush.msra.mxu0 %v5453
      %6140 = vmatpush.msra.mxu0 %v5451
      %6141 = vmatpush.msra.mxu0 %v5449
      %6142 = vmatpush.msra.mxu0 %v5447
      %6143 = vmatpush.msra.mxu0 %v5445
      %6144 = vmatpush.msra.mxu0 %v5443
      %6145 = vmatpush.msra.mxu0 %v5441
      %6146 = vmatmul.f32.gmra.mxu0 %v5082
      %v6147 = vpop.f32.mrf.mxu0
      %v6148 = vadd.f32 %v6119, %v6147
      %6149 = vmatmul.f32.gmra.mxu0 %v5094
      %v6150 = vpop.f32.mrf.mxu0
      %v6151 = vadd.f32 %v6122, %v6150
      %6152 = vmatmul.f32.gmra.mxu0 %v5106
      %v6153 = vpop.f32.mrf.mxu0
      %v6154 = vadd.f32 %v6125, %v6153
      %6155 = vmatmul.f32.gmra.mxu0 %v5118
      %v6156 = vpop.f32.mrf.mxu0
      %v6157 = vadd.f32 %v6128, %v6156
      %6158 = vdwg.mxu0
      %6159 = vmatpush.msra.mxu0 0.0
      %6160 = vmatpush.msra.mxu0 0.0
      %6161 = vmatpush.msra.mxu0 0.0
      %6162 = vmatpush.msra.mxu0 0.0
      %6163 = vmatpush.msra.mxu0 0.0
      %6164 = vmatpush.msra.mxu0 0.0
      %6165 = vmatpush.msra.mxu0 0.0
      %6166 = vmatpush.msra.mxu0 0.0
      %6167 = vmatpush.msra.mxu0 0.0
      %6168 = vmatpush.msra.mxu0 0.0
      %6169 = vmatpush.msra.mxu0 0.0
      %6170 = vmatpush.msra.mxu0 0.0
      %6171 = vmatpush.msra.mxu0 %v5479
      %6172 = vmatpush.msra.mxu0 %v5477
      %6173 = vmatpush.msra.mxu0 %v5475
      %6174 = vmatpush.msra.mxu0 %v5473
      %6175 = vmatmul.f32.gmra.mxu0 %v5481
      %v6176 = vpop.f32.mrf.mxu0
      %v6177 = vadd.f32 %v6148, %v6176
      %6178 = vmatmul.f32.gmra.mxu0 %v5484
      %v6179 = vpop.f32.mrf.mxu0
      %v6180 = vadd.f32 %v6151, %v6179
      %6181 = vmatmul.f32.gmra.mxu0 %v5487
      %v6182 = vpop.f32.mrf.mxu0
      %v6183 = vadd.f32 %v6154, %v6182
      %6184 = vmatmul.f32.gmra.mxu0 %v5490
      %v6185 = vpop.f32.mrf.mxu0
      %v6186 = vadd.f32 %v6157, %v6185
      %6187 = vdwg.mxu0
      %v6188 = vadd.f32 %v5829, %v6177
      %6189 = vadd.xlane.f32.xlu0 %v6188
      %v6190 = vpop.xlane.xlu0 %6189
      %v6191 = vadd.f32 %v5832, %v6180
      %6192 = vadd.xlane.f32.xlu0 %v6191
      %v6193 = vpop.xlane.xlu0 %6192
      %v6194 = vadd.f32 %v5835, %v6183
      %6195 = vadd.xlane.f32.xlu0 %v6194
      %v6196 = vpop.xlane.xlu0 %6195
      %v6197 = vadd.f32 %v5838, %v6186
      %6198 = vadd.xlane.f32.xlu0 %v6197
      %v6199 = vpop.xlane.xlu0 %6198
      %v6200 = vmul.f32 %v6190, %v359
      %v6201 = vmul.f32 %v6193, %v359
      %v6202 = vmul.f32 %v6196, %v359
      %v6203 = vmul.f32 %v6199, %v359
      %v6204 = vsub.f32 %v5829, %v6200
      %v6205 = vsub.f32 %v6177, %v6200
      %v6206 = vsub.f32 %v5832, %v6201
      %v6207 = vsub.f32 %v6180, %v6201
      %v6208 = vsub.f32 %v5835, %v6202
      %v6209 = vsub.f32 %v6183, %v6202
      %v6210 = vsub.f32 %v5838, %v6203
      %v6211 = vsub.f32 %v6186, %v6203
      %v6212 = vmul.f32 %v6204, %v6204
      %v6213 = vmul.f32 %v6205, %v6205
      %v6214 = vmul.f32 %v6206, %v6206
      %v6215 = vmul.f32 %v6207, %v6207
      %v6216 = vmul.f32 %v6208, %v6208
      %v6217 = vmul.f32 %v6209, %v6209
      %v6218 = vmul.f32 %v6210, %v6210
      %v6219 = vmul.f32 %v6211, %v6211
      %v6220 = vadd.f32 %v6212, %v6213
      %6221 = vadd.xlane.f32.xlu0 %v6220
      %v6222 = vpop.xlane.xlu0 %6221
      %v6223 = vadd.f32 %v6214, %v6215
      %6224 = vadd.xlane.f32.xlu0 %v6223
      %v6225 = vpop.xlane.xlu0 %6224
      %v6226 = vadd.f32 %v6216, %v6217
      %6227 = vadd.xlane.f32.xlu0 %v6226
      %v6228 = vpop.xlane.xlu0 %6227
      %v6229 = vadd.f32 %v6218, %v6219
      %6230 = vadd.xlane.f32.xlu0 %v6229
      %v6231 = vpop.xlane.xlu0 %6230
      %v6232 = vmul.f32 %v6222, %v359
      %v6233 = vmul.f32 %v6225, %v359
      %v6234 = vmul.f32 %v6228, %v359
      %v6235 = vmul.f32 %v6231, %v359
      %v6236 = vadd.f32 %v6232, 1e-05
      %v6237 = vadd.f32 %v6233, 1e-05
      %v6238 = vadd.f32 %v6234, 1e-05
      %v6239 = vadd.f32 %v6235, 1e-05
      %v6240 = vrsqrt.pop %v6236
      %v6241 = vmul.f32 %v6240, %v6236
      %v6242 = vmul.f32 %v6241, %v6240
      %v6243 = vmul.f32 0.5, %v6242
      %v6244 = vsub.f32 1.5, %v6243
      %v6245 = vmul.f32 %v6240, %v6244
      %vm6246 = vweird.f32 %v6236
      %vm6247 = vweird.f32 %v6240
      %vm6248 = vmor %vm6246, %vm6247
      %v6249 = vsel %vm6248, %v6240, %v6245
      %v6250 = vrsqrt.pop %v6237
      %v6251 = vmul.f32 %v6250, %v6237
      %v6252 = vmul.f32 %v6251, %v6250
      %v6253 = vmul.f32 0.5, %v6252
      %v6254 = vsub.f32 1.5, %v6253
      %v6255 = vmul.f32 %v6250, %v6254
      %vm6256 = vweird.f32 %v6237
      %vm6257 = vweird.f32 %v6250
      %vm6258 = vmor %vm6256, %vm6257
      %v6259 = vsel %vm6258, %v6250, %v6255
      %v6260 = vrsqrt.pop %v6238
      %v6261 = vmul.f32 %v6260, %v6238
      %v6262 = vmul.f32 %v6261, %v6260
      %v6263 = vmul.f32 0.5, %v6262
      %v6264 = vsub.f32 1.5, %v6263
      %v6265 = vmul.f32 %v6260, %v6264
      %vm6266 = vweird.f32 %v6238
      %vm6267 = vweird.f32 %v6260
      %vm6268 = vmor %vm6266, %vm6267
      %v6269 = vsel %vm6268, %v6260, %v6265
      %v6270 = vrsqrt.pop %v6239
      %v6271 = vmul.f32 %v6270, %v6239
      %v6272 = vmul.f32 %v6271, %v6270
      %v6273 = vmul.f32 0.5, %v6272
      %v6274 = vsub.f32 1.5, %v6273
      %v6275 = vmul.f32 %v6270, %v6274
      %vm6276 = vweird.f32 %v6239
      %vm6277 = vweird.f32 %v6270
      %vm6278 = vmor %vm6276, %vm6277
      %v6279 = vsel %vm6278, %v6270, %v6275
      %v6280 = vmul.f32 %v6204, %v6249
      %v6281 = vmul.f32 %v6205, %v6249
      %v6282 = vmul.f32 %v6206, %v6259
      %v6283 = vmul.f32 %v6207, %v6259
      %v6284 = vmul.f32 %v6208, %v6269
      %v6285 = vmul.f32 %v6209, %v6269
      %v6286 = vmul.f32 %v6210, %v6279
      %v6287 = vmul.f32 %v6211, %v6279
      %v6288 = vmax.f32 %v6280, 0.0
      %v6289 = vmax.f32 %v6281, 0.0
      %v6290 = vmax.f32 %v6282, 0.0
      %v6291 = vmax.f32 %v6283, 0.0
      %v6292 = vmax.f32 %v6284, 0.0
      %v6293 = vmax.f32 %v6285, 0.0
      %v6294 = vmax.f32 %v6286, 0.0
      %v6295 = vmax.f32 %v6287, 0.0
      %6296 = vst [vmem:[#allocation2 + $0x140] sm:$0xff] %v6288
      %6297 = vst [vmem:[#allocation2 + $0x148] sm:$0xff] %v6289
      %6298 = vst [vmem:[#allocation2 + $0x150] sm:$0xff] %v6290
      %6299 = vst [vmem:[#allocation2 + $0x158] sm:$0xff] %v6291
      %6300 = vst [vmem:[#allocation2 + $0x160] sm:$0xff] %v6292
      %6301 = vst [vmem:[#allocation2 + $0x168] sm:$0xff] %v6293
      %6302 = vst [vmem:[#allocation2 + $0x170] sm:$0xff] %v6294
      %6303 = vst [vmem:[#allocation2 + $0x178] sm:$0xff] %v6295
      %v6304 = vld [vmem:[%s7] sm:$0xff]
      %v6305 = vld [vmem:[%s7 + $0x8] sm:$0xff]
      %v6306 = vld [vmem:[%s7 + $0x10] sm:$0xff]
      %v6307 = vld [vmem:[%s7 + $0x18] sm:$0xff]
      %v6308 = vld [vmem:[%s7 + $0x20] sm:$0xff]
      %v6309 = vld [vmem:[%s7 + $0x28] sm:$0xff]
      %v6310 = vld [vmem:[%s7 + $0x30] sm:$0xff]
      %v6311 = vld [vmem:[%s7 + $0x38] sm:$0xff]
      %v6312 = vld [vmem:[%s7 + $0x40] sm:$0xff]
      %v6313 = vld [vmem:[%s7 + $0x48] sm:$0xff]
      %v6314 = vld [vmem:[%s7 + $0x50] sm:$0xff]
      %v6315 = vld [vmem:[%s7 + $0x58] sm:$0xff]
      %v6316 = vld [vmem:[%s7 + $0x60] sm:$0xff]
      %v6317 = vld [vmem:[%s7 + $0x68] sm:$0xff]
      %v6318 = vld [vmem:[%s7 + $0x70] sm:$0xff]
      %v6319 = vld [vmem:[%s7 + $0x78] sm:$0xff]
      %v6320 = vld [vmem:[#allocation2] sm:$0xff]
      %v6321 = vld [vmem:[#allocation2 + $0x8] sm:$0xff]
      %v6322 = vld [vmem:[#allocation2 + $0x10] sm:$0xff]
      %v6323 = vld [vmem:[#allocation2 + $0x18] sm:$0xff]
      %v6324 = vld [vmem:[#allocation2 + $0x20] sm:$0xff]
      %v6325 = vld [vmem:[#allocation2 + $0x28] sm:$0xff]
      %v6326 = vld [vmem:[#allocation2 + $0x30] sm:$0xff]
      %v6327 = vld [vmem:[#allocation2 + $0x38] sm:$0xff]
      %v6328 = vld [vmem:[#allocation2 + $0x40] sm:$0xff]
      %v6329 = vld [vmem:[#allocation2 + $0x48] sm:$0xff]
      %v6330 = vld [vmem:[#allocation2 + $0x50] sm:$0xff]
      %v6331 = vld [vmem:[#allocation2 + $0x58] sm:$0xff]
      %v6332 = vld [vmem:[#allocation2 + $0x60] sm:$0xff]
      %v6333 = vld [vmem:[#allocation2 + $0x68] sm:$0xff]
      %v6334 = vld [vmem:[#allocation2 + $0x70] sm:$0xff]
      %v6335 = vld [vmem:[#allocation2 + $0x78] sm:$0xff]
      %v6336 = vld [vmem:[#allocation2 + $0x80] sm:$0xff]
      %v6337 = vld [vmem:[#allocation2 + $0x88] sm:$0xff]
      %v6338 = vld [vmem:[#allocation2 + $0x90] sm:$0xff]
      %v6339 = vld [vmem:[#allocation2 + $0x98] sm:$0xff]
      %v6340 = vld [vmem:[#allocation2 + $0xa0] sm:$0xff]
      %v6341 = vld [vmem:[#allocation2 + $0xa8] sm:$0xff]
      %v6342 = vld [vmem:[#allocation2 + $0xb0] sm:$0xff]
      %v6343 = vld [vmem:[#allocation2 + $0xb8] sm:$0xff]
      %v6344 = vld [vmem:[#allocation2 + $0xc0] sm:$0xff]
      %v6345 = vld [vmem:[#allocation2 + $0xc8] sm:$0xff]
      %v6346 = vld [vmem:[#allocation2 + $0xd0] sm:$0xff]
      %v6347 = vld [vmem:[#allocation2 + $0xd8] sm:$0xff]
      %v6348 = vld [vmem:[#allocation2 + $0xe0] sm:$0xff]
      %v6349 = vld [vmem:[#allocation2 + $0xe8] sm:$0xff]
      %v6350 = vld [vmem:[#allocation2 + $0xf0] sm:$0xff]
      %v6351 = vld [vmem:[#allocation2 + $0xf8] sm:$0xff]
      %v6352 = vld [vmem:[#allocation2 + $0x100] sm:$0xff]
      %v6353 = vld [vmem:[#allocation2 + $0x108] sm:$0xff]
      %v6354 = vld [vmem:[#allocation2 + $0x110] sm:$0xff]
      %v6355 = vld [vmem:[#allocation2 + $0x118] sm:$0xff]
      %v6356 = vld [vmem:[#allocation2 + $0x120] sm:$0xff]
      %v6357 = vld [vmem:[#allocation2 + $0x128] sm:$0xff]
      %v6358 = vld [vmem:[#allocation2 + $0x130] sm:$0xff]
      %v6359 = vld [vmem:[#allocation2 + $0x138] sm:$0xff]
      %v6360 = vld [vmem:[#allocation2 + $0x140] sm:$0xff]
      %v6361 = vld [vmem:[#allocation2 + $0x148] sm:$0xff]
      %v6362 = vld [vmem:[#allocation2 + $0x150] sm:$0xff]
      %v6363 = vld [vmem:[#allocation2 + $0x158] sm:$0xff]
      %v6364 = vld [vmem:[#allocation2 + $0x160] sm:$0xff]
      %v6365 = vld [vmem:[#allocation2 + $0x168] sm:$0xff]
      %v6366 = vld [vmem:[#allocation2 + $0x170] sm:$0xff]
      %v6367 = vld [vmem:[#allocation2 + $0x178] sm:$0xff]
      %v6369 = vsel %vm1784, %v6305, 0
      %v6372 = vsel %vm1784, %v6307, 0
      %v6375 = vsel %vm1784, %v6309, 0
      %v6378 = vsel %vm1784, %v6311, 0
      %v6381 = vsel %vm1784, %v6313, 0
      %v6384 = vsel %vm1784, %v6315, 0
      %v6387 = vsel %vm1784, %v6317, 0
      %v6390 = vsel %vm1784, %v6319, 0
      %6392 = vmatpush.msra.mxu0 %v6350
      %6393 = vmatpush.msra.mxu0 %v6348
      %6394 = vmatpush.msra.mxu0 %v6346
      %6395 = vmatpush.msra.mxu0 %v6344
      %6396 = vmatpush.msra.mxu0 %v6342
      %6397 = vmatpush.msra.mxu0 %v6340
      %6398 = vmatpush.msra.mxu0 %v6338
      %6399 = vmatpush.msra.mxu0 %v6336
      %6400 = vmatpush.msra.mxu0 %v6334
      %6401 = vmatpush.msra.mxu0 %v6332
      %6402 = vmatpush.msra.mxu0 %v6330
      %6403 = vmatpush.msra.mxu0 %v6328
      %6404 = vmatpush.msra.mxu0 %v6326
      %6405 = vmatpush.msra.mxu0 %v6324
      %6406 = vmatpush.msra.mxu0 %v6322
      %6407 = vmatpush.msra.mxu0 %v6320
      %6408 = vmatmul.f32.gmra.mxu0 %v6304
      %v6409 = vpop.f32.mrf.mxu0
      %v6410 = vadd.f32 0.0, %v6409
      %6411 = vmatmul.f32.gmra.mxu0 %v6306
      %v6412 = vpop.f32.mrf.mxu0
      %v6413 = vadd.f32 0.0, %v6412
      %6414 = vmatmul.f32.gmra.mxu0 %v6308
      %v6415 = vpop.f32.mrf.mxu0
      %v6416 = vadd.f32 0.0, %v6415
      %6417 = vmatmul.f32.gmra.mxu0 %v6310
      %v6418 = vpop.f32.mrf.mxu0
      %v6419 = vadd.f32 0.0, %v6418
      %6420 = vmatmul.f32.gmra.mxu0 %v6312
      %v6421 = vpop.f32.mrf.mxu0
      %v6422 = vadd.f32 0.0, %v6421
      %6423 = vmatmul.f32.gmra.mxu0 %v6314
      %v6424 = vpop.f32.mrf.mxu0
      %v6425 = vadd.f32 0.0, %v6424
      %6426 = vmatmul.f32.gmra.mxu0 %v6316
      %v6427 = vpop.f32.mrf.mxu0
      %v6428 = vadd.f32 0.0, %v6427
      %6429 = vmatmul.f32.gmra.mxu0 %v6318
      %v6430 = vpop.f32.mrf.mxu0
      %v6431 = vadd.f32 0.0, %v6430
      %6432 = vdwg.mxu0
      %6433 = vmatpush.msra.mxu0 0.0
      %6434 = vmatpush.msra.mxu0 0.0
      %6435 = vmatpush.msra.mxu0 0.0
      %6436 = vmatpush.msra.mxu0 0.0
      %6437 = vmatpush.msra.mxu0 0.0
      %6438 = vmatpush.msra.mxu0 0.0
      %6439 = vmatpush.msra.mxu0 0.0
      %6440 = vmatpush.msra.mxu0 0.0
      %6441 = vmatpush.msra.mxu0 %v6366
      %6442 = vmatpush.msra.mxu0 %v6364
      %6443 = vmatpush.msra.mxu0 %v6362
      %6444 = vmatpush.msra.mxu0 %v6360
      %6445 = vmatpush.msra.mxu0 %v6358
      %6446 = vmatpush.msra.mxu0 %v6356
      %6447 = vmatpush.msra.mxu0 %v6354
      %6448 = vmatpush.msra.mxu0 %v6352
      %6449 = vmatmul.f32.gmra.mxu0 %v6369
      %v6450 = vpop.f32.mrf.mxu0
      %v6451 = vadd.f32 %v6410, %v6450
      %6452 = vmatmul.f32.gmra.mxu0 %v6372
      %v6453 = vpop.f32.mrf.mxu0
      %v6454 = vadd.f32 %v6413, %v6453
      %6455 = vmatmul.f32.gmra.mxu0 %v6375
      %v6456 = vpop.f32.mrf.mxu0
      %v6457 = vadd.f32 %v6416, %v6456
      %6458 = vmatmul.f32.gmra.mxu0 %v6378
      %v6459 = vpop.f32.mrf.mxu0
      %v6460 = vadd.f32 %v6419, %v6459
      %6461 = vmatmul.f32.gmra.mxu0 %v6381
      %v6462 = vpop.f32.mrf.mxu0
      %v6463 = vadd.f32 %v6422, %v6462
      %6464 = vmatmul.f32.gmra.mxu0 %v6384
      %v6465 = vpop.f32.mrf.mxu0
      %v6466 = vadd.f32 %v6425, %v6465
      %6467 = vmatmul.f32.gmra.mxu0 %v6387
      %v6468 = vpop.f32.mrf.mxu0
      %v6469 = vadd.f32 %v6428, %v6468
      %6470 = vmatmul.f32.gmra.mxu0 %v6390
      %v6471 = vpop.f32.mrf.mxu0
      %v6472 = vadd.f32 %v6431, %v6471
      %6473 = vdwg.mxu0
      %6474 = vmatpush.msra.mxu0 %v6351
      %6475 = vmatpush.msra.mxu0 %v6349
      %6476 = vmatpush.msra.mxu0 %v6347
      %6477 = vmatpush.msra.mxu0 %v6345
      %6478 = vmatpush.msra.mxu0 %v6343
      %6479 = vmatpush.msra.mxu0 %v6341
      %6480 = vmatpush.msra.mxu0 %v6339
      %6481 = vmatpush.msra.mxu0 %v6337
      %6482 = vmatpush.msra.mxu0 %v6335
      %6483 = vmatpush.msra.mxu0 %v6333
      %6484 = vmatpush.msra.mxu0 %v6331
      %6485 = vmatpush.msra.mxu0 %v6329
      %6486 = vmatpush.msra.mxu0 %v6327
      %6487 = vmatpush.msra.mxu0 %v6325
      %6488 = vmatpush.msra.mxu0 %v6323
      %6489 = vmatpush.msra.mxu0 %v6321
      %6490 = vmatmul.f32.gmra.mxu0 %v6304
      %v6491 = vpop.f32.mrf.mxu0
      %v6492 = vadd.f32 0.0, %v6491
      %6493 = vmatmul.f32.gmra.mxu0 %v6306
      %v6494 = vpop.f32.mrf.mxu0
      %v6495 = vadd.f32 0.0, %v6494
      %6496 = vmatmul.f32.gmra.mxu0 %v6308
      %v6497 = vpop.f32.mrf.mxu0
      %v6498 = vadd.f32 0.0, %v6497
      %6499 = vmatmul.f32.gmra.mxu0 %v6310
      %v6500 = vpop.f32.mrf.mxu0
      %v6501 = vadd.f32 0.0, %v6500
      %6502 = vmatmul.f32.gmra.mxu0 %v6312
      %v6503 = vpop.f32.mrf.mxu0
      %v6504 = vadd.f32 0.0, %v6503
      %6505 = vmatmul.f32.gmra.mxu0 %v6314
      %v6506 = vpop.f32.mrf.mxu0
      %v6507 = vadd.f32 0.0, %v6506
      %6508 = vmatmul.f32.gmra.mxu0 %v6316
      %v6509 = vpop.f32.mrf.mxu0
      %v6510 = vadd.f32 0.0, %v6509
      %6511 = vmatmul.f32.gmra.mxu0 %v6318
      %v6512 = vpop.f32.mrf.mxu0
      %v6513 = vadd.f32 0.0, %v6512
      %6514 = vdwg.mxu0
      %6515 = vmatpush.msra.mxu0 0.0
      %6516 = vmatpush.msra.mxu0 0.0
      %6517 = vmatpush.msra.mxu0 0.0
      %6518 = vmatpush.msra.mxu0 0.0
      %6519 = vmatpush.msra.mxu0 0.0
      %6520 = vmatpush.msra.mxu0 0.0
      %6521 = vmatpush.msra.mxu0 0.0
      %6522 = vmatpush.msra.mxu0 0.0
      %6523 = vmatpush.msra.mxu0 %v6367
      %6524 = vmatpush.msra.mxu0 %v6365
      %6525 = vmatpush.msra.mxu0 %v6363
      %6526 = vmatpush.msra.mxu0 %v6361
      %6527 = vmatpush.msra.mxu0 %v6359
      %6528 = vmatpush.msra.mxu0 %v6357
      %6529 = vmatpush.msra.mxu0 %v6355
      %6530 = vmatpush.msra.mxu0 %v6353
      %6531 = vmatmul.f32.gmra.mxu0 %v6369
      %v6532 = vpop.f32.mrf.mxu0
      %v6533 = vadd.f32 %v6492, %v6532
      %6534 = vmatmul.f32.gmra.mxu0 %v6372
      %v6535 = vpop.f32.mrf.mxu0
      %v6536 = vadd.f32 %v6495, %v6535
      %6537 = vmatmul.f32.gmra.mxu0 %v6375
      %v6538 = vpop.f32.mrf.mxu0
      %v6539 = vadd.f32 %v6498, %v6538
      %6540 = vmatmul.f32.gmra.mxu0 %v6378
      %v6541 = vpop.f32.mrf.mxu0
      %v6542 = vadd.f32 %v6501, %v6541
      %6543 = vmatmul.f32.gmra.mxu0 %v6381
      %v6544 = vpop.f32.mrf.mxu0
      %v6545 = vadd.f32 %v6504, %v6544
      %6546 = vmatmul.f32.gmra.mxu0 %v6384
      %v6547 = vpop.f32.mrf.mxu0
      %v6548 = vadd.f32 %v6507, %v6547
      %6549 = vmatmul.f32.gmra.mxu0 %v6387
      %v6550 = vpop.f32.mrf.mxu0
      %v6551 = vadd.f32 %v6510, %v6550
      %6552 = vmatmul.f32.gmra.mxu0 %v6390
      %v6553 = vpop.f32.mrf.mxu0
      %v6554 = vadd.f32 %v6513, %v6553
      %6555 = vdwg.mxu0
      %v6556 = vadd.f32 %v6451, %v6533
      %6557 = vadd.xlane.f32.xlu0 %v6556
      %v6558 = vpop.xlane.xlu0 %6557
      %v6559 = vadd.f32 %v6454, %v6536
      %6560 = vadd.xlane.f32.xlu0 %v6559
      %v6561 = vpop.xlane.xlu0 %6560
      %v6562 = vadd.f32 %v6457, %v6539
      %6563 = vadd.xlane.f32.xlu0 %v6562
      %v6564 = vpop.xlane.xlu0 %6563
      %v6565 = vadd.f32 %v6460, %v6542
      %6566 = vadd.xlane.f32.xlu0 %v6565
      %v6567 = vpop.xlane.xlu0 %6566
      %v6568 = vadd.f32 %v6463, %v6545
      %6569 = vadd.xlane.f32.xlu0 %v6568
      %v6570 = vpop.xlane.xlu0 %6569
      %v6571 = vadd.f32 %v6466, %v6548
      %6572 = vadd.xlane.f32.xlu0 %v6571
      %v6573 = vpop.xlane.xlu0 %6572
      %v6574 = vadd.f32 %v6469, %v6551
      %6575 = vadd.xlane.f32.xlu0 %v6574
      %v6576 = vpop.xlane.xlu0 %6575
      %v6577 = vadd.f32 %v6472, %v6554
      %6578 = vadd.xlane.f32.xlu0 %v6577
      %v6579 = vpop.xlane.xlu0 %6578
      %v6580 = vmul.f32 %v6558, %v359
      %v6581 = vmul.f32 %v6561, %v359
      %v6582 = vmul.f32 %v6564, %v359
      %v6583 = vmul.f32 %v6567, %v359
      %v6584 = vmul.f32 %v6570, %v359
      %v6585 = vmul.f32 %v6573, %v359
      %v6586 = vmul.f32 %v6576, %v359
      %v6587 = vmul.f32 %v6579, %v359
      %v6588 = vsub.f32 %v6451, %v6580
      %v6589 = vsub.f32 %v6533, %v6580
      %v6590 = vsub.f32 %v6454, %v6581
      %v6591 = vsub.f32 %v6536, %v6581
      %v6592 = vsub.f32 %v6457, %v6582
      %v6593 = vsub.f32 %v6539, %v6582
      %v6594 = vsub.f32 %v6460, %v6583
      %v6595 = vsub.f32 %v6542, %v6583
      %v6596 = vsub.f32 %v6463, %v6584
      %v6597 = vsub.f32 %v6545, %v6584
      %v6598 = vsub.f32 %v6466, %v6585
      %v6599 = vsub.f32 %v6548, %v6585
      %v6600 = vsub.f32 %v6469, %v6586
      %v6601 = vsub.f32 %v6551, %v6586
      %v6602 = vsub.f32 %v6472, %v6587
      %v6603 = vsub.f32 %v6554, %v6587
      %v6604 = vmul.f32 %v6588, %v6588
      %v6605 = vmul.f32 %v6589, %v6589
      %v6606 = vmul.f32 %v6590, %v6590
      %v6607 = vmul.f32 %v6591, %v6591
      %v6608 = vmul.f32 %v6592, %v6592
      %v6609 = vmul.f32 %v6593, %v6593
      %v6610 = vmul.f32 %v6594, %v6594
      %v6611 = vmul.f32 %v6595, %v6595
      %v6612 = vmul.f32 %v6596, %v6596
      %v6613 = vmul.f32 %v6597, %v6597
      %v6614 = vmul.f32 %v6598, %v6598
      %v6615 = vmul.f32 %v6599, %v6599
      %v6616 = vmul.f32 %v6600, %v6600
      %v6617 = vmul.f32 %v6601, %v6601
      %v6618 = vmul.f32 %v6602, %v6602
      %v6619 = vmul.f32 %v6603, %v6603
      %v6620 = vadd.f32 %v6604, %v6605
      %6621 = vadd.xlane.f32.xlu0 %v6620
      %v6622 = vpop.xlane.xlu0 %6621
      %v6623 = vadd.f32 %v6606, %v6607
      %6624 = vadd.xlane.f32.xlu0 %v6623
      %v6625 = vpop.xlane.xlu0 %6624
      %v6626 = vadd.f32 %v6608, %v6609
      %6627 = vadd.xlane.f32.xlu0 %v6626
      %v6628 = vpop.xlane.xlu0 %6627
      %v6629 = vadd.f32 %v6610, %v6611
      %6630 = vadd.xlane.f32.xlu0 %v6629
      %v6631 = vpop.xlane.xlu0 %6630
      %v6632 = vadd.f32 %v6612, %v6613
      %6633 = vadd.xlane.f32.xlu0 %v6632
      %v6634 = vpop.xlane.xlu0 %6633
      %v6635 = vadd.f32 %v6614, %v6615
      %6636 = vadd.xlane.f32.xlu0 %v6635
      %v6637 = vpop.xlane.xlu0 %6636
      %v6638 = vadd.f32 %v6616, %v6617
      %6639 = vadd.xlane.f32.xlu0 %v6638
      %v6640 = vpop.xlane.xlu0 %6639
      %v6641 = vadd.f32 %v6618, %v6619
      %6642 = vadd.xlane.f32.xlu0 %v6641
      %v6643 = vpop.xlane.xlu0 %6642
      %v6644 = vmul.f32 %v6622, %v359
      %v6645 = vmul.f32 %v6625, %v359
      %v6646 = vmul.f32 %v6628, %v359
      %v6647 = vmul.f32 %v6631, %v359
      %v6648 = vmul.f32 %v6634, %v359
      %v6649 = vmul.f32 %v6637, %v359
      %v6650 = vmul.f32 %v6640, %v359
      %v6651 = vmul.f32 %v6643, %v359
      %v6652 = vadd.f32 %v6644, 1e-05
      %v6653 = vadd.f32 %v6645, 1e-05
      %v6654 = vadd.f32 %v6646, 1e-05
      %v6655 = vadd.f32 %v6647, 1e-05
      %v6656 = vadd.f32 %v6648, 1e-05
      %v6657 = vadd.f32 %v6649, 1e-05
      %v6658 = vadd.f32 %v6650, 1e-05
      %v6659 = vadd.f32 %v6651, 1e-05
      %v6660 = vrsqrt.pop %v6652
      %v6661 = vmul.f32 %v6660, %v6652
      %v6662 = vmul.f32 %v6661, %v6660
      %v6663 = vmul.f32 0.5, %v6662
      %v6664 = vsub.f32 1.5, %v6663
      %v6665 = vmul.f32 %v6660, %v6664
      %vm6666 = vweird.f32 %v6652
      %vm6667 = vweird.f32 %v6660
      %vm6668 = vmor %vm6666, %vm6667
      %v6669 = vsel %vm6668, %v6660, %v6665
      %v6670 = vrsqrt.pop %v6653
      %v6671 = vmul.f32 %v6670, %v6653
      %v6672 = vmul.f32 %v6671, %v6670
      %v6673 = vmul.f32 0.5, %v6672
      %v6674 = vsub.f32 1.5, %v6673
      %v6675 = vmul.f32 %v6670, %v6674
      %vm6676 = vweird.f32 %v6653
      %vm6677 = vweird.f32 %v6670
      %vm6678 = vmor %vm6676, %vm6677
      %v6679 = vsel %vm6678, %v6670, %v6675
      %v6680 = vrsqrt.pop %v6654
      %v6681 = vmul.f32 %v6680, %v6654
      %v6682 = vmul.f32 %v6681, %v6680
      %v6683 = vmul.f32 0.5, %v6682
      %v6684 = vsub.f32 1.5, %v6683
      %v6685 = vmul.f32 %v6680, %v6684
      %vm6686 = vweird.f32 %v6654
      %vm6687 = vweird.f32 %v6680
      %vm6688 = vmor %vm6686, %vm6687
      %v6689 = vsel %vm6688, %v6680, %v6685
      %v6690 = vrsqrt.pop %v6655
      %v6691 = vmul.f32 %v6690, %v6655
      %v6692 = vmul.f32 %v6691, %v6690
      %v6693 = vmul.f32 0.5, %v6692
      %v6694 = vsub.f32 1.5, %v6693
      %v6695 = vmul.f32 %v6690, %v6694
      %vm6696 = vweird.f32 %v6655
      %vm6697 = vweird.f32 %v6690
      %vm6698 = vmor %vm6696, %vm6697
      %v6699 = vsel %vm6698, %v6690, %v6695
      %v6700 = vrsqrt.pop %v6656
      %v6701 = vmul.f32 %v6700, %v6656
      %v6702 = vmul.f32 %v6701, %v6700
      %v6703 = vmul.f32 0.5, %v6702
      %v6704 = vsub.f32 1.5, %v6703
      %v6705 = vmul.f32 %v6700, %v6704
      %vm6706 = vweird.f32 %v6656
      %vm6707 = vweird.f32 %v6700
      %vm6708 = vmor %vm6706, %vm6707
      %v6709 = vsel %vm6708, %v6700, %v6705
      %v6710 = vrsqrt.pop %v6657
      %v6711 = vmul.f32 %v6710, %v6657
      %v6712 = vmul.f32 %v6711, %v6710
      %v6713 = vmul.f32 0.5, %v6712
      %v6714 = vsub.f32 1.5, %v6713
      %v6715 = vmul.f32 %v6710, %v6714
      %vm6716 = vweird.f32 %v6657
      %vm6717 = vweird.f32 %v6710
      %vm6718 = vmor %vm6716, %vm6717
      %v6719 = vsel %vm6718, %v6710, %v6715
      %v6720 = vrsqrt.pop %v6658
      %v6721 = vmul.f32 %v6720, %v6658
      %v6722 = vmul.f32 %v6721, %v6720
      %v6723 = vmul.f32 0.5, %v6722
      %v6724 = vsub.f32 1.5, %v6723
      %v6725 = vmul.f32 %v6720, %v6724
      %vm6726 = vweird.f32 %v6658
      %vm6727 = vweird.f32 %v6720
      %vm6728 = vmor %vm6726, %vm6727
      %v6729 = vsel %vm6728, %v6720, %v6725
      %v6730 = vrsqrt.pop %v6659
      %v6731 = vmul.f32 %v6730, %v6659
      %v6732 = vmul.f32 %v6731, %v6730
      %v6733 = vmul.f32 0.5, %v6732
      %v6734 = vsub.f32 1.5, %v6733
      %v6735 = vmul.f32 %v6730, %v6734
      %vm6736 = vweird.f32 %v6659
      %vm6737 = vweird.f32 %v6730
      %vm6738 = vmor %vm6736, %vm6737
      %v6739 = vsel %vm6738, %v6730, %v6735
      %v6740 = vmul.f32 %v6588, %v6669
      %v6741 = vmul.f32 %v6589, %v6669
      %v6742 = vmul.f32 %v6590, %v6679
      %v6743 = vmul.f32 %v6591, %v6679
      %v6744 = vmul.f32 %v6592, %v6689
      %v6745 = vmul.f32 %v6593, %v6689
      %v6746 = vmul.f32 %v6594, %v6699
      %v6747 = vmul.f32 %v6595, %v6699
      %v6748 = vmul.f32 %v6596, %v6709
      %v6749 = vmul.f32 %v6597, %v6709
      %v6750 = vmul.f32 %v6598, %v6719
      %v6751 = vmul.f32 %v6599, %v6719
      %v6752 = vmul.f32 %v6600, %v6729
      %v6753 = vmul.f32 %v6601, %v6729
      %v6754 = vmul.f32 %v6602, %v6739
      %v6755 = vmul.f32 %v6603, %v6739
      %v6756 = vmax.f32 %v6740, 0.0
      %v6757 = vmax.f32 %v6741, 0.0
      %v6758 = vmax.f32 %v6742, 0.0
      %v6759 = vmax.f32 %v6743, 0.0
      %v6760 = vmax.f32 %v6744, 0.0
      %v6761 = vmax.f32 %v6745, 0.0
      %v6762 = vmax.f32 %v6746, 0.0
      %v6763 = vmax.f32 %v6747, 0.0
      %v6764 = vmax.f32 %v6748, 0.0
      %v6765 = vmax.f32 %v6749, 0.0
      %v6766 = vmax.f32 %v6750, 0.0
      %v6767 = vmax.f32 %v6751, 0.0
      %v6768 = vmax.f32 %v6752, 0.0
      %v6769 = vmax.f32 %v6753, 0.0
      %v6770 = vmax.f32 %v6754, 0.0
      %v6771 = vmax.f32 %v6755, 0.0
      %6772 = vrot.lane.b32.xlu0 %v6756, 17
      %v6773 = vpop.permute.xlu0 %6772
      %6774 = vrot.lane.b32.xlu0 %v6758, 17
      %v6775 = vpop.permute.xlu0 %6774
      %6776 = vrot.lane.b32.xlu0 %v6760, 17
      %v6777 = vpop.permute.xlu0 %6776
      %6778 = vrot.lane.b32.xlu0 %v6762, 17
      %v6779 = vpop.permute.xlu0 %6778
      %6780 = vrot.lane.b32.xlu0 %v6764, 17
      %v6781 = vpop.permute.xlu0 %6780
      %6782 = vrot.lane.b32.xlu0 %v6766, 17
      %v6783 = vpop.permute.xlu0 %6782
      %6784 = vrot.lane.b32.xlu0 %v6768, 17
      %v6785 = vpop.permute.xlu0 %6784
      %6786 = vrot.lane.b32.xlu0 %v6770, 17
      %v6787 = vpop.permute.xlu0 %6786
      %6788 = vrot.lane.b32.xlu0 %v6757, 17
      %v6789 = vpop.permute.xlu0 %6788
      %6790 = vrot.lane.b32.xlu0 %v6759, 17
      %v6791 = vpop.permute.xlu0 %6790
      %6792 = vrot.lane.b32.xlu0 %v6761, 17
      %v6793 = vpop.permute.xlu0 %6792
      %6794 = vrot.lane.b32.xlu0 %v6763, 17
      %v6795 = vpop.permute.xlu0 %6794
      %6796 = vrot.lane.b32.xlu0 %v6765, 17
      %v6797 = vpop.permute.xlu0 %6796
      %6798 = vrot.lane.b32.xlu0 %v6767, 17
      %v6799 = vpop.permute.xlu0 %6798
      %6800 = vrot.lane.b32.xlu0 %v6769, 17
      %v6801 = vpop.permute.xlu0 %6800
      %6802 = vrot.lane.b32.xlu0 %v6771, 17
      %v6803 = vpop.permute.xlu0 %6802
      %v6804 = vsel %vm482, %v6773, %v6789
      %v6805 = vsel %vm482, %v6775, %v6791
      %v6806 = vsel %vm482, %v6777, %v6793
      %v6807 = vsel %vm482, %v6779, %v6795
      %v6808 = vsel %vm482, %v6781, %v6797
      %v6809 = vsel %vm482, %v6783, %v6799
      %v6810 = vsel %vm482, %v6785, %v6801
      %v6811 = vsel %vm482, %v6787, %v6803
      %v6812 = vsel %vm482, %v6789, %v6773
      %v6813 = vsel %vm482, %v6791, %v6775
      %v6814 = vsel %vm482, %v6793, %v6777
      %v6815 = vsel %vm482, %v6795, %v6779
      %v6816 = vsel %vm482, %v6797, %v6781
      %v6817 = vsel %vm482, %v6799, %v6783
      %v6818 = vsel %vm482, %v6801, %v6785
      %v6819 = vsel %vm482, %v6803, %v6787
      %v6820 = vld [vmem:[%s1] ss:$8 sm:$0x3]
      %v6822 = vperm.slane %v6820, 0
      %v6823 = vperm.slane %v6820, 1
      %v6826 = vmul.f32 %v6812, %v6822
      %v6827 = vmul.f32 %v6804, %v6823
      %v6828 = vmul.f32 %v6813, %v6822
      %v6829 = vmul.f32 %v6805, %v6823
      %v6830 = vmul.f32 %v6814, %v6822
      %v6831 = vmul.f32 %v6806, %v6823
      %v6832 = vmul.f32 %v6815, %v6822
      %v6833 = vmul.f32 %v6807, %v6823
      %v6834 = vmul.f32 %v6816, %v6822
      %v6835 = vmul.f32 %v6808, %v6823
      %v6836 = vmul.f32 %v6817, %v6822
      %v6837 = vmul.f32 %v6809, %v6823
      %v6838 = vmul.f32 %v6818, %v6822
      %v6839 = vmul.f32 %v6810, %v6823
      %v6840 = vmul.f32 %v6819, %v6822
      %v6841 = vmul.f32 %v6811, %v6823
      %6842 = vst [vmem:[#allocation3] sm:$0xff] %v6826
      %6843 = vst [vmem:[#allocation3 + $0x8] sm:$0xff] %v6827
      %6844 = vst [vmem:[#allocation3 + $0x10] sm:$0xff] %v6828
      %6845 = vst [vmem:[#allocation3 + $0x18] sm:$0xff] %v6829
      %6846 = vst [vmem:[#allocation3 + $0x20] sm:$0xff] %v6830
      %6847 = vst [vmem:[#allocation3 + $0x28] sm:$0xff] %v6831
      %6848 = vst [vmem:[#allocation3 + $0x30] sm:$0xff] %v6832
      %6849 = vst [vmem:[#allocation3 + $0x38] sm:$0xff] %v6833
      %6850 = vst [vmem:[#allocation3 + $0x40] sm:$0xff] %v6834
      %6851 = vst [vmem:[#allocation3 + $0x48] sm:$0xff] %v6835
      %6852 = vst [vmem:[#allocation3 + $0x50] sm:$0xff] %v6836
      %6853 = vst [vmem:[#allocation3 + $0x58] sm:$0xff] %v6837
      %6854 = vst [vmem:[#allocation3 + $0x60] sm:$0xff] %v6838
      %6855 = vst [vmem:[#allocation3 + $0x68] sm:$0xff] %v6839
      %6856 = vst [vmem:[#allocation3 + $0x70] sm:$0xff] %v6840
      %6857 = vst [vmem:[#allocation3 + $0x78] sm:$0xff] %v6841
      %6858 = vrot.lane.b32.xlu0 %v6756, 16
      %v6859 = vpop.permute.xlu0 %6858
      %6860 = vrot.lane.b32.xlu0 %v6758, 16
      %v6861 = vpop.permute.xlu0 %6860
      %6862 = vrot.lane.b32.xlu0 %v6760, 16
      %v6863 = vpop.permute.xlu0 %6862
      %6864 = vrot.lane.b32.xlu0 %v6762, 16
      %v6865 = vpop.permute.xlu0 %6864
      %6866 = vrot.lane.b32.xlu0 %v6764, 16
      %v6867 = vpop.permute.xlu0 %6866
      %6868 = vrot.lane.b32.xlu0 %v6766, 16
      %v6869 = vpop.permute.xlu0 %6868
      %6870 = vrot.lane.b32.xlu0 %v6768, 16
      %v6871 = vpop.permute.xlu0 %6870
      %6872 = vrot.lane.b32.xlu0 %v6770, 16
      %v6873 = vpop.permute.xlu0 %6872
      %6874 = vrot.lane.b32.xlu0 %v6757, 16
      %v6875 = vpop.permute.xlu0 %6874
      %6876 = vrot.lane.b32.xlu0 %v6759, 16
      %v6877 = vpop.permute.xlu0 %6876
      %6878 = vrot.lane.b32.xlu0 %v6761, 16
      %v6879 = vpop.permute.xlu0 %6878
      %6880 = vrot.lane.b32.xlu0 %v6763, 16
      %v6881 = vpop.permute.xlu0 %6880
      %6882 = vrot.lane.b32.xlu0 %v6765, 16
      %v6883 = vpop.permute.xlu0 %6882
      %6884 = vrot.lane.b32.xlu0 %v6767, 16
      %v6885 = vpop.permute.xlu0 %6884
      %6886 = vrot.lane.b32.xlu0 %v6769, 16
      %v6887 = vpop.permute.xlu0 %6886
      %6888 = vrot.lane.b32.xlu0 %v6771, 16
      %v6889 = vpop.permute.xlu0 %6888
      %v6890 = vsel %vm529, %v6859, %v6875
      %v6891 = vsel %vm529, %v6861, %v6877
      %v6892 = vsel %vm529, %v6863, %v6879
      %v6893 = vsel %vm529, %v6865, %v6881
      %v6894 = vsel %vm529, %v6867, %v6883
      %v6895 = vsel %vm529, %v6869, %v6885
      %v6896 = vsel %vm529, %v6871, %v6887
      %v6897 = vsel %vm529, %v6873, %v6889
      %v6898 = vsel %vm529, %v6875, %v6859
      %v6899 = vsel %vm529, %v6877, %v6861
      %v6900 = vsel %vm529, %v6879, %v6863
      %v6901 = vsel %vm529, %v6881, %v6865
      %v6902 = vsel %vm529, %v6883, %v6867
      %v6903 = vsel %vm529, %v6885, %v6869
      %v6904 = vsel %vm529, %v6887, %v6871
      %v6905 = vsel %vm529, %v6889, %v6873
      %v6906 = vld [vmem:[%s538] ss:$8 sm:$0x3]
      %v6908 = vperm.slane %v6906, 0
      %v6909 = vperm.slane %v6906, 1
      %v6912 = vmul.f32 %v6898, %v6908
      %v6913 = vmul.f32 %v6890, %v6909
      %v6914 = vmul.f32 %v6899, %v6908
      %v6915 = vmul.f32 %v6891, %v6909
      %v6916 = vmul.f32 %v6900, %v6908
      %v6917 = vmul.f32 %v6892, %v6909
      %v6918 = vmul.f32 %v6901, %v6908
      %v6919 = vmul.f32 %v6893, %v6909
      %v6920 = vmul.f32 %v6902, %v6908
      %v6921 = vmul.f32 %v6894, %v6909
      %v6922 = vmul.f32 %v6903, %v6908
      %v6923 = vmul.f32 %v6895, %v6909
      %v6924 = vmul.f32 %v6904, %v6908
      %v6925 = vmul.f32 %v6896, %v6909
      %v6926 = vmul.f32 %v6905, %v6908
      %v6927 = vmul.f32 %v6897, %v6909
      %6928 = vst [vmem:[#allocation3 + $0x80] sm:$0xff] %v6912
      %6929 = vst [vmem:[#allocation3 + $0x88] sm:$0xff] %v6913
      %6930 = vst [vmem:[#allocation3 + $0x90] sm:$0xff] %v6914
      %6931 = vst [vmem:[#allocation3 + $0x98] sm:$0xff] %v6915
      %6932 = vst [vmem:[#allocation3 + $0xa0] sm:$0xff] %v6916
      %6933 = vst [vmem:[#allocation3 + $0xa8] sm:$0xff] %v6917
      %6934 = vst [vmem:[#allocation3 + $0xb0] sm:$0xff] %v6918
      %6935 = vst [vmem:[#allocation3 + $0xb8] sm:$0xff] %v6919
      %6936 = vst [vmem:[#allocation3 + $0xc0] sm:$0xff] %v6920
      %6937 = vst [vmem:[#allocation3 + $0xc8] sm:$0xff] %v6921
      %6938 = vst [vmem:[#allocation3 + $0xd0] sm:$0xff] %v6922
      %6939 = vst [vmem:[#allocation3 + $0xd8] sm:$0xff] %v6923
      %6940 = vst [vmem:[#allocation3 + $0xe0] sm:$0xff] %v6924
      %6941 = vst [vmem:[#allocation3 + $0xe8] sm:$0xff] %v6925
      %6942 = vst [vmem:[#allocation3 + $0xf0] sm:$0xff] %v6926
      %6943 = vst [vmem:[#allocation3 + $0xf8] sm:$0xff] %v6927
      %6944 = vrot.lane.b32.xlu0 %v6756, 15
      %v6945 = vpop.permute.xlu0 %6944
      %6946 = vrot.lane.b32.xlu0 %v6758, 15
      %v6947 = vpop.permute.xlu0 %6946
      %6948 = vrot.lane.b32.xlu0 %v6760, 15
      %v6949 = vpop.permute.xlu0 %6948
      %6950 = vrot.lane.b32.xlu0 %v6762, 15
      %v6951 = vpop.permute.xlu0 %6950
      %6952 = vrot.lane.b32.xlu0 %v6764, 15
      %v6953 = vpop.permute.xlu0 %6952
      %6954 = vrot.lane.b32.xlu0 %v6766, 15
      %v6955 = vpop.permute.xlu0 %6954
      %6956 = vrot.lane.b32.xlu0 %v6768, 15
      %v6957 = vpop.permute.xlu0 %6956
      %6958 = vrot.lane.b32.xlu0 %v6770, 15
      %v6959 = vpop.permute.xlu0 %6958
      %6960 = vrot.lane.b32.xlu0 %v6757, 15
      %v6961 = vpop.permute.xlu0 %6960
      %6962 = vrot.lane.b32.xlu0 %v6759, 15
      %v6963 = vpop.permute.xlu0 %6962
      %6964 = vrot.lane.b32.xlu0 %v6761, 15
      %v6965 = vpop.permute.xlu0 %6964
      %6966 = vrot.lane.b32.xlu0 %v6763, 15
      %v6967 = vpop.permute.xlu0 %6966
      %6968 = vrot.lane.b32.xlu0 %v6765, 15
      %v6969 = vpop.permute.xlu0 %6968
      %6970 = vrot.lane.b32.xlu0 %v6767, 15
      %v6971 = vpop.permute.xlu0 %6970
      %6972 = vrot.lane.b32.xlu0 %v6769, 15
      %v6973 = vpop.permute.xlu0 %6972
      %6974 = vrot.lane.b32.xlu0 %v6771, 15
      %v6975 = vpop.permute.xlu0 %6974
      %v6976 = vsel %vm577, %v6945, %v6961
      %v6977 = vsel %vm577, %v6947, %v6963
      %v6978 = vsel %vm577, %v6949, %v6965
      %v6979 = vsel %vm577, %v6951, %v6967
      %v6980 = vsel %vm577, %v6953, %v6969
      %v6981 = vsel %vm577, %v6955, %v6971
      %v6982 = vsel %vm577, %v6957, %v6973
      %v6983 = vsel %vm577, %v6959, %v6975
      %v6984 = vsel %vm577, %v6961, %v6945
      %v6985 = vsel %vm577, %v6963, %v6947
      %v6986 = vsel %vm577, %v6965, %v6949
      %v6987 = vsel %vm577, %v6967, %v6951
      %v6988 = vsel %vm577, %v6969, %v6953
      %v6989 = vsel %vm577, %v6971, %v6955
      %v6990 = vsel %vm577, %v6973, %v6957
      %v6991 = vsel %vm577, %v6975, %v6959
      %v6992 = vld [vmem:[%s586] ss:$8 sm:$0x3]
      %v6994 = vperm.slane %v6992, 0
      %v6995 = vperm.slane %v6992, 1
      %v6998 = vmul.f32 %v6984, %v6994
      %v6999 = vmul.f32 %v6976, %v6995
      %v7000 = vmul.f32 %v6985, %v6994
      %v7001 = vmul.f32 %v6977, %v6995
      %v7002 = vmul.f32 %v6986, %v6994
      %v7003 = vmul.f32 %v6978, %v6995
      %v7004 = vmul.f32 %v6987, %v6994
      %v7005 = vmul.f32 %v6979, %v6995
      %v7006 = vmul.f32 %v6988, %v6994
      %v7007 = vmul.f32 %v6980, %v6995
      %v7008 = vmul.f32 %v6989, %v6994
      %v7009 = vmul.f32 %v6981, %v6995
      %v7010 = vmul.f32 %v6990, %v6994
      %v7011 = vmul.f32 %v6982, %v6995
      %v7012 = vmul.f32 %v6991, %v6994
      %v7013 = vmul.f32 %v6983, %v6995
      %7014 = vst [vmem:[#allocation3 + $0x100] sm:$0xff] %v6998
      %7015 = vst [vmem:[#allocation3 + $0x108] sm:$0xff] %v6999
      %7016 = vst [vmem:[#allocation3 + $0x110] sm:$0xff] %v7000
      %7017 = vst [vmem:[#allocation3 + $0x118] sm:$0xff] %v7001
      %7018 = vst [vmem:[#allocation3 + $0x120] sm:$0xff] %v7002
      %7019 = vst [vmem:[#allocation3 + $0x128] sm:$0xff] %v7003
      %7020 = vst [vmem:[#allocation3 + $0x130] sm:$0xff] %v7004
      %7021 = vst [vmem:[#allocation3 + $0x138] sm:$0xff] %v7005
      %7022 = vst [vmem:[#allocation3 + $0x140] sm:$0xff] %v7006
      %7023 = vst [vmem:[#allocation3 + $0x148] sm:$0xff] %v7007
      %7024 = vst [vmem:[#allocation3 + $0x150] sm:$0xff] %v7008
      %7025 = vst [vmem:[#allocation3 + $0x158] sm:$0xff] %v7009
      %7026 = vst [vmem:[#allocation3 + $0x160] sm:$0xff] %v7010
      %7027 = vst [vmem:[#allocation3 + $0x168] sm:$0xff] %v7011
      %7028 = vst [vmem:[#allocation3 + $0x170] sm:$0xff] %v7012
      %7029 = vst [vmem:[#allocation3 + $0x178] sm:$0xff] %v7013
      %7030 = vrot.lane.b32.xlu0 %v6756, 1
      %v7031 = vpop.permute.xlu0 %7030
      %7032 = vrot.lane.b32.xlu0 %v6758, 1
      %v7033 = vpop.permute.xlu0 %7032
      %7034 = vrot.lane.b32.xlu0 %v6760, 1
      %v7035 = vpop.permute.xlu0 %7034
      %7036 = vrot.lane.b32.xlu0 %v6762, 1
      %v7037 = vpop.permute.xlu0 %7036
      %7038 = vrot.lane.b32.xlu0 %v6764, 1
      %v7039 = vpop.permute.xlu0 %7038
      %7040 = vrot.lane.b32.xlu0 %v6766, 1
      %v7041 = vpop.permute.xlu0 %7040
      %7042 = vrot.lane.b32.xlu0 %v6768, 1
      %v7043 = vpop.permute.xlu0 %7042
      %7044 = vrot.lane.b32.xlu0 %v6770, 1
      %v7045 = vpop.permute.xlu0 %7044
      %7046 = vrot.lane.b32.xlu0 %v6757, 1
      %v7047 = vpop.permute.xlu0 %7046
      %7048 = vrot.lane.b32.xlu0 %v6759, 1
      %v7049 = vpop.permute.xlu0 %7048
      %7050 = vrot.lane.b32.xlu0 %v6761, 1
      %v7051 = vpop.permute.xlu0 %7050
      %7052 = vrot.lane.b32.xlu0 %v6763, 1
      %v7053 = vpop.permute.xlu0 %7052
      %7054 = vrot.lane.b32.xlu0 %v6765, 1
      %v7055 = vpop.permute.xlu0 %7054
      %7056 = vrot.lane.b32.xlu0 %v6767, 1
      %v7057 = vpop.permute.xlu0 %7056
      %7058 = vrot.lane.b32.xlu0 %v6769, 1
      %v7059 = vpop.permute.xlu0 %7058
      %7060 = vrot.lane.b32.xlu0 %v6771, 1
      %v7061 = vpop.permute.xlu0 %7060
      %v7062 = vsel %vm625, %v7031, %v7047
      %v7063 = vsel %vm625, %v7033, %v7049
      %v7064 = vsel %vm625, %v7035, %v7051
      %v7065 = vsel %vm625, %v7037, %v7053
      %v7066 = vsel %vm625, %v7039, %v7055
      %v7067 = vsel %vm625, %v7041, %v7057
      %v7068 = vsel %vm625, %v7043, %v7059
      %v7069 = vsel %vm625, %v7045, %v7061
      %v7070 = vsel %vm625, %v7047, %v7031
      %v7071 = vsel %vm625, %v7049, %v7033
      %v7072 = vsel %vm625, %v7051, %v7035
      %v7073 = vsel %vm625, %v7053, %v7037
      %v7074 = vsel %vm625, %v7055, %v7039
      %v7075 = vsel %vm625, %v7057, %v7041
      %v7076 = vsel %vm625, %v7059, %v7043
      %v7077 = vsel %vm625, %v7061, %v7045
      %v7078 = vld [vmem:[%s634] ss:$8 sm:$0x3]
      %v7080 = vperm.slane %v7078, 0
      %v7081 = vperm.slane %v7078, 1
      %v7084 = vmul.f32 %v7070, %v7080
      %v7085 = vmul.f32 %v7062, %v7081
      %v7086 = vmul.f32 %v7071, %v7080
      %v7087 = vmul.f32 %v7063, %v7081
      %v7088 = vmul.f32 %v7072, %v7080
      %v7089 = vmul.f32 %v7064, %v7081
      %v7090 = vmul.f32 %v7073, %v7080
      %v7091 = vmul.f32 %v7065, %v7081
      %v7092 = vmul.f32 %v7074, %v7080
      %v7093 = vmul.f32 %v7066, %v7081
      %v7094 = vmul.f32 %v7075, %v7080
      %v7095 = vmul.f32 %v7067, %v7081
      %v7096 = vmul.f32 %v7076, %v7080
      %v7097 = vmul.f32 %v7068, %v7081
      %v7098 = vmul.f32 %v7077, %v7080
      %v7099 = vmul.f32 %v7069, %v7081
      %7100 = vst [vmem:[#allocation3 + $0x180] sm:$0xff] %v7084
      %7101 = vst [vmem:[#allocation3 + $0x188] sm:$0xff] %v7085
      %7102 = vst [vmem:[#allocation3 + $0x190] sm:$0xff] %v7086
      %7103 = vst [vmem:[#allocation3 + $0x198] sm:$0xff] %v7087
      %7104 = vst [vmem:[#allocation3 + $0x1a0] sm:$0xff] %v7088
      %7105 = vst [vmem:[#allocation3 + $0x1a8] sm:$0xff] %v7089
      %7106 = vst [vmem:[#allocation3 + $0x1b0] sm:$0xff] %v7090
      %7107 = vst [vmem:[#allocation3 + $0x1b8] sm:$0xff] %v7091
      %7108 = vst [vmem:[#allocation3 + $0x1c0] sm:$0xff] %v7092
      %7109 = vst [vmem:[#allocation3 + $0x1c8] sm:$0xff] %v7093
      %7110 = vst [vmem:[#allocation3 + $0x1d0] sm:$0xff] %v7094
      %7111 = vst [vmem:[#allocation3 + $0x1d8] sm:$0xff] %v7095
      %7112 = vst [vmem:[#allocation3 + $0x1e0] sm:$0xff] %v7096
      %7113 = vst [vmem:[#allocation3 + $0x1e8] sm:$0xff] %v7097
      %7114 = vst [vmem:[#allocation3 + $0x1f0] sm:$0xff] %v7098
      %7115 = vst [vmem:[#allocation3 + $0x1f8] sm:$0xff] %v7099
      %7116 = vst [vmem:[#allocation3 + $0x200] sm:$0xff] %v6756
      %7117 = vst [vmem:[#allocation3 + $0x208] sm:$0xff] %v6757
      %7118 = vst [vmem:[#allocation3 + $0x210] sm:$0xff] %v6758
      %7119 = vst [vmem:[#allocation3 + $0x218] sm:$0xff] %v6759
      %7120 = vst [vmem:[#allocation3 + $0x220] sm:$0xff] %v6760
      %7121 = vst [vmem:[#allocation3 + $0x228] sm:$0xff] %v6761
      %7122 = vst [vmem:[#allocation3 + $0x230] sm:$0xff] %v6762
      %7123 = vst [vmem:[#allocation3 + $0x238] sm:$0xff] %v6763
      %7124 = vst [vmem:[#allocation3 + $0x240] sm:$0xff] %v6764
      %7125 = vst [vmem:[#allocation3 + $0x248] sm:$0xff] %v6765
      %7126 = vst [vmem:[#allocation3 + $0x250] sm:$0xff] %v6766
      %7127 = vst [vmem:[#allocation3 + $0x258] sm:$0xff] %v6767
      %7128 = vst [vmem:[#allocation3 + $0x260] sm:$0xff] %v6768
      %7129 = vst [vmem:[#allocation3 + $0x268] sm:$0xff] %v6769
      %7130 = vst [vmem:[#allocation3 + $0x270] sm:$0xff] %v6770
      %7131 = vst [vmem:[#allocation3 + $0x278] sm:$0xff] %v6771
      %7132 = vrot.lane.b32.xlu0 %v6756, 127
      %v7133 = vpop.permute.xlu0 %7132
      %7134 = vrot.lane.b32.xlu0 %v6758, 127
      %v7135 = vpop.permute.xlu0 %7134
      %7136 = vrot.lane.b32.xlu0 %v6760, 127
      %v7137 = vpop.permute.xlu0 %7136
      %7138 = vrot.lane.b32.xlu0 %v6762, 127
      %v7139 = vpop.permute.xlu0 %7138
      %7140 = vrot.lane.b32.xlu0 %v6764, 127
      %v7141 = vpop.permute.xlu0 %7140
      %7142 = vrot.lane.b32.xlu0 %v6766, 127
      %v7143 = vpop.permute.xlu0 %7142
      %7144 = vrot.lane.b32.xlu0 %v6768, 127
      %v7145 = vpop.permute.xlu0 %7144
      %7146 = vrot.lane.b32.xlu0 %v6770, 127
      %v7147 = vpop.permute.xlu0 %7146
      %7148 = vrot.lane.b32.xlu0 %v6757, 127
      %v7149 = vpop.permute.xlu0 %7148
      %7150 = vrot.lane.b32.xlu0 %v6759, 127
      %v7151 = vpop.permute.xlu0 %7150
      %7152 = vrot.lane.b32.xlu0 %v6761, 127
      %v7153 = vpop.permute.xlu0 %7152
      %7154 = vrot.lane.b32.xlu0 %v6763, 127
      %v7155 = vpop.permute.xlu0 %7154
      %7156 = vrot.lane.b32.xlu0 %v6765, 127
      %v7157 = vpop.permute.xlu0 %7156
      %7158 = vrot.lane.b32.xlu0 %v6767, 127
      %v7159 = vpop.permute.xlu0 %7158
      %7160 = vrot.lane.b32.xlu0 %v6769, 127
      %v7161 = vpop.permute.xlu0 %7160
      %7162 = vrot.lane.b32.xlu0 %v6771, 127
      %v7163 = vpop.permute.xlu0 %7162
      %v7164 = vsel %vm681, %v7133, %v7149
      %v7165 = vsel %vm681, %v7135, %v7151
      %v7166 = vsel %vm681, %v7137, %v7153
      %v7167 = vsel %vm681, %v7139, %v7155
      %v7168 = vsel %vm681, %v7141, %v7157
      %v7169 = vsel %vm681, %v7143, %v7159
      %v7170 = vsel %vm681, %v7145, %v7161
      %v7171 = vsel %vm681, %v7147, %v7163
      %v7172 = vsel %vm681, %v7149, %v7133
      %v7173 = vsel %vm681, %v7151, %v7135
      %v7174 = vsel %vm681, %v7153, %v7137
      %v7175 = vsel %vm681, %v7155, %v7139
      %v7176 = vsel %vm681, %v7157, %v7141
      %v7177 = vsel %vm681, %v7159, %v7143
      %v7178 = vsel %vm681, %v7161, %v7145
      %v7179 = vsel %vm681, %v7163, %v7147
      %v7180 = vld [vmem:[%s690] ss:$8 sm:$0x3]
      %v7182 = vperm.slane %v7180, 0
      %v7183 = vperm.slane %v7180, 1
      %v7186 = vmul.f32 %v7164, %v7182
      %v7187 = vmul.f32 %v7172, %v7183
      %v7188 = vmul.f32 %v7165, %v7182
      %v7189 = vmul.f32 %v7173, %v7183
      %v7190 = vmul.f32 %v7166, %v7182
      %v7191 = vmul.f32 %v7174, %v7183
      %v7192 = vmul.f32 %v7167, %v7182
      %v7193 = vmul.f32 %v7175, %v7183
      %v7194 = vmul.f32 %v7168, %v7182
      %v7195 = vmul.f32 %v7176, %v7183
      %v7196 = vmul.f32 %v7169, %v7182
      %v7197 = vmul.f32 %v7177, %v7183
      %v7198 = vmul.f32 %v7170, %v7182
      %v7199 = vmul.f32 %v7178, %v7183
      %v7200 = vmul.f32 %v7171, %v7182
      %v7201 = vmul.f32 %v7179, %v7183
      %7202 = vst [vmem:[#allocation3 + $0x280] sm:$0xff] %v7186
      %7203 = vst [vmem:[#allocation3 + $0x288] sm:$0xff] %v7187
      %7204 = vst [vmem:[#allocation3 + $0x290] sm:$0xff] %v7188
      %7205 = vst [vmem:[#allocation3 + $0x298] sm:$0xff] %v7189
      %7206 = vst [vmem:[#allocation3 + $0x2a0] sm:$0xff] %v7190
      %7207 = vst [vmem:[#allocation3 + $0x2a8] sm:$0xff] %v7191
      %7208 = vst [vmem:[#allocation3 + $0x2b0] sm:$0xff] %v7192
      %7209 = vst [vmem:[#allocation3 + $0x2b8] sm:$0xff] %v7193
      %7210 = vst [vmem:[#allocation3 + $0x2c0] sm:$0xff] %v7194
      %7211 = vst [vmem:[#allocation3 + $0x2c8] sm:$0xff] %v7195
      %7212 = vst [vmem:[#allocation3 + $0x2d0] sm:$0xff] %v7196
      %7213 = vst [vmem:[#allocation3 + $0x2d8] sm:$0xff] %v7197
      %7214 = vst [vmem:[#allocation3 + $0x2e0] sm:$0xff] %v7198
      %7215 = vst [vmem:[#allocation3 + $0x2e8] sm:$0xff] %v7199
      %7216 = vst [vmem:[#allocation3 + $0x2f0] sm:$0xff] %v7200
      %7217 = vst [vmem:[#allocation3 + $0x2f8] sm:$0xff] %v7201
      %7218 = vrot.lane.b32.xlu0 %v6756, 113
      %v7219 = vpop.permute.xlu0 %7218
      %7220 = vrot.lane.b32.xlu0 %v6758, 113
      %v7221 = vpop.permute.xlu0 %7220
      %7222 = vrot.lane.b32.xlu0 %v6760, 113
      %v7223 = vpop.permute.xlu0 %7222
      %7224 = vrot.lane.b32.xlu0 %v6762, 113
      %v7225 = vpop.permute.xlu0 %7224
      %7226 = vrot.lane.b32.xlu0 %v6764, 113
      %v7227 = vpop.permute.xlu0 %7226
      %7228 = vrot.lane.b32.xlu0 %v6766, 113
      %v7229 = vpop.permute.xlu0 %7228
      %7230 = vrot.lane.b32.xlu0 %v6768, 113
      %v7231 = vpop.permute.xlu0 %7230
      %7232 = vrot.lane.b32.xlu0 %v6770, 113
      %v7233 = vpop.permute.xlu0 %7232
      %7234 = vrot.lane.b32.xlu0 %v6757, 113
      %v7235 = vpop.permute.xlu0 %7234
      %7236 = vrot.lane.b32.xlu0 %v6759, 113
      %v7237 = vpop.permute.xlu0 %7236
      %7238 = vrot.lane.b32.xlu0 %v6761, 113
      %v7239 = vpop.permute.xlu0 %7238
      %7240 = vrot.lane.b32.xlu0 %v6763, 113
      %v7241 = vpop.permute.xlu0 %7240
      %7242 = vrot.lane.b32.xlu0 %v6765, 113
      %v7243 = vpop.permute.xlu0 %7242
      %7244 = vrot.lane.b32.xlu0 %v6767, 113
      %v7245 = vpop.permute.xlu0 %7244
      %7246 = vrot.lane.b32.xlu0 %v6769, 113
      %v7247 = vpop.permute.xlu0 %7246
      %7248 = vrot.lane.b32.xlu0 %v6771, 113
      %v7249 = vpop.permute.xlu0 %7248
      %v7250 = vsel %vm729, %v7219, %v7235
      %v7251 = vsel %vm729, %v7221, %v7237
      %v7252 = vsel %vm729, %v7223, %v7239
      %v7253 = vsel %vm729, %v7225, %v7241
      %v7254 = vsel %vm729, %v7227, %v7243
      %v7255 = vsel %vm729, %v7229, %v7245
      %v7256 = vsel %vm729, %v7231, %v7247
      %v7257 = vsel %vm729, %v7233, %v7249
      %v7258 = vsel %vm729, %v7235, %v7219
      %v7259 = vsel %vm729, %v7237, %v7221
      %v7260 = vsel %vm729, %v7239, %v7223
      %v7261 = vsel %vm729, %v7241, %v7225
      %v7262 = vsel %vm729, %v7243, %v7227
      %v7263 = vsel %vm729, %v7245, %v7229
      %v7264 = vsel %vm729, %v7247, %v7231
      %v7265 = vsel %vm729, %v7249, %v7233
      %v7266 = vld [vmem:[%s738] ss:$8 sm:$0x3]
      %v7268 = vperm.slane %v7266, 0
      %v7269 = vperm.slane %v7266, 1
      %v7272 = vmul.f32 %v7250, %v7268
      %v7273 = vmul.f32 %v7258, %v7269
      %v7274 = vmul.f32 %v7251, %v7268
      %v7275 = vmul.f32 %v7259, %v7269
      %v7276 = vmul.f32 %v7252, %v7268
      %v7277 = vmul.f32 %v7260, %v7269
      %v7278 = vmul.f32 %v7253, %v7268
      %v7279 = vmul.f32 %v7261, %v7269
      %v7280 = vmul.f32 %v7254, %v7268
      %v7281 = vmul.f32 %v7262, %v7269
      %v7282 = vmul.f32 %v7255, %v7268
      %v7283 = vmul.f32 %v7263, %v7269
      %v7284 = vmul.f32 %v7256, %v7268
      %v7285 = vmul.f32 %v7264, %v7269
      %v7286 = vmul.f32 %v7257, %v7268
      %v7287 = vmul.f32 %v7265, %v7269
      %7288 = vst [vmem:[#allocation3 + $0x300] sm:$0xff] %v7272
      %7289 = vst [vmem:[#allocation3 + $0x308] sm:$0xff] %v7273
      %7290 = vst [vmem:[#allocation3 + $0x310] sm:$0xff] %v7274
      %7291 = vst [vmem:[#allocation3 + $0x318] sm:$0xff] %v7275
      %7292 = vst [vmem:[#allocation3 + $0x320] sm:$0xff] %v7276
      %7293 = vst [vmem:[#allocation3 + $0x328] sm:$0xff] %v7277
      %7294 = vst [vmem:[#allocation3 + $0x330] sm:$0xff] %v7278
      %7295 = vst [vmem:[#allocation3 + $0x338] sm:$0xff] %v7279
      %7296 = vst [vmem:[#allocation3 + $0x340] sm:$0xff] %v7280
      %7297 = vst [vmem:[#allocation3 + $0x348] sm:$0xff] %v7281
      %7298 = vst [vmem:[#allocation3 + $0x350] sm:$0xff] %v7282
      %7299 = vst [vmem:[#allocation3 + $0x358] sm:$0xff] %v7283
      %7300 = vst [vmem:[#allocation3 + $0x360] sm:$0xff] %v7284
      %7301 = vst [vmem:[#allocation3 + $0x368] sm:$0xff] %v7285
      %7302 = vst [vmem:[#allocation3 + $0x370] sm:$0xff] %v7286
      %7303 = vst [vmem:[#allocation3 + $0x378] sm:$0xff] %v7287
      %7304 = vrot.lane.b32.xlu0 %v6756, 112
      %v7305 = vpop.permute.xlu0 %7304
      %7306 = vrot.lane.b32.xlu0 %v6758, 112
      %v7307 = vpop.permute.xlu0 %7306
      %7308 = vrot.lane.b32.xlu0 %v6760, 112
      %v7309 = vpop.permute.xlu0 %7308
      %7310 = vrot.lane.b32.xlu0 %v6762, 112
      %v7311 = vpop.permute.xlu0 %7310
      %7312 = vrot.lane.b32.xlu0 %v6764, 112
      %v7313 = vpop.permute.xlu0 %7312
      %7314 = vrot.lane.b32.xlu0 %v6766, 112
      %v7315 = vpop.permute.xlu0 %7314
      %7316 = vrot.lane.b32.xlu0 %v6768, 112
      %v7317 = vpop.permute.xlu0 %7316
      %7318 = vrot.lane.b32.xlu0 %v6770, 112
      %v7319 = vpop.permute.xlu0 %7318
      %7320 = vrot.lane.b32.xlu0 %v6757, 112
      %v7321 = vpop.permute.xlu0 %7320
      %7322 = vrot.lane.b32.xlu0 %v6759, 112
      %v7323 = vpop.permute.xlu0 %7322
      %7324 = vrot.lane.b32.xlu0 %v6761, 112
      %v7325 = vpop.permute.xlu0 %7324
      %7326 = vrot.lane.b32.xlu0 %v6763, 112
      %v7327 = vpop.permute.xlu0 %7326
      %7328 = vrot.lane.b32.xlu0 %v6765, 112
      %v7329 = vpop.permute.xlu0 %7328
      %7330 = vrot.lane.b32.xlu0 %v6767, 112
      %v7331 = vpop.permute.xlu0 %7330
      %7332 = vrot.lane.b32.xlu0 %v6769, 112
      %v7333 = vpop.permute.xlu0 %7332
      %7334 = vrot.lane.b32.xlu0 %v6771, 112
      %v7335 = vpop.permute.xlu0 %7334
      %v7336 = vsel %vm777, %v7305, %v7321
      %v7337 = vsel %vm777, %v7307, %v7323
      %v7338 = vsel %vm777, %v7309, %v7325
      %v7339 = vsel %vm777, %v7311, %v7327
      %v7340 = vsel %vm777, %v7313, %v7329
      %v7341 = vsel %vm777, %v7315, %v7331
      %v7342 = vsel %vm777, %v7317, %v7333
      %v7343 = vsel %vm777, %v7319, %v7335
      %v7344 = vsel %vm777, %v7321, %v7305
      %v7345 = vsel %vm777, %v7323, %v7307
      %v7346 = vsel %vm777, %v7325, %v7309
      %v7347 = vsel %vm777, %v7327, %v7311
      %v7348 = vsel %vm777, %v7329, %v7313
      %v7349 = vsel %vm777, %v7331, %v7315
      %v7350 = vsel %vm777, %v7333, %v7317
      %v7351 = vsel %vm777, %v7335, %v7319
      %v7352 = vld [vmem:[%s786] ss:$8 sm:$0x3]
      %v7354 = vperm.slane %v7352, 0
      %v7355 = vperm.slane %v7352, 1
      %v7358 = vmul.f32 %v7336, %v7354
      %v7359 = vmul.f32 %v7344, %v7355
      %v7360 = vmul.f32 %v7337, %v7354
      %v7361 = vmul.f32 %v7345, %v7355
      %v7362 = vmul.f32 %v7338, %v7354
      %v7363 = vmul.f32 %v7346, %v7355
      %v7364 = vmul.f32 %v7339, %v7354
      %v7365 = vmul.f32 %v7347, %v7355
      %v7366 = vmul.f32 %v7340, %v7354
      %v7367 = vmul.f32 %v7348, %v7355
      %v7368 = vmul.f32 %v7341, %v7354
      %v7369 = vmul.f32 %v7349, %v7355
      %v7370 = vmul.f32 %v7342, %v7354
      %v7371 = vmul.f32 %v7350, %v7355
      %v7372 = vmul.f32 %v7343, %v7354
      %v7373 = vmul.f32 %v7351, %v7355
      %7374 = vst [vmem:[#allocation3 + $0x380] sm:$0xff] %v7358
      %7375 = vst [vmem:[#allocation3 + $0x388] sm:$0xff] %v7359
      %7376 = vst [vmem:[#allocation3 + $0x390] sm:$0xff] %v7360
      %7377 = vst [vmem:[#allocation3 + $0x398] sm:$0xff] %v7361
      %7378 = vst [vmem:[#allocation3 + $0x3a0] sm:$0xff] %v7362
      %7379 = vst [vmem:[#allocation3 + $0x3a8] sm:$0xff] %v7363
      %7380 = vst [vmem:[#allocation3 + $0x3b0] sm:$0xff] %v7364
      %7381 = vst [vmem:[#allocation3 + $0x3b8] sm:$0xff] %v7365
      %7382 = vst [vmem:[#allocation3 + $0x3c0] sm:$0xff] %v7366
      %7383 = vst [vmem:[#allocation3 + $0x3c8] sm:$0xff] %v7367
      %7384 = vst [vmem:[#allocation3 + $0x3d0] sm:$0xff] %v7368
      %7385 = vst [vmem:[#allocation3 + $0x3d8] sm:$0xff] %v7369
      %7386 = vst [vmem:[#allocation3 + $0x3e0] sm:$0xff] %v7370
      %7387 = vst [vmem:[#allocation3 + $0x3e8] sm:$0xff] %v7371
      %7388 = vst [vmem:[#allocation3 + $0x3f0] sm:$0xff] %v7372
      %7389 = vst [vmem:[#allocation3 + $0x3f8] sm:$0xff] %v7373
      %7390 = vrot.lane.b32.xlu0 %v6756, 111
      %v7391 = vpop.permute.xlu0 %7390
      %7392 = vrot.lane.b32.xlu0 %v6758, 111
      %v7393 = vpop.permute.xlu0 %7392
      %7394 = vrot.lane.b32.xlu0 %v6760, 111
      %v7395 = vpop.permute.xlu0 %7394
      %7396 = vrot.lane.b32.xlu0 %v6762, 111
      %v7397 = vpop.permute.xlu0 %7396
      %7398 = vrot.lane.b32.xlu0 %v6764, 111
      %v7399 = vpop.permute.xlu0 %7398
      %7400 = vrot.lane.b32.xlu0 %v6766, 111
      %v7401 = vpop.permute.xlu0 %7400
      %7402 = vrot.lane.b32.xlu0 %v6768, 111
      %v7403 = vpop.permute.xlu0 %7402
      %7404 = vrot.lane.b32.xlu0 %v6770, 111
      %v7405 = vpop.permute.xlu0 %7404
      %7406 = vrot.lane.b32.xlu0 %v6757, 111
      %v7407 = vpop.permute.xlu0 %7406
      %7408 = vrot.lane.b32.xlu0 %v6759, 111
      %v7409 = vpop.permute.xlu0 %7408
      %7410 = vrot.lane.b32.xlu0 %v6761, 111
      %v7411 = vpop.permute.xlu0 %7410
      %7412 = vrot.lane.b32.xlu0 %v6763, 111
      %v7413 = vpop.permute.xlu0 %7412
      %7414 = vrot.lane.b32.xlu0 %v6765, 111
      %v7415 = vpop.permute.xlu0 %7414
      %7416 = vrot.lane.b32.xlu0 %v6767, 111
      %v7417 = vpop.permute.xlu0 %7416
      %7418 = vrot.lane.b32.xlu0 %v6769, 111
      %v7419 = vpop.permute.xlu0 %7418
      %7420 = vrot.lane.b32.xlu0 %v6771, 111
      %v7421 = vpop.permute.xlu0 %7420
      %v7422 = vsel %vm825, %v7391, %v7407
      %v7423 = vsel %vm825, %v7393, %v7409
      %v7424 = vsel %vm825, %v7395, %v7411
      %v7425 = vsel %vm825, %v7397, %v7413
      %v7426 = vsel %vm825, %v7399, %v7415
      %v7427 = vsel %vm825, %v7401, %v7417
      %v7428 = vsel %vm825, %v7403, %v7419
      %v7429 = vsel %vm825, %v7405, %v7421
      %v7430 = vsel %vm825, %v7407, %v7391
      %v7431 = vsel %vm825, %v7409, %v7393
      %v7432 = vsel %vm825, %v7411, %v7395
      %v7433 = vsel %vm825, %v7413, %v7397
      %v7434 = vsel %vm825, %v7415, %v7399
      %v7435 = vsel %vm825, %v7417, %v7401
      %v7436 = vsel %vm825, %v7419, %v7403
      %v7437 = vsel %vm825, %v7421, %v7405
      %v7438 = vld [vmem:[%s834] ss:$8 sm:$0x3]
      %v7440 = vperm.slane %v7438, 0
      %v7441 = vperm.slane %v7438, 1
      %v7444 = vmul.f32 %v7422, %v7440
      %v7445 = vmul.f32 %v7430, %v7441
      %v7446 = vmul.f32 %v7423, %v7440
      %v7447 = vmul.f32 %v7431, %v7441
      %v7448 = vmul.f32 %v7424, %v7440
      %v7449 = vmul.f32 %v7432, %v7441
      %v7450 = vmul.f32 %v7425, %v7440
      %v7451 = vmul.f32 %v7433, %v7441
      %v7452 = vmul.f32 %v7426, %v7440
      %v7453 = vmul.f32 %v7434, %v7441
      %v7454 = vmul.f32 %v7427, %v7440
      %v7455 = vmul.f32 %v7435, %v7441
      %v7456 = vmul.f32 %v7428, %v7440
      %v7457 = vmul.f32 %v7436, %v7441
      %v7458 = vmul.f32 %v7429, %v7440
      %v7459 = vmul.f32 %v7437, %v7441
      %7460 = vst [vmem:[#allocation3 + $0x400] sm:$0xff] %v7444
      %7461 = vst [vmem:[#allocation3 + $0x408] sm:$0xff] %v7445
      %7462 = vst [vmem:[#allocation3 + $0x410] sm:$0xff] %v7446
      %7463 = vst [vmem:[#allocation3 + $0x418] sm:$0xff] %v7447
      %7464 = vst [vmem:[#allocation3 + $0x420] sm:$0xff] %v7448
      %7465 = vst [vmem:[#allocation3 + $0x428] sm:$0xff] %v7449
      %7466 = vst [vmem:[#allocation3 + $0x430] sm:$0xff] %v7450
      %7467 = vst [vmem:[#allocation3 + $0x438] sm:$0xff] %v7451
      %7468 = vst [vmem:[#allocation3 + $0x440] sm:$0xff] %v7452
      %7469 = vst [vmem:[#allocation3 + $0x448] sm:$0xff] %v7453
      %7470 = vst [vmem:[#allocation3 + $0x450] sm:$0xff] %v7454
      %7471 = vst [vmem:[#allocation3 + $0x458] sm:$0xff] %v7455
      %7472 = vst [vmem:[#allocation3 + $0x460] sm:$0xff] %v7456
      %7473 = vst [vmem:[#allocation3 + $0x468] sm:$0xff] %v7457
      %7474 = vst [vmem:[#allocation3 + $0x470] sm:$0xff] %v7458
      %7475 = vst [vmem:[#allocation3 + $0x478] sm:$0xff] %v7459
      %v7476 = vld [vmem:[%s8] sm:$0xff]
      %v7477 = vld [vmem:[%s8 + $0x8] sm:$0xff]
      %v7478 = vld [vmem:[%s8 + $0x10] sm:$0xff]
      %v7479 = vld [vmem:[%s8 + $0x18] sm:$0xff]
      %v7480 = vld [vmem:[%s8 + $0x20] sm:$0xff]
      %v7481 = vld [vmem:[%s8 + $0x28] sm:$0xff]
      %v7482 = vld [vmem:[%s8 + $0x30] sm:$0xff]
      %v7483 = vld [vmem:[%s8 + $0x38] sm:$0xff]
      %v7484 = vld [vmem:[%s8 + $0x40] sm:$0xff]
      %v7485 = vld [vmem:[%s8 + $0x48] sm:$0xff]
      %v7486 = vld [vmem:[#allocation3] sm:$0xff]
      %v7487 = vld [vmem:[#allocation3 + $0x8] sm:$0xff]
      %v7488 = vld [vmem:[#allocation3 + $0x10] sm:$0xff]
      %v7489 = vld [vmem:[#allocation3 + $0x18] sm:$0xff]
      %v7490 = vld [vmem:[#allocation3 + $0x20] sm:$0xff]
      %v7491 = vld [vmem:[#allocation3 + $0x28] sm:$0xff]
      %v7492 = vld [vmem:[#allocation3 + $0x30] sm:$0xff]
      %v7493 = vld [vmem:[#allocation3 + $0x38] sm:$0xff]
      %v7494 = vld [vmem:[#allocation3 + $0x40] sm:$0xff]
      %v7495 = vld [vmem:[#allocation3 + $0x48] sm:$0xff]
      %v7496 = vld [vmem:[#allocation3 + $0x50] sm:$0xff]
      %v7497 = vld [vmem:[#allocation3 + $0x58] sm:$0xff]
      %v7498 = vld [vmem:[#allocation3 + $0x60] sm:$0xff]
      %v7499 = vld [vmem:[#allocation3 + $0x68] sm:$0xff]
      %v7500 = vld [vmem:[#allocation3 + $0x70] sm:$0xff]
      %v7501 = vld [vmem:[#allocation3 + $0x78] sm:$0xff]
      %v7502 = vld [vmem:[#allocation3 + $0x80] sm:$0xff]
      %v7503 = vld [vmem:[#allocation3 + $0x88] sm:$0xff]
      %v7504 = vld [vmem:[#allocation3 + $0x90] sm:$0xff]
      %v7505 = vld [vmem:[#allocation3 + $0x98] sm:$0xff]
      %v7506 = vld [vmem:[#allocation3 + $0xa0] sm:$0xff]
      %v7507 = vld [vmem:[#allocation3 + $0xa8] sm:$0xff]
      %v7508 = vld [vmem:[#allocation3 + $0xb0] sm:$0xff]
      %v7509 = vld [vmem:[#allocation3 + $0xb8] sm:$0xff]
      %v7510 = vld [vmem:[#allocation3 + $0xc0] sm:$0xff]
      %v7511 = vld [vmem:[#allocation3 + $0xc8] sm:$0xff]
      %v7512 = vld [vmem:[#allocation3 + $0xd0] sm:$0xff]
      %v7513 = vld [vmem:[#allocation3 + $0xd8] sm:$0xff]
      %v7514 = vld [vmem:[#allocation3 + $0xe0] sm:$0xff]
      %v7515 = vld [vmem:[#allocation3 + $0xe8] sm:$0xff]
      %v7516 = vld [vmem:[#allocation3 + $0xf0] sm:$0xff]
      %v7517 = vld [vmem:[#allocation3 + $0xf8] sm:$0xff]
      %v7518 = vld [vmem:[#allocation3 + $0x100] sm:$0xff]
      %v7519 = vld [vmem:[#allocation3 + $0x108] sm:$0xff]
      %v7520 = vld [vmem:[#allocation3 + $0x110] sm:$0xff]
      %v7521 = vld [vmem:[#allocation3 + $0x118] sm:$0xff]
      %v7522 = vld [vmem:[#allocation3 + $0x120] sm:$0xff]
      %v7523 = vld [vmem:[#allocation3 + $0x128] sm:$0xff]
      %v7524 = vld [vmem:[#allocation3 + $0x130] sm:$0xff]
      %v7525 = vld [vmem:[#allocation3 + $0x138] sm:$0xff]
      %v7526 = vld [vmem:[#allocation3 + $0x140] sm:$0xff]
      %v7527 = vld [vmem:[#allocation3 + $0x148] sm:$0xff]
      %v7528 = vld [vmem:[#allocation3 + $0x150] sm:$0xff]
      %v7529 = vld [vmem:[#allocation3 + $0x158] sm:$0xff]
      %v7530 = vld [vmem:[#allocation3 + $0x160] sm:$0xff]
      %v7531 = vld [vmem:[#allocation3 + $0x168] sm:$0xff]
      %v7532 = vld [vmem:[#allocation3 + $0x170] sm:$0xff]
      %v7533 = vld [vmem:[#allocation3 + $0x178] sm:$0xff]
      %v7534 = vld [vmem:[#allocation3 + $0x180] sm:$0xff]
      %v7535 = vld [vmem:[#allocation3 + $0x188] sm:$0xff]
      %v7536 = vld [vmem:[#allocation3 + $0x190] sm:$0xff]
      %v7537 = vld [vmem:[#allocation3 + $0x198] sm:$0xff]
      %v7538 = vld [vmem:[#allocation3 + $0x1a0] sm:$0xff]
      %v7539 = vld [vmem:[#allocation3 + $0x1a8] sm:$0xff]
      %v7540 = vld [vmem:[#allocation3 + $0x1b0] sm:$0xff]
      %v7541 = vld [vmem:[#allocation3 + $0x1b8] sm:$0xff]
      %v7542 = vld [vmem:[#allocation3 + $0x1c0] sm:$0xff]
      %v7543 = vld [vmem:[#allocation3 + $0x1c8] sm:$0xff]
      %v7544 = vld [vmem:[#allocation3 + $0x1d0] sm:$0xff]
      %v7545 = vld [vmem:[#allocation3 + $0x1d8] sm:$0xff]
      %v7546 = vld [vmem:[#allocation3 + $0x1e0] sm:$0xff]
      %v7547 = vld [vmem:[#allocation3 + $0x1e8] sm:$0xff]
      %v7548 = vld [vmem:[#allocation3 + $0x1f0] sm:$0xff]
      %v7549 = vld [vmem:[#allocation3 + $0x1f8] sm:$0xff]
      %v7550 = vld [vmem:[#allocation3 + $0x200] sm:$0xff]
      %v7551 = vld [vmem:[#allocation3 + $0x208] sm:$0xff]
      %v7552 = vld [vmem:[#allocation3 + $0x210] sm:$0xff]
      %v7553 = vld [vmem:[#allocation3 + $0x218] sm:$0xff]
      %v7554 = vld [vmem:[#allocation3 + $0x220] sm:$0xff]
      %v7555 = vld [vmem:[#allocation3 + $0x228] sm:$0xff]
      %v7556 = vld [vmem:[#allocation3 + $0x230] sm:$0xff]
      %v7557 = vld [vmem:[#allocation3 + $0x238] sm:$0xff]
      %v7558 = vld [vmem:[#allocation3 + $0x240] sm:$0xff]
      %v7559 = vld [vmem:[#allocation3 + $0x248] sm:$0xff]
      %v7560 = vld [vmem:[#allocation3 + $0x250] sm:$0xff]
      %v7561 = vld [vmem:[#allocation3 + $0x258] sm:$0xff]
      %v7562 = vld [vmem:[#allocation3 + $0x260] sm:$0xff]
      %v7563 = vld [vmem:[#allocation3 + $0x268] sm:$0xff]
      %v7564 = vld [vmem:[#allocation3 + $0x270] sm:$0xff]
      %v7565 = vld [vmem:[#allocation3 + $0x278] sm:$0xff]
      %v7566 = vld [vmem:[#allocation3 + $0x280] sm:$0xff]
      %v7567 = vld [vmem:[#allocation3 + $0x288] sm:$0xff]
      %v7568 = vld [vmem:[#allocation3 + $0x290] sm:$0xff]
      %v7569 = vld [vmem:[#allocation3 + $0x298] sm:$0xff]
      %v7570 = vld [vmem:[#allocation3 + $0x2a0] sm:$0xff]
      %v7571 = vld [vmem:[#allocation3 + $0x2a8] sm:$0xff]
      %v7572 = vld [vmem:[#allocation3 + $0x2b0] sm:$0xff]
      %v7573 = vld [vmem:[#allocation3 + $0x2b8] sm:$0xff]
      %v7574 = vld [vmem:[#allocation3 + $0x2c0] sm:$0xff]
      %v7575 = vld [vmem:[#allocation3 + $0x2c8] sm:$0xff]
      %v7576 = vld [vmem:[#allocation3 + $0x2d0] sm:$0xff]
      %v7577 = vld [vmem:[#allocation3 + $0x2d8] sm:$0xff]
      %v7578 = vld [vmem:[#allocation3 + $0x2e0] sm:$0xff]
      %v7579 = vld [vmem:[#allocation3 + $0x2e8] sm:$0xff]
      %v7580 = vld [vmem:[#allocation3 + $0x2f0] sm:$0xff]
      %v7581 = vld [vmem:[#allocation3 + $0x2f8] sm:$0xff]
      %v7582 = vld [vmem:[#allocation3 + $0x300] sm:$0xff]
      %v7583 = vld [vmem:[#allocation3 + $0x308] sm:$0xff]
      %v7584 = vld [vmem:[#allocation3 + $0x310] sm:$0xff]
      %v7585 = vld [vmem:[#allocation3 + $0x318] sm:$0xff]
      %v7586 = vld [vmem:[#allocation3 + $0x320] sm:$0xff]
      %v7587 = vld [vmem:[#allocation3 + $0x328] sm:$0xff]
      %v7588 = vld [vmem:[#allocation3 + $0x330] sm:$0xff]
      %v7589 = vld [vmem:[#allocation3 + $0x338] sm:$0xff]
      %v7590 = vld [vmem:[#allocation3 + $0x340] sm:$0xff]
      %v7591 = vld [vmem:[#allocation3 + $0x348] sm:$0xff]
      %v7592 = vld [vmem:[#allocation3 + $0x350] sm:$0xff]
      %v7593 = vld [vmem:[#allocation3 + $0x358] sm:$0xff]
      %v7594 = vld [vmem:[#allocation3 + $0x360] sm:$0xff]
      %v7595 = vld [vmem:[#allocation3 + $0x368] sm:$0xff]
      %v7596 = vld [vmem:[#allocation3 + $0x370] sm:$0xff]
      %v7597 = vld [vmem:[#allocation3 + $0x378] sm:$0xff]
      %v7598 = vld [vmem:[#allocation3 + $0x380] sm:$0xff]
      %v7599 = vld [vmem:[#allocation3 + $0x388] sm:$0xff]
      %v7600 = vld [vmem:[#allocation3 + $0x390] sm:$0xff]
      %v7601 = vld [vmem:[#allocation3 + $0x398] sm:$0xff]
      %v7602 = vld [vmem:[#allocation3 + $0x3a0] sm:$0xff]
      %v7603 = vld [vmem:[#allocation3 + $0x3a8] sm:$0xff]
      %v7604 = vld [vmem:[#allocation3 + $0x3b0] sm:$0xff]
      %v7605 = vld [vmem:[#allocation3 + $0x3b8] sm:$0xff]
      %v7606 = vld [vmem:[#allocation3 + $0x3c0] sm:$0xff]
      %v7607 = vld [vmem:[#allocation3 + $0x3c8] sm:$0xff]
      %v7608 = vld [vmem:[#allocation3 + $0x3d0] sm:$0xff]
      %v7609 = vld [vmem:[#allocation3 + $0x3d8] sm:$0xff]
      %v7610 = vld [vmem:[#allocation3 + $0x3e0] sm:$0xff]
      %v7611 = vld [vmem:[#allocation3 + $0x3e8] sm:$0xff]
      %v7612 = vld [vmem:[#allocation3 + $0x3f0] sm:$0xff]
      %v7613 = vld [vmem:[#allocation3 + $0x3f8] sm:$0xff]
      %v7614 = vld [vmem:[#allocation3 + $0x400] sm:$0xff]
      %v7615 = vld [vmem:[#allocation3 + $0x408] sm:$0xff]
      %v7616 = vld [vmem:[#allocation3 + $0x410] sm:$0xff]
      %v7617 = vld [vmem:[#allocation3 + $0x418] sm:$0xff]
      %v7618 = vld [vmem:[#allocation3 + $0x420] sm:$0xff]
      %v7619 = vld [vmem:[#allocation3 + $0x428] sm:$0xff]
      %v7620 = vld [vmem:[#allocation3 + $0x430] sm:$0xff]
      %v7621 = vld [vmem:[#allocation3 + $0x438] sm:$0xff]
      %v7622 = vld [vmem:[#allocation3 + $0x440] sm:$0xff]
      %v7623 = vld [vmem:[#allocation3 + $0x448] sm:$0xff]
      %v7624 = vld [vmem:[#allocation3 + $0x450] sm:$0xff]
      %v7625 = vld [vmem:[#allocation3 + $0x458] sm:$0xff]
      %v7626 = vld [vmem:[#allocation3 + $0x460] sm:$0xff]
      %v7627 = vld [vmem:[#allocation3 + $0x468] sm:$0xff]
      %v7628 = vld [vmem:[#allocation3 + $0x470] sm:$0xff]
      %v7629 = vld [vmem:[#allocation3 + $0x478] sm:$0xff]
      %v7631 = vsel %vm1784, %v7480, 0
      %v7634 = vsel %vm1784, %v7485, 0
      %7636 = vmatpush.msra.mxu0 %v7516
      %7637 = vmatpush.msra.mxu0 %v7514
      %7638 = vmatpush.msra.mxu0 %v7512
      %7639 = vmatpush.msra.mxu0 %v7510
      %7640 = vmatpush.msra.mxu0 %v7508
      %7641 = vmatpush.msra.mxu0 %v7506
      %7642 = vmatpush.msra.mxu0 %v7504
      %7643 = vmatpush.msra.mxu0 %v7502
      %7644 = vmatpush.msra.mxu0 %v7500
      %7645 = vmatpush.msra.mxu0 %v7498
      %7646 = vmatpush.msra.mxu0 %v7496
      %7647 = vmatpush.msra.mxu0 %v7494
      %7648 = vmatpush.msra.mxu0 %v7492
      %7649 = vmatpush.msra.mxu0 %v7490
      %7650 = vmatpush.msra.mxu0 %v7488
      %7651 = vmatpush.msra.mxu0 %v7486
      %7652 = vmatmul.f32.gmra.mxu0 %v7476
      %v7653 = vpop.f32.mrf.mxu0
      %v7654 = vadd.f32 0.0, %v7653
      %7655 = vmatmul.f32.gmra.mxu0 %v7481
      %v7656 = vpop.f32.mrf.mxu0
      %v7657 = vadd.f32 0.0, %v7656
      %7658 = vdwg.mxu0
      %7659 = vmatpush.msra.mxu0 %v7548
      %7660 = vmatpush.msra.mxu0 %v7546
      %7661 = vmatpush.msra.mxu0 %v7544
      %7662 = vmatpush.msra.mxu0 %v7542
      %7663 = vmatpush.msra.mxu0 %v7540
      %7664 = vmatpush.msra.mxu0 %v7538
      %7665 = vmatpush.msra.mxu0 %v7536
      %7666 = vmatpush.msra.mxu0 %v7534
      %7667 = vmatpush.msra.mxu0 %v7532
      %7668 = vmatpush.msra.mxu0 %v7530
      %7669 = vmatpush.msra.mxu0 %v7528
      %7670 = vmatpush.msra.mxu0 %v7526
      %7671 = vmatpush.msra.mxu0 %v7524
      %7672 = vmatpush.msra.mxu0 %v7522
      %7673 = vmatpush.msra.mxu0 %v7520
      %7674 = vmatpush.msra.mxu0 %v7518
      %7675 = vmatmul.f32.gmra.mxu0 %v7477
      %v7676 = vpop.f32.mrf.mxu0
      %v7677 = vadd.f32 %v7654, %v7676
      %7678 = vmatmul.f32.gmra.mxu0 %v7482
      %v7679 = vpop.f32.mrf.mxu0
      %v7680 = vadd.f32 %v7657, %v7679
      %7681 = vdwg.mxu0
      %7682 = vmatpush.msra.mxu0 %v7580
      %7683 = vmatpush.msra.mxu0 %v7578
      %7684 = vmatpush.msra.mxu0 %v7576
      %7685 = vmatpush.msra.mxu0 %v7574
      %7686 = vmatpush.msra.mxu0 %v7572
      %7687 = vmatpush.msra.mxu0 %v7570
      %7688 = vmatpush.msra.mxu0 %v7568
      %7689 = vmatpush.msra.mxu0 %v7566
      %7690 = vmatpush.msra.mxu0 %v7564
      %7691 = vmatpush.msra.mxu0 %v7562
      %7692 = vmatpush.msra.mxu0 %v7560
      %7693 = vmatpush.msra.mxu0 %v7558
      %7694 = vmatpush.msra.mxu0 %v7556
      %7695 = vmatpush.msra.mxu0 %v7554
      %7696 = vmatpush.msra.mxu0 %v7552
      %7697 = vmatpush.msra.mxu0 %v7550
      %7698 = vmatmul.f32.gmra.mxu0 %v7478
      %v7699 = vpop.f32.mrf.mxu0
      %v7700 = vadd.f32 %v7677, %v7699
      %7701 = vmatmul.f32.gmra.mxu0 %v7483
      %v7702 = vpop.f32.mrf.mxu0
      %v7703 = vadd.f32 %v7680, %v7702
      %7704 = vdwg.mxu0
      %7705 = vmatpush.msra.mxu0 %v7612
      %7706 = vmatpush.msra.mxu0 %v7610
      %7707 = vmatpush.msra.mxu0 %v7608
      %7708 = vmatpush.msra.mxu0 %v7606
      %7709 = vmatpush.msra.mxu0 %v7604
      %7710 = vmatpush.msra.mxu0 %v7602
      %7711 = vmatpush.msra.mxu0 %v7600
      %7712 = vmatpush.msra.mxu0 %v7598
      %7713 = vmatpush.msra.mxu0 %v7596
      %7714 = vmatpush.msra.mxu0 %v7594
      %7715 = vmatpush.msra.mxu0 %v7592
      %7716 = vmatpush.msra.mxu0 %v7590
      %7717 = vmatpush.msra.mxu0 %v7588
      %7718 = vmatpush.msra.mxu0 %v7586
      %7719 = vmatpush.msra.mxu0 %v7584
      %7720 = vmatpush.msra.mxu0 %v7582
      %7721 = vmatmul.f32.gmra.mxu0 %v7479
      %v7722 = vpop.f32.mrf.mxu0
      %v7723 = vadd.f32 %v7700, %v7722
      %7724 = vmatmul.f32.gmra.mxu0 %v7484
      %v7725 = vpop.f32.mrf.mxu0
      %v7726 = vadd.f32 %v7703, %v7725
      %7727 = vdwg.mxu0
      %7728 = vmatpush.msra.mxu0 0.0
      %7729 = vmatpush.msra.mxu0 0.0
      %7730 = vmatpush.msra.mxu0 0.0
      %7731 = vmatpush.msra.mxu0 0.0
      %7732 = vmatpush.msra.mxu0 0.0
      %7733 = vmatpush.msra.mxu0 0.0
      %7734 = vmatpush.msra.mxu0 0.0
      %7735 = vmatpush.msra.mxu0 0.0
      %7736 = vmatpush.msra.mxu0 %v7628
      %7737 = vmatpush.msra.mxu0 %v7626
      %7738 = vmatpush.msra.mxu0 %v7624
      %7739 = vmatpush.msra.mxu0 %v7622
      %7740 = vmatpush.msra.mxu0 %v7620
      %7741 = vmatpush.msra.mxu0 %v7618
      %7742 = vmatpush.msra.mxu0 %v7616
      %7743 = vmatpush.msra.mxu0 %v7614
      %7744 = vmatmul.f32.gmra.mxu0 %v7631
      %v7745 = vpop.f32.mrf.mxu0
      %v7746 = vadd.f32 %v7723, %v7745
      %7747 = vmatmul.f32.gmra.mxu0 %v7634
      %v7748 = vpop.f32.mrf.mxu0
      %v7749 = vadd.f32 %v7726, %v7748
      %7750 = vdwg.mxu0
      %7751 = vmatpush.msra.mxu0 %v7517
      %7752 = vmatpush.msra.mxu0 %v7515
      %7753 = vmatpush.msra.mxu0 %v7513
      %7754 = vmatpush.msra.mxu0 %v7511
      %7755 = vmatpush.msra.mxu0 %v7509
      %7756 = vmatpush.msra.mxu0 %v7507
      %7757 = vmatpush.msra.mxu0 %v7505
      %7758 = vmatpush.msra.mxu0 %v7503
      %7759 = vmatpush.msra.mxu0 %v7501
      %7760 = vmatpush.msra.mxu0 %v7499
      %7761 = vmatpush.msra.mxu0 %v7497
      %7762 = vmatpush.msra.mxu0 %v7495
      %7763 = vmatpush.msra.mxu0 %v7493
      %7764 = vmatpush.msra.mxu0 %v7491
      %7765 = vmatpush.msra.mxu0 %v7489
      %7766 = vmatpush.msra.mxu0 %v7487
      %7767 = vmatmul.f32.gmra.mxu0 %v7476
      %v7768 = vpop.f32.mrf.mxu0
      %v7769 = vadd.f32 0.0, %v7768
      %7770 = vmatmul.f32.gmra.mxu0 %v7481
      %v7771 = vpop.f32.mrf.mxu0
      %v7772 = vadd.f32 0.0, %v7771
      %7773 = vdwg.mxu0
      %7774 = vmatpush.msra.mxu0 %v7549
      %7775 = vmatpush.msra.mxu0 %v7547
      %7776 = vmatpush.msra.mxu0 %v7545
      %7777 = vmatpush.msra.mxu0 %v7543
      %7778 = vmatpush.msra.mxu0 %v7541
      %7779 = vmatpush.msra.mxu0 %v7539
      %7780 = vmatpush.msra.mxu0 %v7537
      %7781 = vmatpush.msra.mxu0 %v7535
      %7782 = vmatpush.msra.mxu0 %v7533
      %7783 = vmatpush.msra.mxu0 %v7531
      %7784 = vmatpush.msra.mxu0 %v7529
      %7785 = vmatpush.msra.mxu0 %v7527
      %7786 = vmatpush.msra.mxu0 %v7525
      %7787 = vmatpush.msra.mxu0 %v7523
      %7788 = vmatpush.msra.mxu0 %v7521
      %7789 = vmatpush.msra.mxu0 %v7519
      %7790 = vmatmul.f32.gmra.mxu0 %v7477
      %v7791 = vpop.f32.mrf.mxu0
      %v7792 = vadd.f32 %v7769, %v7791
      %7793 = vmatmul.f32.gmra.mxu0 %v7482
      %v7794 = vpop.f32.mrf.mxu0
      %v7795 = vadd.f32 %v7772, %v7794
      %7796 = vdwg.mxu0
      %7797 = vmatpush.msra.mxu0 %v7581
      %7798 = vmatpush.msra.mxu0 %v7579
      %7799 = vmatpush.msra.mxu0 %v7577
      %7800 = vmatpush.msra.mxu0 %v7575
      %7801 = vmatpush.msra.mxu0 %v7573
      %7802 = vmatpush.msra.mxu0 %v7571
      %7803 = vmatpush.msra.mxu0 %v7569
      %7804 = vmatpush.msra.mxu0 %v7567
      %7805 = vmatpush.msra.mxu0 %v7565
      %7806 = vmatpush.msra.mxu0 %v7563
      %7807 = vmatpush.msra.mxu0 %v7561
      %7808 = vmatpush.msra.mxu0 %v7559
      %7809 = vmatpush.msra.mxu0 %v7557
      %7810 = vmatpush.msra.mxu0 %v7555
      %7811 = vmatpush.msra.mxu0 %v7553
      %7812 = vmatpush.msra.mxu0 %v7551
      %7813 = vmatmul.f32.gmra.mxu0 %v7478
      %v7814 = vpop.f32.mrf.mxu0
      %v7815 = vadd.f32 %v7792, %v7814
      %7816 = vmatmul.f32.gmra.mxu0 %v7483
      %v7817 = vpop.f32.mrf.mxu0
      %v7818 = vadd.f32 %v7795, %v7817
      %7819 = vdwg.mxu0
      %7820 = vmatpush.msra.mxu0 %v7613
      %7821 = vmatpush.msra.mxu0 %v7611
      %7822 = vmatpush.msra.mxu0 %v7609
      %7823 = vmatpush.msra.mxu0 %v7607
      %7824 = vmatpush.msra.mxu0 %v7605
      %7825 = vmatpush.msra.mxu0 %v7603
      %7826 = vmatpush.msra.mxu0 %v7601
      %7827 = vmatpush.msra.mxu0 %v7599
      %7828 = vmatpush.msra.mxu0 %v7597
      %7829 = vmatpush.msra.mxu0 %v7595
      %7830 = vmatpush.msra.mxu0 %v7593
      %7831 = vmatpush.msra.mxu0 %v7591
      %7832 = vmatpush.msra.mxu0 %v7589
      %7833 = vmatpush.msra.mxu0 %v7587
      %7834 = vmatpush.msra.mxu0 %v7585
      %7835 = vmatpush.msra.mxu0 %v7583
      %7836 = vmatmul.f32.gmra.mxu0 %v7479
      %v7837 = vpop.f32.mrf.mxu0
      %v7838 = vadd.f32 %v7815, %v7837
      %7839 = vmatmul.f32.gmra.mxu0 %v7484
      %v7840 = vpop.f32.mrf.mxu0
      %v7841 = vadd.f32 %v7818, %v7840
      %7842 = vdwg.mxu0
      %7843 = vmatpush.msra.mxu0 0.0
      %7844 = vmatpush.msra.mxu0 0.0
      %7845 = vmatpush.msra.mxu0 0.0
      %7846 = vmatpush.msra.mxu0 0.0
      %7847 = vmatpush.msra.mxu0 0.0
      %7848 = vmatpush.msra.mxu0 0.0
      %7849 = vmatpush.msra.mxu0 0.0
      %7850 = vmatpush.msra.mxu0 0.0
      %7851 = vmatpush.msra.mxu0 %v7629
      %7852 = vmatpush.msra.mxu0 %v7627
      %7853 = vmatpush.msra.mxu0 %v7625
      %7854 = vmatpush.msra.mxu0 %v7623
      %7855 = vmatpush.msra.mxu0 %v7621
      %7856 = vmatpush.msra.mxu0 %v7619
      %7857 = vmatpush.msra.mxu0 %v7617
      %7858 = vmatpush.msra.mxu0 %v7615
      %7859 = vmatmul.f32.gmra.mxu0 %v7631
      %v7860 = vpop.f32.mrf.mxu0
      %v7861 = vadd.f32 %v7838, %v7860
      %7862 = vmatmul.f32.gmra.mxu0 %v7634
      %v7863 = vpop.f32.mrf.mxu0
      %v7864 = vadd.f32 %v7841, %v7863
      %7865 = vdwg.mxu0
      %v7866 = vld [vmem:[%s327] sm:$0xff]
      %v7867 = vld [vmem:[%s327 + $0x8] sm:$0xff]
      %v7868 = vld [vmem:[%s327 + $0x10] sm:$0xff]
      %v7869 = vld [vmem:[%s327 + $0x18] sm:$0xff]
      %v7870 = vld [vmem:[%s327 + $0x20] sm:$0xff]
      %v7871 = vld [vmem:[%s327 + $0x28] sm:$0xff]
      %v7872 = vld [vmem:[%s327 + $0x30] sm:$0xff]
      %v7873 = vld [vmem:[%s327 + $0x38] sm:$0xff]
      %7874 = vst [vmem:[%s332] sm:$0xff] %v7866
      %7875 = vst [vmem:[%s332 + $0x8] sm:$0xff] %v7867
      %7876 = vst [vmem:[%s332 + $0x10] sm:$0xff] %v7868
      %7877 = vst [vmem:[%s332 + $0x18] sm:$0xff] %v7869
      %7878 = vst [vmem:[%s332 + $0x20] sm:$0xff] %v7870
      %7879 = vst [vmem:[%s332 + $0x28] sm:$0xff] %v7871
      %7880 = vst [vmem:[%s332 + $0x30] sm:$0xff] %v7872
      %7881 = vst [vmem:[%s332 + $0x38] sm:$0xff] %v7873
      %7882 = vst [vmem:[%s332 + $0x40] sm:$0xff] %v7746
      %7883 = vst [vmem:[%s332 + $0x48] sm:$0xff] %v7861
      %7884 = vst [vmem:[%s332 + $0x50] sm:$0xff] %v7749
      %7885 = vst [vmem:[%s332 + $0x58] sm:$0xff] %v7864
      %p7886 = scmp.lt.s32.totalorder %s20, 1
      %s7887 = scalar_select %p7886, %s20, 1
      %s7888 = smul.addr %s7887, 12
      %s7889 = smul.addr %s7888, 8
      %s7890 = scalar_lea.vmem %s9, %s7889
      // Predicated region
      $region57: #{bottleneck_decoder_block_ins.1} parent=55 // pred_check
        %p7891 = pneg %p232
      $region58: #{bottleneck_decoder_block_ins.1} parent=55 // pred_check_branch
        %7893 = sbr.rel (%p7891) target = $region60
      $region59: #{bottleneck_decoder_block_ins.1} parent=55 // pred_region
        _
      $region60: #{bottleneck_decoder_block_ins.1} parent=55 // pred_fallthru
        _
    $region56: #{bottleneck_decoder_block_ins.1} parent=5 // pred_fallthru
      _
    %p7894 = scmp.le.s32.totalorder 2, %s15
    // Predicated region
    $region61: #{bottleneck_decoder_block_ins.1} parent=5 // pred_check
      %p7895 = pneg %p7894
    $region62: #{bottleneck_decoder_block_ins.1} parent=5 // pred_check_branch
      %7897 = sbr.rel (%p7895) target = $region64
    $region63: #{bottleneck_decoder_block_ins.1} parent=5 // pred_region
      %s7898 = ssub.s32 %s15, 2
      // Predicated region
      $region65: #{bottleneck_decoder_block_ins.1} parent=63 // pred_check
        %p7899 = pneg %p238
      $region66: #{bottleneck_decoder_block_ins.1} parent=63 // pred_check_branch
        %7901 = sbr.rel (%p7899) target = $region68
      $region67: #{bottleneck_decoder_block_ins.1} parent=63 // pred_region
        %p7902 = scmp.lt.s32.totalorder %s21, 1
        %s7903 = scalar_select %p7902, %s21, 1
        %s7904 = smul.addr %s7903, 12
        %s7905 = smul.addr %s7904, 8
        %s7906 = scalar_lea.vmem %s9, %s7905
      $region68: #{bottleneck_decoder_block_ins.1} parent=63 // pred_fallthru
        _
    $region64: #{bottleneck_decoder_block_ins.1} parent=5 // pred_fallthru
      _
  $region6: #{bottleneck_decoder_block_ins.1} parent=0 // loop_footer
    %s19 = sadd.s32 1, %s15
  $region7: #{bottleneck_decoder_block_ins.1} parent=0 // loop_footer_branch
    %14 = sbr.rel target = $region3
  $region8: #{bottleneck_decoder_block_ins.1} parent=0 // loop_exit
    _

</llo_original>
